<compile_context>
chip_gen: v6e
topology: v6e:2x2x1
jax: 0.10.0
libtpu: 0.0.40
codegen_flags: <defaults>
</compile_context>

<pallas_src>
import functools

import jax
import jax.numpy as jnp
from jax.experimental import pallas as pl
from jax.experimental.pallas import tpu as pltpu


def _round_up(n, m):
    return ((n + m - 1) // m) * m


@functools.lru_cache(maxsize=None)
def _vmem_limit_bytes():
    """Generation-aware VMEM budget: ~0.6x of 64 MiB/TC chips, ~0.75x of 128 MiB chips."""
    cap = None
    try:
        cap = getattr(pltpu.get_tpu_info(), "vmem_capacity_bytes", None)
    except Exception:
        cap = None
    if not cap:
        cap = 64 * 1024 * 1024                      # conservative fallback (v7x per-core)
    frac = 0.6 if cap <= 64 * 1024 * 1024 else 0.75
    return int(cap * frac)


@functools.lru_cache(maxsize=None)
def _is_v5e():
    try:
        kind = jax.devices()[0].device_kind.lower()
    except Exception:
        return False
    return ("v5 lite" in kind) or ("v5e" in kind)


# ----------------------------------------------------------------------------
# Fused GEMM kernel:  y = act((A @ B) * scale + shift)
# Grid (M tiles, N tiles, K tiles); K is the reduction ("arbitrary") axis.
# Used for the stem im2col GEMM, the 1x1x1 downsamples and the final FC.
# ----------------------------------------------------------------------------

def _gemm_fused_kernel(a_ref, b_ref, s_ref, t_ref, o_ref, acc_ref, *, relu):
    k = pl.program_id(2)

    @pl.when(k == 0)
    def _():
        acc_ref[...] = jnp.zeros_like(acc_ref)

    acc_ref[...] += jnp.dot(a_ref[...], b_ref[...],
                            preferred_element_type=jnp.float32)

    @pl.when(k == pl.num_programs(2) - 1)
    def _():
        y = acc_ref[...] * s_ref[...] + t_ref[...]       # epilogue kept in f32
        if relu:
            y = jnp.maximum(y, 0.0)
        o_ref[...] = y.astype(o_ref.dtype)


def gemm_fused(a, b, scale, shift, *, relu, out_dtype, cast_bf16=True):
    """a: [M, K], b: [K, N], scale/shift: [N]."""
    M, K = a.shape
    K2, N = b.shape
    assert K == K2
    if cast_bf16:
        a = a.astype(jnp.bfloat16)
        b = b.astype(jnp.bfloat16)
    scale = jnp.asarray(scale, jnp.float32).reshape(1, N)
    shift = jnp.asarray(shift, jnp.float32).reshape(1, N)

    tm = min(512, _round_up(M, 8))
    Mp = _round_up(M, tm)
    tk = min(1024, _round_up(K, 128))
    Kp = _round_up(K, tk)
    tn = min(128 if _is_v5e() else 256, _round_up(N, 128))   # v5e MXU is 128-wide
    Np = _round_up(N, tn)

    a_p = jnp.pad(a, ((0, Mp - M), (0, Kp - K)))
    b_p = jnp.pad(b, ((0, Kp - K), (0, Np - N)))
    s_p = jnp.pad(scale, ((0, 0), (0, Np - N)))
    t_p = jnp.pad(shift, ((0, 0), (0, Np - N)))

    out = pl.pallas_call(
        functools.partial(_gemm_fused_kernel, relu=relu),
        out_shape=jax.ShapeDtypeStruct((Mp, Np), out_dtype),
        grid_spec=pltpu.PrefetchScalarGridSpec(
            num_scalar_prefetch=0,
            grid=(Mp // tm, Np // tn, Kp // tk),
            in_specs=[
                pl.BlockSpec((tm, tk), lambda i, j, k: (i, k)),
                pl.BlockSpec((tk, tn), lambda i, j, k: (k, j)),
                pl.BlockSpec((1, tn), lambda i, j, k: (0, j)),
                pl.BlockSpec((1, tn), lambda i, j, k: (0, j)),
            ],
            out_specs=pl.BlockSpec((tm, tn), lambda i, j, k: (i, j)),
            scratch_shapes=[pltpu.VMEM((tm, tn), jnp.float32)],
        ),
        compiler_params=pltpu.CompilerParams(
            dimension_semantics=("parallel", "parallel", "arbitrary"),
            vmem_limit_bytes=_vmem_limit_bytes()),
    )(a_p, b_p, s_p, t_p)
    return out[:M, :N]


# ----------------------------------------------------------------------------
# Direct 3x3x3 conv kernel (stride 1 or 2): on-chip im2col into a VMEM scratch,
# a few large MXU dots, fused BN (+ residual) (+ ReLU).  No HBM im2col.
# ----------------------------------------------------------------------------

def _phase_split(x, ks, strides, pads):
    """Zero-pad and parity-split so every conv tap becomes one contiguous slice.

    Returns (xph, (To, Ho, Wo), (Tq, Hq, Wq)) with xph: (B, st*sh*sw, Tq, Hq, Wq, C).
    For stride-1 this degenerates to a plain pad (the transpose is a no-op).
    """
    B, C = x.shape[0], x.shape[-1]
    pad_cfg = [(0, 0)]
    outs, qs = [], []
    for n, k, s, p in zip(x.shape[1:4], ks, strides, pads):
        o = (n + 2 * p - k) // s + 1
        q = o + (k - 1) // s                     # per-phase length
        rp = s * q - n - p
        assert rp >= 0
        pad_cfg.append((p, rp))
        outs.append(o)
        qs.append(q)
    pad_cfg.append((0, 0))
    st, sh, sw = strides
    Tq, Hq, Wq = qs
    xp = jnp.pad(x, pad_cfg)
    xp = xp.reshape(B, Tq, st, Hq, sh, Wq, sw, C)
    xp = jnp.transpose(xp, (0, 2, 4, 6, 1, 3, 5, 7))
    xp = xp.reshape(B, st * sh * sw, Tq, Hq, Wq, C)
    return xp, tuple(outs), (Tq, Hq, Wq)


def _pick_k_tile(K, Cin, Cout, budget=1 << 20):
    """Largest fused-tap K chunk whose weight slab stays around 1 MiB."""
    for mult in (27, 9, 3, 1):
        tk = mult * Cin
        if K % tk == 0 and tk * Cout * 2 <= budget:
            return tk
    return Cin


def _pick_group(To, Ho, Wop, tk, budget=1 << 20):
    """Largest number of T-planes per MXU dot (raises M) within a ~1 MiB operand."""
    best = 1
    for g in range(1, To + 1):
        if To % g == 0 and g * Ho * Wop <= 1024 and g * Ho * Wop * tk * 2 <= budget:
            best = g
    return best


def _make_direct_conv_kernel(ks, strides, odims, Cin, Cout, Wop, G, tk, relu, has_res):
    kt, kh, kw = ks
    st, sh, sw = strides
    To, Ho, Wo = odims
    K = kt * kh * kw * Cin
    taps = [(dt, dh, dw) for dt in range(kt) for dh in range(kh) for dw in range(kw)]
    n_groups = To // G
    n_kc = K // tk
    rows = G * Ho * Wop
    nsp = sh * sw

    def kernel(*refs):
        if has_res:
            x_ref, w_ref, s_ref, b_ref, r_ref, o_ref, im_ref = refs
        else:
            x_ref, w_ref, s_ref, b_ref, o_ref, im_ref = refs
            r_ref = None

        if Wop > Wo:   # keep the sublane-padding rows deterministic
            im_ref[:, :, Wo:, :] = jnp.zeros((To, Ho, Wop - Wo, K), im_ref.dtype)

        # On-chip im2col: each tap is ONE contiguous slice of its phase volume.
        for ti, (dt, dh, dw) in enumerate(taps):
            pi = (dt % st) * nsp + (dh % sh) * sw + (dw % sw)
            v = x_ref[0, pi,
                      dt // st: dt // st + To,
                      dh // sh: dh // sh + Ho,
                      dw // sw: dw // sw + Wo, :]
            im_ref[:, :, 0:Wo, ti * Cin:(ti + 1) * Cin] = v

        # A few LARGE MXU dots: M = G*Ho*Wop output rows, K tiled in tk-wide chunks.
        for g in range(n_groups):
            acc = jnp.zeros((rows, Cout), jnp.float32)
            for c in range(n_kc):
                a = im_ref[g * G:(g + 1) * G, :, :, c * tk:(c + 1) * tk]
                a = a.reshape(rows, tk)
                acc = acc + jnp.dot(a, w_ref[c * tk:(c + 1) * tk, :],
                                    preferred_element_type=jnp.float32)
            y = acc * s_ref[...] + b_ref[...]                 # folded BN (f32 epilogue)
            y = y.reshape(G, Ho, Wop, Cout)[:, :, :Wo, :]
            if has_res:
                y = y + r_ref[0, g * G:(g + 1) * G].astype(jnp.float32)
            if relu:
                y = jnp.maximum(y, 0.0)
            o_ref[0, g * G:(g + 1) * G] = y.astype(o_ref.dtype)

    return kernel


def conv3d_direct(x, w, scale, shift, *, strides=(1, 1, 1), relu=True, residual=None):
    """kxkxk conv (stride 1 or 2) + folded BN (+ residual) (+ ReLU) in one Pallas kernel."""
    B, T, H, W, Cin = x.shape
    kt, kh, kw, _, Cout = w.shape
    st, sh, sw = strides
    pads = (kt // 2, kh // 2, kw // 2)
    nph = st * sh * sw

    xph, (To, Ho, Wo), (Tq, Hq, Wq) = _phase_split(
        x.astype(jnp.bfloat16), (kt, kh, kw), strides, pads)
    K = kt * kh * kw * Cin
    Wop = _round_up(Wo, 8)
    tk = _pick_k_tile(K, Cin, Cout)
    G = _pick_group(To, Ho, Wop, tk)

    w2 = w.astype(jnp.bfloat16).reshape(K, Cout)
    s2 = jnp.asarray(scale, jnp.float32).reshape(1, Cout)
    t2 = jnp.asarray(shift, jnp.float32).reshape(1, Cout)

    in_specs = [
        pl.BlockSpec((1, nph, Tq, Hq, Wq, Cin), lambda b: (b, 0, 0, 0, 0, 0)),
        pl.BlockSpec((K, Cout), lambda b: (0, 0)),         # weights stay VMEM-resident
        pl.BlockSpec((1, Cout), lambda b: (0, 0)),
        pl.BlockSpec((1, Cout), lambda b: (0, 0)),
    ]
    args = [xph, w2, s2, t2]
    if residual is not None:
        in_specs.append(pl.BlockSpec((1, To, Ho, Wo, Cout), lambda b: (b, 0, 0, 0, 0)))
        args.append(residual.astype(jnp.bfloat16))

    kernel = _make_direct_conv_kernel((kt, kh, kw), strides, (To, Ho, Wo),
                                      Cin, Cout, Wop, G, tk, relu,
                                      residual is not None)
    return pl.pallas_call(
        kernel,
        out_shape=jax.ShapeDtypeStruct((B, To, Ho, Wo, Cout), jnp.bfloat16),
        grid_spec=pltpu.PrefetchScalarGridSpec(
            num_scalar_prefetch=0,
            grid=(B,),
            in_specs=in_specs,
            out_specs=pl.BlockSpec((1, To, Ho, Wo, Cout), lambda b: (b, 0, 0, 0, 0)),
            scratch_shapes=[pltpu.VMEM((To, Ho, Wop, K), jnp.bfloat16)],
        ),
        compiler_params=pltpu.CompilerParams(
            dimension_semantics=("parallel",),
            vmem_limit_bytes=_vmem_limit_bytes()),
    )(*args)


# ----------------------------------------------------------------------------
# Stem (3x7x7, Cin=3): small host-side im2col + fused GEMM.
# ----------------------------------------------------------------------------

def conv3d_im2col_fused(x, w, stride, padding, scale, shift, *, relu):
    B, T, H, W, Cin = x.shape
    kt, kh, kw, _, Cout = w.shape
    st, sh, sw = stride
    pt, ph, pw = padding
    xp = jnp.pad(x.astype(jnp.bfloat16),
                 ((0, 0), (pt, pt), (ph, ph), (pw, pw), (0, 0)))
    To = (T + 2 * pt - kt) // st + 1
    Ho = (H + 2 * ph - kh) // sh + 1
    Wo = (W + 2 * pw - kw) // sw + 1
    patches = []
    for dt in range(kt):
        for dh in range(kh):
            for dw in range(kw):
                patches.append(xp[:, dt:dt + To * st:st,
                                     dh:dh + Ho * sh:sh,
                                     dw:dw + Wo * sw:sw, :])
    a = jnp.stack(patches, axis=4).reshape(B * To * Ho * Wo, kt * kh * kw * Cin)
    b = w.astype(jnp.bfloat16).reshape(kt * kh * kw * Cin, Cout)
    out = gemm_fused(a, b, scale, shift, relu=relu, out_dtype=jnp.bfloat16)
    return out.reshape(B, To, Ho, Wo, Cout)


# ----------------------------------------------------------------------------
# r3d_18 forward
# ----------------------------------------------------------------------------

def basic_block(x, blk, stride):
    h = conv3d_direct(x, blk["conv1_w"], blk["bn1"]["scale"], blk["bn1"]["shift"],
                      strides=(stride,) * 3, relu=True)
    if "down_w" in blk:
        xs = x[:, ::stride, ::stride, ::stride, :]      # 1x1x1 stride-2: pure subsample
        B, To, Ho, Wo, Cin = xs.shape
        Cout = blk["down_w"].shape[-1]
        res = gemm_fused(xs.reshape(B * To * Ho * Wo, Cin),
                         blk["down_w"].reshape(Cin, Cout),
                         blk["down_bn"]["scale"], blk["down_bn"]["shift"],
                         relu=False, out_dtype=jnp.bfloat16)
        res = res.reshape(B, To, Ho, Wo, Cout)
    else:
        res = x
    # conv2 + BN + residual add + ReLU fully fused in the direct-conv epilogue.
    return conv3d_direct(h, blk["conv2_w"], blk["bn2"]["scale"], blk["bn2"]["shift"],
                         strides=(1, 1, 1), relu=True, residual=res)


def r3d18_forward(x_ncthw, params):
    # PyTorch NCDHW -> channels-last NDHWC (channels on the lane axis), bf16.
    x = jnp.transpose(x_ncthw, (0, 2, 3, 4, 1)).astype(jnp.bfloat16)

    # Stem: Conv3d(3, 64, k=(3,7,7), s=(1,2,2), p=(1,3,3)) + BN + ReLU (fused GEMM).
    x = conv3d_im2col_fused(x, params["stem_w"], (1, 2, 2), (1, 3, 3),
                            params["stem_bn"]["scale"], params["stem_bn"]["shift"],
                            relu=True)

    bi = 0
    for stage in range(4):
        for b in range(2):
            blk = params["blocks"][bi]
            bi += 1
            stride = 2 if (stage > 0 and b == 0) else 1
            x = basic_block(x, blk, stride)

    # AdaptiveAvgPool3d(1) folded into plain jnp (identity-sized at this depth),
    # FC through the fused GEMM kernel in f32.
    feats = jnp.mean(x.astype(jnp.float32), axis=(1, 2, 3))        # [B, 512]
    num_classes = params["fc_w"].shape[1]
    logits = gemm_fused(feats, params["fc_w"],
                        jnp.ones((num_classes,), jnp.float32), params["fc_b"],
                        relu=False, out_dtype=jnp.float32, cast_bf16=False)
    return logits


# ----------------------------------------------------------------------------
# Deterministic parameter initialization (synthetic; shapes match r3d_18)
# ----------------------------------------------------------------------------

def init_r3d18_params(key, num_classes=10):
    keys = iter(jax.random.split(key, 64))

    def conv_w(cin, cout, k):
        kt, kh, kw = k
        std = (2.0 / (kt * kh * kw * cin)) ** 0.5
        return jax.random.normal(next(keys), (kt, kh, kw, cin, cout), jnp.float32) * std

    def bn(c):
        # Eval-mode BN folded to per-channel scale/shift (gamma=1, beta=0, mean=0, var=1).
        eps = 1e-5
        return {"scale": jnp.full((c,), 1.0 / (1.0 + eps) ** 0.5, jnp.float32),
                "shift": jnp.zeros((c,), jnp.float32)}

    params = {"stem_w": conv_w(3, 64, (3, 7, 7)), "stem_bn": bn(64)}
    widths = [64, 64, 128, 256, 512]
    blocks = []
    for stage in range(4):
        cin_stage, cout = widths[stage], widths[stage + 1]
        for b in range(2):
            bcin = cin_stage if b == 0 else cout
            stride = 2 if (stage > 0 and b == 0) else 1
            blk = {"conv1_w": conv_w(bcin, cout, (3, 3, 3)), "bn1": bn(cout),
                   "conv2_w": conv_w(cout, cout, (3, 3, 3)), "bn2": bn(cout)}
            if stride != 1 or bcin != cout:
                blk["down_w"] = conv_w(bcin, cout, (1, 1, 1))
                blk["down_bn"] = bn(cout)
            blocks.append(blk)
    params["blocks"] = blocks

    bound = (1.0 / 512) ** 0.5
    params["fc_w"] = jax.random.uniform(next(keys), (512, num_classes),
                                        jnp.float32, -bound, bound)
    params["fc_b"] = jax.random.uniform(next(keys), (num_classes,),
                                        jnp.float32, -bound, bound)
    return params


# ----------------------------------------------------------------------------
# Numerical self-check of the direct conv kernel against a pure-jnp reference
# ----------------------------------------------------------------------------

def _reference_conv(x, w, scale, shift, strides, relu, residual=None):
    st, sh, sw = strides
    kt, kh, kw, Cin, Cout = w.shape
    pt, ph, pw = kt // 2, kh // 2, kw // 2
    xf = x.astype(jnp.float32)
    wf = w.astype(jnp.float32)
    xp = jnp.pad(xf, ((0, 0), (pt, pt), (ph, ph), (pw, pw), (0, 0)))
    B, T, H, W, _ = x.shape
    To = (T + 2 * pt - kt) // st + 1
    Ho = (H + 2 * ph - kh) // sh + 1
    Wo = (W + 2 * pw - kw) // sw + 1
    acc = jnp.zeros((B, To, Ho, Wo, Cout), jnp.float32)
    for dt in range(kt):
        for dh in range(kh):
            for dw in range(kw):
                xs = xp[:, dt:dt + (To - 1) * st + 1:st,
                           dh:dh + (Ho - 1) * sh + 1:sh,
                           dw:dw + (Wo - 1) * sw + 1:sw, :]
                acc = acc + jnp.einsum('bthwc,cd->bthwd', xs, wf[dt, dh, dw],
                                       precision=jax.lax.Precision.HIGHEST)
    y = acc * scale.reshape(1, 1, 1, 1, Cout) + shift.reshape(1, 1, 1, 1, Cout)
    if residual is not None:
        y = y + residual.astype(jnp.float32)
    if relu:
        y = jnp.maximum(y, 0.0)
    return y


def _self_check():
    k1, k2, k3, k4, k5 = jax.random.split(jax.random.PRNGKey(1), 5)

    # stride-1 + residual + ReLU
    xs = jax.random.normal(k1, (1, 4, 8, 8, 16), jnp.float32).astype(jnp.bfloat16)
    ws = (jax.random.normal(k2, (3, 3, 3, 16, 32), jnp.float32) * 0.05).astype(jnp.bfloat16)
    rs = jax.random.normal(k3, (1, 4, 8, 8, 32), jnp.float32).astype(jnp.bfloat16)
    sc = jnp.full((32,), 0.9, jnp.float32)
    bi = jnp.full((32,), 0.1, jnp.float32)
    got = conv3d_direct(xs, ws, sc, bi, strides=(1, 1, 1), relu=True, residual=rs)
    want = _reference_conv(xs, ws, sc, bi, (1, 1, 1), True, rs)
    assert bool(jnp.allclose(got.astype(jnp.float32), want, atol=3e-2, rtol=3e-2)), \
        "direct conv (stride 1) mismatch"

    # stride-2 (phase-split path, narrow output)
    xs2 = jax.random.normal(k4, (1, 4, 6, 6, 8), jnp.float32).astype(jnp.bfloat16)
    ws2 = (jax.random.normal(k5, (3, 3, 3, 8, 16), jnp.float32) * 0.1).astype(jnp.bfloat16)
    sc2 = jnp.ones((16,), jnp.float32)
    bi2 = jnp.zeros((16,), jnp.float32)
    got2 = conv3d_direct(xs2, ws2, sc2, bi2, strides=(2, 2, 2), relu=False)
    want2 = _reference_conv(xs2, ws2, sc2, bi2, (2, 2, 2), False)
    assert bool(jnp.allclose(got2.astype(jnp.float32), want2, atol=3e-2, rtol=3e-2)), \
        "direct conv (stride 2) mismatch"


# ----------------------------------------------------------------------------
# Demo
# ----------------------------------------------------------------------------

if __name__ == "__main__":
    key = jax.random.PRNGKey(0)
    pkey, xkey = jax.random.split(key)

    params = init_r3d18_params(pkey, num_classes=10)

    # [Batch, Channels, NumFrames, Height, Width] -- small demo shapes.
    x = jax.random.normal(xkey, (2, 3, 8, 16, 16), jnp.float32)

    _self_check()

    forward = jax.jit(r3d18_forward)
    logits = jax.block_until_ready(forward(x, params))

    assert logits.shape == (2, 10), logits.shape
    assert bool(jnp.all(jnp.isfinite(logits)))
    print("KERNEL_OK")
</pallas_src>

<mosaic_0001>
module attributes {stable_mosaic.version = 11 : i64} {
  func.func @kernel(%arg0: i32, %arg1: memref<1x1x6x10x10x16xbf16, #tpu.memory_space<vmem>>, %arg2: memref<432x32xbf16, #tpu.memory_space<vmem>>, %arg3: memref<1x32xf32, #tpu.memory_space<vmem>>, %arg4: memref<1x32xf32, #tpu.memory_space<vmem>>, %arg5: memref<1x4x8x8x32xbf16, #tpu.memory_space<vmem>>, %arg6: memref<1x4x8x8x32xbf16, #tpu.memory_space<vmem>>, %arg7: memref<4x8x8x432xbf16, #tpu.memory_space<vmem>>) attributes {dimension_semantics = [#tpu.dimension_semantics<parallel>], iteration_bounds = array<i64: 1>, scalar_prefetch = 0 : i64, scratch_operands = 1 : i64, tpu.core_type = #tpu.core_type<tc>, window_params = [{transform_indices = @transform_0, window_bounds = array<i64: 1, 1, 6, 10, 10, 16>}, {pipeline_mode = #tpu.pipeline_mode<synchronous>, transform_indices = @transform_1, window_bounds = array<i64: 432, 32>}, {pipeline_mode = #tpu.pipeline_mode<synchronous>, transform_indices = @transform_2, window_bounds = array<i64: 1, 32>}, {pipeline_mode = #tpu.pipeline_mode<synchronous>, transform_indices = @transform_3, window_bounds = array<i64: 1, 32>}, {transform_indices = @transform_4, window_bounds = array<i64: 1, 4, 8, 8, 32>}, {transform_indices = @transform_5, window_bounds = array<i64: 1, 4, 8, 8, 32>}]} {
    %c0 = arith.constant 0 : index
    %c0_0 = arith.constant 0 : index
    %c0_1 = arith.constant 0 : index
    %c0_2 = arith.constant 0 : index
    %c0_3 = arith.constant 0 : index
    %c0_4 = arith.constant 0 : index
    %0 = vector.load %arg1[%c0, %c0_0, %c0_1, %c0_2, %c0_3, %c0_4] : memref<1x1x6x10x10x16xbf16, #tpu.memory_space<vmem>>, vector<1x1x4x8x8x16xbf16>
    %1 = vector.shape_cast %0 : vector<1x1x4x8x8x16xbf16> to vector<4x8x8x16xbf16>
    %c0_5 = arith.constant 0 : index
    %c0_6 = arith.constant 0 : index
    %c0_7 = arith.constant 0 : index
    %c0_8 = arith.constant 0 : index
    %2 = vector.load %arg7[%c0_5, %c0_6, %c0_7, %c0_8] : memref<4x8x8x432xbf16, #tpu.memory_space<vmem>>, vector<4x8x8x16xbf16>
    tpu.vector_store %arg7[%c0_5, %c0_6, %c0_7, %c0_8], %1 {strides = array<i32>} : memref<4x8x8x432xbf16, #tpu.memory_space<vmem>>, vector<4x8x8x16xbf16>,
    %c0_9 = arith.constant 0 : index
    %c0_10 = arith.constant 0 : index
    %c0_11 = arith.constant 0 : index
    %c0_12 = arith.constant 0 : index
    %c1 = arith.constant 1 : index
    %c0_13 = arith.constant 0 : index
    %3 = vector.load %arg1[%c0_9, %c0_10, %c0_11, %c0_12, %c1, %c0_13] : memref<1x1x6x10x10x16xbf16, #tpu.memory_space<vmem>>, vector<1x1x4x8x8x16xbf16>
    %4 = vector.shape_cast %3 : vector<1x1x4x8x8x16xbf16> to vector<4x8x8x16xbf16>
    %c0_14 = arith.constant 0 : index
    %c0_15 = arith.constant 0 : index
    %c0_16 = arith.constant 0 : index
    %c16 = arith.constant 16 : index
    %5 = vector.load %arg7[%c0_14, %c0_15, %c0_16, %c16] : memref<4x8x8x432xbf16, #tpu.memory_space<vmem>>, vector<4x8x8x16xbf16>
    tpu.vector_store %arg7[%c0_14, %c0_15, %c0_16, %c16], %4 {strides = array<i32>} : memref<4x8x8x432xbf16, #tpu.memory_space<vmem>>, vector<4x8x8x16xbf16>,
    %c0_17 = arith.constant 0 : index
    %c0_18 = arith.constant 0 : index
    %c0_19 = arith.constant 0 : index
    %c0_20 = arith.constant 0 : index
    %c2 = arith.constant 2 : index
    %c0_21 = arith.constant 0 : index
    %6 = vector.load %arg1[%c0_17, %c0_18, %c0_19, %c0_20, %c2, %c0_21] : memref<1x1x6x10x10x16xbf16, #tpu.memory_space<vmem>>, vector<1x1x4x8x8x16xbf16>
    %7 = vector.shape_cast %6 : vector<1x1x4x8x8x16xbf16> to vector<4x8x8x16xbf16>
    %c0_22 = arith.constant 0 : index
    %c0_23 = arith.constant 0 : index
    %c0_24 = arith.constant 0 : index
    %c32 = arith.constant 32 : index
    %8 = vector.load %arg7[%c0_22, %c0_23, %c0_24, %c32] : memref<4x8x8x432xbf16, #tpu.memory_space<vmem>>, vector<4x8x8x16xbf16>
    tpu.vector_store %arg7[%c0_22, %c0_23, %c0_24, %c32], %7 {strides = array<i32>} : memref<4x8x8x432xbf16, #tpu.memory_space<vmem>>, vector<4x8x8x16xbf16>,
    %c0_25 = arith.constant 0 : index
    %c0_26 = arith.constant 0 : index
    %c0_27 = arith.constant 0 : index
    %c1_28 = arith.constant 1 : index
    %c0_29 = arith.constant 0 : index
    %c0_30 = arith.constant 0 : index
    %9 = vector.load %arg1[%c0_25, %c0_26, %c0_27, %c1_28, %c0_29, %c0_30] : memref<1x1x6x10x10x16xbf16, #tpu.memory_space<vmem>>, vector<1x1x4x8x8x16xbf16>
    %10 = vector.shape_cast %9 : vector<1x1x4x8x8x16xbf16> to vector<4x8x8x16xbf16>
    %c0_31 = arith.constant 0 : index
    %c0_32 = arith.constant 0 : index
    %c0_33 = arith.constant 0 : index
    %c48 = arith.constant 48 : index
    %11 = vector.load %arg7[%c0_31, %c0_32, %c0_33, %c48] : memref<4x8x8x432xbf16, #tpu.memory_space<vmem>>, vector<4x8x8x16xbf16>
    tpu.vector_store %arg7[%c0_31, %c0_32, %c0_33, %c48], %10 {strides = array<i32>} : memref<4x8x8x432xbf16, #tpu.memory_space<vmem>>, vector<4x8x8x16xbf16>,
    %c0_34 = arith.constant 0 : index
    %c0_35 = arith.constant 0 : index
    %c0_36 = arith.constant 0 : index
    %c1_37 = arith.constant 1 : index
    %c1_38 = arith.constant 1 : index
    %c0_39 = arith.constant 0 : index
    %12 = vector.load %arg1[%c0_34, %c0_35, %c0_36, %c1_37, %c1_38, %c0_39] : memref<1x1x6x10x10x16xbf16, #tpu.memory_space<vmem>>, vector<1x1x4x8x8x16xbf16>
    %13 = vector.shape_cast %12 : vector<1x1x4x8x8x16xbf16> to vector<4x8x8x16xbf16>
    %c0_40 = arith.constant 0 : index
    %c0_41 = arith.constant 0 : index
    %c0_42 = arith.constant 0 : index
    %c64 = arith.constant 64 : index
    %14 = vector.load %arg7[%c0_40, %c0_41, %c0_42, %c64] : memref<4x8x8x432xbf16, #tpu.memory_space<vmem>>, vector<4x8x8x16xbf16>
    tpu.vector_store %arg7[%c0_40, %c0_41, %c0_42, %c64], %13 {strides = array<i32>} : memref<4x8x8x432xbf16, #tpu.memory_space<vmem>>, vector<4x8x8x16xbf16>,
    %c0_43 = arith.constant 0 : index
    %c0_44 = arith.constant 0 : index
    %c0_45 = arith.constant 0 : index
    %c1_46 = arith.constant 1 : index
    %c2_47 = arith.constant 2 : index
    %c0_48 = arith.constant 0 : index
    %15 = vector.load %arg1[%c0_43, %c0_44, %c0_45, %c1_46, %c2_47, %c0_48] : memref<1x1x6x10x10x16xbf16, #tpu.memory_space<vmem>>, vector<1x1x4x8x8x16xbf16>
    %16 = vector.shape_cast %15 : vector<1x1x4x8x8x16xbf16> to vector<4x8x8x16xbf16>
    %c0_49 = arith.constant 0 : index
    %c0_50 = arith.constant 0 : index
    %c0_51 = arith.constant 0 : index
    %c80 = arith.constant 80 : index
    %17 = vector.load %arg7[%c0_49, %c0_50, %c0_51, %c80] : memref<4x8x8x432xbf16, #tpu.memory_space<vmem>>, vector<4x8x8x16xbf16>
    tpu.vector_store %arg7[%c0_49, %c0_50, %c0_51, %c80], %16 {strides = array<i32>} : memref<4x8x8x432xbf16, #tpu.memory_space<vmem>>, vector<4x8x8x16xbf16>,
    %c0_52 = arith.constant 0 : index
    %c0_53 = arith.constant 0 : index
    %c0_54 = arith.constant 0 : index
    %c2_55 = arith.constant 2 : index
    %c0_56 = arith.constant 0 : index
    %c0_57 = arith.constant 0 : index
    %18 = vector.load %arg1[%c0_52, %c0_53, %c0_54, %c2_55, %c0_56, %c0_57] : memref<1x1x6x10x10x16xbf16, #tpu.memory_space<vmem>>, vector<1x1x4x8x8x16xbf16>
    %19 = vector.shape_cast %18 : vector<1x1x4x8x8x16xbf16> to vector<4x8x8x16xbf16>
    %c0_58 = arith.constant 0 : index
    %c0_59 = arith.constant 0 : index
    %c0_60 = arith.constant 0 : index
    %c96 = arith.constant 96 : index
    %20 = vector.load %arg7[%c0_58, %c0_59, %c0_60, %c96] : memref<4x8x8x432xbf16, #tpu.memory_space<vmem>>, vector<4x8x8x16xbf16>
    tpu.vector_store %arg7[%c0_58, %c0_59, %c0_60, %c96], %19 {strides = array<i32>} : memref<4x8x8x432xbf16, #tpu.memory_space<vmem>>, vector<4x8x8x16xbf16>,
    %c0_61 = arith.constant 0 : index
    %c0_62 = arith.constant 0 : index
    %c0_63 = arith.constant 0 : index
    %c2_64 = arith.constant 2 : index
    %c1_65 = arith.constant 1 : index
    %c0_66 = arith.constant 0 : index
    %21 = vector.load %arg1[%c0_61, %c0_62, %c0_63, %c2_64, %c1_65, %c0_66] : memref<1x1x6x10x10x16xbf16, #tpu.memory_space<vmem>>, vector<1x1x4x8x8x16xbf16>
    %22 = vector.shape_cast %21 : vector<1x1x4x8x8x16xbf16> to vector<4x8x8x16xbf16>
    %c0_67 = arith.constant 0 : index
    %c0_68 = arith.constant 0 : index
    %c0_69 = arith.constant 0 : index
    %c112 = arith.constant 112 : index
    %23 = vector.load %arg7[%c0_67, %c0_68, %c0_69, %c112] : memref<4x8x8x432xbf16, #tpu.memory_space<vmem>>, vector<4x8x8x16xbf16>
    tpu.vector_store %arg7[%c0_67, %c0_68, %c0_69, %c112], %22 {strides = array<i32>} : memref<4x8x8x432xbf16, #tpu.memory_space<vmem>>, vector<4x8x8x16xbf16>,
    %c0_70 = arith.constant 0 : index
    %c0_71 = arith.constant 0 : index
    %c0_72 = arith.constant 0 : index
    %c2_73 = arith.constant 2 : index
    %c2_74 = arith.constant 2 : index
    %c0_75 = arith.constant 0 : index
    %24 = vector.load %arg1[%c0_70, %c0_71, %c0_72, %c2_73, %c2_74, %c0_75] : memref<1x1x6x10x10x16xbf16, #tpu.memory_space<vmem>>, vector<1x1x4x8x8x16xbf16>
    %25 = vector.shape_cast %24 : vector<1x1x4x8x8x16xbf16> to vector<4x8x8x16xbf16>
    %c0_76 = arith.constant 0 : index
    %c0_77 = arith.constant 0 : index
    %c0_78 = arith.constant 0 : index
    %c128 = arith.constant 128 : index
    %26 = vector.load %arg7[%c0_76, %c0_77, %c0_78, %c128] : memref<4x8x8x432xbf16, #tpu.memory_space<vmem>>, vector<4x8x8x16xbf16>
    tpu.vector_store %arg7[%c0_76, %c0_77, %c0_78, %c128], %25 {strides = array<i32>} : memref<4x8x8x432xbf16, #tpu.memory_space<vmem>>, vector<4x8x8x16xbf16>,
    %c0_79 = arith.constant 0 : index
    %c0_80 = arith.constant 0 : index
    %c1_81 = arith.constant 1 : index
    %c0_82 = arith.constant 0 : index
    %c0_83 = arith.constant 0 : index
    %c0_84 = arith.constant 0 : index
    %27 = vector.load %arg1[%c0_79, %c0_80, %c1_81, %c0_82, %c0_83, %c0_84] : memref<1x1x6x10x10x16xbf16, #tpu.memory_space<vmem>>, vector<1x1x4x8x8x16xbf16>
    %28 = vector.shape_cast %27 : vector<1x1x4x8x8x16xbf16> to vector<4x8x8x16xbf16>
    %c0_85 = arith.constant 0 : index
    %c0_86 = arith.constant 0 : index
    %c0_87 = arith.constant 0 : index
    %c144 = arith.constant 144 : index
    %29 = vector.load %arg7[%c0_85, %c0_86, %c0_87, %c144] : memref<4x8x8x432xbf16, #tpu.memory_space<vmem>>, vector<4x8x8x16xbf16>
    tpu.vector_store %arg7[%c0_85, %c0_86, %c0_87, %c144], %28 {strides = array<i32>} : memref<4x8x8x432xbf16, #tpu.memory_space<vmem>>, vector<4x8x8x16xbf16>,
    %c0_88 = arith.constant 0 : index
    %c0_89 = arith.constant 0 : index
    %c1_90 = arith.constant 1 : index
    %c0_91 = arith.constant 0 : index
    %c1_92 = arith.constant 1 : index
    %c0_93 = arith.constant 0 : index
    %30 = vector.load %arg1[%c0_88, %c0_89, %c1_90, %c0_91, %c1_92, %c0_93] : memref<1x1x6x10x10x16xbf16, #tpu.memory_space<vmem>>, vector<1x1x4x8x8x16xbf16>
    %31 = vector.shape_cast %30 : vector<1x1x4x8x8x16xbf16> to vector<4x8x8x16xbf16>
    %c0_94 = arith.constant 0 : index
    %c0_95 = arith.constant 0 : index
    %c0_96 = arith.constant 0 : index
    %c160 = arith.constant 160 : index
    %32 = vector.load %arg7[%c0_94, %c0_95, %c0_96, %c160] : memref<4x8x8x432xbf16, #tpu.memory_space<vmem>>, vector<4x8x8x16xbf16>
    tpu.vector_store %arg7[%c0_94, %c0_95, %c0_96, %c160], %31 {strides = array<i32>} : memref<4x8x8x432xbf16, #tpu.memory_space<vmem>>, vector<4x8x8x16xbf16>,
    %c0_97 = arith.constant 0 : index
    %c0_98 = arith.constant 0 : index
    %c1_99 = arith.constant 1 : index
    %c0_100 = arith.constant 0 : index
    %c2_101 = arith.constant 2 : index
    %c0_102 = arith.constant 0 : index
    %33 = vector.load %arg1[%c0_97, %c0_98, %c1_99, %c0_100, %c2_101, %c0_102] : memref<1x1x6x10x10x16xbf16, #tpu.memory_space<vmem>>, vector<1x1x4x8x8x16xbf16>
    %34 = vector.shape_cast %33 : vector<1x1x4x8x8x16xbf16> to vector<4x8x8x16xbf16>
    %c0_103 = arith.constant 0 : index
    %c0_104 = arith.constant 0 : index
    %c0_105 = arith.constant 0 : index
    %c176 = arith.constant 176 : index
    %35 = vector.load %arg7[%c0_103, %c0_104, %c0_105, %c176] : memref<4x8x8x432xbf16, #tpu.memory_space<vmem>>, vector<4x8x8x16xbf16>
    tpu.vector_store %arg7[%c0_103, %c0_104, %c0_105, %c176], %34 {strides = array<i32>} : memref<4x8x8x432xbf16, #tpu.memory_space<vmem>>, vector<4x8x8x16xbf16>,
    %c0_106 = arith.constant 0 : index
    %c0_107 = arith.constant 0 : index
    %c1_108 = arith.constant 1 : index
    %c1_109 = arith.constant 1 : index
    %c0_110 = arith.constant 0 : index
    %c0_111 = arith.constant 0 : index
    %36 = vector.load %arg1[%c0_106, %c0_107, %c1_108, %c1_109, %c0_110, %c0_111] : memref<1x1x6x10x10x16xbf16, #tpu.memory_space<vmem>>, vector<1x1x4x8x8x16xbf16>
    %37 = vector.shape_cast %36 : vector<1x1x4x8x8x16xbf16> to vector<4x8x8x16xbf16>
    %c0_112 = arith.constant 0 : index
    %c0_113 = arith.constant 0 : index
    %c0_114 = arith.constant 0 : index
    %c192 = arith.constant 192 : index
    %38 = vector.load %arg7[%c0_112, %c0_113, %c0_114, %c192] : memref<4x8x8x432xbf16, #tpu.memory_space<vmem>>, vector<4x8x8x16xbf16>
    tpu.vector_store %arg7[%c0_112, %c0_113, %c0_114, %c192], %37 {strides = array<i32>} : memref<4x8x8x432xbf16, #tpu.memory_space<vmem>>, vector<4x8x8x16xbf16>,
    %c0_115 = arith.constant 0 : index
    %c0_116 = arith.constant 0 : index
    %c1_117 = arith.constant 1 : index
    %c1_118 = arith.constant 1 : index
    %c1_119 = arith.constant 1 : index
    %c0_120 = arith.constant 0 : index
    %39 = vector.load %arg1[%c0_115, %c0_116, %c1_117, %c1_118, %c1_119, %c0_120] : memref<1x1x6x10x10x16xbf16, #tpu.memory_space<vmem>>, vector<1x1x4x8x8x16xbf16>
    %40 = vector.shape_cast %39 : vector<1x1x4x8x8x16xbf16> to vector<4x8x8x16xbf16>
    %c0_121 = arith.constant 0 : index
    %c0_122 = arith.constant 0 : index
    %c0_123 = arith.constant 0 : index
    %c208 = arith.constant 208 : index
    %41 = vector.load %arg7[%c0_121, %c0_122, %c0_123, %c208] : memref<4x8x8x432xbf16, #tpu.memory_space<vmem>>, vector<4x8x8x16xbf16>
    tpu.vector_store %arg7[%c0_121, %c0_122, %c0_123, %c208], %40 {strides = array<i32>} : memref<4x8x8x432xbf16, #tpu.memory_space<vmem>>, vector<4x8x8x16xbf16>,
    %c0_124 = arith.constant 0 : index
    %c0_125 = arith.constant 0 : index
    %c1_126 = arith.constant 1 : index
    %c1_127 = arith.constant 1 : index
    %c2_128 = arith.constant 2 : index
    %c0_129 = arith.constant 0 : index
    %42 = vector.load %arg1[%c0_124, %c0_125, %c1_126, %c1_127, %c2_128, %c0_129] : memref<1x1x6x10x10x16xbf16, #tpu.memory_space<vmem>>, vector<1x1x4x8x8x16xbf16>
    %43 = vector.shape_cast %42 : vector<1x1x4x8x8x16xbf16> to vector<4x8x8x16xbf16>
    %c0_130 = arith.constant 0 : index
    %c0_131 = arith.constant 0 : index
    %c0_132 = arith.constant 0 : index
    %c224 = arith.constant 224 : index
    %44 = vector.load %arg7[%c0_130, %c0_131, %c0_132, %c224] : memref<4x8x8x432xbf16, #tpu.memory_space<vmem>>, vector<4x8x8x16xbf16>
    tpu.vector_store %arg7[%c0_130, %c0_131, %c0_132, %c224], %43 {strides = array<i32>} : memref<4x8x8x432xbf16, #tpu.memory_space<vmem>>, vector<4x8x8x16xbf16>,
    %c0_133 = arith.constant 0 : index
    %c0_134 = arith.constant 0 : index
    %c1_135 = arith.constant 1 : index
    %c2_136 = arith.constant 2 : index
    %c0_137 = arith.constant 0 : index
    %c0_138 = arith.constant 0 : index
    %45 = vector.load %arg1[%c0_133, %c0_134, %c1_135, %c2_136, %c0_137, %c0_138] : memref<1x1x6x10x10x16xbf16, #tpu.memory_space<vmem>>, vector<1x1x4x8x8x16xbf16>
    %46 = vector.shape_cast %45 : vector<1x1x4x8x8x16xbf16> to vector<4x8x8x16xbf16>
    %c0_139 = arith.constant 0 : index
    %c0_140 = arith.constant 0 : index
    %c0_141 = arith.constant 0 : index
    %c240 = arith.constant 240 : index
    %47 = vector.load %arg7[%c0_139, %c0_140, %c0_141, %c240] : memref<4x8x8x432xbf16, #tpu.memory_space<vmem>>, vector<4x8x8x16xbf16>
    tpu.vector_store %arg7[%c0_139, %c0_140, %c0_141, %c240], %46 {strides = array<i32>} : memref<4x8x8x432xbf16, #tpu.memory_space<vmem>>, vector<4x8x8x16xbf16>,
    %c0_142 = arith.constant 0 : index
    %c0_143 = arith.constant 0 : index
    %c1_144 = arith.constant 1 : index
    %c2_145 = arith.constant 2 : index
    %c1_146 = arith.constant 1 : index
    %c0_147 = arith.constant 0 : index
    %48 = vector.load %arg1[%c0_142, %c0_143, %c1_144, %c2_145, %c1_146, %c0_147] : memref<1x1x6x10x10x16xbf16, #tpu.memory_space<vmem>>, vector<1x1x4x8x8x16xbf16>
    %49 = vector.shape_cast %48 : vector<1x1x4x8x8x16xbf16> to vector<4x8x8x16xbf16>
    %c0_148 = arith.constant 0 : index
    %c0_149 = arith.constant 0 : index
    %c0_150 = arith.constant 0 : index
    %c256 = arith.constant 256 : index
    %50 = vector.load %arg7[%c0_148, %c0_149, %c0_150, %c256] : memref<4x8x8x432xbf16, #tpu.memory_space<vmem>>, vector<4x8x8x16xbf16>
    tpu.vector_store %arg7[%c0_148, %c0_149, %c0_150, %c256], %49 {strides = array<i32>} : memref<4x8x8x432xbf16, #tpu.memory_space<vmem>>, vector<4x8x8x16xbf16>,
    %c0_151 = arith.constant 0 : index
    %c0_152 = arith.constant 0 : index
    %c1_153 = arith.constant 1 : index
    %c2_154 = arith.constant 2 : index
    %c2_155 = arith.constant 2 : index
    %c0_156 = arith.constant 0 : index
    %51 = vector.load %arg1[%c0_151, %c0_152, %c1_153, %c2_154, %c2_155, %c0_156] : memref<1x1x6x10x10x16xbf16, #tpu.memory_space<vmem>>, vector<1x1x4x8x8x16xbf16>
    %52 = vector.shape_cast %51 : vector<1x1x4x8x8x16xbf16> to vector<4x8x8x16xbf16>
    %c0_157 = arith.constant 0 : index
    %c0_158 = arith.constant 0 : index
    %c0_159 = arith.constant 0 : index
    %c272 = arith.constant 272 : index
    %53 = vector.load %arg7[%c0_157, %c0_158, %c0_159, %c272] : memref<4x8x8x432xbf16, #tpu.memory_space<vmem>>, vector<4x8x8x16xbf16>
    tpu.vector_store %arg7[%c0_157, %c0_158, %c0_159, %c272], %52 {strides = array<i32>} : memref<4x8x8x432xbf16, #tpu.memory_space<vmem>>, vector<4x8x8x16xbf16>,
    %c0_160 = arith.constant 0 : index
    %c0_161 = arith.constant 0 : index
    %c2_162 = arith.constant 2 : index
    %c0_163 = arith.constant 0 : index
    %c0_164 = arith.constant 0 : index
    %c0_165 = arith.constant 0 : index
    %54 = vector.load %arg1[%c0_160, %c0_161, %c2_162, %c0_163, %c0_164, %c0_165] : memref<1x1x6x10x10x16xbf16, #tpu.memory_space<vmem>>, vector<1x1x4x8x8x16xbf16>
    %55 = vector.shape_cast %54 : vector<1x1x4x8x8x16xbf16> to vector<4x8x8x16xbf16>
    %c0_166 = arith.constant 0 : index
    %c0_167 = arith.constant 0 : index
    %c0_168 = arith.constant 0 : index
    %c288 = arith.constant 288 : index
    %56 = vector.load %arg7[%c0_166, %c0_167, %c0_168, %c288] : memref<4x8x8x432xbf16, #tpu.memory_space<vmem>>, vector<4x8x8x16xbf16>
    tpu.vector_store %arg7[%c0_166, %c0_167, %c0_168, %c288], %55 {strides = array<i32>} : memref<4x8x8x432xbf16, #tpu.memory_space<vmem>>, vector<4x8x8x16xbf16>,
    %c0_169 = arith.constant 0 : index
    %c0_170 = arith.constant 0 : index
    %c2_171 = arith.constant 2 : index
    %c0_172 = arith.constant 0 : index
    %c1_173 = arith.constant 1 : index
    %c0_174 = arith.constant 0 : index
    %57 = vector.load %arg1[%c0_169, %c0_170, %c2_171, %c0_172, %c1_173, %c0_174] : memref<1x1x6x10x10x16xbf16, #tpu.memory_space<vmem>>, vector<1x1x4x8x8x16xbf16>
    %58 = vector.shape_cast %57 : vector<1x1x4x8x8x16xbf16> to vector<4x8x8x16xbf16>
    %c0_175 = arith.constant 0 : index
    %c0_176 = arith.constant 0 : index
    %c0_177 = arith.constant 0 : index
    %c304 = arith.constant 304 : index
    %59 = vector.load %arg7[%c0_175, %c0_176, %c0_177, %c304] : memref<4x8x8x432xbf16, #tpu.memory_space<vmem>>, vector<4x8x8x16xbf16>
    tpu.vector_store %arg7[%c0_175, %c0_176, %c0_177, %c304], %58 {strides = array<i32>} : memref<4x8x8x432xbf16, #tpu.memory_space<vmem>>, vector<4x8x8x16xbf16>,
    %c0_178 = arith.constant 0 : index
    %c0_179 = arith.constant 0 : index
    %c2_180 = arith.constant 2 : index
    %c0_181 = arith.constant 0 : index
    %c2_182 = arith.constant 2 : index
    %c0_183 = arith.constant 0 : index
    %60 = vector.load %arg1[%c0_178, %c0_179, %c2_180, %c0_181, %c2_182, %c0_183] : memref<1x1x6x10x10x16xbf16, #tpu.memory_space<vmem>>, vector<1x1x4x8x8x16xbf16>
    %61 = vector.shape_cast %60 : vector<1x1x4x8x8x16xbf16> to vector<4x8x8x16xbf16>
    %c0_184 = arith.constant 0 : index
    %c0_185 = arith.constant 0 : index
    %c0_186 = arith.constant 0 : index
    %c320 = arith.constant 320 : index
    %62 = vector.load %arg7[%c0_184, %c0_185, %c0_186, %c320] : memref<4x8x8x432xbf16, #tpu.memory_space<vmem>>, vector<4x8x8x16xbf16>
    tpu.vector_store %arg7[%c0_184, %c0_185, %c0_186, %c320], %61 {strides = array<i32>} : memref<4x8x8x432xbf16, #tpu.memory_space<vmem>>, vector<4x8x8x16xbf16>,
    %c0_187 = arith.constant 0 : index
    %c0_188 = arith.constant 0 : index
    %c2_189 = arith.constant 2 : index
    %c1_190 = arith.constant 1 : index
    %c0_191 = arith.constant 0 : index
    %c0_192 = arith.constant 0 : index
    %63 = vector.load %arg1[%c0_187, %c0_188, %c2_189, %c1_190, %c0_191, %c0_192] : memref<1x1x6x10x10x16xbf16, #tpu.memory_space<vmem>>, vector<1x1x4x8x8x16xbf16>
    %64 = vector.shape_cast %63 : vector<1x1x4x8x8x16xbf16> to vector<4x8x8x16xbf16>
    %c0_193 = arith.constant 0 : index
    %c0_194 = arith.constant 0 : index
    %c0_195 = arith.constant 0 : index
    %c336 = arith.constant 336 : index
    %65 = vector.load %arg7[%c0_193, %c0_194, %c0_195, %c336] : memref<4x8x8x432xbf16, #tpu.memory_space<vmem>>, vector<4x8x8x16xbf16>
    tpu.vector_store %arg7[%c0_193, %c0_194, %c0_195, %c336], %64 {strides = array<i32>} : memref<4x8x8x432xbf16, #tpu.memory_space<vmem>>, vector<4x8x8x16xbf16>,
    %c0_196 = arith.constant 0 : index
    %c0_197 = arith.constant 0 : index
    %c2_198 = arith.constant 2 : index
    %c1_199 = arith.constant 1 : index
    %c1_200 = arith.constant 1 : index
    %c0_201 = arith.constant 0 : index
    %66 = vector.load %arg1[%c0_196, %c0_197, %c2_198, %c1_199, %c1_200, %c0_201] : memref<1x1x6x10x10x16xbf16, #tpu.memory_space<vmem>>, vector<1x1x4x8x8x16xbf16>
    %67 = vector.shape_cast %66 : vector<1x1x4x8x8x16xbf16> to vector<4x8x8x16xbf16>
    %c0_202 = arith.constant 0 : index
    %c0_203 = arith.constant 0 : index
    %c0_204 = arith.constant 0 : index
    %c352 = arith.constant 352 : index
    %68 = vector.load %arg7[%c0_202, %c0_203, %c0_204, %c352] : memref<4x8x8x432xbf16, #tpu.memory_space<vmem>>, vector<4x8x8x16xbf16>
    tpu.vector_store %arg7[%c0_202, %c0_203, %c0_204, %c352], %67 {strides = array<i32>} : memref<4x8x8x432xbf16, #tpu.memory_space<vmem>>, vector<4x8x8x16xbf16>,
    %c0_205 = arith.constant 0 : index
    %c0_206 = arith.constant 0 : index
    %c2_207 = arith.constant 2 : index
    %c1_208 = arith.constant 1 : index
    %c2_209 = arith.constant 2 : index
    %c0_210 = arith.constant 0 : index
    %69 = vector.load %arg1[%c0_205, %c0_206, %c2_207, %c1_208, %c2_209, %c0_210] : memref<1x1x6x10x10x16xbf16, #tpu.memory_space<vmem>>, vector<1x1x4x8x8x16xbf16>
    %70 = vector.shape_cast %69 : vector<1x1x4x8x8x16xbf16> to vector<4x8x8x16xbf16>
    %c0_211 = arith.constant 0 : index
    %c0_212 = arith.constant 0 : index
    %c0_213 = arith.constant 0 : index
    %c368 = arith.constant 368 : index
    %71 = vector.load %arg7[%c0_211, %c0_212, %c0_213, %c368] : memref<4x8x8x432xbf16, #tpu.memory_space<vmem>>, vector<4x8x8x16xbf16>
    tpu.vector_store %arg7[%c0_211, %c0_212, %c0_213, %c368], %70 {strides = array<i32>} : memref<4x8x8x432xbf16, #tpu.memory_space<vmem>>, vector<4x8x8x16xbf16>,
    %c0_214 = arith.constant 0 : index
    %c0_215 = arith.constant 0 : index
    %c2_216 = arith.constant 2 : index
    %c2_217 = arith.constant 2 : index
    %c0_218 = arith.constant 0 : index
    %c0_219 = arith.constant 0 : index
    %72 = vector.load %arg1[%c0_214, %c0_215, %c2_216, %c2_217, %c0_218, %c0_219] : memref<1x1x6x10x10x16xbf16, #tpu.memory_space<vmem>>, vector<1x1x4x8x8x16xbf16>
    %73 = vector.shape_cast %72 : vector<1x1x4x8x8x16xbf16> to vector<4x8x8x16xbf16>
    %c0_220 = arith.constant 0 : index
    %c0_221 = arith.constant 0 : index
    %c0_222 = arith.constant 0 : index
    %c384 = arith.constant 384 : index
    %74 = vector.load %arg7[%c0_220, %c0_221, %c0_222, %c384] : memref<4x8x8x432xbf16, #tpu.memory_space<vmem>>, vector<4x8x8x16xbf16>
    tpu.vector_store %arg7[%c0_220, %c0_221, %c0_222, %c384], %73 {strides = array<i32>} : memref<4x8x8x432xbf16, #tpu.memory_space<vmem>>, vector<4x8x8x16xbf16>,
    %c0_223 = arith.constant 0 : index
    %c0_224 = arith.constant 0 : index
    %c2_225 = arith.constant 2 : index
    %c2_226 = arith.constant 2 : index
    %c1_227 = arith.constant 1 : index
    %c0_228 = arith.constant 0 : index
    %75 = vector.load %arg1[%c0_223, %c0_224, %c2_225, %c2_226, %c1_227, %c0_228] : memref<1x1x6x10x10x16xbf16, #tpu.memory_space<vmem>>, vector<1x1x4x8x8x16xbf16>
    %76 = vector.shape_cast %75 : vector<1x1x4x8x8x16xbf16> to vector<4x8x8x16xbf16>
    %c0_229 = arith.constant 0 : index
    %c0_230 = arith.constant 0 : index
    %c0_231 = arith.constant 0 : index
    %c400 = arith.constant 400 : index
    %77 = vector.load %arg7[%c0_229, %c0_230, %c0_231, %c400] : memref<4x8x8x432xbf16, #tpu.memory_space<vmem>>, vector<4x8x8x16xbf16>
    tpu.vector_store %arg7[%c0_229, %c0_230, %c0_231, %c400], %76 {strides = array<i32>} : memref<4x8x8x432xbf16, #tpu.memory_space<vmem>>, vector<4x8x8x16xbf16>,
    %c0_232 = arith.constant 0 : index
    %c0_233 = arith.constant 0 : index
    %c2_234 = arith.constant 2 : index
    %c2_235 = arith.constant 2 : index
    %c2_236 = arith.constant 2 : index
    %c0_237 = arith.constant 0 : index
    %78 = vector.load %arg1[%c0_232, %c0_233, %c2_234, %c2_235, %c2_236, %c0_237] : memref<1x1x6x10x10x16xbf16, #tpu.memory_space<vmem>>, vector<1x1x4x8x8x16xbf16>
    %79 = vector.shape_cast %78 : vector<1x1x4x8x8x16xbf16> to vector<4x8x8x16xbf16>
    %c0_238 = arith.constant 0 : index
    %c0_239 = arith.constant 0 : index
    %c0_240 = arith.constant 0 : index
    %c416 = arith.constant 416 : index
    %80 = vector.load %arg7[%c0_238, %c0_239, %c0_240, %c416] : memref<4x8x8x432xbf16, #tpu.memory_space<vmem>>, vector<4x8x8x16xbf16>
    tpu.vector_store %arg7[%c0_238, %c0_239, %c0_240, %c416], %79 {strides = array<i32>} : memref<4x8x8x432xbf16, #tpu.memory_space<vmem>>, vector<4x8x8x16xbf16>,
    %cst = arith.constant 0.000000e+00 : f32
    %81 = vector.broadcast %cst : f32 to vector<256x32xf32>
    %c0_241 = arith.constant 0 : index
    %c0_242 = arith.constant 0 : index
    %c0_243 = arith.constant 0 : index
    %c0_244 = arith.constant 0 : index
    %82 = vector.load %arg7[%c0_241, %c0_242, %c0_243, %c0_244] : memref<4x8x8x432xbf16, #tpu.memory_space<vmem>>, vector<4x8x8x432xbf16>
    %83 = vector.shape_cast %82 : vector<4x8x8x432xbf16> to vector<256x432xbf16>
    %c0_245 = arith.constant 0 : index
    %c0_246 = arith.constant 0 : index
    %84 = vector.load %arg2[%c0_245, %c0_246] : memref<432x32xbf16, #tpu.memory_space<vmem>>, vector<432x32xbf16>
    %cst_247 = arith.constant dense<0.000000e+00> : vector<256x32xf32>
    %85 = tpu.matmul %83, %84, %cst_247 {dimension_numbers = #tpu.dot_dimension_numbers<[1], [0], [0], [1], [0, 0, 1, 1], [], []>} : vector<256x432xbf16>, vector<432x32xbf16>, vector<256x32xf32> -> vector<256x32xf32>
    %86 = arith.addf %81, %85 : vector<256x32xf32>
    %c0_248 = arith.constant 0 : index
    %c0_249 = arith.constant 0 : index
    %87 = vector.load %arg3[%c0_248, %c0_249] : memref<1x32xf32, #tpu.memory_space<vmem>>, vector<1x32xf32>
    %88 = vector.broadcast %87 : vector<1x32xf32> to vector<256x32xf32>
    %89 = arith.mulf %86, %88 : vector<256x32xf32>
    %c0_250 = arith.constant 0 : index
    %c0_251 = arith.constant 0 : index
    %90 = vector.load %arg4[%c0_250, %c0_251] : memref<1x32xf32, #tpu.memory_space<vmem>>, vector<1x32xf32>
    %91 = vector.broadcast %90 : vector<1x32xf32> to vector<256x32xf32>
    %92 = arith.addf %89, %91 : vector<256x32xf32>
    %93 = vector.shape_cast %92 : vector<256x32xf32> to vector<4x8x8x32xf32>
    %c0_252 = arith.constant 0 : index
    %c0_253 = arith.constant 0 : index
    %c0_254 = arith.constant 0 : index
    %c0_255 = arith.constant 0 : index
    %c0_256 = arith.constant 0 : index
    %94 = vector.load %arg5[%c0_252, %c0_253, %c0_254, %c0_255, %c0_256] : memref<1x4x8x8x32xbf16, #tpu.memory_space<vmem>>, vector<1x4x8x8x32xbf16>
    %95 = vector.shape_cast %94 : vector<1x4x8x8x32xbf16> to vector<4x8x8x32xbf16>
    %96 = arith.extf %95 : vector<4x8x8x32xbf16> to vector<4x8x8x32xf32>
    %97 = arith.addf %93, %96 : vector<4x8x8x32xf32>
    %cst_257 = arith.constant 0.000000e+00 : f32
    %98 = vector.broadcast %cst_257 : f32 to vector<4x8x8x32xf32>
    %99 = arith.maximumf %97, %98 : vector<4x8x8x32xf32>
    %100 = arith.truncf %99 : vector<4x8x8x32xf32> to vector<4x8x8x32xbf16>
    %c0_258 = arith.constant 0 : index
    %c0_259 = arith.constant 0 : index
    %c0_260 = arith.constant 0 : index
    %c0_261 = arith.constant 0 : index
    %c0_262 = arith.constant 0 : index
    %101 = vector.load %arg6[%c0_258, %c0_259, %c0_260, %c0_261, %c0_262] : memref<1x4x8x8x32xbf16, #tpu.memory_space<vmem>>, vector<1x4x8x8x32xbf16>
    %102 = vector.shape_cast %101 : vector<1x4x8x8x32xbf16> to vector<4x8x8x32xbf16>
    %103 = vector.shape_cast %100 : vector<4x8x8x32xbf16> to vector<1x4x8x8x32xbf16>
    tpu.vector_store %arg6[%c0_258, %c0_259, %c0_260, %c0_261, %c0_262], %103 {strides = array<i32>} : memref<1x4x8x8x32xbf16, #tpu.memory_space<vmem>>, vector<1x4x8x8x32xbf16>,
    return
  }
  func.func @transform_0(%arg0: i32) -> (i32, i32, i32, i32, i32, i32) {
    %c0_i32 = arith.constant 0 : i32
    %c0_i32_0 = arith.constant 0 : i32
    %c0_i32_1 = arith.constant 0 : i32
    %c0_i32_2 = arith.constant 0 : i32
    %c0_i32_3 = arith.constant 0 : i32
    %c0_i32_4 = arith.constant 0 : i32
    return %arg0, %c0_i32, %c0_i32_0, %c0_i32_1, %c0_i32_2, %c0_i32_3 : i32, i32, i32, i32, i32, i32
  }
  func.func @transform_1(%arg0: i32) -> (i32, i32) {
    %c0_i32 = arith.constant 0 : i32
    %c0_i32_0 = arith.constant 0 : i32
    %c0_i32_1 = arith.constant 0 : i32
    return %c0_i32, %c0_i32_0 : i32, i32
  }
  func.func @transform_2(%arg0: i32) -> (i32, i32) {
    %c0_i32 = arith.constant 0 : i32
    %c0_i32_0 = arith.constant 0 : i32
    %c0_i32_1 = arith.constant 0 : i32
    return %c0_i32, %c0_i32_0 : i32, i32
  }
  func.func @transform_3(%arg0: i32) -> (i32, i32) {
    %c0_i32 = arith.constant 0 : i32
    %c0_i32_0 = arith.constant 0 : i32
    %c0_i32_1 = arith.constant 0 : i32
    return %c0_i32, %c0_i32_0 : i32, i32
  }
  func.func @transform_4(%arg0: i32) -> (i32, i32, i32, i32, i32) {
    %c0_i32 = arith.constant 0 : i32
    %c0_i32_0 = arith.constant 0 : i32
    %c0_i32_1 = arith.constant 0 : i32
    %c0_i32_2 = arith.constant 0 : i32
    %c0_i32_3 = arith.constant 0 : i32
    return %arg0, %c0_i32, %c0_i32_0, %c0_i32_1, %c0_i32_2 : i32, i32, i32, i32, i32
  }
  func.func @transform_5(%arg0: i32) -> (i32, i32, i32, i32, i32) {
    %c0_i32 = arith.constant 0 : i32
    %c0_i32_0 = arith.constant 0 : i32
    %c0_i32_1 = arith.constant 0 : i32
    %c0_i32_2 = arith.constant 0 : i32
    %c0_i32_3 = arith.constant 0 : i32
    return %arg0, %c0_i32, %c0_i32_0, %c0_i32_1, %c0_i32_2 : i32, i32, i32, i32, i32
  }
}

</mosaic_0001>

<llo_original>
// kernel: tpu_custom_call.1
$region0: #{tpu_custom_call.1}
  #allocation0 [shape = 'u32[]', space=smem, size = 0x4, offset = 0x4, fixed_abs, tag = 'smem constant byte address 0x4 - core index']
  #allocation1 [shape = 'u32[144,128]{1,0:T(1,128)}', space=vmem, size = 0x12000, scoped, tag = 'internal scratch']
  #allocation2 [shape = 'bf16[4,8,8,432]{3,2,1,0:T(8,128)(2,1)}', space=vmem, size = 0x40000, scoped, tag = 'scratch operand']
  %s0 = inlined_call_operand.vmem [shape: bf16[1,1,6,10,10,16], index: 0, kind: input, shape index: {}]
  %s1 = inlined_call_operand.vmem [shape: bf16[432,32], index: 1, kind: input, shape index: {}]
  %s2 = inlined_call_operand.vmem [shape: f32[1,32], index: 2, kind: input, shape index: {}]
  %s3 = inlined_call_operand.vmem [shape: f32[1,32], index: 3, kind: input, shape index: {}]
  %s4 = inlined_call_operand.vmem [shape: bf16[1,4,8,8,32], index: 4, kind: input, shape index: {}]
  %s5 = inlined_call_operand.hbm [shape: bf16[1,4,8,8,32], index: 5, kind: output, shape index: {}]
  %s6 = sld [smem:[#allocation0]]
  $region30: #{tpu_custom_call.1} parent=0
    _
  %s8 = ssub.s32 1, %s6
  %s9 = scalar_select 0, %s8, %s6
  $region1: #{tpu_custom_call.1} parent=0
    #allocation3 [shape = 'u8[65536]{0}', space=vmem, size = 0x10000, scoped, tag = 'output window, operand 0, single buffered']
    #allocation4 [shape = 's32[1]{0}', space=sflag, size = 0x4, scoped, tag = 'scoped memory for tpu_custom_call.1']
    %10 = vsyncpa [#allocation4], 0
    // Predicated region
    $region2: #{tpu_custom_call.1} parent=1 // pred_check
      _
    $region3: #{tpu_custom_call.1} parent=1 // pred_check_branch
      %12 = sbr.rel (0) target = $region5
    $region4: #{tpu_custom_call.1} parent=1 // pred_region
      _
    $region5: #{tpu_custom_call.1} parent=1 // pred_fallthru
      _
    // Predicated region
    $region6: #{tpu_custom_call.1} parent=1 // pred_check
      _
    $region7: #{tpu_custom_call.1} parent=1 // pred_check_branch
      %14 = sbr.rel (0) target = $region9
    $region8: #{tpu_custom_call.1} parent=1 // pred_region
      _
    $region9: #{tpu_custom_call.1} parent=1 // pred_fallthru
      _
    // Predicated region
    $region10: #{tpu_custom_call.1} parent=1 // pred_check
      _
    $region11: #{tpu_custom_call.1} parent=1 // pred_check_branch
      %16 = sbr.rel (0) target = $region13
    $region12: #{tpu_custom_call.1} parent=1 // pred_region
      _
    $region13: #{tpu_custom_call.1} parent=1 // pred_fallthru
      _
    // Predicated region
    $region14: #{tpu_custom_call.1} parent=1 // pred_check
      _
    $region15: #{tpu_custom_call.1} parent=1 // pred_check_branch
      %18 = sbr.rel (0) target = $region17
    $region16: #{tpu_custom_call.1} parent=1 // pred_region
      _
    $region17: #{tpu_custom_call.1} parent=1 // pred_fallthru
      _
    // Predicated region
    $region18: #{tpu_custom_call.1} parent=1 // pred_check
      _
    $region19: #{tpu_custom_call.1} parent=1 // pred_check_branch
      %20 = sbr.rel (0) target = $region21
    $region20: #{tpu_custom_call.1} parent=1 // pred_region
      _
    $region21: #{tpu_custom_call.1} parent=1 // pred_fallthru
      _
    %v22 = vld [vmem:[%s0] sm:$0xf]
    %v23 = vld [vmem:[%s0 + $0x8] sm:$0xf]
    %v24 = vld [vmem:[%s0 + $0x10] sm:$0xf]
    %v25 = vld [vmem:[%s0 + $0x18] sm:$0xf]
    %v26 = vld [vmem:[%s0 + $0x20] sm:$0xf]
    %v27 = vld [vmem:[%s0 + $0x28] sm:$0xf]
    %v28 = vld [vmem:[%s0 + $0x30] sm:$0xf]
    %v29 = vld [vmem:[%s0 + $0x38] sm:$0xf]
    %v30 = vld [vmem:[%s0 + $0x50] sm:$0xf]
    %v31 = vld [vmem:[%s0 + $0x58] sm:$0xf]
    %v32 = vld [vmem:[%s0 + $0x60] sm:$0xf]
    %v33 = vld [vmem:[%s0 + $0x68] sm:$0xf]
    %v34 = vld [vmem:[%s0 + $0x70] sm:$0xf]
    %v35 = vld [vmem:[%s0 + $0x78] sm:$0xf]
    %v36 = vld [vmem:[%s0 + $0x80] sm:$0xf]
    %v37 = vld [vmem:[%s0 + $0x88] sm:$0xf]
    %v38 = vld [vmem:[%s0 + $0xa0] sm:$0xf]
    %v39 = vld [vmem:[%s0 + $0xa8] sm:$0xf]
    %v40 = vld [vmem:[%s0 + $0xb0] sm:$0xf]
    %v41 = vld [vmem:[%s0 + $0xb8] sm:$0xf]
    %v42 = vld [vmem:[%s0 + $0xc0] sm:$0xf]
    %v43 = vld [vmem:[%s0 + $0xc8] sm:$0xf]
    %v44 = vld [vmem:[%s0 + $0xd0] sm:$0xf]
    %v45 = vld [vmem:[%s0 + $0xd8] sm:$0xf]
    %v46 = vld [vmem:[%s0 + $0xf0] sm:$0xf]
    %v47 = vld [vmem:[%s0 + $0xf8] sm:$0xf]
    %v48 = vld [vmem:[%s0 + $0x100] sm:$0xf]
    %v49 = vld [vmem:[%s0 + $0x108] sm:$0xf]
    %v50 = vld [vmem:[%s0 + $0x110] sm:$0xf]
    %v51 = vld [vmem:[%s0 + $0x118] sm:$0xf]
    %v52 = vld [vmem:[%s0 + $0x120] sm:$0xf]
    %v53 = vld [vmem:[%s0 + $0x128] sm:$0xf]
    %vm54 = vcmask 125952
    %55 = vst.msk [vmem:[#allocation2] sm:$0xf] %vm54, %v22
    %56 = vst.msk [vmem:[#allocation2 + $0x10] sm:$0xf] %vm54, %v23
    %57 = vst.msk [vmem:[#allocation2 + $0x20] sm:$0xf] %vm54, %v24
    %58 = vst.msk [vmem:[#allocation2 + $0x30] sm:$0xf] %vm54, %v25
    %59 = vst.msk [vmem:[#allocation2 + $0x40] sm:$0xf] %vm54, %v26
    %60 = vst.msk [vmem:[#allocation2 + $0x50] sm:$0xf] %vm54, %v27
    %61 = vst.msk [vmem:[#allocation2 + $0x60] sm:$0xf] %vm54, %v28
    %62 = vst.msk [vmem:[#allocation2 + $0x70] sm:$0xf] %vm54, %v29
    %63 = vst.msk [vmem:[#allocation2 + $0x80] sm:$0xf] %vm54, %v30
    %64 = vst.msk [vmem:[#allocation2 + $0x90] sm:$0xf] %vm54, %v31
    %65 = vst.msk [vmem:[#allocation2 + $0xa0] sm:$0xf] %vm54, %v32
    %66 = vst.msk [vmem:[#allocation2 + $0xb0] sm:$0xf] %vm54, %v33
    %67 = vst.msk [vmem:[#allocation2 + $0xc0] sm:$0xf] %vm54, %v34
    %68 = vst.msk [vmem:[#allocation2 + $0xd0] sm:$0xf] %vm54, %v35
    %69 = vst.msk [vmem:[#allocation2 + $0xe0] sm:$0xf] %vm54, %v36
    %70 = vst.msk [vmem:[#allocation2 + $0xf0] sm:$0xf] %vm54, %v37
    %71 = vst.msk [vmem:[#allocation2 + $0x100] sm:$0xf] %vm54, %v38
    %72 = vst.msk [vmem:[#allocation2 + $0x110] sm:$0xf] %vm54, %v39
    %73 = vst.msk [vmem:[#allocation2 + $0x120] sm:$0xf] %vm54, %v40
    %74 = vst.msk [vmem:[#allocation2 + $0x130] sm:$0xf] %vm54, %v41
    %75 = vst.msk [vmem:[#allocation2 + $0x140] sm:$0xf] %vm54, %v42
    %76 = vst.msk [vmem:[#allocation2 + $0x150] sm:$0xf] %vm54, %v43
    %77 = vst.msk [vmem:[#allocation2 + $0x160] sm:$0xf] %vm54, %v44
    %78 = vst.msk [vmem:[#allocation2 + $0x170] sm:$0xf] %vm54, %v45
    %79 = vst.msk [vmem:[#allocation2 + $0x180] sm:$0xf] %vm54, %v46
    %80 = vst.msk [vmem:[#allocation2 + $0x190] sm:$0xf] %vm54, %v47
    %81 = vst.msk [vmem:[#allocation2 + $0x1a0] sm:$0xf] %vm54, %v48
    %82 = vst.msk [vmem:[#allocation2 + $0x1b0] sm:$0xf] %vm54, %v49
    %83 = vst.msk [vmem:[#allocation2 + $0x1c0] sm:$0xf] %vm54, %v50
    %84 = vst.msk [vmem:[#allocation2 + $0x1d0] sm:$0xf] %vm54, %v51
    %85 = vst.msk [vmem:[#allocation2 + $0x1e0] sm:$0xf] %vm54, %v52
    %86 = vst.msk [vmem:[#allocation2 + $0x1f0] sm:$0xf] %vm54, %v53
    %v87 = vld [vmem:[%s0] sm:$0xf]
    %v88 = vld [vmem:[%s0 + $0x4] sm:$0x1]
    %v89 = vld [vmem:[%s0 + $0x8] sm:$0xf]
    %v90 = vld [vmem:[%s0 + $0xc] sm:$0x1]
    %v91 = vld [vmem:[%s0 + $0x10] sm:$0xf]
    %v92 = vld [vmem:[%s0 + $0x14] sm:$0x1]
    %v93 = vld [vmem:[%s0 + $0x18] sm:$0xf]
    %v94 = vld [vmem:[%s0 + $0x1c] sm:$0x1]
    %v95 = vld [vmem:[%s0 + $0x20] sm:$0xf]
    %v96 = vld [vmem:[%s0 + $0x24] sm:$0x1]
    %v97 = vld [vmem:[%s0 + $0x28] sm:$0xf]
    %v98 = vld [vmem:[%s0 + $0x2c] sm:$0x1]
    %v99 = vld [vmem:[%s0 + $0x30] sm:$0xf]
    %v100 = vld [vmem:[%s0 + $0x34] sm:$0x1]
    %v101 = vld [vmem:[%s0 + $0x38] sm:$0xf]
    %v102 = vld [vmem:[%s0 + $0x3c] sm:$0x1]
    %v103 = vld [vmem:[%s0 + $0x50] sm:$0xf]
    %v104 = vld [vmem:[%s0 + $0x54] sm:$0x1]
    %v105 = vld [vmem:[%s0 + $0x58] sm:$0xf]
    %v106 = vld [vmem:[%s0 + $0x5c] sm:$0x1]
    %v107 = vld [vmem:[%s0 + $0x60] sm:$0xf]
    %v108 = vld [vmem:[%s0 + $0x64] sm:$0x1]
    %v109 = vld [vmem:[%s0 + $0x68] sm:$0xf]
    %v110 = vld [vmem:[%s0 + $0x6c] sm:$0x1]
    %v111 = vld [vmem:[%s0 + $0x70] sm:$0xf]
    %v112 = vld [vmem:[%s0 + $0x74] sm:$0x1]
    %v113 = vld [vmem:[%s0 + $0x78] sm:$0xf]
    %v114 = vld [vmem:[%s0 + $0x7c] sm:$0x1]
    %v115 = vld [vmem:[%s0 + $0x80] sm:$0xf]
    %v116 = vld [vmem:[%s0 + $0x84] sm:$0x1]
    %v117 = vld [vmem:[%s0 + $0x88] sm:$0xf]
    %v118 = vld [vmem:[%s0 + $0x8c] sm:$0x1]
    %v119 = vld [vmem:[%s0 + $0xa0] sm:$0xf]
    %v120 = vld [vmem:[%s0 + $0xa4] sm:$0x1]
    %v121 = vld [vmem:[%s0 + $0xa8] sm:$0xf]
    %v122 = vld [vmem:[%s0 + $0xac] sm:$0x1]
    %v123 = vld [vmem:[%s0 + $0xb0] sm:$0xf]
    %v124 = vld [vmem:[%s0 + $0xb4] sm:$0x1]
    %v125 = vld [vmem:[%s0 + $0xb8] sm:$0xf]
    %v126 = vld [vmem:[%s0 + $0xbc] sm:$0x1]
    %v127 = vld [vmem:[%s0 + $0xc0] sm:$0xf]
    %v128 = vld [vmem:[%s0 + $0xc4] sm:$0x1]
    %v129 = vld [vmem:[%s0 + $0xc8] sm:$0xf]
    %v130 = vld [vmem:[%s0 + $0xcc] sm:$0x1]
    %v131 = vld [vmem:[%s0 + $0xd0] sm:$0xf]
    %v132 = vld [vmem:[%s0 + $0xd4] sm:$0x1]
    %v133 = vld [vmem:[%s0 + $0xd8] sm:$0xf]
    %v134 = vld [vmem:[%s0 + $0xdc] sm:$0x1]
    %v135 = vld [vmem:[%s0 + $0xf0] sm:$0xf]
    %v136 = vld [vmem:[%s0 + $0xf4] sm:$0x1]
    %v137 = vld [vmem:[%s0 + $0xf8] sm:$0xf]
    %v138 = vld [vmem:[%s0 + $0xfc] sm:$0x1]
    %v139 = vld [vmem:[%s0 + $0x100] sm:$0xf]
    %v140 = vld [vmem:[%s0 + $0x104] sm:$0x1]
    %v141 = vld [vmem:[%s0 + $0x108] sm:$0xf]
    %v142 = vld [vmem:[%s0 + $0x10c] sm:$0x1]
    %v143 = vld [vmem:[%s0 + $0x110] sm:$0xf]
    %v144 = vld [vmem:[%s0 + $0x114] sm:$0x1]
    %v145 = vld [vmem:[%s0 + $0x118] sm:$0xf]
    %v146 = vld [vmem:[%s0 + $0x11c] sm:$0x1]
    %v147 = vld [vmem:[%s0 + $0x120] sm:$0xf]
    %v148 = vld [vmem:[%s0 + $0x124] sm:$0x1]
    %v149 = vld [vmem:[%s0 + $0x128] sm:$0xf]
    %v150 = vld [vmem:[%s0 + $0x12c] sm:$0x1]
    %vm151 = vsmask.f32 3328
    %vm152 = vsmask.f32 7440
    %vm153 = vmor %vm151, %vm152
    %v155 = vshrl.u32 %v87, 16
    %v157 = vrot.slane %v155, 4
    %v158 = vshll.u32 %v87, 16
    %v160 = vrot.slane %v158, 5
    %v161 = vor.u32 %v157, %v160
    %v162 = vrot.slane %v161, 4
    %v164 = vshll.u32 %v88, 16
    %v166 = vrot.slane %v164, 5
    %v167 = vsel %vm153, %v162, %v166
    %v169 = vshrl.u32 %v89, 16
    %v171 = vrot.slane %v169, 4
    %v172 = vshll.u32 %v89, 16
    %v174 = vrot.slane %v172, 5
    %v175 = vor.u32 %v171, %v174
    %v176 = vrot.slane %v175, 4
    %v178 = vshll.u32 %v90, 16
    %v180 = vrot.slane %v178, 5
    %v181 = vsel %vm153, %v176, %v180
    %v183 = vshrl.u32 %v91, 16
    %v185 = vrot.slane %v183, 4
    %v186 = vshll.u32 %v91, 16
    %v188 = vrot.slane %v186, 5
    %v189 = vor.u32 %v185, %v188
    %v190 = vrot.slane %v189, 4
    %v192 = vshll.u32 %v92, 16
    %v194 = vrot.slane %v192, 5
    %v195 = vsel %vm153, %v190, %v194
    %v197 = vshrl.u32 %v93, 16
    %v199 = vrot.slane %v197, 4
    %v200 = vshll.u32 %v93, 16
    %v202 = vrot.slane %v200, 5
    %v203 = vor.u32 %v199, %v202
    %v204 = vrot.slane %v203, 4
    %v206 = vshll.u32 %v94, 16
    %v208 = vrot.slane %v206, 5
    %v209 = vsel %vm153, %v204, %v208
    %v211 = vshrl.u32 %v95, 16
    %v213 = vrot.slane %v211, 4
    %v214 = vshll.u32 %v95, 16
    %v216 = vrot.slane %v214, 5
    %v217 = vor.u32 %v213, %v216
    %v218 = vrot.slane %v217, 4
    %v220 = vshll.u32 %v96, 16
    %v222 = vrot.slane %v220, 5
    %v223 = vsel %vm153, %v218, %v222
    %v225 = vshrl.u32 %v97, 16
    %v227 = vrot.slane %v225, 4
    %v228 = vshll.u32 %v97, 16
    %v230 = vrot.slane %v228, 5
    %v231 = vor.u32 %v227, %v230
    %v232 = vrot.slane %v231, 4
    %v234 = vshll.u32 %v98, 16
    %v236 = vrot.slane %v234, 5
    %v237 = vsel %vm153, %v232, %v236
    %v239 = vshrl.u32 %v99, 16
    %v241 = vrot.slane %v239, 4
    %v242 = vshll.u32 %v99, 16
    %v244 = vrot.slane %v242, 5
    %v245 = vor.u32 %v241, %v244
    %v246 = vrot.slane %v245, 4
    %v248 = vshll.u32 %v100, 16
    %v250 = vrot.slane %v248, 5
    %v251 = vsel %vm153, %v246, %v250
    %v253 = vshrl.u32 %v101, 16
    %v255 = vrot.slane %v253, 4
    %v256 = vshll.u32 %v101, 16
    %v258 = vrot.slane %v256, 5
    %v259 = vor.u32 %v255, %v258
    %v260 = vrot.slane %v259, 4
    %v262 = vshll.u32 %v102, 16
    %v264 = vrot.slane %v262, 5
    %v265 = vsel %vm153, %v260, %v264
    %v267 = vshrl.u32 %v103, 16
    %v269 = vrot.slane %v267, 4
    %v270 = vshll.u32 %v103, 16
    %v272 = vrot.slane %v270, 5
    %v273 = vor.u32 %v269, %v272
    %v274 = vrot.slane %v273, 4
    %v276 = vshll.u32 %v104, 16
    %v278 = vrot.slane %v276, 5
    %v279 = vsel %vm153, %v274, %v278
    %v281 = vshrl.u32 %v105, 16
    %v283 = vrot.slane %v281, 4
    %v284 = vshll.u32 %v105, 16
    %v286 = vrot.slane %v284, 5
    %v287 = vor.u32 %v283, %v286
    %v288 = vrot.slane %v287, 4
    %v290 = vshll.u32 %v106, 16
    %v292 = vrot.slane %v290, 5
    %v293 = vsel %vm153, %v288, %v292
    %v295 = vshrl.u32 %v107, 16
    %v297 = vrot.slane %v295, 4
    %v298 = vshll.u32 %v107, 16
    %v300 = vrot.slane %v298, 5
    %v301 = vor.u32 %v297, %v300
    %v302 = vrot.slane %v301, 4
    %v304 = vshll.u32 %v108, 16
    %v306 = vrot.slane %v304, 5
    %v307 = vsel %vm153, %v302, %v306
    %v309 = vshrl.u32 %v109, 16
    %v311 = vrot.slane %v309, 4
    %v312 = vshll.u32 %v109, 16
    %v314 = vrot.slane %v312, 5
    %v315 = vor.u32 %v311, %v314
    %v316 = vrot.slane %v315, 4
    %v318 = vshll.u32 %v110, 16
    %v320 = vrot.slane %v318, 5
    %v321 = vsel %vm153, %v316, %v320
    %v323 = vshrl.u32 %v111, 16
    %v325 = vrot.slane %v323, 4
    %v326 = vshll.u32 %v111, 16
    %v328 = vrot.slane %v326, 5
    %v329 = vor.u32 %v325, %v328
    %v330 = vrot.slane %v329, 4
    %v332 = vshll.u32 %v112, 16
    %v334 = vrot.slane %v332, 5
    %v335 = vsel %vm153, %v330, %v334
    %v337 = vshrl.u32 %v113, 16
    %v339 = vrot.slane %v337, 4
    %v340 = vshll.u32 %v113, 16
    %v342 = vrot.slane %v340, 5
    %v343 = vor.u32 %v339, %v342
    %v344 = vrot.slane %v343, 4
    %v346 = vshll.u32 %v114, 16
    %v348 = vrot.slane %v346, 5
    %v349 = vsel %vm153, %v344, %v348
    %v351 = vshrl.u32 %v115, 16
    %v353 = vrot.slane %v351, 4
    %v354 = vshll.u32 %v115, 16
    %v356 = vrot.slane %v354, 5
    %v357 = vor.u32 %v353, %v356
    %v358 = vrot.slane %v357, 4
    %v360 = vshll.u32 %v116, 16
    %v362 = vrot.slane %v360, 5
    %v363 = vsel %vm153, %v358, %v362
    %v365 = vshrl.u32 %v117, 16
    %v367 = vrot.slane %v365, 4
    %v368 = vshll.u32 %v117, 16
    %v370 = vrot.slane %v368, 5
    %v371 = vor.u32 %v367, %v370
    %v372 = vrot.slane %v371, 4
    %v374 = vshll.u32 %v118, 16
    %v376 = vrot.slane %v374, 5
    %v377 = vsel %vm153, %v372, %v376
    %v379 = vshrl.u32 %v119, 16
    %v381 = vrot.slane %v379, 4
    %v382 = vshll.u32 %v119, 16
    %v384 = vrot.slane %v382, 5
    %v385 = vor.u32 %v381, %v384
    %v386 = vrot.slane %v385, 4
    %v388 = vshll.u32 %v120, 16
    %v390 = vrot.slane %v388, 5
    %v391 = vsel %vm153, %v386, %v390
    %v393 = vshrl.u32 %v121, 16
    %v395 = vrot.slane %v393, 4
    %v396 = vshll.u32 %v121, 16
    %v398 = vrot.slane %v396, 5
    %v399 = vor.u32 %v395, %v398
    %v400 = vrot.slane %v399, 4
    %v402 = vshll.u32 %v122, 16
    %v404 = vrot.slane %v402, 5
    %v405 = vsel %vm153, %v400, %v404
    %v407 = vshrl.u32 %v123, 16
    %v409 = vrot.slane %v407, 4
    %v410 = vshll.u32 %v123, 16
    %v412 = vrot.slane %v410, 5
    %v413 = vor.u32 %v409, %v412
    %v414 = vrot.slane %v413, 4
    %v416 = vshll.u32 %v124, 16
    %v418 = vrot.slane %v416, 5
    %v419 = vsel %vm153, %v414, %v418
    %v421 = vshrl.u32 %v125, 16
    %v423 = vrot.slane %v421, 4
    %v424 = vshll.u32 %v125, 16
    %v426 = vrot.slane %v424, 5
    %v427 = vor.u32 %v423, %v426
    %v428 = vrot.slane %v427, 4
    %v430 = vshll.u32 %v126, 16
    %v432 = vrot.slane %v430, 5
    %v433 = vsel %vm153, %v428, %v432
    %v435 = vshrl.u32 %v127, 16
    %v437 = vrot.slane %v435, 4
    %v438 = vshll.u32 %v127, 16
    %v440 = vrot.slane %v438, 5
    %v441 = vor.u32 %v437, %v440
    %v442 = vrot.slane %v441, 4
    %v444 = vshll.u32 %v128, 16
    %v446 = vrot.slane %v444, 5
    %v447 = vsel %vm153, %v442, %v446
    %v449 = vshrl.u32 %v129, 16
    %v451 = vrot.slane %v449, 4
    %v452 = vshll.u32 %v129, 16
    %v454 = vrot.slane %v452, 5
    %v455 = vor.u32 %v451, %v454
    %v456 = vrot.slane %v455, 4
    %v458 = vshll.u32 %v130, 16
    %v460 = vrot.slane %v458, 5
    %v461 = vsel %vm153, %v456, %v460
    %v463 = vshrl.u32 %v131, 16
    %v465 = vrot.slane %v463, 4
    %v466 = vshll.u32 %v131, 16
    %v468 = vrot.slane %v466, 5
    %v469 = vor.u32 %v465, %v468
    %v470 = vrot.slane %v469, 4
    %v472 = vshll.u32 %v132, 16
    %v474 = vrot.slane %v472, 5
    %v475 = vsel %vm153, %v470, %v474
    %v477 = vshrl.u32 %v133, 16
    %v479 = vrot.slane %v477, 4
    %v480 = vshll.u32 %v133, 16
    %v482 = vrot.slane %v480, 5
    %v483 = vor.u32 %v479, %v482
    %v484 = vrot.slane %v483, 4
    %v486 = vshll.u32 %v134, 16
    %v488 = vrot.slane %v486, 5
    %v489 = vsel %vm153, %v484, %v488
    %v491 = vshrl.u32 %v135, 16
    %v493 = vrot.slane %v491, 4
    %v494 = vshll.u32 %v135, 16
    %v496 = vrot.slane %v494, 5
    %v497 = vor.u32 %v493, %v496
    %v498 = vrot.slane %v497, 4
    %v500 = vshll.u32 %v136, 16
    %v502 = vrot.slane %v500, 5
    %v503 = vsel %vm153, %v498, %v502
    %v505 = vshrl.u32 %v137, 16
    %v507 = vrot.slane %v505, 4
    %v508 = vshll.u32 %v137, 16
    %v510 = vrot.slane %v508, 5
    %v511 = vor.u32 %v507, %v510
    %v512 = vrot.slane %v511, 4
    %v514 = vshll.u32 %v138, 16
    %v516 = vrot.slane %v514, 5
    %v517 = vsel %vm153, %v512, %v516
    %v519 = vshrl.u32 %v139, 16
    %v521 = vrot.slane %v519, 4
    %v522 = vshll.u32 %v139, 16
    %v524 = vrot.slane %v522, 5
    %v525 = vor.u32 %v521, %v524
    %v526 = vrot.slane %v525, 4
    %v528 = vshll.u32 %v140, 16
    %v530 = vrot.slane %v528, 5
    %v531 = vsel %vm153, %v526, %v530
    %v533 = vshrl.u32 %v141, 16
    %v535 = vrot.slane %v533, 4
    %v536 = vshll.u32 %v141, 16
    %v538 = vrot.slane %v536, 5
    %v539 = vor.u32 %v535, %v538
    %v540 = vrot.slane %v539, 4
    %v542 = vshll.u32 %v142, 16
    %v544 = vrot.slane %v542, 5
    %v545 = vsel %vm153, %v540, %v544
    %v547 = vshrl.u32 %v143, 16
    %v549 = vrot.slane %v547, 4
    %v550 = vshll.u32 %v143, 16
    %v552 = vrot.slane %v550, 5
    %v553 = vor.u32 %v549, %v552
    %v554 = vrot.slane %v553, 4
    %v556 = vshll.u32 %v144, 16
    %v558 = vrot.slane %v556, 5
    %v559 = vsel %vm153, %v554, %v558
    %v561 = vshrl.u32 %v145, 16
    %v563 = vrot.slane %v561, 4
    %v564 = vshll.u32 %v145, 16
    %v566 = vrot.slane %v564, 5
    %v567 = vor.u32 %v563, %v566
    %v568 = vrot.slane %v567, 4
    %v570 = vshll.u32 %v146, 16
    %v572 = vrot.slane %v570, 5
    %v573 = vsel %vm153, %v568, %v572
    %v575 = vshrl.u32 %v147, 16
    %v577 = vrot.slane %v575, 4
    %v578 = vshll.u32 %v147, 16
    %v580 = vrot.slane %v578, 5
    %v581 = vor.u32 %v577, %v580
    %v582 = vrot.slane %v581, 4
    %v584 = vshll.u32 %v148, 16
    %v586 = vrot.slane %v584, 5
    %v587 = vsel %vm153, %v582, %v586
    %v589 = vshrl.u32 %v149, 16
    %v591 = vrot.slane %v589, 4
    %v592 = vshll.u32 %v149, 16
    %v594 = vrot.slane %v592, 5
    %v595 = vor.u32 %v591, %v594
    %v596 = vrot.slane %v595, 4
    %v598 = vshll.u32 %v150, 16
    %v600 = vrot.slane %v598, 5
    %v601 = vsel %vm153, %v596, %v600
    %602 = vrot.lane.b32.xlu0 %v167, 16
    %v603 = vpop.permute.xlu0 %602
    %604 = vrot.lane.b32.xlu0 %v181, 16
    %v605 = vpop.permute.xlu0 %604
    %606 = vrot.lane.b32.xlu0 %v195, 16
    %v607 = vpop.permute.xlu0 %606
    %608 = vrot.lane.b32.xlu0 %v209, 16
    %v609 = vpop.permute.xlu0 %608
    %610 = vrot.lane.b32.xlu0 %v223, 16
    %v611 = vpop.permute.xlu0 %610
    %612 = vrot.lane.b32.xlu0 %v237, 16
    %v613 = vpop.permute.xlu0 %612
    %614 = vrot.lane.b32.xlu0 %v251, 16
    %v615 = vpop.permute.xlu0 %614
    %616 = vrot.lane.b32.xlu0 %v265, 16
    %v617 = vpop.permute.xlu0 %616
    %618 = vrot.lane.b32.xlu0 %v279, 16
    %v619 = vpop.permute.xlu0 %618
    %620 = vrot.lane.b32.xlu0 %v293, 16
    %v621 = vpop.permute.xlu0 %620
    %622 = vrot.lane.b32.xlu0 %v307, 16
    %v623 = vpop.permute.xlu0 %622
    %624 = vrot.lane.b32.xlu0 %v321, 16
    %v625 = vpop.permute.xlu0 %624
    %626 = vrot.lane.b32.xlu0 %v335, 16
    %v627 = vpop.permute.xlu0 %626
    %628 = vrot.lane.b32.xlu0 %v349, 16
    %v629 = vpop.permute.xlu0 %628
    %630 = vrot.lane.b32.xlu0 %v363, 16
    %v631 = vpop.permute.xlu0 %630
    %632 = vrot.lane.b32.xlu0 %v377, 16
    %v633 = vpop.permute.xlu0 %632
    %634 = vrot.lane.b32.xlu0 %v391, 16
    %v635 = vpop.permute.xlu0 %634
    %636 = vrot.lane.b32.xlu0 %v405, 16
    %v637 = vpop.permute.xlu0 %636
    %638 = vrot.lane.b32.xlu0 %v419, 16
    %v639 = vpop.permute.xlu0 %638
    %640 = vrot.lane.b32.xlu0 %v433, 16
    %v641 = vpop.permute.xlu0 %640
    %642 = vrot.lane.b32.xlu0 %v447, 16
    %v643 = vpop.permute.xlu0 %642
    %644 = vrot.lane.b32.xlu0 %v461, 16
    %v645 = vpop.permute.xlu0 %644
    %646 = vrot.lane.b32.xlu0 %v475, 16
    %v647 = vpop.permute.xlu0 %646
    %648 = vrot.lane.b32.xlu0 %v489, 16
    %v649 = vpop.permute.xlu0 %648
    %650 = vrot.lane.b32.xlu0 %v503, 16
    %v651 = vpop.permute.xlu0 %650
    %652 = vrot.lane.b32.xlu0 %v517, 16
    %v653 = vpop.permute.xlu0 %652
    %654 = vrot.lane.b32.xlu0 %v531, 16
    %v655 = vpop.permute.xlu0 %654
    %656 = vrot.lane.b32.xlu0 %v545, 16
    %v657 = vpop.permute.xlu0 %656
    %658 = vrot.lane.b32.xlu0 %v559, 16
    %v659 = vpop.permute.xlu0 %658
    %660 = vrot.lane.b32.xlu0 %v573, 16
    %v661 = vpop.permute.xlu0 %660
    %662 = vrot.lane.b32.xlu0 %v587, 16
    %v663 = vpop.permute.xlu0 %662
    %664 = vrot.lane.b32.xlu0 %v601, 16
    %v665 = vpop.permute.xlu0 %664
    %vm698 = vcmask 257152
    %699 = vst.msk [vmem:[#allocation2] sm:$0xf] %vm698, %v603
    %700 = vst.msk [vmem:[#allocation2 + $0x10] sm:$0xf] %vm698, %v605
    %701 = vst.msk [vmem:[#allocation2 + $0x20] sm:$0xf] %vm698, %v607
    %702 = vst.msk [vmem:[#allocation2 + $0x30] sm:$0xf] %vm698, %v609
    %703 = vst.msk [vmem:[#allocation2 + $0x40] sm:$0xf] %vm698, %v611
    %704 = vst.msk [vmem:[#allocation2 + $0x50] sm:$0xf] %vm698, %v613
    %705 = vst.msk [vmem:[#allocation2 + $0x60] sm:$0xf] %vm698, %v615
    %706 = vst.msk [vmem:[#allocation2 + $0x70] sm:$0xf] %vm698, %v617
    %707 = vst.msk [vmem:[#allocation2 + $0x80] sm:$0xf] %vm698, %v619
    %708 = vst.msk [vmem:[#allocation2 + $0x90] sm:$0xf] %vm698, %v621
    %709 = vst.msk [vmem:[#allocation2 + $0xa0] sm:$0xf] %vm698, %v623
    %710 = vst.msk [vmem:[#allocation2 + $0xb0] sm:$0xf] %vm698, %v625
    %711 = vst.msk [vmem:[#allocation2 + $0xc0] sm:$0xf] %vm698, %v627
    %712 = vst.msk [vmem:[#allocation2 + $0xd0] sm:$0xf] %vm698, %v629
    %713 = vst.msk [vmem:[#allocation2 + $0xe0] sm:$0xf] %vm698, %v631
    %714 = vst.msk [vmem:[#allocation2 + $0xf0] sm:$0xf] %vm698, %v633
    %715 = vst.msk [vmem:[#allocation2 + $0x100] sm:$0xf] %vm698, %v635
    %716 = vst.msk [vmem:[#allocation2 + $0x110] sm:$0xf] %vm698, %v637
    %717 = vst.msk [vmem:[#allocation2 + $0x120] sm:$0xf] %vm698, %v639
    %718 = vst.msk [vmem:[#allocation2 + $0x130] sm:$0xf] %vm698, %v641
    %719 = vst.msk [vmem:[#allocation2 + $0x140] sm:$0xf] %vm698, %v643
    %720 = vst.msk [vmem:[#allocation2 + $0x150] sm:$0xf] %vm698, %v645
    %721 = vst.msk [vmem:[#allocation2 + $0x160] sm:$0xf] %vm698, %v647
    %722 = vst.msk [vmem:[#allocation2 + $0x170] sm:$0xf] %vm698, %v649
    %723 = vst.msk [vmem:[#allocation2 + $0x180] sm:$0xf] %vm698, %v651
    %724 = vst.msk [vmem:[#allocation2 + $0x190] sm:$0xf] %vm698, %v653
    %725 = vst.msk [vmem:[#allocation2 + $0x1a0] sm:$0xf] %vm698, %v655
    %726 = vst.msk [vmem:[#allocation2 + $0x1b0] sm:$0xf] %vm698, %v657
    %727 = vst.msk [vmem:[#allocation2 + $0x1c0] sm:$0xf] %vm698, %v659
    %728 = vst.msk [vmem:[#allocation2 + $0x1d0] sm:$0xf] %vm698, %v661
    %729 = vst.msk [vmem:[#allocation2 + $0x1e0] sm:$0xf] %vm698, %v663
    %730 = vst.msk [vmem:[#allocation2 + $0x1f0] sm:$0xf] %vm698, %v665
    %v731 = vld [vmem:[%s0] sm:$0xe]
    %v732 = vld [vmem:[%s0 + $0x4] sm:$0x1]
    %v733 = vld [vmem:[%s0 + $0x8] sm:$0xe]
    %v734 = vld [vmem:[%s0 + $0xc] sm:$0x1]
    %v735 = vld [vmem:[%s0 + $0x10] sm:$0xe]
    %v736 = vld [vmem:[%s0 + $0x14] sm:$0x1]
    %v737 = vld [vmem:[%s0 + $0x18] sm:$0xe]
    %v738 = vld [vmem:[%s0 + $0x1c] sm:$0x1]
    %v739 = vld [vmem:[%s0 + $0x20] sm:$0xe]
    %v740 = vld [vmem:[%s0 + $0x24] sm:$0x1]
    %v741 = vld [vmem:[%s0 + $0x28] sm:$0xe]
    %v742 = vld [vmem:[%s0 + $0x2c] sm:$0x1]
    %v743 = vld [vmem:[%s0 + $0x30] sm:$0xe]
    %v744 = vld [vmem:[%s0 + $0x34] sm:$0x1]
    %v745 = vld [vmem:[%s0 + $0x38] sm:$0xe]
    %v746 = vld [vmem:[%s0 + $0x3c] sm:$0x1]
    %v747 = vld [vmem:[%s0 + $0x50] sm:$0xe]
    %v748 = vld [vmem:[%s0 + $0x54] sm:$0x1]
    %v749 = vld [vmem:[%s0 + $0x58] sm:$0xe]
    %v750 = vld [vmem:[%s0 + $0x5c] sm:$0x1]
    %v751 = vld [vmem:[%s0 + $0x60] sm:$0xe]
    %v752 = vld [vmem:[%s0 + $0x64] sm:$0x1]
    %v753 = vld [vmem:[%s0 + $0x68] sm:$0xe]
    %v754 = vld [vmem:[%s0 + $0x6c] sm:$0x1]
    %v755 = vld [vmem:[%s0 + $0x70] sm:$0xe]
    %v756 = vld [vmem:[%s0 + $0x74] sm:$0x1]
    %v757 = vld [vmem:[%s0 + $0x78] sm:$0xe]
    %v758 = vld [vmem:[%s0 + $0x7c] sm:$0x1]
    %v759 = vld [vmem:[%s0 + $0x80] sm:$0xe]
    %v760 = vld [vmem:[%s0 + $0x84] sm:$0x1]
    %v761 = vld [vmem:[%s0 + $0x88] sm:$0xe]
    %v762 = vld [vmem:[%s0 + $0x8c] sm:$0x1]
    %v763 = vld [vmem:[%s0 + $0xa0] sm:$0xe]
    %v764 = vld [vmem:[%s0 + $0xa4] sm:$0x1]
    %v765 = vld [vmem:[%s0 + $0xa8] sm:$0xe]
    %v766 = vld [vmem:[%s0 + $0xac] sm:$0x1]
    %v767 = vld [vmem:[%s0 + $0xb0] sm:$0xe]
    %v768 = vld [vmem:[%s0 + $0xb4] sm:$0x1]
    %v769 = vld [vmem:[%s0 + $0xb8] sm:$0xe]
    %v770 = vld [vmem:[%s0 + $0xbc] sm:$0x1]
    %v771 = vld [vmem:[%s0 + $0xc0] sm:$0xe]
    %v772 = vld [vmem:[%s0 + $0xc4] sm:$0x1]
    %v773 = vld [vmem:[%s0 + $0xc8] sm:$0xe]
    %v774 = vld [vmem:[%s0 + $0xcc] sm:$0x1]
    %v775 = vld [vmem:[%s0 + $0xd0] sm:$0xe]
    %v776 = vld [vmem:[%s0 + $0xd4] sm:$0x1]
    %v777 = vld [vmem:[%s0 + $0xd8] sm:$0xe]
    %v778 = vld [vmem:[%s0 + $0xdc] sm:$0x1]
    %v779 = vld [vmem:[%s0 + $0xf0] sm:$0xe]
    %v780 = vld [vmem:[%s0 + $0xf4] sm:$0x1]
    %v781 = vld [vmem:[%s0 + $0xf8] sm:$0xe]
    %v782 = vld [vmem:[%s0 + $0xfc] sm:$0x1]
    %v783 = vld [vmem:[%s0 + $0x100] sm:$0xe]
    %v784 = vld [vmem:[%s0 + $0x104] sm:$0x1]
    %v785 = vld [vmem:[%s0 + $0x108] sm:$0xe]
    %v786 = vld [vmem:[%s0 + $0x10c] sm:$0x1]
    %v787 = vld [vmem:[%s0 + $0x110] sm:$0xe]
    %v788 = vld [vmem:[%s0 + $0x114] sm:$0x1]
    %v789 = vld [vmem:[%s0 + $0x118] sm:$0xe]
    %v790 = vld [vmem:[%s0 + $0x11c] sm:$0x1]
    %v791 = vld [vmem:[%s0 + $0x120] sm:$0xe]
    %v792 = vld [vmem:[%s0 + $0x124] sm:$0x1]
    %v793 = vld [vmem:[%s0 + $0x128] sm:$0xe]
    %v794 = vld [vmem:[%s0 + $0x12c] sm:$0x1]
    %vm859 = vcmask 1042432
    %vm860 = vcmask 1046532
    %vm861 = vmor %vm859, %vm860
    %v862 = vrot.slane %v731, 5
    %v863 = vrot.slane %v862, 4
    %v864 = vrot.slane %v732, 5
    %v865 = vsel %vm861, %v863, %v864
    %v866 = vrot.slane %v733, 5
    %v867 = vrot.slane %v866, 4
    %v868 = vrot.slane %v734, 5
    %v869 = vsel %vm861, %v867, %v868
    %v870 = vrot.slane %v735, 5
    %v871 = vrot.slane %v870, 4
    %v872 = vrot.slane %v736, 5
    %v873 = vsel %vm861, %v871, %v872
    %v874 = vrot.slane %v737, 5
    %v875 = vrot.slane %v874, 4
    %v876 = vrot.slane %v738, 5
    %v877 = vsel %vm861, %v875, %v876
    %v878 = vrot.slane %v739, 5
    %v879 = vrot.slane %v878, 4
    %v880 = vrot.slane %v740, 5
    %v881 = vsel %vm861, %v879, %v880
    %v882 = vrot.slane %v741, 5
    %v883 = vrot.slane %v882, 4
    %v884 = vrot.slane %v742, 5
    %v885 = vsel %vm861, %v883, %v884
    %v886 = vrot.slane %v743, 5
    %v887 = vrot.slane %v886, 4
    %v888 = vrot.slane %v744, 5
    %v889 = vsel %vm861, %v887, %v888
    %v890 = vrot.slane %v745, 5
    %v891 = vrot.slane %v890, 4
    %v892 = vrot.slane %v746, 5
    %v893 = vsel %vm861, %v891, %v892
    %v894 = vrot.slane %v747, 5
    %v895 = vrot.slane %v894, 4
    %v896 = vrot.slane %v748, 5
    %v897 = vsel %vm861, %v895, %v896
    %v898 = vrot.slane %v749, 5
    %v899 = vrot.slane %v898, 4
    %v900 = vrot.slane %v750, 5
    %v901 = vsel %vm861, %v899, %v900
    %v902 = vrot.slane %v751, 5
    %v903 = vrot.slane %v902, 4
    %v904 = vrot.slane %v752, 5
    %v905 = vsel %vm861, %v903, %v904
    %v906 = vrot.slane %v753, 5
    %v907 = vrot.slane %v906, 4
    %v908 = vrot.slane %v754, 5
    %v909 = vsel %vm861, %v907, %v908
    %v910 = vrot.slane %v755, 5
    %v911 = vrot.slane %v910, 4
    %v912 = vrot.slane %v756, 5
    %v913 = vsel %vm861, %v911, %v912
    %v914 = vrot.slane %v757, 5
    %v915 = vrot.slane %v914, 4
    %v916 = vrot.slane %v758, 5
    %v917 = vsel %vm861, %v915, %v916
    %v918 = vrot.slane %v759, 5
    %v919 = vrot.slane %v918, 4
    %v920 = vrot.slane %v760, 5
    %v921 = vsel %vm861, %v919, %v920
    %v922 = vrot.slane %v761, 5
    %v923 = vrot.slane %v922, 4
    %v924 = vrot.slane %v762, 5
    %v925 = vsel %vm861, %v923, %v924
    %v926 = vrot.slane %v763, 5
    %v927 = vrot.slane %v926, 4
    %v928 = vrot.slane %v764, 5
    %v929 = vsel %vm861, %v927, %v928
    %v930 = vrot.slane %v765, 5
    %v931 = vrot.slane %v930, 4
    %v932 = vrot.slane %v766, 5
    %v933 = vsel %vm861, %v931, %v932
    %v934 = vrot.slane %v767, 5
    %v935 = vrot.slane %v934, 4
    %v936 = vrot.slane %v768, 5
    %v937 = vsel %vm861, %v935, %v936
    %v938 = vrot.slane %v769, 5
    %v939 = vrot.slane %v938, 4
    %v940 = vrot.slane %v770, 5
    %v941 = vsel %vm861, %v939, %v940
    %v942 = vrot.slane %v771, 5
    %v943 = vrot.slane %v942, 4
    %v944 = vrot.slane %v772, 5
    %v945 = vsel %vm861, %v943, %v944
    %v946 = vrot.slane %v773, 5
    %v947 = vrot.slane %v946, 4
    %v948 = vrot.slane %v774, 5
    %v949 = vsel %vm861, %v947, %v948
    %v950 = vrot.slane %v775, 5
    %v951 = vrot.slane %v950, 4
    %v952 = vrot.slane %v776, 5
    %v953 = vsel %vm861, %v951, %v952
    %v954 = vrot.slane %v777, 5
    %v955 = vrot.slane %v954, 4
    %v956 = vrot.slane %v778, 5
    %v957 = vsel %vm861, %v955, %v956
    %v958 = vrot.slane %v779, 5
    %v959 = vrot.slane %v958, 4
    %v960 = vrot.slane %v780, 5
    %v961 = vsel %vm861, %v959, %v960
    %v962 = vrot.slane %v781, 5
    %v963 = vrot.slane %v962, 4
    %v964 = vrot.slane %v782, 5
    %v965 = vsel %vm861, %v963, %v964
    %v966 = vrot.slane %v783, 5
    %v967 = vrot.slane %v966, 4
    %v968 = vrot.slane %v784, 5
    %v969 = vsel %vm861, %v967, %v968
    %v970 = vrot.slane %v785, 5
    %v971 = vrot.slane %v970, 4
    %v972 = vrot.slane %v786, 5
    %v973 = vsel %vm861, %v971, %v972
    %v974 = vrot.slane %v787, 5
    %v975 = vrot.slane %v974, 4
    %v976 = vrot.slane %v788, 5
    %v977 = vsel %vm861, %v975, %v976
    %v978 = vrot.slane %v789, 5
    %v979 = vrot.slane %v978, 4
    %v980 = vrot.slane %v790, 5
    %v981 = vsel %vm861, %v979, %v980
    %v982 = vrot.slane %v791, 5
    %v983 = vrot.slane %v982, 4
    %v984 = vrot.slane %v792, 5
    %v985 = vsel %vm861, %v983, %v984
    %v986 = vrot.slane %v793, 5
    %v987 = vrot.slane %v986, 4
    %v988 = vrot.slane %v794, 5
    %v989 = vsel %vm861, %v987, %v988
    %990 = vrot.lane.b32.xlu0 %v865, 32
    %v991 = vpop.permute.xlu0 %990
    %992 = vrot.lane.b32.xlu0 %v869, 32
    %v993 = vpop.permute.xlu0 %992
    %994 = vrot.lane.b32.xlu0 %v873, 32
    %v995 = vpop.permute.xlu0 %994
    %996 = vrot.lane.b32.xlu0 %v877, 32
    %v997 = vpop.permute.xlu0 %996
    %998 = vrot.lane.b32.xlu0 %v881, 32
    %v999 = vpop.permute.xlu0 %998
    %1000 = vrot.lane.b32.xlu0 %v885, 32
    %v1001 = vpop.permute.xlu0 %1000
    %1002 = vrot.lane.b32.xlu0 %v889, 32
    %v1003 = vpop.permute.xlu0 %1002
    %1004 = vrot.lane.b32.xlu0 %v893, 32
    %v1005 = vpop.permute.xlu0 %1004
    %1006 = vrot.lane.b32.xlu0 %v897, 32
    %v1007 = vpop.permute.xlu0 %1006
    %1008 = vrot.lane.b32.xlu0 %v901, 32
    %v1009 = vpop.permute.xlu0 %1008
    %1010 = vrot.lane.b32.xlu0 %v905, 32
    %v1011 = vpop.permute.xlu0 %1010
    %1012 = vrot.lane.b32.xlu0 %v909, 32
    %v1013 = vpop.permute.xlu0 %1012
    %1014 = vrot.lane.b32.xlu0 %v913, 32
    %v1015 = vpop.permute.xlu0 %1014
    %1016 = vrot.lane.b32.xlu0 %v917, 32
    %v1017 = vpop.permute.xlu0 %1016
    %1018 = vrot.lane.b32.xlu0 %v921, 32
    %v1019 = vpop.permute.xlu0 %1018
    %1020 = vrot.lane.b32.xlu0 %v925, 32
    %v1021 = vpop.permute.xlu0 %1020
    %1022 = vrot.lane.b32.xlu0 %v929, 32
    %v1023 = vpop.permute.xlu0 %1022
    %1024 = vrot.lane.b32.xlu0 %v933, 32
    %v1025 = vpop.permute.xlu0 %1024
    %1026 = vrot.lane.b32.xlu0 %v937, 32
    %v1027 = vpop.permute.xlu0 %1026
    %1028 = vrot.lane.b32.xlu0 %v941, 32
    %v1029 = vpop.permute.xlu0 %1028
    %1030 = vrot.lane.b32.xlu0 %v945, 32
    %v1031 = vpop.permute.xlu0 %1030
    %1032 = vrot.lane.b32.xlu0 %v949, 32
    %v1033 = vpop.permute.xlu0 %1032
    %1034 = vrot.lane.b32.xlu0 %v953, 32
    %v1035 = vpop.permute.xlu0 %1034
    %1036 = vrot.lane.b32.xlu0 %v957, 32
    %v1037 = vpop.permute.xlu0 %1036
    %1038 = vrot.lane.b32.xlu0 %v961, 32
    %v1039 = vpop.permute.xlu0 %1038
    %1040 = vrot.lane.b32.xlu0 %v965, 32
    %v1041 = vpop.permute.xlu0 %1040
    %1042 = vrot.lane.b32.xlu0 %v969, 32
    %v1043 = vpop.permute.xlu0 %1042
    %1044 = vrot.lane.b32.xlu0 %v973, 32
    %v1045 = vpop.permute.xlu0 %1044
    %1046 = vrot.lane.b32.xlu0 %v977, 32
    %v1047 = vpop.permute.xlu0 %1046
    %1048 = vrot.lane.b32.xlu0 %v981, 32
    %v1049 = vpop.permute.xlu0 %1048
    %1050 = vrot.lane.b32.xlu0 %v985, 32
    %v1051 = vpop.permute.xlu0 %1050
    %1052 = vrot.lane.b32.xlu0 %v989, 32
    %v1053 = vpop.permute.xlu0 %1052
    %vm1086 = vcmask 388352
    %1087 = vst.msk [vmem:[#allocation2] sm:$0xf] %vm1086, %v991
    %1088 = vst.msk [vmem:[#allocation2 + $0x10] sm:$0xf] %vm1086, %v993
    %1089 = vst.msk [vmem:[#allocation2 + $0x20] sm:$0xf] %vm1086, %v995
    %1090 = vst.msk [vmem:[#allocation2 + $0x30] sm:$0xf] %vm1086, %v997
    %1091 = vst.msk [vmem:[#allocation2 + $0x40] sm:$0xf] %vm1086, %v999
    %1092 = vst.msk [vmem:[#allocation2 + $0x50] sm:$0xf] %vm1086, %v1001
    %1093 = vst.msk [vmem:[#allocation2 + $0x60] sm:$0xf] %vm1086, %v1003
    %1094 = vst.msk [vmem:[#allocation2 + $0x70] sm:$0xf] %vm1086, %v1005
    %1095 = vst.msk [vmem:[#allocation2 + $0x80] sm:$0xf] %vm1086, %v1007
    %1096 = vst.msk [vmem:[#allocation2 + $0x90] sm:$0xf] %vm1086, %v1009
    %1097 = vst.msk [vmem:[#allocation2 + $0xa0] sm:$0xf] %vm1086, %v1011
    %1098 = vst.msk [vmem:[#allocation2 + $0xb0] sm:$0xf] %vm1086, %v1013
    %1099 = vst.msk [vmem:[#allocation2 + $0xc0] sm:$0xf] %vm1086, %v1015
    %1100 = vst.msk [vmem:[#allocation2 + $0xd0] sm:$0xf] %vm1086, %v1017
    %1101 = vst.msk [vmem:[#allocation2 + $0xe0] sm:$0xf] %vm1086, %v1019
    %1102 = vst.msk [vmem:[#allocation2 + $0xf0] sm:$0xf] %vm1086, %v1021
    %1103 = vst.msk [vmem:[#allocation2 + $0x100] sm:$0xf] %vm1086, %v1023
    %1104 = vst.msk [vmem:[#allocation2 + $0x110] sm:$0xf] %vm1086, %v1025
    %1105 = vst.msk [vmem:[#allocation2 + $0x120] sm:$0xf] %vm1086, %v1027
    %1106 = vst.msk [vmem:[#allocation2 + $0x130] sm:$0xf] %vm1086, %v1029
    %1107 = vst.msk [vmem:[#allocation2 + $0x140] sm:$0xf] %vm1086, %v1031
    %1108 = vst.msk [vmem:[#allocation2 + $0x150] sm:$0xf] %vm1086, %v1033
    %1109 = vst.msk [vmem:[#allocation2 + $0x160] sm:$0xf] %vm1086, %v1035
    %1110 = vst.msk [vmem:[#allocation2 + $0x170] sm:$0xf] %vm1086, %v1037
    %1111 = vst.msk [vmem:[#allocation2 + $0x180] sm:$0xf] %vm1086, %v1039
    %1112 = vst.msk [vmem:[#allocation2 + $0x190] sm:$0xf] %vm1086, %v1041
    %1113 = vst.msk [vmem:[#allocation2 + $0x1a0] sm:$0xf] %vm1086, %v1043
    %1114 = vst.msk [vmem:[#allocation2 + $0x1b0] sm:$0xf] %vm1086, %v1045
    %1115 = vst.msk [vmem:[#allocation2 + $0x1c0] sm:$0xf] %vm1086, %v1047
    %1116 = vst.msk [vmem:[#allocation2 + $0x1d0] sm:$0xf] %vm1086, %v1049
    %1117 = vst.msk [vmem:[#allocation2 + $0x1e0] sm:$0xf] %vm1086, %v1051
    %1118 = vst.msk [vmem:[#allocation2 + $0x1f0] sm:$0xf] %vm1086, %v1053
    %s1119 = scalar_lea.vmem %s0, 8
    %v1120 = vld [vmem:[%s1119] sm:$0xf]
    %v1121 = vld [vmem:[%s1119 + $0x8] sm:$0xf]
    %v1122 = vld [vmem:[%s1119 + $0x10] sm:$0xf]
    %v1123 = vld [vmem:[%s1119 + $0x18] sm:$0xf]
    %v1124 = vld [vmem:[%s1119 + $0x20] sm:$0xf]
    %v1125 = vld [vmem:[%s1119 + $0x28] sm:$0xf]
    %v1126 = vld [vmem:[%s1119 + $0x30] sm:$0xf]
    %v1127 = vld [vmem:[%s1119 + $0x38] sm:$0xf]
    %v1128 = vld [vmem:[%s1119 + $0x50] sm:$0xf]
    %v1129 = vld [vmem:[%s1119 + $0x58] sm:$0xf]
    %v1130 = vld [vmem:[%s1119 + $0x60] sm:$0xf]
    %v1131 = vld [vmem:[%s1119 + $0x68] sm:$0xf]
    %v1132 = vld [vmem:[%s1119 + $0x70] sm:$0xf]
    %v1133 = vld [vmem:[%s1119 + $0x78] sm:$0xf]
    %v1134 = vld [vmem:[%s1119 + $0x80] sm:$0xf]
    %v1135 = vld [vmem:[%s1119 + $0x88] sm:$0xf]
    %v1136 = vld [vmem:[%s1119 + $0xa0] sm:$0xf]
    %v1137 = vld [vmem:[%s1119 + $0xa8] sm:$0xf]
    %v1138 = vld [vmem:[%s1119 + $0xb0] sm:$0xf]
    %v1139 = vld [vmem:[%s1119 + $0xb8] sm:$0xf]
    %v1140 = vld [vmem:[%s1119 + $0xc0] sm:$0xf]
    %v1141 = vld [vmem:[%s1119 + $0xc8] sm:$0xf]
    %v1142 = vld [vmem:[%s1119 + $0xd0] sm:$0xf]
    %v1143 = vld [vmem:[%s1119 + $0xd8] sm:$0xf]
    %v1144 = vld [vmem:[%s1119 + $0xf0] sm:$0xf]
    %v1145 = vld [vmem:[%s1119 + $0xf8] sm:$0xf]
    %v1146 = vld [vmem:[%s1119 + $0x100] sm:$0xf]
    %v1147 = vld [vmem:[%s1119 + $0x108] sm:$0xf]
    %v1148 = vld [vmem:[%s1119 + $0x110] sm:$0xf]
    %v1149 = vld [vmem:[%s1119 + $0x118] sm:$0xf]
    %v1150 = vld [vmem:[%s1119 + $0x120] sm:$0xf]
    %v1151 = vld [vmem:[%s1119 + $0x128] sm:$0xf]
    %1184 = vrot.lane.b32.xlu0 %v1120, 48
    %v1185 = vpop.permute.xlu0 %1184
    %1186 = vrot.lane.b32.xlu0 %v1121, 48
    %v1187 = vpop.permute.xlu0 %1186
    %1188 = vrot.lane.b32.xlu0 %v1122, 48
    %v1189 = vpop.permute.xlu0 %1188
    %1190 = vrot.lane.b32.xlu0 %v1123, 48
    %v1191 = vpop.permute.xlu0 %1190
    %1192 = vrot.lane.b32.xlu0 %v1124, 48
    %v1193 = vpop.permute.xlu0 %1192
    %1194 = vrot.lane.b32.xlu0 %v1125, 48
    %v1195 = vpop.permute.xlu0 %1194
    %1196 = vrot.lane.b32.xlu0 %v1126, 48
    %v1197 = vpop.permute.xlu0 %1196
    %1198 = vrot.lane.b32.xlu0 %v1127, 48
    %v1199 = vpop.permute.xlu0 %1198
    %1200 = vrot.lane.b32.xlu0 %v1128, 48
    %v1201 = vpop.permute.xlu0 %1200
    %1202 = vrot.lane.b32.xlu0 %v1129, 48
    %v1203 = vpop.permute.xlu0 %1202
    %1204 = vrot.lane.b32.xlu0 %v1130, 48
    %v1205 = vpop.permute.xlu0 %1204
    %1206 = vrot.lane.b32.xlu0 %v1131, 48
    %v1207 = vpop.permute.xlu0 %1206
    %1208 = vrot.lane.b32.xlu0 %v1132, 48
    %v1209 = vpop.permute.xlu0 %1208
    %1210 = vrot.lane.b32.xlu0 %v1133, 48
    %v1211 = vpop.permute.xlu0 %1210
    %1212 = vrot.lane.b32.xlu0 %v1134, 48
    %v1213 = vpop.permute.xlu0 %1212
    %1214 = vrot.lane.b32.xlu0 %v1135, 48
    %v1215 = vpop.permute.xlu0 %1214
    %1216 = vrot.lane.b32.xlu0 %v1136, 48
    %v1217 = vpop.permute.xlu0 %1216
    %1218 = vrot.lane.b32.xlu0 %v1137, 48
    %v1219 = vpop.permute.xlu0 %1218
    %1220 = vrot.lane.b32.xlu0 %v1138, 48
    %v1221 = vpop.permute.xlu0 %1220
    %1222 = vrot.lane.b32.xlu0 %v1139, 48
    %v1223 = vpop.permute.xlu0 %1222
    %1224 = vrot.lane.b32.xlu0 %v1140, 48
    %v1225 = vpop.permute.xlu0 %1224
    %1226 = vrot.lane.b32.xlu0 %v1141, 48
    %v1227 = vpop.permute.xlu0 %1226
    %1228 = vrot.lane.b32.xlu0 %v1142, 48
    %v1229 = vpop.permute.xlu0 %1228
    %1230 = vrot.lane.b32.xlu0 %v1143, 48
    %v1231 = vpop.permute.xlu0 %1230
    %1232 = vrot.lane.b32.xlu0 %v1144, 48
    %v1233 = vpop.permute.xlu0 %1232
    %1234 = vrot.lane.b32.xlu0 %v1145, 48
    %v1235 = vpop.permute.xlu0 %1234
    %1236 = vrot.lane.b32.xlu0 %v1146, 48
    %v1237 = vpop.permute.xlu0 %1236
    %1238 = vrot.lane.b32.xlu0 %v1147, 48
    %v1239 = vpop.permute.xlu0 %1238
    %1240 = vrot.lane.b32.xlu0 %v1148, 48
    %v1241 = vpop.permute.xlu0 %1240
    %1242 = vrot.lane.b32.xlu0 %v1149, 48
    %v1243 = vpop.permute.xlu0 %1242
    %1244 = vrot.lane.b32.xlu0 %v1150, 48
    %v1245 = vpop.permute.xlu0 %1244
    %1246 = vrot.lane.b32.xlu0 %v1151, 48
    %v1247 = vpop.permute.xlu0 %1246
    %vm1280 = vcmask 519552
    %1281 = vst.msk [vmem:[#allocation2] sm:$0xf] %vm1280, %v1185
    %1282 = vst.msk [vmem:[#allocation2 + $0x10] sm:$0xf] %vm1280, %v1187
    %1283 = vst.msk [vmem:[#allocation2 + $0x20] sm:$0xf] %vm1280, %v1189
    %1284 = vst.msk [vmem:[#allocation2 + $0x30] sm:$0xf] %vm1280, %v1191
    %1285 = vst.msk [vmem:[#allocation2 + $0x40] sm:$0xf] %vm1280, %v1193
    %1286 = vst.msk [vmem:[#allocation2 + $0x50] sm:$0xf] %vm1280, %v1195
    %1287 = vst.msk [vmem:[#allocation2 + $0x60] sm:$0xf] %vm1280, %v1197
    %1288 = vst.msk [vmem:[#allocation2 + $0x70] sm:$0xf] %vm1280, %v1199
    %1289 = vst.msk [vmem:[#allocation2 + $0x80] sm:$0xf] %vm1280, %v1201
    %1290 = vst.msk [vmem:[#allocation2 + $0x90] sm:$0xf] %vm1280, %v1203
    %1291 = vst.msk [vmem:[#allocation2 + $0xa0] sm:$0xf] %vm1280, %v1205
    %1292 = vst.msk [vmem:[#allocation2 + $0xb0] sm:$0xf] %vm1280, %v1207
    %1293 = vst.msk [vmem:[#allocation2 + $0xc0] sm:$0xf] %vm1280, %v1209
    %1294 = vst.msk [vmem:[#allocation2 + $0xd0] sm:$0xf] %vm1280, %v1211
    %1295 = vst.msk [vmem:[#allocation2 + $0xe0] sm:$0xf] %vm1280, %v1213
    %1296 = vst.msk [vmem:[#allocation2 + $0xf0] sm:$0xf] %vm1280, %v1215
    %1297 = vst.msk [vmem:[#allocation2 + $0x100] sm:$0xf] %vm1280, %v1217
    %1298 = vst.msk [vmem:[#allocation2 + $0x110] sm:$0xf] %vm1280, %v1219
    %1299 = vst.msk [vmem:[#allocation2 + $0x120] sm:$0xf] %vm1280, %v1221
    %1300 = vst.msk [vmem:[#allocation2 + $0x130] sm:$0xf] %vm1280, %v1223
    %1301 = vst.msk [vmem:[#allocation2 + $0x140] sm:$0xf] %vm1280, %v1225
    %1302 = vst.msk [vmem:[#allocation2 + $0x150] sm:$0xf] %vm1280, %v1227
    %1303 = vst.msk [vmem:[#allocation2 + $0x160] sm:$0xf] %vm1280, %v1229
    %1304 = vst.msk [vmem:[#allocation2 + $0x170] sm:$0xf] %vm1280, %v1231
    %1305 = vst.msk [vmem:[#allocation2 + $0x180] sm:$0xf] %vm1280, %v1233
    %1306 = vst.msk [vmem:[#allocation2 + $0x190] sm:$0xf] %vm1280, %v1235
    %1307 = vst.msk [vmem:[#allocation2 + $0x1a0] sm:$0xf] %vm1280, %v1237
    %1308 = vst.msk [vmem:[#allocation2 + $0x1b0] sm:$0xf] %vm1280, %v1239
    %1309 = vst.msk [vmem:[#allocation2 + $0x1c0] sm:$0xf] %vm1280, %v1241
    %1310 = vst.msk [vmem:[#allocation2 + $0x1d0] sm:$0xf] %vm1280, %v1243
    %1311 = vst.msk [vmem:[#allocation2 + $0x1e0] sm:$0xf] %vm1280, %v1245
    %1312 = vst.msk [vmem:[#allocation2 + $0x1f0] sm:$0xf] %vm1280, %v1247
    %v1313 = vld [vmem:[%s1119] sm:$0xf]
    %v1314 = vld [vmem:[%s1119 + $0x4] sm:$0x1]
    %v1315 = vld [vmem:[%s1119 + $0x8] sm:$0xf]
    %v1316 = vld [vmem:[%s1119 + $0xc] sm:$0x1]
    %v1317 = vld [vmem:[%s1119 + $0x10] sm:$0xf]
    %v1318 = vld [vmem:[%s1119 + $0x14] sm:$0x1]
    %v1319 = vld [vmem:[%s1119 + $0x18] sm:$0xf]
    %v1320 = vld [vmem:[%s1119 + $0x1c] sm:$0x1]
    %v1321 = vld [vmem:[%s1119 + $0x20] sm:$0xf]
    %v1322 = vld [vmem:[%s1119 + $0x24] sm:$0x1]
    %v1323 = vld [vmem:[%s1119 + $0x28] sm:$0xf]
    %v1324 = vld [vmem:[%s1119 + $0x2c] sm:$0x1]
    %v1325 = vld [vmem:[%s1119 + $0x30] sm:$0xf]
    %v1326 = vld [vmem:[%s1119 + $0x34] sm:$0x1]
    %v1327 = vld [vmem:[%s1119 + $0x38] sm:$0xf]
    %v1328 = vld [vmem:[%s1119 + $0x3c] sm:$0x1]
    %v1329 = vld [vmem:[%s1119 + $0x50] sm:$0xf]
    %v1330 = vld [vmem:[%s1119 + $0x54] sm:$0x1]
    %v1331 = vld [vmem:[%s1119 + $0x58] sm:$0xf]
    %v1332 = vld [vmem:[%s1119 + $0x5c] sm:$0x1]
    %v1333 = vld [vmem:[%s1119 + $0x60] sm:$0xf]
    %v1334 = vld [vmem:[%s1119 + $0x64] sm:$0x1]
    %v1335 = vld [vmem:[%s1119 + $0x68] sm:$0xf]
    %v1336 = vld [vmem:[%s1119 + $0x6c] sm:$0x1]
    %v1337 = vld [vmem:[%s1119 + $0x70] sm:$0xf]
    %v1338 = vld [vmem:[%s1119 + $0x74] sm:$0x1]
    %v1339 = vld [vmem:[%s1119 + $0x78] sm:$0xf]
    %v1340 = vld [vmem:[%s1119 + $0x7c] sm:$0x1]
    %v1341 = vld [vmem:[%s1119 + $0x80] sm:$0xf]
    %v1342 = vld [vmem:[%s1119 + $0x84] sm:$0x1]
    %v1343 = vld [vmem:[%s1119 + $0x88] sm:$0xf]
    %v1344 = vld [vmem:[%s1119 + $0x8c] sm:$0x1]
    %v1345 = vld [vmem:[%s1119 + $0xa0] sm:$0xf]
    %v1346 = vld [vmem:[%s1119 + $0xa4] sm:$0x1]
    %v1347 = vld [vmem:[%s1119 + $0xa8] sm:$0xf]
    %v1348 = vld [vmem:[%s1119 + $0xac] sm:$0x1]
    %v1349 = vld [vmem:[%s1119 + $0xb0] sm:$0xf]
    %v1350 = vld [vmem:[%s1119 + $0xb4] sm:$0x1]
    %v1351 = vld [vmem:[%s1119 + $0xb8] sm:$0xf]
    %v1352 = vld [vmem:[%s1119 + $0xbc] sm:$0x1]
    %v1353 = vld [vmem:[%s1119 + $0xc0] sm:$0xf]
    %v1354 = vld [vmem:[%s1119 + $0xc4] sm:$0x1]
    %v1355 = vld [vmem:[%s1119 + $0xc8] sm:$0xf]
    %v1356 = vld [vmem:[%s1119 + $0xcc] sm:$0x1]
    %v1357 = vld [vmem:[%s1119 + $0xd0] sm:$0xf]
    %v1358 = vld [vmem:[%s1119 + $0xd4] sm:$0x1]
    %v1359 = vld [vmem:[%s1119 + $0xd8] sm:$0xf]
    %v1360 = vld [vmem:[%s1119 + $0xdc] sm:$0x1]
    %v1361 = vld [vmem:[%s1119 + $0xf0] sm:$0xf]
    %v1362 = vld [vmem:[%s1119 + $0xf4] sm:$0x1]
    %v1363 = vld [vmem:[%s1119 + $0xf8] sm:$0xf]
    %v1364 = vld [vmem:[%s1119 + $0xfc] sm:$0x1]
    %v1365 = vld [vmem:[%s1119 + $0x100] sm:$0xf]
    %v1366 = vld [vmem:[%s1119 + $0x104] sm:$0x1]
    %v1367 = vld [vmem:[%s1119 + $0x108] sm:$0xf]
    %v1368 = vld [vmem:[%s1119 + $0x10c] sm:$0x1]
    %v1369 = vld [vmem:[%s1119 + $0x110] sm:$0xf]
    %v1370 = vld [vmem:[%s1119 + $0x114] sm:$0x1]
    %v1371 = vld [vmem:[%s1119 + $0x118] sm:$0xf]
    %v1372 = vld [vmem:[%s1119 + $0x11c] sm:$0x1]
    %v1373 = vld [vmem:[%s1119 + $0x120] sm:$0xf]
    %v1374 = vld [vmem:[%s1119 + $0x124] sm:$0x1]
    %v1375 = vld [vmem:[%s1119 + $0x128] sm:$0xf]
    %v1376 = vld [vmem:[%s1119 + $0x12c] sm:$0x1]
    %v1378 = vshrl.u32 %v1313, 16
    %v1380 = vrot.slane %v1378, 4
    %v1381 = vshll.u32 %v1313, 16
    %v1383 = vrot.slane %v1381, 5
    %v1384 = vor.u32 %v1380, %v1383
    %v1385 = vrot.slane %v1384, 4
    %v1387 = vshll.u32 %v1314, 16
    %v1389 = vrot.slane %v1387, 5
    %v1390 = vsel %vm153, %v1385, %v1389
    %v1392 = vshrl.u32 %v1315, 16
    %v1394 = vrot.slane %v1392, 4
    %v1395 = vshll.u32 %v1315, 16
    %v1397 = vrot.slane %v1395, 5
    %v1398 = vor.u32 %v1394, %v1397
    %v1399 = vrot.slane %v1398, 4
    %v1401 = vshll.u32 %v1316, 16
    %v1403 = vrot.slane %v1401, 5
    %v1404 = vsel %vm153, %v1399, %v1403
    %v1406 = vshrl.u32 %v1317, 16
    %v1408 = vrot.slane %v1406, 4
    %v1409 = vshll.u32 %v1317, 16
    %v1411 = vrot.slane %v1409, 5
    %v1412 = vor.u32 %v1408, %v1411
    %v1413 = vrot.slane %v1412, 4
    %v1415 = vshll.u32 %v1318, 16
    %v1417 = vrot.slane %v1415, 5
    %v1418 = vsel %vm153, %v1413, %v1417
    %v1420 = vshrl.u32 %v1319, 16
    %v1422 = vrot.slane %v1420, 4
    %v1423 = vshll.u32 %v1319, 16
    %v1425 = vrot.slane %v1423, 5
    %v1426 = vor.u32 %v1422, %v1425
    %v1427 = vrot.slane %v1426, 4
    %v1429 = vshll.u32 %v1320, 16
    %v1431 = vrot.slane %v1429, 5
    %v1432 = vsel %vm153, %v1427, %v1431
    %v1434 = vshrl.u32 %v1321, 16
    %v1436 = vrot.slane %v1434, 4
    %v1437 = vshll.u32 %v1321, 16
    %v1439 = vrot.slane %v1437, 5
    %v1440 = vor.u32 %v1436, %v1439
    %v1441 = vrot.slane %v1440, 4
    %v1443 = vshll.u32 %v1322, 16
    %v1445 = vrot.slane %v1443, 5
    %v1446 = vsel %vm153, %v1441, %v1445
    %v1448 = vshrl.u32 %v1323, 16
    %v1450 = vrot.slane %v1448, 4
    %v1451 = vshll.u32 %v1323, 16
    %v1453 = vrot.slane %v1451, 5
    %v1454 = vor.u32 %v1450, %v1453
    %v1455 = vrot.slane %v1454, 4
    %v1457 = vshll.u32 %v1324, 16
    %v1459 = vrot.slane %v1457, 5
    %v1460 = vsel %vm153, %v1455, %v1459
    %v1462 = vshrl.u32 %v1325, 16
    %v1464 = vrot.slane %v1462, 4
    %v1465 = vshll.u32 %v1325, 16
    %v1467 = vrot.slane %v1465, 5
    %v1468 = vor.u32 %v1464, %v1467
    %v1469 = vrot.slane %v1468, 4
    %v1471 = vshll.u32 %v1326, 16
    %v1473 = vrot.slane %v1471, 5
    %v1474 = vsel %vm153, %v1469, %v1473
    %v1476 = vshrl.u32 %v1327, 16
    %v1478 = vrot.slane %v1476, 4
    %v1479 = vshll.u32 %v1327, 16
    %v1481 = vrot.slane %v1479, 5
    %v1482 = vor.u32 %v1478, %v1481
    %v1483 = vrot.slane %v1482, 4
    %v1485 = vshll.u32 %v1328, 16
    %v1487 = vrot.slane %v1485, 5
    %v1488 = vsel %vm153, %v1483, %v1487
    %v1490 = vshrl.u32 %v1329, 16
    %v1492 = vrot.slane %v1490, 4
    %v1493 = vshll.u32 %v1329, 16
    %v1495 = vrot.slane %v1493, 5
    %v1496 = vor.u32 %v1492, %v1495
    %v1497 = vrot.slane %v1496, 4
    %v1499 = vshll.u32 %v1330, 16
    %v1501 = vrot.slane %v1499, 5
    %v1502 = vsel %vm153, %v1497, %v1501
    %v1504 = vshrl.u32 %v1331, 16
    %v1506 = vrot.slane %v1504, 4
    %v1507 = vshll.u32 %v1331, 16
    %v1509 = vrot.slane %v1507, 5
    %v1510 = vor.u32 %v1506, %v1509
    %v1511 = vrot.slane %v1510, 4
    %v1513 = vshll.u32 %v1332, 16
    %v1515 = vrot.slane %v1513, 5
    %v1516 = vsel %vm153, %v1511, %v1515
    %v1518 = vshrl.u32 %v1333, 16
    %v1520 = vrot.slane %v1518, 4
    %v1521 = vshll.u32 %v1333, 16
    %v1523 = vrot.slane %v1521, 5
    %v1524 = vor.u32 %v1520, %v1523
    %v1525 = vrot.slane %v1524, 4
    %v1527 = vshll.u32 %v1334, 16
    %v1529 = vrot.slane %v1527, 5
    %v1530 = vsel %vm153, %v1525, %v1529
    %v1532 = vshrl.u32 %v1335, 16
    %v1534 = vrot.slane %v1532, 4
    %v1535 = vshll.u32 %v1335, 16
    %v1537 = vrot.slane %v1535, 5
    %v1538 = vor.u32 %v1534, %v1537
    %v1539 = vrot.slane %v1538, 4
    %v1541 = vshll.u32 %v1336, 16
    %v1543 = vrot.slane %v1541, 5
    %v1544 = vsel %vm153, %v1539, %v1543
    %v1546 = vshrl.u32 %v1337, 16
    %v1548 = vrot.slane %v1546, 4
    %v1549 = vshll.u32 %v1337, 16
    %v1551 = vrot.slane %v1549, 5
    %v1552 = vor.u32 %v1548, %v1551
    %v1553 = vrot.slane %v1552, 4
    %v1555 = vshll.u32 %v1338, 16
    %v1557 = vrot.slane %v1555, 5
    %v1558 = vsel %vm153, %v1553, %v1557
    %v1560 = vshrl.u32 %v1339, 16
    %v1562 = vrot.slane %v1560, 4
    %v1563 = vshll.u32 %v1339, 16
    %v1565 = vrot.slane %v1563, 5
    %v1566 = vor.u32 %v1562, %v1565
    %v1567 = vrot.slane %v1566, 4
    %v1569 = vshll.u32 %v1340, 16
    %v1571 = vrot.slane %v1569, 5
    %v1572 = vsel %vm153, %v1567, %v1571
    %v1574 = vshrl.u32 %v1341, 16
    %v1576 = vrot.slane %v1574, 4
    %v1577 = vshll.u32 %v1341, 16
    %v1579 = vrot.slane %v1577, 5
    %v1580 = vor.u32 %v1576, %v1579
    %v1581 = vrot.slane %v1580, 4
    %v1583 = vshll.u32 %v1342, 16
    %v1585 = vrot.slane %v1583, 5
    %v1586 = vsel %vm153, %v1581, %v1585
    %v1588 = vshrl.u32 %v1343, 16
    %v1590 = vrot.slane %v1588, 4
    %v1591 = vshll.u32 %v1343, 16
    %v1593 = vrot.slane %v1591, 5
    %v1594 = vor.u32 %v1590, %v1593
    %v1595 = vrot.slane %v1594, 4
    %v1597 = vshll.u32 %v1344, 16
    %v1599 = vrot.slane %v1597, 5
    %v1600 = vsel %vm153, %v1595, %v1599
    %v1602 = vshrl.u32 %v1345, 16
    %v1604 = vrot.slane %v1602, 4
    %v1605 = vshll.u32 %v1345, 16
    %v1607 = vrot.slane %v1605, 5
    %v1608 = vor.u32 %v1604, %v1607
    %v1609 = vrot.slane %v1608, 4
    %v1611 = vshll.u32 %v1346, 16
    %v1613 = vrot.slane %v1611, 5
    %v1614 = vsel %vm153, %v1609, %v1613
    %v1616 = vshrl.u32 %v1347, 16
    %v1618 = vrot.slane %v1616, 4
    %v1619 = vshll.u32 %v1347, 16
    %v1621 = vrot.slane %v1619, 5
    %v1622 = vor.u32 %v1618, %v1621
    %v1623 = vrot.slane %v1622, 4
    %v1625 = vshll.u32 %v1348, 16
    %v1627 = vrot.slane %v1625, 5
    %v1628 = vsel %vm153, %v1623, %v1627
    %v1630 = vshrl.u32 %v1349, 16
    %v1632 = vrot.slane %v1630, 4
    %v1633 = vshll.u32 %v1349, 16
    %v1635 = vrot.slane %v1633, 5
    %v1636 = vor.u32 %v1632, %v1635
    %v1637 = vrot.slane %v1636, 4
    %v1639 = vshll.u32 %v1350, 16
    %v1641 = vrot.slane %v1639, 5
    %v1642 = vsel %vm153, %v1637, %v1641
    %v1644 = vshrl.u32 %v1351, 16
    %v1646 = vrot.slane %v1644, 4
    %v1647 = vshll.u32 %v1351, 16
    %v1649 = vrot.slane %v1647, 5
    %v1650 = vor.u32 %v1646, %v1649
    %v1651 = vrot.slane %v1650, 4
    %v1653 = vshll.u32 %v1352, 16
    %v1655 = vrot.slane %v1653, 5
    %v1656 = vsel %vm153, %v1651, %v1655
    %v1658 = vshrl.u32 %v1353, 16
    %v1660 = vrot.slane %v1658, 4
    %v1661 = vshll.u32 %v1353, 16
    %v1663 = vrot.slane %v1661, 5
    %v1664 = vor.u32 %v1660, %v1663
    %v1665 = vrot.slane %v1664, 4
    %v1667 = vshll.u32 %v1354, 16
    %v1669 = vrot.slane %v1667, 5
    %v1670 = vsel %vm153, %v1665, %v1669
    %v1672 = vshrl.u32 %v1355, 16
    %v1674 = vrot.slane %v1672, 4
    %v1675 = vshll.u32 %v1355, 16
    %v1677 = vrot.slane %v1675, 5
    %v1678 = vor.u32 %v1674, %v1677
    %v1679 = vrot.slane %v1678, 4
    %v1681 = vshll.u32 %v1356, 16
    %v1683 = vrot.slane %v1681, 5
    %v1684 = vsel %vm153, %v1679, %v1683
    %v1686 = vshrl.u32 %v1357, 16
    %v1688 = vrot.slane %v1686, 4
    %v1689 = vshll.u32 %v1357, 16
    %v1691 = vrot.slane %v1689, 5
    %v1692 = vor.u32 %v1688, %v1691
    %v1693 = vrot.slane %v1692, 4
    %v1695 = vshll.u32 %v1358, 16
    %v1697 = vrot.slane %v1695, 5
    %v1698 = vsel %vm153, %v1693, %v1697
    %v1700 = vshrl.u32 %v1359, 16
    %v1702 = vrot.slane %v1700, 4
    %v1703 = vshll.u32 %v1359, 16
    %v1705 = vrot.slane %v1703, 5
    %v1706 = vor.u32 %v1702, %v1705
    %v1707 = vrot.slane %v1706, 4
    %v1709 = vshll.u32 %v1360, 16
    %v1711 = vrot.slane %v1709, 5
    %v1712 = vsel %vm153, %v1707, %v1711
    %v1714 = vshrl.u32 %v1361, 16
    %v1716 = vrot.slane %v1714, 4
    %v1717 = vshll.u32 %v1361, 16
    %v1719 = vrot.slane %v1717, 5
    %v1720 = vor.u32 %v1716, %v1719
    %v1721 = vrot.slane %v1720, 4
    %v1723 = vshll.u32 %v1362, 16
    %v1725 = vrot.slane %v1723, 5
    %v1726 = vsel %vm153, %v1721, %v1725
    %v1728 = vshrl.u32 %v1363, 16
    %v1730 = vrot.slane %v1728, 4
    %v1731 = vshll.u32 %v1363, 16
    %v1733 = vrot.slane %v1731, 5
    %v1734 = vor.u32 %v1730, %v1733
    %v1735 = vrot.slane %v1734, 4
    %v1737 = vshll.u32 %v1364, 16
    %v1739 = vrot.slane %v1737, 5
    %v1740 = vsel %vm153, %v1735, %v1739
    %v1742 = vshrl.u32 %v1365, 16
    %v1744 = vrot.slane %v1742, 4
    %v1745 = vshll.u32 %v1365, 16
    %v1747 = vrot.slane %v1745, 5
    %v1748 = vor.u32 %v1744, %v1747
    %v1749 = vrot.slane %v1748, 4
    %v1751 = vshll.u32 %v1366, 16
    %v1753 = vrot.slane %v1751, 5
    %v1754 = vsel %vm153, %v1749, %v1753
    %v1756 = vshrl.u32 %v1367, 16
    %v1758 = vrot.slane %v1756, 4
    %v1759 = vshll.u32 %v1367, 16
    %v1761 = vrot.slane %v1759, 5
    %v1762 = vor.u32 %v1758, %v1761
    %v1763 = vrot.slane %v1762, 4
    %v1765 = vshll.u32 %v1368, 16
    %v1767 = vrot.slane %v1765, 5
    %v1768 = vsel %vm153, %v1763, %v1767
    %v1770 = vshrl.u32 %v1369, 16
    %v1772 = vrot.slane %v1770, 4
    %v1773 = vshll.u32 %v1369, 16
    %v1775 = vrot.slane %v1773, 5
    %v1776 = vor.u32 %v1772, %v1775
    %v1777 = vrot.slane %v1776, 4
    %v1779 = vshll.u32 %v1370, 16
    %v1781 = vrot.slane %v1779, 5
    %v1782 = vsel %vm153, %v1777, %v1781
    %v1784 = vshrl.u32 %v1371, 16
    %v1786 = vrot.slane %v1784, 4
    %v1787 = vshll.u32 %v1371, 16
    %v1789 = vrot.slane %v1787, 5
    %v1790 = vor.u32 %v1786, %v1789
    %v1791 = vrot.slane %v1790, 4
    %v1793 = vshll.u32 %v1372, 16
    %v1795 = vrot.slane %v1793, 5
    %v1796 = vsel %vm153, %v1791, %v1795
    %v1798 = vshrl.u32 %v1373, 16
    %v1800 = vrot.slane %v1798, 4
    %v1801 = vshll.u32 %v1373, 16
    %v1803 = vrot.slane %v1801, 5
    %v1804 = vor.u32 %v1800, %v1803
    %v1805 = vrot.slane %v1804, 4
    %v1807 = vshll.u32 %v1374, 16
    %v1809 = vrot.slane %v1807, 5
    %v1810 = vsel %vm153, %v1805, %v1809
    %v1812 = vshrl.u32 %v1375, 16
    %v1814 = vrot.slane %v1812, 4
    %v1815 = vshll.u32 %v1375, 16
    %v1817 = vrot.slane %v1815, 5
    %v1818 = vor.u32 %v1814, %v1817
    %v1819 = vrot.slane %v1818, 4
    %v1821 = vshll.u32 %v1376, 16
    %v1823 = vrot.slane %v1821, 5
    %v1824 = vsel %vm153, %v1819, %v1823
    %1825 = vrot.lane.b32.xlu0 %v1390, 64
    %v1826 = vpop.permute.xlu0 %1825
    %1827 = vrot.lane.b32.xlu0 %v1404, 64
    %v1828 = vpop.permute.xlu0 %1827
    %1829 = vrot.lane.b32.xlu0 %v1418, 64
    %v1830 = vpop.permute.xlu0 %1829
    %1831 = vrot.lane.b32.xlu0 %v1432, 64
    %v1832 = vpop.permute.xlu0 %1831
    %1833 = vrot.lane.b32.xlu0 %v1446, 64
    %v1834 = vpop.permute.xlu0 %1833
    %1835 = vrot.lane.b32.xlu0 %v1460, 64
    %v1836 = vpop.permute.xlu0 %1835
    %1837 = vrot.lane.b32.xlu0 %v1474, 64
    %v1838 = vpop.permute.xlu0 %1837
    %1839 = vrot.lane.b32.xlu0 %v1488, 64
    %v1840 = vpop.permute.xlu0 %1839
    %1841 = vrot.lane.b32.xlu0 %v1502, 64
    %v1842 = vpop.permute.xlu0 %1841
    %1843 = vrot.lane.b32.xlu0 %v1516, 64
    %v1844 = vpop.permute.xlu0 %1843
    %1845 = vrot.lane.b32.xlu0 %v1530, 64
    %v1846 = vpop.permute.xlu0 %1845
    %1847 = vrot.lane.b32.xlu0 %v1544, 64
    %v1848 = vpop.permute.xlu0 %1847
    %1849 = vrot.lane.b32.xlu0 %v1558, 64
    %v1850 = vpop.permute.xlu0 %1849
    %1851 = vrot.lane.b32.xlu0 %v1572, 64
    %v1852 = vpop.permute.xlu0 %1851
    %1853 = vrot.lane.b32.xlu0 %v1586, 64
    %v1854 = vpop.permute.xlu0 %1853
    %1855 = vrot.lane.b32.xlu0 %v1600, 64
    %v1856 = vpop.permute.xlu0 %1855
    %1857 = vrot.lane.b32.xlu0 %v1614, 64
    %v1858 = vpop.permute.xlu0 %1857
    %1859 = vrot.lane.b32.xlu0 %v1628, 64
    %v1860 = vpop.permute.xlu0 %1859
    %1861 = vrot.lane.b32.xlu0 %v1642, 64
    %v1862 = vpop.permute.xlu0 %1861
    %1863 = vrot.lane.b32.xlu0 %v1656, 64
    %v1864 = vpop.permute.xlu0 %1863
    %1865 = vrot.lane.b32.xlu0 %v1670, 64
    %v1866 = vpop.permute.xlu0 %1865
    %1867 = vrot.lane.b32.xlu0 %v1684, 64
    %v1868 = vpop.permute.xlu0 %1867
    %1869 = vrot.lane.b32.xlu0 %v1698, 64
    %v1870 = vpop.permute.xlu0 %1869
    %1871 = vrot.lane.b32.xlu0 %v1712, 64
    %v1872 = vpop.permute.xlu0 %1871
    %1873 = vrot.lane.b32.xlu0 %v1726, 64
    %v1874 = vpop.permute.xlu0 %1873
    %1875 = vrot.lane.b32.xlu0 %v1740, 64
    %v1876 = vpop.permute.xlu0 %1875
    %1877 = vrot.lane.b32.xlu0 %v1754, 64
    %v1878 = vpop.permute.xlu0 %1877
    %1879 = vrot.lane.b32.xlu0 %v1768, 64
    %v1880 = vpop.permute.xlu0 %1879
    %1881 = vrot.lane.b32.xlu0 %v1782, 64
    %v1882 = vpop.permute.xlu0 %1881
    %1883 = vrot.lane.b32.xlu0 %v1796, 64
    %v1884 = vpop.permute.xlu0 %1883
    %1885 = vrot.lane.b32.xlu0 %v1810, 64
    %v1886 = vpop.permute.xlu0 %1885
    %1887 = vrot.lane.b32.xlu0 %v1824, 64
    %v1888 = vpop.permute.xlu0 %1887
    %vm1921 = vcmask 650752
    %1922 = vst.msk [vmem:[#allocation2] sm:$0xf] %vm1921, %v1826
    %1923 = vst.msk [vmem:[#allocation2 + $0x10] sm:$0xf] %vm1921, %v1828
    %1924 = vst.msk [vmem:[#allocation2 + $0x20] sm:$0xf] %vm1921, %v1830
    %1925 = vst.msk [vmem:[#allocation2 + $0x30] sm:$0xf] %vm1921, %v1832
    %1926 = vst.msk [vmem:[#allocation2 + $0x40] sm:$0xf] %vm1921, %v1834
    %1927 = vst.msk [vmem:[#allocation2 + $0x50] sm:$0xf] %vm1921, %v1836
    %1928 = vst.msk [vmem:[#allocation2 + $0x60] sm:$0xf] %vm1921, %v1838
    %1929 = vst.msk [vmem:[#allocation2 + $0x70] sm:$0xf] %vm1921, %v1840
    %1930 = vst.msk [vmem:[#allocation2 + $0x80] sm:$0xf] %vm1921, %v1842
    %1931 = vst.msk [vmem:[#allocation2 + $0x90] sm:$0xf] %vm1921, %v1844
    %1932 = vst.msk [vmem:[#allocation2 + $0xa0] sm:$0xf] %vm1921, %v1846
    %1933 = vst.msk [vmem:[#allocation2 + $0xb0] sm:$0xf] %vm1921, %v1848
    %1934 = vst.msk [vmem:[#allocation2 + $0xc0] sm:$0xf] %vm1921, %v1850
    %1935 = vst.msk [vmem:[#allocation2 + $0xd0] sm:$0xf] %vm1921, %v1852
    %1936 = vst.msk [vmem:[#allocation2 + $0xe0] sm:$0xf] %vm1921, %v1854
    %1937 = vst.msk [vmem:[#allocation2 + $0xf0] sm:$0xf] %vm1921, %v1856
    %1938 = vst.msk [vmem:[#allocation2 + $0x100] sm:$0xf] %vm1921, %v1858
    %1939 = vst.msk [vmem:[#allocation2 + $0x110] sm:$0xf] %vm1921, %v1860
    %1940 = vst.msk [vmem:[#allocation2 + $0x120] sm:$0xf] %vm1921, %v1862
    %1941 = vst.msk [vmem:[#allocation2 + $0x130] sm:$0xf] %vm1921, %v1864
    %1942 = vst.msk [vmem:[#allocation2 + $0x140] sm:$0xf] %vm1921, %v1866
    %1943 = vst.msk [vmem:[#allocation2 + $0x150] sm:$0xf] %vm1921, %v1868
    %1944 = vst.msk [vmem:[#allocation2 + $0x160] sm:$0xf] %vm1921, %v1870
    %1945 = vst.msk [vmem:[#allocation2 + $0x170] sm:$0xf] %vm1921, %v1872
    %1946 = vst.msk [vmem:[#allocation2 + $0x180] sm:$0xf] %vm1921, %v1874
    %1947 = vst.msk [vmem:[#allocation2 + $0x190] sm:$0xf] %vm1921, %v1876
    %1948 = vst.msk [vmem:[#allocation2 + $0x1a0] sm:$0xf] %vm1921, %v1878
    %1949 = vst.msk [vmem:[#allocation2 + $0x1b0] sm:$0xf] %vm1921, %v1880
    %1950 = vst.msk [vmem:[#allocation2 + $0x1c0] sm:$0xf] %vm1921, %v1882
    %1951 = vst.msk [vmem:[#allocation2 + $0x1d0] sm:$0xf] %vm1921, %v1884
    %1952 = vst.msk [vmem:[#allocation2 + $0x1e0] sm:$0xf] %vm1921, %v1886
    %1953 = vst.msk [vmem:[#allocation2 + $0x1f0] sm:$0xf] %vm1921, %v1888
    %v1954 = vld [vmem:[%s1119] sm:$0xe]
    %v1955 = vld [vmem:[%s1119 + $0x4] sm:$0x1]
    %v1956 = vld [vmem:[%s1119 + $0x8] sm:$0xe]
    %v1957 = vld [vmem:[%s1119 + $0xc] sm:$0x1]
    %v1958 = vld [vmem:[%s1119 + $0x10] sm:$0xe]
    %v1959 = vld [vmem:[%s1119 + $0x14] sm:$0x1]
    %v1960 = vld [vmem:[%s1119 + $0x18] sm:$0xe]
    %v1961 = vld [vmem:[%s1119 + $0x1c] sm:$0x1]
    %v1962 = vld [vmem:[%s1119 + $0x20] sm:$0xe]
    %v1963 = vld [vmem:[%s1119 + $0x24] sm:$0x1]
    %v1964 = vld [vmem:[%s1119 + $0x28] sm:$0xe]
    %v1965 = vld [vmem:[%s1119 + $0x2c] sm:$0x1]
    %v1966 = vld [vmem:[%s1119 + $0x30] sm:$0xe]
    %v1967 = vld [vmem:[%s1119 + $0x34] sm:$0x1]
    %v1968 = vld [vmem:[%s1119 + $0x38] sm:$0xe]
    %v1969 = vld [vmem:[%s1119 + $0x3c] sm:$0x1]
    %v1970 = vld [vmem:[%s1119 + $0x50] sm:$0xe]
    %v1971 = vld [vmem:[%s1119 + $0x54] sm:$0x1]
    %v1972 = vld [vmem:[%s1119 + $0x58] sm:$0xe]
    %v1973 = vld [vmem:[%s1119 + $0x5c] sm:$0x1]
    %v1974 = vld [vmem:[%s1119 + $0x60] sm:$0xe]
    %v1975 = vld [vmem:[%s1119 + $0x64] sm:$0x1]
    %v1976 = vld [vmem:[%s1119 + $0x68] sm:$0xe]
    %v1977 = vld [vmem:[%s1119 + $0x6c] sm:$0x1]
    %v1978 = vld [vmem:[%s1119 + $0x70] sm:$0xe]
    %v1979 = vld [vmem:[%s1119 + $0x74] sm:$0x1]
    %v1980 = vld [vmem:[%s1119 + $0x78] sm:$0xe]
    %v1981 = vld [vmem:[%s1119 + $0x7c] sm:$0x1]
    %v1982 = vld [vmem:[%s1119 + $0x80] sm:$0xe]
    %v1983 = vld [vmem:[%s1119 + $0x84] sm:$0x1]
    %v1984 = vld [vmem:[%s1119 + $0x88] sm:$0xe]
    %v1985 = vld [vmem:[%s1119 + $0x8c] sm:$0x1]
    %v1986 = vld [vmem:[%s1119 + $0xa0] sm:$0xe]
    %v1987 = vld [vmem:[%s1119 + $0xa4] sm:$0x1]
    %v1988 = vld [vmem:[%s1119 + $0xa8] sm:$0xe]
    %v1989 = vld [vmem:[%s1119 + $0xac] sm:$0x1]
    %v1990 = vld [vmem:[%s1119 + $0xb0] sm:$0xe]
    %v1991 = vld [vmem:[%s1119 + $0xb4] sm:$0x1]
    %v1992 = vld [vmem:[%s1119 + $0xb8] sm:$0xe]
    %v1993 = vld [vmem:[%s1119 + $0xbc] sm:$0x1]
    %v1994 = vld [vmem:[%s1119 + $0xc0] sm:$0xe]
    %v1995 = vld [vmem:[%s1119 + $0xc4] sm:$0x1]
    %v1996 = vld [vmem:[%s1119 + $0xc8] sm:$0xe]
    %v1997 = vld [vmem:[%s1119 + $0xcc] sm:$0x1]
    %v1998 = vld [vmem:[%s1119 + $0xd0] sm:$0xe]
    %v1999 = vld [vmem:[%s1119 + $0xd4] sm:$0x1]
    %v2000 = vld [vmem:[%s1119 + $0xd8] sm:$0xe]
    %v2001 = vld [vmem:[%s1119 + $0xdc] sm:$0x1]
    %v2002 = vld [vmem:[%s1119 + $0xf0] sm:$0xe]
    %v2003 = vld [vmem:[%s1119 + $0xf4] sm:$0x1]
    %v2004 = vld [vmem:[%s1119 + $0xf8] sm:$0xe]
    %v2005 = vld [vmem:[%s1119 + $0xfc] sm:$0x1]
    %v2006 = vld [vmem:[%s1119 + $0x100] sm:$0xe]
    %v2007 = vld [vmem:[%s1119 + $0x104] sm:$0x1]
    %v2008 = vld [vmem:[%s1119 + $0x108] sm:$0xe]
    %v2009 = vld [vmem:[%s1119 + $0x10c] sm:$0x1]
    %v2010 = vld [vmem:[%s1119 + $0x110] sm:$0xe]
    %v2011 = vld [vmem:[%s1119 + $0x114] sm:$0x1]
    %v2012 = vld [vmem:[%s1119 + $0x118] sm:$0xe]
    %v2013 = vld [vmem:[%s1119 + $0x11c] sm:$0x1]
    %v2014 = vld [vmem:[%s1119 + $0x120] sm:$0xe]
    %v2015 = vld [vmem:[%s1119 + $0x124] sm:$0x1]
    %v2016 = vld [vmem:[%s1119 + $0x128] sm:$0xe]
    %v2017 = vld [vmem:[%s1119 + $0x12c] sm:$0x1]
    %v2082 = vrot.slane %v1954, 5
    %v2083 = vrot.slane %v2082, 4
    %v2084 = vrot.slane %v1955, 5
    %v2085 = vsel %vm861, %v2083, %v2084
    %v2086 = vrot.slane %v1956, 5
    %v2087 = vrot.slane %v2086, 4
    %v2088 = vrot.slane %v1957, 5
    %v2089 = vsel %vm861, %v2087, %v2088
    %v2090 = vrot.slane %v1958, 5
    %v2091 = vrot.slane %v2090, 4
    %v2092 = vrot.slane %v1959, 5
    %v2093 = vsel %vm861, %v2091, %v2092
    %v2094 = vrot.slane %v1960, 5
    %v2095 = vrot.slane %v2094, 4
    %v2096 = vrot.slane %v1961, 5
    %v2097 = vsel %vm861, %v2095, %v2096
    %v2098 = vrot.slane %v1962, 5
    %v2099 = vrot.slane %v2098, 4
    %v2100 = vrot.slane %v1963, 5
    %v2101 = vsel %vm861, %v2099, %v2100
    %v2102 = vrot.slane %v1964, 5
    %v2103 = vrot.slane %v2102, 4
    %v2104 = vrot.slane %v1965, 5
    %v2105 = vsel %vm861, %v2103, %v2104
    %v2106 = vrot.slane %v1966, 5
    %v2107 = vrot.slane %v2106, 4
    %v2108 = vrot.slane %v1967, 5
    %v2109 = vsel %vm861, %v2107, %v2108
    %v2110 = vrot.slane %v1968, 5
    %v2111 = vrot.slane %v2110, 4
    %v2112 = vrot.slane %v1969, 5
    %v2113 = vsel %vm861, %v2111, %v2112
    %v2114 = vrot.slane %v1970, 5
    %v2115 = vrot.slane %v2114, 4
    %v2116 = vrot.slane %v1971, 5
    %v2117 = vsel %vm861, %v2115, %v2116
    %v2118 = vrot.slane %v1972, 5
    %v2119 = vrot.slane %v2118, 4
    %v2120 = vrot.slane %v1973, 5
    %v2121 = vsel %vm861, %v2119, %v2120
    %v2122 = vrot.slane %v1974, 5
    %v2123 = vrot.slane %v2122, 4
    %v2124 = vrot.slane %v1975, 5
    %v2125 = vsel %vm861, %v2123, %v2124
    %v2126 = vrot.slane %v1976, 5
    %v2127 = vrot.slane %v2126, 4
    %v2128 = vrot.slane %v1977, 5
    %v2129 = vsel %vm861, %v2127, %v2128
    %v2130 = vrot.slane %v1978, 5
    %v2131 = vrot.slane %v2130, 4
    %v2132 = vrot.slane %v1979, 5
    %v2133 = vsel %vm861, %v2131, %v2132
    %v2134 = vrot.slane %v1980, 5
    %v2135 = vrot.slane %v2134, 4
    %v2136 = vrot.slane %v1981, 5
    %v2137 = vsel %vm861, %v2135, %v2136
    %v2138 = vrot.slane %v1982, 5
    %v2139 = vrot.slane %v2138, 4
    %v2140 = vrot.slane %v1983, 5
    %v2141 = vsel %vm861, %v2139, %v2140
    %v2142 = vrot.slane %v1984, 5
    %v2143 = vrot.slane %v2142, 4
    %v2144 = vrot.slane %v1985, 5
    %v2145 = vsel %vm861, %v2143, %v2144
    %v2146 = vrot.slane %v1986, 5
    %v2147 = vrot.slane %v2146, 4
    %v2148 = vrot.slane %v1987, 5
    %v2149 = vsel %vm861, %v2147, %v2148
    %v2150 = vrot.slane %v1988, 5
    %v2151 = vrot.slane %v2150, 4
    %v2152 = vrot.slane %v1989, 5
    %v2153 = vsel %vm861, %v2151, %v2152
    %v2154 = vrot.slane %v1990, 5
    %v2155 = vrot.slane %v2154, 4
    %v2156 = vrot.slane %v1991, 5
    %v2157 = vsel %vm861, %v2155, %v2156
    %v2158 = vrot.slane %v1992, 5
    %v2159 = vrot.slane %v2158, 4
    %v2160 = vrot.slane %v1993, 5
    %v2161 = vsel %vm861, %v2159, %v2160
    %v2162 = vrot.slane %v1994, 5
    %v2163 = vrot.slane %v2162, 4
    %v2164 = vrot.slane %v1995, 5
    %v2165 = vsel %vm861, %v2163, %v2164
    %v2166 = vrot.slane %v1996, 5
    %v2167 = vrot.slane %v2166, 4
    %v2168 = vrot.slane %v1997, 5
    %v2169 = vsel %vm861, %v2167, %v2168
    %v2170 = vrot.slane %v1998, 5
    %v2171 = vrot.slane %v2170, 4
    %v2172 = vrot.slane %v1999, 5
    %v2173 = vsel %vm861, %v2171, %v2172
    %v2174 = vrot.slane %v2000, 5
    %v2175 = vrot.slane %v2174, 4
    %v2176 = vrot.slane %v2001, 5
    %v2177 = vsel %vm861, %v2175, %v2176
    %v2178 = vrot.slane %v2002, 5
    %v2179 = vrot.slane %v2178, 4
    %v2180 = vrot.slane %v2003, 5
    %v2181 = vsel %vm861, %v2179, %v2180
    %v2182 = vrot.slane %v2004, 5
    %v2183 = vrot.slane %v2182, 4
    %v2184 = vrot.slane %v2005, 5
    %v2185 = vsel %vm861, %v2183, %v2184
    %v2186 = vrot.slane %v2006, 5
    %v2187 = vrot.slane %v2186, 4
    %v2188 = vrot.slane %v2007, 5
    %v2189 = vsel %vm861, %v2187, %v2188
    %v2190 = vrot.slane %v2008, 5
    %v2191 = vrot.slane %v2190, 4
    %v2192 = vrot.slane %v2009, 5
    %v2193 = vsel %vm861, %v2191, %v2192
    %v2194 = vrot.slane %v2010, 5
    %v2195 = vrot.slane %v2194, 4
    %v2196 = vrot.slane %v2011, 5
    %v2197 = vsel %vm861, %v2195, %v2196
    %v2198 = vrot.slane %v2012, 5
    %v2199 = vrot.slane %v2198, 4
    %v2200 = vrot.slane %v2013, 5
    %v2201 = vsel %vm861, %v2199, %v2200
    %v2202 = vrot.slane %v2014, 5
    %v2203 = vrot.slane %v2202, 4
    %v2204 = vrot.slane %v2015, 5
    %v2205 = vsel %vm861, %v2203, %v2204
    %v2206 = vrot.slane %v2016, 5
    %v2207 = vrot.slane %v2206, 4
    %v2208 = vrot.slane %v2017, 5
    %v2209 = vsel %vm861, %v2207, %v2208
    %2210 = vrot.lane.b32.xlu0 %v2085, 80
    %v2211 = vpop.permute.xlu0 %2210
    %2212 = vrot.lane.b32.xlu0 %v2089, 80
    %v2213 = vpop.permute.xlu0 %2212
    %2214 = vrot.lane.b32.xlu0 %v2093, 80
    %v2215 = vpop.permute.xlu0 %2214
    %2216 = vrot.lane.b32.xlu0 %v2097, 80
    %v2217 = vpop.permute.xlu0 %2216
    %2218 = vrot.lane.b32.xlu0 %v2101, 80
    %v2219 = vpop.permute.xlu0 %2218
    %2220 = vrot.lane.b32.xlu0 %v2105, 80
    %v2221 = vpop.permute.xlu0 %2220
    %2222 = vrot.lane.b32.xlu0 %v2109, 80
    %v2223 = vpop.permute.xlu0 %2222
    %2224 = vrot.lane.b32.xlu0 %v2113, 80
    %v2225 = vpop.permute.xlu0 %2224
    %2226 = vrot.lane.b32.xlu0 %v2117, 80
    %v2227 = vpop.permute.xlu0 %2226
    %2228 = vrot.lane.b32.xlu0 %v2121, 80
    %v2229 = vpop.permute.xlu0 %2228
    %2230 = vrot.lane.b32.xlu0 %v2125, 80
    %v2231 = vpop.permute.xlu0 %2230
    %2232 = vrot.lane.b32.xlu0 %v2129, 80
    %v2233 = vpop.permute.xlu0 %2232
    %2234 = vrot.lane.b32.xlu0 %v2133, 80
    %v2235 = vpop.permute.xlu0 %2234
    %2236 = vrot.lane.b32.xlu0 %v2137, 80
    %v2237 = vpop.permute.xlu0 %2236
    %2238 = vrot.lane.b32.xlu0 %v2141, 80
    %v2239 = vpop.permute.xlu0 %2238
    %2240 = vrot.lane.b32.xlu0 %v2145, 80
    %v2241 = vpop.permute.xlu0 %2240
    %2242 = vrot.lane.b32.xlu0 %v2149, 80
    %v2243 = vpop.permute.xlu0 %2242
    %2244 = vrot.lane.b32.xlu0 %v2153, 80
    %v2245 = vpop.permute.xlu0 %2244
    %2246 = vrot.lane.b32.xlu0 %v2157, 80
    %v2247 = vpop.permute.xlu0 %2246
    %2248 = vrot.lane.b32.xlu0 %v2161, 80
    %v2249 = vpop.permute.xlu0 %2248
    %2250 = vrot.lane.b32.xlu0 %v2165, 80
    %v2251 = vpop.permute.xlu0 %2250
    %2252 = vrot.lane.b32.xlu0 %v2169, 80
    %v2253 = vpop.permute.xlu0 %2252
    %2254 = vrot.lane.b32.xlu0 %v2173, 80
    %v2255 = vpop.permute.xlu0 %2254
    %2256 = vrot.lane.b32.xlu0 %v2177, 80
    %v2257 = vpop.permute.xlu0 %2256
    %2258 = vrot.lane.b32.xlu0 %v2181, 80
    %v2259 = vpop.permute.xlu0 %2258
    %2260 = vrot.lane.b32.xlu0 %v2185, 80
    %v2261 = vpop.permute.xlu0 %2260
    %2262 = vrot.lane.b32.xlu0 %v2189, 80
    %v2263 = vpop.permute.xlu0 %2262
    %2264 = vrot.lane.b32.xlu0 %v2193, 80
    %v2265 = vpop.permute.xlu0 %2264
    %2266 = vrot.lane.b32.xlu0 %v2197, 80
    %v2267 = vpop.permute.xlu0 %2266
    %2268 = vrot.lane.b32.xlu0 %v2201, 80
    %v2269 = vpop.permute.xlu0 %2268
    %2270 = vrot.lane.b32.xlu0 %v2205, 80
    %v2271 = vpop.permute.xlu0 %2270
    %2272 = vrot.lane.b32.xlu0 %v2209, 80
    %v2273 = vpop.permute.xlu0 %2272
    %vm2306 = vcmask 781952
    %2307 = vst.msk [vmem:[#allocation2] sm:$0xf] %vm2306, %v2211
    %2308 = vst.msk [vmem:[#allocation2 + $0x10] sm:$0xf] %vm2306, %v2213
    %2309 = vst.msk [vmem:[#allocation2 + $0x20] sm:$0xf] %vm2306, %v2215
    %2310 = vst.msk [vmem:[#allocation2 + $0x30] sm:$0xf] %vm2306, %v2217
    %2311 = vst.msk [vmem:[#allocation2 + $0x40] sm:$0xf] %vm2306, %v2219
    %2312 = vst.msk [vmem:[#allocation2 + $0x50] sm:$0xf] %vm2306, %v2221
    %2313 = vst.msk [vmem:[#allocation2 + $0x60] sm:$0xf] %vm2306, %v2223
    %2314 = vst.msk [vmem:[#allocation2 + $0x70] sm:$0xf] %vm2306, %v2225
    %2315 = vst.msk [vmem:[#allocation2 + $0x80] sm:$0xf] %vm2306, %v2227
    %2316 = vst.msk [vmem:[#allocation2 + $0x90] sm:$0xf] %vm2306, %v2229
    %2317 = vst.msk [vmem:[#allocation2 + $0xa0] sm:$0xf] %vm2306, %v2231
    %2318 = vst.msk [vmem:[#allocation2 + $0xb0] sm:$0xf] %vm2306, %v2233
    %2319 = vst.msk [vmem:[#allocation2 + $0xc0] sm:$0xf] %vm2306, %v2235
    %2320 = vst.msk [vmem:[#allocation2 + $0xd0] sm:$0xf] %vm2306, %v2237
    %2321 = vst.msk [vmem:[#allocation2 + $0xe0] sm:$0xf] %vm2306, %v2239
    %2322 = vst.msk [vmem:[#allocation2 + $0xf0] sm:$0xf] %vm2306, %v2241
    %2323 = vst.msk [vmem:[#allocation2 + $0x100] sm:$0xf] %vm2306, %v2243
    %2324 = vst.msk [vmem:[#allocation2 + $0x110] sm:$0xf] %vm2306, %v2245
    %2325 = vst.msk [vmem:[#allocation2 + $0x120] sm:$0xf] %vm2306, %v2247
    %2326 = vst.msk [vmem:[#allocation2 + $0x130] sm:$0xf] %vm2306, %v2249
    %2327 = vst.msk [vmem:[#allocation2 + $0x140] sm:$0xf] %vm2306, %v2251
    %2328 = vst.msk [vmem:[#allocation2 + $0x150] sm:$0xf] %vm2306, %v2253
    %2329 = vst.msk [vmem:[#allocation2 + $0x160] sm:$0xf] %vm2306, %v2255
    %2330 = vst.msk [vmem:[#allocation2 + $0x170] sm:$0xf] %vm2306, %v2257
    %2331 = vst.msk [vmem:[#allocation2 + $0x180] sm:$0xf] %vm2306, %v2259
    %2332 = vst.msk [vmem:[#allocation2 + $0x190] sm:$0xf] %vm2306, %v2261
    %2333 = vst.msk [vmem:[#allocation2 + $0x1a0] sm:$0xf] %vm2306, %v2263
    %2334 = vst.msk [vmem:[#allocation2 + $0x1b0] sm:$0xf] %vm2306, %v2265
    %2335 = vst.msk [vmem:[#allocation2 + $0x1c0] sm:$0xf] %vm2306, %v2267
    %2336 = vst.msk [vmem:[#allocation2 + $0x1d0] sm:$0xf] %vm2306, %v2269
    %2337 = vst.msk [vmem:[#allocation2 + $0x1e0] sm:$0xf] %vm2306, %v2271
    %2338 = vst.msk [vmem:[#allocation2 + $0x1f0] sm:$0xf] %vm2306, %v2273
    %s2339 = scalar_lea.vmem %s0, 16
    %v2340 = vld [vmem:[%s2339] sm:$0xf]
    %v2341 = vld [vmem:[%s2339 + $0x8] sm:$0xf]
    %v2342 = vld [vmem:[%s2339 + $0x10] sm:$0xf]
    %v2343 = vld [vmem:[%s2339 + $0x18] sm:$0xf]
    %v2344 = vld [vmem:[%s2339 + $0x20] sm:$0xf]
    %v2345 = vld [vmem:[%s2339 + $0x28] sm:$0xf]
    %v2346 = vld [vmem:[%s2339 + $0x30] sm:$0xf]
    %v2347 = vld [vmem:[%s2339 + $0x38] sm:$0xf]
    %v2348 = vld [vmem:[%s2339 + $0x50] sm:$0xf]
    %v2349 = vld [vmem:[%s2339 + $0x58] sm:$0xf]
    %v2350 = vld [vmem:[%s2339 + $0x60] sm:$0xf]
    %v2351 = vld [vmem:[%s2339 + $0x68] sm:$0xf]
    %v2352 = vld [vmem:[%s2339 + $0x70] sm:$0xf]
    %v2353 = vld [vmem:[%s2339 + $0x78] sm:$0xf]
    %v2354 = vld [vmem:[%s2339 + $0x80] sm:$0xf]
    %v2355 = vld [vmem:[%s2339 + $0x88] sm:$0xf]
    %v2356 = vld [vmem:[%s2339 + $0xa0] sm:$0xf]
    %v2357 = vld [vmem:[%s2339 + $0xa8] sm:$0xf]
    %v2358 = vld [vmem:[%s2339 + $0xb0] sm:$0xf]
    %v2359 = vld [vmem:[%s2339 + $0xb8] sm:$0xf]
    %v2360 = vld [vmem:[%s2339 + $0xc0] sm:$0xf]
    %v2361 = vld [vmem:[%s2339 + $0xc8] sm:$0xf]
    %v2362 = vld [vmem:[%s2339 + $0xd0] sm:$0xf]
    %v2363 = vld [vmem:[%s2339 + $0xd8] sm:$0xf]
    %v2364 = vld [vmem:[%s2339 + $0xf0] sm:$0xf]
    %v2365 = vld [vmem:[%s2339 + $0xf8] sm:$0xf]
    %v2366 = vld [vmem:[%s2339 + $0x100] sm:$0xf]
    %v2367 = vld [vmem:[%s2339 + $0x108] sm:$0xf]
    %v2368 = vld [vmem:[%s2339 + $0x110] sm:$0xf]
    %v2369 = vld [vmem:[%s2339 + $0x118] sm:$0xf]
    %v2370 = vld [vmem:[%s2339 + $0x120] sm:$0xf]
    %v2371 = vld [vmem:[%s2339 + $0x128] sm:$0xf]
    %2404 = vrot.lane.b32.xlu0 %v2340, 96
    %v2405 = vpop.permute.xlu0 %2404
    %2406 = vrot.lane.b32.xlu0 %v2341, 96
    %v2407 = vpop.permute.xlu0 %2406
    %2408 = vrot.lane.b32.xlu0 %v2342, 96
    %v2409 = vpop.permute.xlu0 %2408
    %2410 = vrot.lane.b32.xlu0 %v2343, 96
    %v2411 = vpop.permute.xlu0 %2410
    %2412 = vrot.lane.b32.xlu0 %v2344, 96
    %v2413 = vpop.permute.xlu0 %2412
    %2414 = vrot.lane.b32.xlu0 %v2345, 96
    %v2415 = vpop.permute.xlu0 %2414
    %2416 = vrot.lane.b32.xlu0 %v2346, 96
    %v2417 = vpop.permute.xlu0 %2416
    %2418 = vrot.lane.b32.xlu0 %v2347, 96
    %v2419 = vpop.permute.xlu0 %2418
    %2420 = vrot.lane.b32.xlu0 %v2348, 96
    %v2421 = vpop.permute.xlu0 %2420
    %2422 = vrot.lane.b32.xlu0 %v2349, 96
    %v2423 = vpop.permute.xlu0 %2422
    %2424 = vrot.lane.b32.xlu0 %v2350, 96
    %v2425 = vpop.permute.xlu0 %2424
    %2426 = vrot.lane.b32.xlu0 %v2351, 96
    %v2427 = vpop.permute.xlu0 %2426
    %2428 = vrot.lane.b32.xlu0 %v2352, 96
    %v2429 = vpop.permute.xlu0 %2428
    %2430 = vrot.lane.b32.xlu0 %v2353, 96
    %v2431 = vpop.permute.xlu0 %2430
    %2432 = vrot.lane.b32.xlu0 %v2354, 96
    %v2433 = vpop.permute.xlu0 %2432
    %2434 = vrot.lane.b32.xlu0 %v2355, 96
    %v2435 = vpop.permute.xlu0 %2434
    %2436 = vrot.lane.b32.xlu0 %v2356, 96
    %v2437 = vpop.permute.xlu0 %2436
    %2438 = vrot.lane.b32.xlu0 %v2357, 96
    %v2439 = vpop.permute.xlu0 %2438
    %2440 = vrot.lane.b32.xlu0 %v2358, 96
    %v2441 = vpop.permute.xlu0 %2440
    %2442 = vrot.lane.b32.xlu0 %v2359, 96
    %v2443 = vpop.permute.xlu0 %2442
    %2444 = vrot.lane.b32.xlu0 %v2360, 96
    %v2445 = vpop.permute.xlu0 %2444
    %2446 = vrot.lane.b32.xlu0 %v2361, 96
    %v2447 = vpop.permute.xlu0 %2446
    %2448 = vrot.lane.b32.xlu0 %v2362, 96
    %v2449 = vpop.permute.xlu0 %2448
    %2450 = vrot.lane.b32.xlu0 %v2363, 96
    %v2451 = vpop.permute.xlu0 %2450
    %2452 = vrot.lane.b32.xlu0 %v2364, 96
    %v2453 = vpop.permute.xlu0 %2452
    %2454 = vrot.lane.b32.xlu0 %v2365, 96
    %v2455 = vpop.permute.xlu0 %2454
    %2456 = vrot.lane.b32.xlu0 %v2366, 96
    %v2457 = vpop.permute.xlu0 %2456
    %2458 = vrot.lane.b32.xlu0 %v2367, 96
    %v2459 = vpop.permute.xlu0 %2458
    %2460 = vrot.lane.b32.xlu0 %v2368, 96
    %v2461 = vpop.permute.xlu0 %2460
    %2462 = vrot.lane.b32.xlu0 %v2369, 96
    %v2463 = vpop.permute.xlu0 %2462
    %2464 = vrot.lane.b32.xlu0 %v2370, 96
    %v2465 = vpop.permute.xlu0 %2464
    %2466 = vrot.lane.b32.xlu0 %v2371, 96
    %v2467 = vpop.permute.xlu0 %2466
    %vm2500 = vcmask 913152
    %2501 = vst.msk [vmem:[#allocation2] sm:$0xf] %vm2500, %v2405
    %2502 = vst.msk [vmem:[#allocation2 + $0x10] sm:$0xf] %vm2500, %v2407
    %2503 = vst.msk [vmem:[#allocation2 + $0x20] sm:$0xf] %vm2500, %v2409
    %2504 = vst.msk [vmem:[#allocation2 + $0x30] sm:$0xf] %vm2500, %v2411
    %2505 = vst.msk [vmem:[#allocation2 + $0x40] sm:$0xf] %vm2500, %v2413
    %2506 = vst.msk [vmem:[#allocation2 + $0x50] sm:$0xf] %vm2500, %v2415
    %2507 = vst.msk [vmem:[#allocation2 + $0x60] sm:$0xf] %vm2500, %v2417
    %2508 = vst.msk [vmem:[#allocation2 + $0x70] sm:$0xf] %vm2500, %v2419
    %2509 = vst.msk [vmem:[#allocation2 + $0x80] sm:$0xf] %vm2500, %v2421
    %2510 = vst.msk [vmem:[#allocation2 + $0x90] sm:$0xf] %vm2500, %v2423
    %2511 = vst.msk [vmem:[#allocation2 + $0xa0] sm:$0xf] %vm2500, %v2425
    %2512 = vst.msk [vmem:[#allocation2 + $0xb0] sm:$0xf] %vm2500, %v2427
    %2513 = vst.msk [vmem:[#allocation2 + $0xc0] sm:$0xf] %vm2500, %v2429
    %2514 = vst.msk [vmem:[#allocation2 + $0xd0] sm:$0xf] %vm2500, %v2431
    %2515 = vst.msk [vmem:[#allocation2 + $0xe0] sm:$0xf] %vm2500, %v2433
    %2516 = vst.msk [vmem:[#allocation2 + $0xf0] sm:$0xf] %vm2500, %v2435
    %2517 = vst.msk [vmem:[#allocation2 + $0x100] sm:$0xf] %vm2500, %v2437
    %2518 = vst.msk [vmem:[#allocation2 + $0x110] sm:$0xf] %vm2500, %v2439
    %2519 = vst.msk [vmem:[#allocation2 + $0x120] sm:$0xf] %vm2500, %v2441
    %2520 = vst.msk [vmem:[#allocation2 + $0x130] sm:$0xf] %vm2500, %v2443
    %2521 = vst.msk [vmem:[#allocation2 + $0x140] sm:$0xf] %vm2500, %v2445
    %2522 = vst.msk [vmem:[#allocation2 + $0x150] sm:$0xf] %vm2500, %v2447
    %2523 = vst.msk [vmem:[#allocation2 + $0x160] sm:$0xf] %vm2500, %v2449
    %2524 = vst.msk [vmem:[#allocation2 + $0x170] sm:$0xf] %vm2500, %v2451
    %2525 = vst.msk [vmem:[#allocation2 + $0x180] sm:$0xf] %vm2500, %v2453
    %2526 = vst.msk [vmem:[#allocation2 + $0x190] sm:$0xf] %vm2500, %v2455
    %2527 = vst.msk [vmem:[#allocation2 + $0x1a0] sm:$0xf] %vm2500, %v2457
    %2528 = vst.msk [vmem:[#allocation2 + $0x1b0] sm:$0xf] %vm2500, %v2459
    %2529 = vst.msk [vmem:[#allocation2 + $0x1c0] sm:$0xf] %vm2500, %v2461
    %2530 = vst.msk [vmem:[#allocation2 + $0x1d0] sm:$0xf] %vm2500, %v2463
    %2531 = vst.msk [vmem:[#allocation2 + $0x1e0] sm:$0xf] %vm2500, %v2465
    %2532 = vst.msk [vmem:[#allocation2 + $0x1f0] sm:$0xf] %vm2500, %v2467
    %v2533 = vld [vmem:[%s2339] sm:$0xf]
    %v2534 = vld [vmem:[%s2339 + $0x4] sm:$0x1]
    %v2535 = vld [vmem:[%s2339 + $0x8] sm:$0xf]
    %v2536 = vld [vmem:[%s2339 + $0xc] sm:$0x1]
    %v2537 = vld [vmem:[%s2339 + $0x10] sm:$0xf]
    %v2538 = vld [vmem:[%s2339 + $0x14] sm:$0x1]
    %v2539 = vld [vmem:[%s2339 + $0x18] sm:$0xf]
    %v2540 = vld [vmem:[%s2339 + $0x1c] sm:$0x1]
    %v2541 = vld [vmem:[%s2339 + $0x20] sm:$0xf]
    %v2542 = vld [vmem:[%s2339 + $0x24] sm:$0x1]
    %v2543 = vld [vmem:[%s2339 + $0x28] sm:$0xf]
    %v2544 = vld [vmem:[%s2339 + $0x2c] sm:$0x1]
    %v2545 = vld [vmem:[%s2339 + $0x30] sm:$0xf]
    %v2546 = vld [vmem:[%s2339 + $0x34] sm:$0x1]
    %v2547 = vld [vmem:[%s2339 + $0x38] sm:$0xf]
    %v2548 = vld [vmem:[%s2339 + $0x3c] sm:$0x1]
    %v2549 = vld [vmem:[%s2339 + $0x50] sm:$0xf]
    %v2550 = vld [vmem:[%s2339 + $0x54] sm:$0x1]
    %v2551 = vld [vmem:[%s2339 + $0x58] sm:$0xf]
    %v2552 = vld [vmem:[%s2339 + $0x5c] sm:$0x1]
    %v2553 = vld [vmem:[%s2339 + $0x60] sm:$0xf]
    %v2554 = vld [vmem:[%s2339 + $0x64] sm:$0x1]
    %v2555 = vld [vmem:[%s2339 + $0x68] sm:$0xf]
    %v2556 = vld [vmem:[%s2339 + $0x6c] sm:$0x1]
    %v2557 = vld [vmem:[%s2339 + $0x70] sm:$0xf]
    %v2558 = vld [vmem:[%s2339 + $0x74] sm:$0x1]
    %v2559 = vld [vmem:[%s2339 + $0x78] sm:$0xf]
    %v2560 = vld [vmem:[%s2339 + $0x7c] sm:$0x1]
    %v2561 = vld [vmem:[%s2339 + $0x80] sm:$0xf]
    %v2562 = vld [vmem:[%s2339 + $0x84] sm:$0x1]
    %v2563 = vld [vmem:[%s2339 + $0x88] sm:$0xf]
    %v2564 = vld [vmem:[%s2339 + $0x8c] sm:$0x1]
    %v2565 = vld [vmem:[%s2339 + $0xa0] sm:$0xf]
    %v2566 = vld [vmem:[%s2339 + $0xa4] sm:$0x1]
    %v2567 = vld [vmem:[%s2339 + $0xa8] sm:$0xf]
    %v2568 = vld [vmem:[%s2339 + $0xac] sm:$0x1]
    %v2569 = vld [vmem:[%s2339 + $0xb0] sm:$0xf]
    %v2570 = vld [vmem:[%s2339 + $0xb4] sm:$0x1]
    %v2571 = vld [vmem:[%s2339 + $0xb8] sm:$0xf]
    %v2572 = vld [vmem:[%s2339 + $0xbc] sm:$0x1]
    %v2573 = vld [vmem:[%s2339 + $0xc0] sm:$0xf]
    %v2574 = vld [vmem:[%s2339 + $0xc4] sm:$0x1]
    %v2575 = vld [vmem:[%s2339 + $0xc8] sm:$0xf]
    %v2576 = vld [vmem:[%s2339 + $0xcc] sm:$0x1]
    %v2577 = vld [vmem:[%s2339 + $0xd0] sm:$0xf]
    %v2578 = vld [vmem:[%s2339 + $0xd4] sm:$0x1]
    %v2579 = vld [vmem:[%s2339 + $0xd8] sm:$0xf]
    %v2580 = vld [vmem:[%s2339 + $0xdc] sm:$0x1]
    %v2581 = vld [vmem:[%s2339 + $0xf0] sm:$0xf]
    %v2582 = vld [vmem:[%s2339 + $0xf4] sm:$0x1]
    %v2583 = vld [vmem:[%s2339 + $0xf8] sm:$0xf]
    %v2584 = vld [vmem:[%s2339 + $0xfc] sm:$0x1]
    %v2585 = vld [vmem:[%s2339 + $0x100] sm:$0xf]
    %v2586 = vld [vmem:[%s2339 + $0x104] sm:$0x1]
    %v2587 = vld [vmem:[%s2339 + $0x108] sm:$0xf]
    %v2588 = vld [vmem:[%s2339 + $0x10c] sm:$0x1]
    %v2589 = vld [vmem:[%s2339 + $0x110] sm:$0xf]
    %v2590 = vld [vmem:[%s2339 + $0x114] sm:$0x1]
    %v2591 = vld [vmem:[%s2339 + $0x118] sm:$0xf]
    %v2592 = vld [vmem:[%s2339 + $0x11c] sm:$0x1]
    %v2593 = vld [vmem:[%s2339 + $0x120] sm:$0xf]
    %v2594 = vld [vmem:[%s2339 + $0x124] sm:$0x1]
    %v2595 = vld [vmem:[%s2339 + $0x128] sm:$0xf]
    %v2596 = vld [vmem:[%s2339 + $0x12c] sm:$0x1]
    %v2598 = vshrl.u32 %v2533, 16
    %v2600 = vrot.slane %v2598, 4
    %v2601 = vshll.u32 %v2533, 16
    %v2603 = vrot.slane %v2601, 5
    %v2604 = vor.u32 %v2600, %v2603
    %v2605 = vrot.slane %v2604, 4
    %v2607 = vshll.u32 %v2534, 16
    %v2609 = vrot.slane %v2607, 5
    %v2610 = vsel %vm153, %v2605, %v2609
    %v2612 = vshrl.u32 %v2535, 16
    %v2614 = vrot.slane %v2612, 4
    %v2615 = vshll.u32 %v2535, 16
    %v2617 = vrot.slane %v2615, 5
    %v2618 = vor.u32 %v2614, %v2617
    %v2619 = vrot.slane %v2618, 4
    %v2621 = vshll.u32 %v2536, 16
    %v2623 = vrot.slane %v2621, 5
    %v2624 = vsel %vm153, %v2619, %v2623
    %v2626 = vshrl.u32 %v2537, 16
    %v2628 = vrot.slane %v2626, 4
    %v2629 = vshll.u32 %v2537, 16
    %v2631 = vrot.slane %v2629, 5
    %v2632 = vor.u32 %v2628, %v2631
    %v2633 = vrot.slane %v2632, 4
    %v2635 = vshll.u32 %v2538, 16
    %v2637 = vrot.slane %v2635, 5
    %v2638 = vsel %vm153, %v2633, %v2637
    %v2640 = vshrl.u32 %v2539, 16
    %v2642 = vrot.slane %v2640, 4
    %v2643 = vshll.u32 %v2539, 16
    %v2645 = vrot.slane %v2643, 5
    %v2646 = vor.u32 %v2642, %v2645
    %v2647 = vrot.slane %v2646, 4
    %v2649 = vshll.u32 %v2540, 16
    %v2651 = vrot.slane %v2649, 5
    %v2652 = vsel %vm153, %v2647, %v2651
    %v2654 = vshrl.u32 %v2541, 16
    %v2656 = vrot.slane %v2654, 4
    %v2657 = vshll.u32 %v2541, 16
    %v2659 = vrot.slane %v2657, 5
    %v2660 = vor.u32 %v2656, %v2659
    %v2661 = vrot.slane %v2660, 4
    %v2663 = vshll.u32 %v2542, 16
    %v2665 = vrot.slane %v2663, 5
    %v2666 = vsel %vm153, %v2661, %v2665
    %v2668 = vshrl.u32 %v2543, 16
    %v2670 = vrot.slane %v2668, 4
    %v2671 = vshll.u32 %v2543, 16
    %v2673 = vrot.slane %v2671, 5
    %v2674 = vor.u32 %v2670, %v2673
    %v2675 = vrot.slane %v2674, 4
    %v2677 = vshll.u32 %v2544, 16
    %v2679 = vrot.slane %v2677, 5
    %v2680 = vsel %vm153, %v2675, %v2679
    %v2682 = vshrl.u32 %v2545, 16
    %v2684 = vrot.slane %v2682, 4
    %v2685 = vshll.u32 %v2545, 16
    %v2687 = vrot.slane %v2685, 5
    %v2688 = vor.u32 %v2684, %v2687
    %v2689 = vrot.slane %v2688, 4
    %v2691 = vshll.u32 %v2546, 16
    %v2693 = vrot.slane %v2691, 5
    %v2694 = vsel %vm153, %v2689, %v2693
    %v2696 = vshrl.u32 %v2547, 16
    %v2698 = vrot.slane %v2696, 4
    %v2699 = vshll.u32 %v2547, 16
    %v2701 = vrot.slane %v2699, 5
    %v2702 = vor.u32 %v2698, %v2701
    %v2703 = vrot.slane %v2702, 4
    %v2705 = vshll.u32 %v2548, 16
    %v2707 = vrot.slane %v2705, 5
    %v2708 = vsel %vm153, %v2703, %v2707
    %v2710 = vshrl.u32 %v2549, 16
    %v2712 = vrot.slane %v2710, 4
    %v2713 = vshll.u32 %v2549, 16
    %v2715 = vrot.slane %v2713, 5
    %v2716 = vor.u32 %v2712, %v2715
    %v2717 = vrot.slane %v2716, 4
    %v2719 = vshll.u32 %v2550, 16
    %v2721 = vrot.slane %v2719, 5
    %v2722 = vsel %vm153, %v2717, %v2721
    %v2724 = vshrl.u32 %v2551, 16
    %v2726 = vrot.slane %v2724, 4
    %v2727 = vshll.u32 %v2551, 16
    %v2729 = vrot.slane %v2727, 5
    %v2730 = vor.u32 %v2726, %v2729
    %v2731 = vrot.slane %v2730, 4
    %v2733 = vshll.u32 %v2552, 16
    %v2735 = vrot.slane %v2733, 5
    %v2736 = vsel %vm153, %v2731, %v2735
    %v2738 = vshrl.u32 %v2553, 16
    %v2740 = vrot.slane %v2738, 4
    %v2741 = vshll.u32 %v2553, 16
    %v2743 = vrot.slane %v2741, 5
    %v2744 = vor.u32 %v2740, %v2743
    %v2745 = vrot.slane %v2744, 4
    %v2747 = vshll.u32 %v2554, 16
    %v2749 = vrot.slane %v2747, 5
    %v2750 = vsel %vm153, %v2745, %v2749
    %v2752 = vshrl.u32 %v2555, 16
    %v2754 = vrot.slane %v2752, 4
    %v2755 = vshll.u32 %v2555, 16
    %v2757 = vrot.slane %v2755, 5
    %v2758 = vor.u32 %v2754, %v2757
    %v2759 = vrot.slane %v2758, 4
    %v2761 = vshll.u32 %v2556, 16
    %v2763 = vrot.slane %v2761, 5
    %v2764 = vsel %vm153, %v2759, %v2763
    %v2766 = vshrl.u32 %v2557, 16
    %v2768 = vrot.slane %v2766, 4
    %v2769 = vshll.u32 %v2557, 16
    %v2771 = vrot.slane %v2769, 5
    %v2772 = vor.u32 %v2768, %v2771
    %v2773 = vrot.slane %v2772, 4
    %v2775 = vshll.u32 %v2558, 16
    %v2777 = vrot.slane %v2775, 5
    %v2778 = vsel %vm153, %v2773, %v2777
    %v2780 = vshrl.u32 %v2559, 16
    %v2782 = vrot.slane %v2780, 4
    %v2783 = vshll.u32 %v2559, 16
    %v2785 = vrot.slane %v2783, 5
    %v2786 = vor.u32 %v2782, %v2785
    %v2787 = vrot.slane %v2786, 4
    %v2789 = vshll.u32 %v2560, 16
    %v2791 = vrot.slane %v2789, 5
    %v2792 = vsel %vm153, %v2787, %v2791
    %v2794 = vshrl.u32 %v2561, 16
    %v2796 = vrot.slane %v2794, 4
    %v2797 = vshll.u32 %v2561, 16
    %v2799 = vrot.slane %v2797, 5
    %v2800 = vor.u32 %v2796, %v2799
    %v2801 = vrot.slane %v2800, 4
    %v2803 = vshll.u32 %v2562, 16
    %v2805 = vrot.slane %v2803, 5
    %v2806 = vsel %vm153, %v2801, %v2805
    %v2808 = vshrl.u32 %v2563, 16
    %v2810 = vrot.slane %v2808, 4
    %v2811 = vshll.u32 %v2563, 16
    %v2813 = vrot.slane %v2811, 5
    %v2814 = vor.u32 %v2810, %v2813
    %v2815 = vrot.slane %v2814, 4
    %v2817 = vshll.u32 %v2564, 16
    %v2819 = vrot.slane %v2817, 5
    %v2820 = vsel %vm153, %v2815, %v2819
    %v2822 = vshrl.u32 %v2565, 16
    %v2824 = vrot.slane %v2822, 4
    %v2825 = vshll.u32 %v2565, 16
    %v2827 = vrot.slane %v2825, 5
    %v2828 = vor.u32 %v2824, %v2827
    %v2829 = vrot.slane %v2828, 4
    %v2831 = vshll.u32 %v2566, 16
    %v2833 = vrot.slane %v2831, 5
    %v2834 = vsel %vm153, %v2829, %v2833
    %v2836 = vshrl.u32 %v2567, 16
    %v2838 = vrot.slane %v2836, 4
    %v2839 = vshll.u32 %v2567, 16
    %v2841 = vrot.slane %v2839, 5
    %v2842 = vor.u32 %v2838, %v2841
    %v2843 = vrot.slane %v2842, 4
    %v2845 = vshll.u32 %v2568, 16
    %v2847 = vrot.slane %v2845, 5
    %v2848 = vsel %vm153, %v2843, %v2847
    %v2850 = vshrl.u32 %v2569, 16
    %v2852 = vrot.slane %v2850, 4
    %v2853 = vshll.u32 %v2569, 16
    %v2855 = vrot.slane %v2853, 5
    %v2856 = vor.u32 %v2852, %v2855
    %v2857 = vrot.slane %v2856, 4
    %v2859 = vshll.u32 %v2570, 16
    %v2861 = vrot.slane %v2859, 5
    %v2862 = vsel %vm153, %v2857, %v2861
    %v2864 = vshrl.u32 %v2571, 16
    %v2866 = vrot.slane %v2864, 4
    %v2867 = vshll.u32 %v2571, 16
    %v2869 = vrot.slane %v2867, 5
    %v2870 = vor.u32 %v2866, %v2869
    %v2871 = vrot.slane %v2870, 4
    %v2873 = vshll.u32 %v2572, 16
    %v2875 = vrot.slane %v2873, 5
    %v2876 = vsel %vm153, %v2871, %v2875
    %v2878 = vshrl.u32 %v2573, 16
    %v2880 = vrot.slane %v2878, 4
    %v2881 = vshll.u32 %v2573, 16
    %v2883 = vrot.slane %v2881, 5
    %v2884 = vor.u32 %v2880, %v2883
    %v2885 = vrot.slane %v2884, 4
    %v2887 = vshll.u32 %v2574, 16
    %v2889 = vrot.slane %v2887, 5
    %v2890 = vsel %vm153, %v2885, %v2889
    %v2892 = vshrl.u32 %v2575, 16
    %v2894 = vrot.slane %v2892, 4
    %v2895 = vshll.u32 %v2575, 16
    %v2897 = vrot.slane %v2895, 5
    %v2898 = vor.u32 %v2894, %v2897
    %v2899 = vrot.slane %v2898, 4
    %v2901 = vshll.u32 %v2576, 16
    %v2903 = vrot.slane %v2901, 5
    %v2904 = vsel %vm153, %v2899, %v2903
    %v2906 = vshrl.u32 %v2577, 16
    %v2908 = vrot.slane %v2906, 4
    %v2909 = vshll.u32 %v2577, 16
    %v2911 = vrot.slane %v2909, 5
    %v2912 = vor.u32 %v2908, %v2911
    %v2913 = vrot.slane %v2912, 4
    %v2915 = vshll.u32 %v2578, 16
    %v2917 = vrot.slane %v2915, 5
    %v2918 = vsel %vm153, %v2913, %v2917
    %v2920 = vshrl.u32 %v2579, 16
    %v2922 = vrot.slane %v2920, 4
    %v2923 = vshll.u32 %v2579, 16
    %v2925 = vrot.slane %v2923, 5
    %v2926 = vor.u32 %v2922, %v2925
    %v2927 = vrot.slane %v2926, 4
    %v2929 = vshll.u32 %v2580, 16
    %v2931 = vrot.slane %v2929, 5
    %v2932 = vsel %vm153, %v2927, %v2931
    %v2934 = vshrl.u32 %v2581, 16
    %v2936 = vrot.slane %v2934, 4
    %v2937 = vshll.u32 %v2581, 16
    %v2939 = vrot.slane %v2937, 5
    %v2940 = vor.u32 %v2936, %v2939
    %v2941 = vrot.slane %v2940, 4
    %v2943 = vshll.u32 %v2582, 16
    %v2945 = vrot.slane %v2943, 5
    %v2946 = vsel %vm153, %v2941, %v2945
    %v2948 = vshrl.u32 %v2583, 16
    %v2950 = vrot.slane %v2948, 4
    %v2951 = vshll.u32 %v2583, 16
    %v2953 = vrot.slane %v2951, 5
    %v2954 = vor.u32 %v2950, %v2953
    %v2955 = vrot.slane %v2954, 4
    %v2957 = vshll.u32 %v2584, 16
    %v2959 = vrot.slane %v2957, 5
    %v2960 = vsel %vm153, %v2955, %v2959
    %v2962 = vshrl.u32 %v2585, 16
    %v2964 = vrot.slane %v2962, 4
    %v2965 = vshll.u32 %v2585, 16
    %v2967 = vrot.slane %v2965, 5
    %v2968 = vor.u32 %v2964, %v2967
    %v2969 = vrot.slane %v2968, 4
    %v2971 = vshll.u32 %v2586, 16
    %v2973 = vrot.slane %v2971, 5
    %v2974 = vsel %vm153, %v2969, %v2973
    %v2976 = vshrl.u32 %v2587, 16
    %v2978 = vrot.slane %v2976, 4
    %v2979 = vshll.u32 %v2587, 16
    %v2981 = vrot.slane %v2979, 5
    %v2982 = vor.u32 %v2978, %v2981
    %v2983 = vrot.slane %v2982, 4
    %v2985 = vshll.u32 %v2588, 16
    %v2987 = vrot.slane %v2985, 5
    %v2988 = vsel %vm153, %v2983, %v2987
    %v2990 = vshrl.u32 %v2589, 16
    %v2992 = vrot.slane %v2990, 4
    %v2993 = vshll.u32 %v2589, 16
    %v2995 = vrot.slane %v2993, 5
    %v2996 = vor.u32 %v2992, %v2995
    %v2997 = vrot.slane %v2996, 4
    %v2999 = vshll.u32 %v2590, 16
    %v3001 = vrot.slane %v2999, 5
    %v3002 = vsel %vm153, %v2997, %v3001
    %v3004 = vshrl.u32 %v2591, 16
    %v3006 = vrot.slane %v3004, 4
    %v3007 = vshll.u32 %v2591, 16
    %v3009 = vrot.slane %v3007, 5
    %v3010 = vor.u32 %v3006, %v3009
    %v3011 = vrot.slane %v3010, 4
    %v3013 = vshll.u32 %v2592, 16
    %v3015 = vrot.slane %v3013, 5
    %v3016 = vsel %vm153, %v3011, %v3015
    %v3018 = vshrl.u32 %v2593, 16
    %v3020 = vrot.slane %v3018, 4
    %v3021 = vshll.u32 %v2593, 16
    %v3023 = vrot.slane %v3021, 5
    %v3024 = vor.u32 %v3020, %v3023
    %v3025 = vrot.slane %v3024, 4
    %v3027 = vshll.u32 %v2594, 16
    %v3029 = vrot.slane %v3027, 5
    %v3030 = vsel %vm153, %v3025, %v3029
    %v3032 = vshrl.u32 %v2595, 16
    %v3034 = vrot.slane %v3032, 4
    %v3035 = vshll.u32 %v2595, 16
    %v3037 = vrot.slane %v3035, 5
    %v3038 = vor.u32 %v3034, %v3037
    %v3039 = vrot.slane %v3038, 4
    %v3041 = vshll.u32 %v2596, 16
    %v3043 = vrot.slane %v3041, 5
    %v3044 = vsel %vm153, %v3039, %v3043
    %3045 = vrot.lane.b32.xlu0 %v2610, 112
    %v3046 = vpop.permute.xlu0 %3045
    %3047 = vrot.lane.b32.xlu0 %v2624, 112
    %v3048 = vpop.permute.xlu0 %3047
    %3049 = vrot.lane.b32.xlu0 %v2638, 112
    %v3050 = vpop.permute.xlu0 %3049
    %3051 = vrot.lane.b32.xlu0 %v2652, 112
    %v3052 = vpop.permute.xlu0 %3051
    %3053 = vrot.lane.b32.xlu0 %v2666, 112
    %v3054 = vpop.permute.xlu0 %3053
    %3055 = vrot.lane.b32.xlu0 %v2680, 112
    %v3056 = vpop.permute.xlu0 %3055
    %3057 = vrot.lane.b32.xlu0 %v2694, 112
    %v3058 = vpop.permute.xlu0 %3057
    %3059 = vrot.lane.b32.xlu0 %v2708, 112
    %v3060 = vpop.permute.xlu0 %3059
    %3061 = vrot.lane.b32.xlu0 %v2722, 112
    %v3062 = vpop.permute.xlu0 %3061
    %3063 = vrot.lane.b32.xlu0 %v2736, 112
    %v3064 = vpop.permute.xlu0 %3063
    %3065 = vrot.lane.b32.xlu0 %v2750, 112
    %v3066 = vpop.permute.xlu0 %3065
    %3067 = vrot.lane.b32.xlu0 %v2764, 112
    %v3068 = vpop.permute.xlu0 %3067
    %3069 = vrot.lane.b32.xlu0 %v2778, 112
    %v3070 = vpop.permute.xlu0 %3069
    %3071 = vrot.lane.b32.xlu0 %v2792, 112
    %v3072 = vpop.permute.xlu0 %3071
    %3073 = vrot.lane.b32.xlu0 %v2806, 112
    %v3074 = vpop.permute.xlu0 %3073
    %3075 = vrot.lane.b32.xlu0 %v2820, 112
    %v3076 = vpop.permute.xlu0 %3075
    %3077 = vrot.lane.b32.xlu0 %v2834, 112
    %v3078 = vpop.permute.xlu0 %3077
    %3079 = vrot.lane.b32.xlu0 %v2848, 112
    %v3080 = vpop.permute.xlu0 %3079
    %3081 = vrot.lane.b32.xlu0 %v2862, 112
    %v3082 = vpop.permute.xlu0 %3081
    %3083 = vrot.lane.b32.xlu0 %v2876, 112
    %v3084 = vpop.permute.xlu0 %3083
    %3085 = vrot.lane.b32.xlu0 %v2890, 112
    %v3086 = vpop.permute.xlu0 %3085
    %3087 = vrot.lane.b32.xlu0 %v2904, 112
    %v3088 = vpop.permute.xlu0 %3087
    %3089 = vrot.lane.b32.xlu0 %v2918, 112
    %v3090 = vpop.permute.xlu0 %3089
    %3091 = vrot.lane.b32.xlu0 %v2932, 112
    %v3092 = vpop.permute.xlu0 %3091
    %3093 = vrot.lane.b32.xlu0 %v2946, 112
    %v3094 = vpop.permute.xlu0 %3093
    %3095 = vrot.lane.b32.xlu0 %v2960, 112
    %v3096 = vpop.permute.xlu0 %3095
    %3097 = vrot.lane.b32.xlu0 %v2974, 112
    %v3098 = vpop.permute.xlu0 %3097
    %3099 = vrot.lane.b32.xlu0 %v2988, 112
    %v3100 = vpop.permute.xlu0 %3099
    %3101 = vrot.lane.b32.xlu0 %v3002, 112
    %v3102 = vpop.permute.xlu0 %3101
    %3103 = vrot.lane.b32.xlu0 %v3016, 112
    %v3104 = vpop.permute.xlu0 %3103
    %3105 = vrot.lane.b32.xlu0 %v3030, 112
    %v3106 = vpop.permute.xlu0 %3105
    %3107 = vrot.lane.b32.xlu0 %v3044, 112
    %v3108 = vpop.permute.xlu0 %3107
    %vm3141 = vcmask 1044352
    %3142 = vst.msk [vmem:[#allocation2] sm:$0xf] %vm3141, %v3046
    %3143 = vst.msk [vmem:[#allocation2 + $0x10] sm:$0xf] %vm3141, %v3048
    %3144 = vst.msk [vmem:[#allocation2 + $0x20] sm:$0xf] %vm3141, %v3050
    %3145 = vst.msk [vmem:[#allocation2 + $0x30] sm:$0xf] %vm3141, %v3052
    %3146 = vst.msk [vmem:[#allocation2 + $0x40] sm:$0xf] %vm3141, %v3054
    %3147 = vst.msk [vmem:[#allocation2 + $0x50] sm:$0xf] %vm3141, %v3056
    %3148 = vst.msk [vmem:[#allocation2 + $0x60] sm:$0xf] %vm3141, %v3058
    %3149 = vst.msk [vmem:[#allocation2 + $0x70] sm:$0xf] %vm3141, %v3060
    %3150 = vst.msk [vmem:[#allocation2 + $0x80] sm:$0xf] %vm3141, %v3062
    %3151 = vst.msk [vmem:[#allocation2 + $0x90] sm:$0xf] %vm3141, %v3064
    %3152 = vst.msk [vmem:[#allocation2 + $0xa0] sm:$0xf] %vm3141, %v3066
    %3153 = vst.msk [vmem:[#allocation2 + $0xb0] sm:$0xf] %vm3141, %v3068
    %3154 = vst.msk [vmem:[#allocation2 + $0xc0] sm:$0xf] %vm3141, %v3070
    %3155 = vst.msk [vmem:[#allocation2 + $0xd0] sm:$0xf] %vm3141, %v3072
    %3156 = vst.msk [vmem:[#allocation2 + $0xe0] sm:$0xf] %vm3141, %v3074
    %3157 = vst.msk [vmem:[#allocation2 + $0xf0] sm:$0xf] %vm3141, %v3076
    %3158 = vst.msk [vmem:[#allocation2 + $0x100] sm:$0xf] %vm3141, %v3078
    %3159 = vst.msk [vmem:[#allocation2 + $0x110] sm:$0xf] %vm3141, %v3080
    %3160 = vst.msk [vmem:[#allocation2 + $0x120] sm:$0xf] %vm3141, %v3082
    %3161 = vst.msk [vmem:[#allocation2 + $0x130] sm:$0xf] %vm3141, %v3084
    %3162 = vst.msk [vmem:[#allocation2 + $0x140] sm:$0xf] %vm3141, %v3086
    %3163 = vst.msk [vmem:[#allocation2 + $0x150] sm:$0xf] %vm3141, %v3088
    %3164 = vst.msk [vmem:[#allocation2 + $0x160] sm:$0xf] %vm3141, %v3090
    %3165 = vst.msk [vmem:[#allocation2 + $0x170] sm:$0xf] %vm3141, %v3092
    %3166 = vst.msk [vmem:[#allocation2 + $0x180] sm:$0xf] %vm3141, %v3094
    %3167 = vst.msk [vmem:[#allocation2 + $0x190] sm:$0xf] %vm3141, %v3096
    %3168 = vst.msk [vmem:[#allocation2 + $0x1a0] sm:$0xf] %vm3141, %v3098
    %3169 = vst.msk [vmem:[#allocation2 + $0x1b0] sm:$0xf] %vm3141, %v3100
    %3170 = vst.msk [vmem:[#allocation2 + $0x1c0] sm:$0xf] %vm3141, %v3102
    %3171 = vst.msk [vmem:[#allocation2 + $0x1d0] sm:$0xf] %vm3141, %v3104
    %3172 = vst.msk [vmem:[#allocation2 + $0x1e0] sm:$0xf] %vm3141, %v3106
    %3173 = vst.msk [vmem:[#allocation2 + $0x1f0] sm:$0xf] %vm3141, %v3108
    %v3174 = vld [vmem:[%s2339] sm:$0xe]
    %v3175 = vld [vmem:[%s2339 + $0x4] sm:$0x1]
    %v3176 = vld [vmem:[%s2339 + $0x8] sm:$0xe]
    %v3177 = vld [vmem:[%s2339 + $0xc] sm:$0x1]
    %v3178 = vld [vmem:[%s2339 + $0x10] sm:$0xe]
    %v3179 = vld [vmem:[%s2339 + $0x14] sm:$0x1]
    %v3180 = vld [vmem:[%s2339 + $0x18] sm:$0xe]
    %v3181 = vld [vmem:[%s2339 + $0x1c] sm:$0x1]
    %v3182 = vld [vmem:[%s2339 + $0x20] sm:$0xe]
    %v3183 = vld [vmem:[%s2339 + $0x24] sm:$0x1]
    %v3184 = vld [vmem:[%s2339 + $0x28] sm:$0xe]
    %v3185 = vld [vmem:[%s2339 + $0x2c] sm:$0x1]
    %v3186 = vld [vmem:[%s2339 + $0x30] sm:$0xe]
    %v3187 = vld [vmem:[%s2339 + $0x34] sm:$0x1]
    %v3188 = vld [vmem:[%s2339 + $0x38] sm:$0xe]
    %v3189 = vld [vmem:[%s2339 + $0x3c] sm:$0x1]
    %v3190 = vld [vmem:[%s2339 + $0x50] sm:$0xe]
    %v3191 = vld [vmem:[%s2339 + $0x54] sm:$0x1]
    %v3192 = vld [vmem:[%s2339 + $0x58] sm:$0xe]
    %v3193 = vld [vmem:[%s2339 + $0x5c] sm:$0x1]
    %v3194 = vld [vmem:[%s2339 + $0x60] sm:$0xe]
    %v3195 = vld [vmem:[%s2339 + $0x64] sm:$0x1]
    %v3196 = vld [vmem:[%s2339 + $0x68] sm:$0xe]
    %v3197 = vld [vmem:[%s2339 + $0x6c] sm:$0x1]
    %v3198 = vld [vmem:[%s2339 + $0x70] sm:$0xe]
    %v3199 = vld [vmem:[%s2339 + $0x74] sm:$0x1]
    %v3200 = vld [vmem:[%s2339 + $0x78] sm:$0xe]
    %v3201 = vld [vmem:[%s2339 + $0x7c] sm:$0x1]
    %v3202 = vld [vmem:[%s2339 + $0x80] sm:$0xe]
    %v3203 = vld [vmem:[%s2339 + $0x84] sm:$0x1]
    %v3204 = vld [vmem:[%s2339 + $0x88] sm:$0xe]
    %v3205 = vld [vmem:[%s2339 + $0x8c] sm:$0x1]
    %v3206 = vld [vmem:[%s2339 + $0xa0] sm:$0xe]
    %v3207 = vld [vmem:[%s2339 + $0xa4] sm:$0x1]
    %v3208 = vld [vmem:[%s2339 + $0xa8] sm:$0xe]
    %v3209 = vld [vmem:[%s2339 + $0xac] sm:$0x1]
    %v3210 = vld [vmem:[%s2339 + $0xb0] sm:$0xe]
    %v3211 = vld [vmem:[%s2339 + $0xb4] sm:$0x1]
    %v3212 = vld [vmem:[%s2339 + $0xb8] sm:$0xe]
    %v3213 = vld [vmem:[%s2339 + $0xbc] sm:$0x1]
    %v3214 = vld [vmem:[%s2339 + $0xc0] sm:$0xe]
    %v3215 = vld [vmem:[%s2339 + $0xc4] sm:$0x1]
    %v3216 = vld [vmem:[%s2339 + $0xc8] sm:$0xe]
    %v3217 = vld [vmem:[%s2339 + $0xcc] sm:$0x1]
    %v3218 = vld [vmem:[%s2339 + $0xd0] sm:$0xe]
    %v3219 = vld [vmem:[%s2339 + $0xd4] sm:$0x1]
    %v3220 = vld [vmem:[%s2339 + $0xd8] sm:$0xe]
    %v3221 = vld [vmem:[%s2339 + $0xdc] sm:$0x1]
    %v3222 = vld [vmem:[%s2339 + $0xf0] sm:$0xe]
    %v3223 = vld [vmem:[%s2339 + $0xf4] sm:$0x1]
    %v3224 = vld [vmem:[%s2339 + $0xf8] sm:$0xe]
    %v3225 = vld [vmem:[%s2339 + $0xfc] sm:$0x1]
    %v3226 = vld [vmem:[%s2339 + $0x100] sm:$0xe]
    %v3227 = vld [vmem:[%s2339 + $0x104] sm:$0x1]
    %v3228 = vld [vmem:[%s2339 + $0x108] sm:$0xe]
    %v3229 = vld [vmem:[%s2339 + $0x10c] sm:$0x1]
    %v3230 = vld [vmem:[%s2339 + $0x110] sm:$0xe]
    %v3231 = vld [vmem:[%s2339 + $0x114] sm:$0x1]
    %v3232 = vld [vmem:[%s2339 + $0x118] sm:$0xe]
    %v3233 = vld [vmem:[%s2339 + $0x11c] sm:$0x1]
    %v3234 = vld [vmem:[%s2339 + $0x120] sm:$0xe]
    %v3235 = vld [vmem:[%s2339 + $0x124] sm:$0x1]
    %v3236 = vld [vmem:[%s2339 + $0x128] sm:$0xe]
    %v3237 = vld [vmem:[%s2339 + $0x12c] sm:$0x1]
    %v3302 = vrot.slane %v3174, 5
    %v3303 = vrot.slane %v3302, 4
    %v3304 = vrot.slane %v3175, 5
    %v3305 = vsel %vm861, %v3303, %v3304
    %v3306 = vrot.slane %v3176, 5
    %v3307 = vrot.slane %v3306, 4
    %v3308 = vrot.slane %v3177, 5
    %v3309 = vsel %vm861, %v3307, %v3308
    %v3310 = vrot.slane %v3178, 5
    %v3311 = vrot.slane %v3310, 4
    %v3312 = vrot.slane %v3179, 5
    %v3313 = vsel %vm861, %v3311, %v3312
    %v3314 = vrot.slane %v3180, 5
    %v3315 = vrot.slane %v3314, 4
    %v3316 = vrot.slane %v3181, 5
    %v3317 = vsel %vm861, %v3315, %v3316
    %v3318 = vrot.slane %v3182, 5
    %v3319 = vrot.slane %v3318, 4
    %v3320 = vrot.slane %v3183, 5
    %v3321 = vsel %vm861, %v3319, %v3320
    %v3322 = vrot.slane %v3184, 5
    %v3323 = vrot.slane %v3322, 4
    %v3324 = vrot.slane %v3185, 5
    %v3325 = vsel %vm861, %v3323, %v3324
    %v3326 = vrot.slane %v3186, 5
    %v3327 = vrot.slane %v3326, 4
    %v3328 = vrot.slane %v3187, 5
    %v3329 = vsel %vm861, %v3327, %v3328
    %v3330 = vrot.slane %v3188, 5
    %v3331 = vrot.slane %v3330, 4
    %v3332 = vrot.slane %v3189, 5
    %v3333 = vsel %vm861, %v3331, %v3332
    %v3334 = vrot.slane %v3190, 5
    %v3335 = vrot.slane %v3334, 4
    %v3336 = vrot.slane %v3191, 5
    %v3337 = vsel %vm861, %v3335, %v3336
    %v3338 = vrot.slane %v3192, 5
    %v3339 = vrot.slane %v3338, 4
    %v3340 = vrot.slane %v3193, 5
    %v3341 = vsel %vm861, %v3339, %v3340
    %v3342 = vrot.slane %v3194, 5
    %v3343 = vrot.slane %v3342, 4
    %v3344 = vrot.slane %v3195, 5
    %v3345 = vsel %vm861, %v3343, %v3344
    %v3346 = vrot.slane %v3196, 5
    %v3347 = vrot.slane %v3346, 4
    %v3348 = vrot.slane %v3197, 5
    %v3349 = vsel %vm861, %v3347, %v3348
    %v3350 = vrot.slane %v3198, 5
    %v3351 = vrot.slane %v3350, 4
    %v3352 = vrot.slane %v3199, 5
    %v3353 = vsel %vm861, %v3351, %v3352
    %v3354 = vrot.slane %v3200, 5
    %v3355 = vrot.slane %v3354, 4
    %v3356 = vrot.slane %v3201, 5
    %v3357 = vsel %vm861, %v3355, %v3356
    %v3358 = vrot.slane %v3202, 5
    %v3359 = vrot.slane %v3358, 4
    %v3360 = vrot.slane %v3203, 5
    %v3361 = vsel %vm861, %v3359, %v3360
    %v3362 = vrot.slane %v3204, 5
    %v3363 = vrot.slane %v3362, 4
    %v3364 = vrot.slane %v3205, 5
    %v3365 = vsel %vm861, %v3363, %v3364
    %v3366 = vrot.slane %v3206, 5
    %v3367 = vrot.slane %v3366, 4
    %v3368 = vrot.slane %v3207, 5
    %v3369 = vsel %vm861, %v3367, %v3368
    %v3370 = vrot.slane %v3208, 5
    %v3371 = vrot.slane %v3370, 4
    %v3372 = vrot.slane %v3209, 5
    %v3373 = vsel %vm861, %v3371, %v3372
    %v3374 = vrot.slane %v3210, 5
    %v3375 = vrot.slane %v3374, 4
    %v3376 = vrot.slane %v3211, 5
    %v3377 = vsel %vm861, %v3375, %v3376
    %v3378 = vrot.slane %v3212, 5
    %v3379 = vrot.slane %v3378, 4
    %v3380 = vrot.slane %v3213, 5
    %v3381 = vsel %vm861, %v3379, %v3380
    %v3382 = vrot.slane %v3214, 5
    %v3383 = vrot.slane %v3382, 4
    %v3384 = vrot.slane %v3215, 5
    %v3385 = vsel %vm861, %v3383, %v3384
    %v3386 = vrot.slane %v3216, 5
    %v3387 = vrot.slane %v3386, 4
    %v3388 = vrot.slane %v3217, 5
    %v3389 = vsel %vm861, %v3387, %v3388
    %v3390 = vrot.slane %v3218, 5
    %v3391 = vrot.slane %v3390, 4
    %v3392 = vrot.slane %v3219, 5
    %v3393 = vsel %vm861, %v3391, %v3392
    %v3394 = vrot.slane %v3220, 5
    %v3395 = vrot.slane %v3394, 4
    %v3396 = vrot.slane %v3221, 5
    %v3397 = vsel %vm861, %v3395, %v3396
    %v3398 = vrot.slane %v3222, 5
    %v3399 = vrot.slane %v3398, 4
    %v3400 = vrot.slane %v3223, 5
    %v3401 = vsel %vm861, %v3399, %v3400
    %v3402 = vrot.slane %v3224, 5
    %v3403 = vrot.slane %v3402, 4
    %v3404 = vrot.slane %v3225, 5
    %v3405 = vsel %vm861, %v3403, %v3404
    %v3406 = vrot.slane %v3226, 5
    %v3407 = vrot.slane %v3406, 4
    %v3408 = vrot.slane %v3227, 5
    %v3409 = vsel %vm861, %v3407, %v3408
    %v3410 = vrot.slane %v3228, 5
    %v3411 = vrot.slane %v3410, 4
    %v3412 = vrot.slane %v3229, 5
    %v3413 = vsel %vm861, %v3411, %v3412
    %v3414 = vrot.slane %v3230, 5
    %v3415 = vrot.slane %v3414, 4
    %v3416 = vrot.slane %v3231, 5
    %v3417 = vsel %vm861, %v3415, %v3416
    %v3418 = vrot.slane %v3232, 5
    %v3419 = vrot.slane %v3418, 4
    %v3420 = vrot.slane %v3233, 5
    %v3421 = vsel %vm861, %v3419, %v3420
    %v3422 = vrot.slane %v3234, 5
    %v3423 = vrot.slane %v3422, 4
    %v3424 = vrot.slane %v3235, 5
    %v3425 = vsel %vm861, %v3423, %v3424
    %v3426 = vrot.slane %v3236, 5
    %v3427 = vrot.slane %v3426, 4
    %v3428 = vrot.slane %v3237, 5
    %v3429 = vsel %vm861, %v3427, %v3428
    %3462 = vst.msk [vmem:[#allocation2 + $0x4] sm:$0xf] %vm54, %v3305
    %3463 = vst.msk [vmem:[#allocation2 + $0x14] sm:$0xf] %vm54, %v3309
    %3464 = vst.msk [vmem:[#allocation2 + $0x24] sm:$0xf] %vm54, %v3313
    %3465 = vst.msk [vmem:[#allocation2 + $0x34] sm:$0xf] %vm54, %v3317
    %3466 = vst.msk [vmem:[#allocation2 + $0x44] sm:$0xf] %vm54, %v3321
    %3467 = vst.msk [vmem:[#allocation2 + $0x54] sm:$0xf] %vm54, %v3325
    %3468 = vst.msk [vmem:[#allocation2 + $0x64] sm:$0xf] %vm54, %v3329
    %3469 = vst.msk [vmem:[#allocation2 + $0x74] sm:$0xf] %vm54, %v3333
    %3470 = vst.msk [vmem:[#allocation2 + $0x84] sm:$0xf] %vm54, %v3337
    %3471 = vst.msk [vmem:[#allocation2 + $0x94] sm:$0xf] %vm54, %v3341
    %3472 = vst.msk [vmem:[#allocation2 + $0xa4] sm:$0xf] %vm54, %v3345
    %3473 = vst.msk [vmem:[#allocation2 + $0xb4] sm:$0xf] %vm54, %v3349
    %3474 = vst.msk [vmem:[#allocation2 + $0xc4] sm:$0xf] %vm54, %v3353
    %3475 = vst.msk [vmem:[#allocation2 + $0xd4] sm:$0xf] %vm54, %v3357
    %3476 = vst.msk [vmem:[#allocation2 + $0xe4] sm:$0xf] %vm54, %v3361
    %3477 = vst.msk [vmem:[#allocation2 + $0xf4] sm:$0xf] %vm54, %v3365
    %3478 = vst.msk [vmem:[#allocation2 + $0x104] sm:$0xf] %vm54, %v3369
    %3479 = vst.msk [vmem:[#allocation2 + $0x114] sm:$0xf] %vm54, %v3373
    %3480 = vst.msk [vmem:[#allocation2 + $0x124] sm:$0xf] %vm54, %v3377
    %3481 = vst.msk [vmem:[#allocation2 + $0x134] sm:$0xf] %vm54, %v3381
    %3482 = vst.msk [vmem:[#allocation2 + $0x144] sm:$0xf] %vm54, %v3385
    %3483 = vst.msk [vmem:[#allocation2 + $0x154] sm:$0xf] %vm54, %v3389
    %3484 = vst.msk [vmem:[#allocation2 + $0x164] sm:$0xf] %vm54, %v3393
    %3485 = vst.msk [vmem:[#allocation2 + $0x174] sm:$0xf] %vm54, %v3397
    %3486 = vst.msk [vmem:[#allocation2 + $0x184] sm:$0xf] %vm54, %v3401
    %3487 = vst.msk [vmem:[#allocation2 + $0x194] sm:$0xf] %vm54, %v3405
    %3488 = vst.msk [vmem:[#allocation2 + $0x1a4] sm:$0xf] %vm54, %v3409
    %3489 = vst.msk [vmem:[#allocation2 + $0x1b4] sm:$0xf] %vm54, %v3413
    %3490 = vst.msk [vmem:[#allocation2 + $0x1c4] sm:$0xf] %vm54, %v3417
    %3491 = vst.msk [vmem:[#allocation2 + $0x1d4] sm:$0xf] %vm54, %v3421
    %3492 = vst.msk [vmem:[#allocation2 + $0x1e4] sm:$0xf] %vm54, %v3425
    %3493 = vst.msk [vmem:[#allocation2 + $0x1f4] sm:$0xf] %vm54, %v3429
    %s3494 = scalar_lea.vmem %s0, 80
    %v3495 = vld [vmem:[%s3494] sm:$0xf]
    %v3496 = vld [vmem:[%s3494 + $0x8] sm:$0xf]
    %v3497 = vld [vmem:[%s3494 + $0x10] sm:$0xf]
    %v3498 = vld [vmem:[%s3494 + $0x18] sm:$0xf]
    %v3499 = vld [vmem:[%s3494 + $0x20] sm:$0xf]
    %v3500 = vld [vmem:[%s3494 + $0x28] sm:$0xf]
    %v3501 = vld [vmem:[%s3494 + $0x30] sm:$0xf]
    %v3502 = vld [vmem:[%s3494 + $0x38] sm:$0xf]
    %v3503 = vld [vmem:[%s3494 + $0x50] sm:$0xf]
    %v3504 = vld [vmem:[%s3494 + $0x58] sm:$0xf]
    %v3505 = vld [vmem:[%s3494 + $0x60] sm:$0xf]
    %v3506 = vld [vmem:[%s3494 + $0x68] sm:$0xf]
    %v3507 = vld [vmem:[%s3494 + $0x70] sm:$0xf]
    %v3508 = vld [vmem:[%s3494 + $0x78] sm:$0xf]
    %v3509 = vld [vmem:[%s3494 + $0x80] sm:$0xf]
    %v3510 = vld [vmem:[%s3494 + $0x88] sm:$0xf]
    %v3511 = vld [vmem:[%s3494 + $0xa0] sm:$0xf]
    %v3512 = vld [vmem:[%s3494 + $0xa8] sm:$0xf]
    %v3513 = vld [vmem:[%s3494 + $0xb0] sm:$0xf]
    %v3514 = vld [vmem:[%s3494 + $0xb8] sm:$0xf]
    %v3515 = vld [vmem:[%s3494 + $0xc0] sm:$0xf]
    %v3516 = vld [vmem:[%s3494 + $0xc8] sm:$0xf]
    %v3517 = vld [vmem:[%s3494 + $0xd0] sm:$0xf]
    %v3518 = vld [vmem:[%s3494 + $0xd8] sm:$0xf]
    %v3519 = vld [vmem:[%s3494 + $0xf0] sm:$0xf]
    %v3520 = vld [vmem:[%s3494 + $0xf8] sm:$0xf]
    %v3521 = vld [vmem:[%s3494 + $0x100] sm:$0xf]
    %v3522 = vld [vmem:[%s3494 + $0x108] sm:$0xf]
    %v3523 = vld [vmem:[%s3494 + $0x110] sm:$0xf]
    %v3524 = vld [vmem:[%s3494 + $0x118] sm:$0xf]
    %v3525 = vld [vmem:[%s3494 + $0x120] sm:$0xf]
    %v3526 = vld [vmem:[%s3494 + $0x128] sm:$0xf]
    %3559 = vrot.lane.b32.xlu0 %v3495, 16
    %v3560 = vpop.permute.xlu0 %3559
    %3561 = vrot.lane.b32.xlu0 %v3496, 16
    %v3562 = vpop.permute.xlu0 %3561
    %3563 = vrot.lane.b32.xlu0 %v3497, 16
    %v3564 = vpop.permute.xlu0 %3563
    %3565 = vrot.lane.b32.xlu0 %v3498, 16
    %v3566 = vpop.permute.xlu0 %3565
    %3567 = vrot.lane.b32.xlu0 %v3499, 16
    %v3568 = vpop.permute.xlu0 %3567
    %3569 = vrot.lane.b32.xlu0 %v3500, 16
    %v3570 = vpop.permute.xlu0 %3569
    %3571 = vrot.lane.b32.xlu0 %v3501, 16
    %v3572 = vpop.permute.xlu0 %3571
    %3573 = vrot.lane.b32.xlu0 %v3502, 16
    %v3574 = vpop.permute.xlu0 %3573
    %3575 = vrot.lane.b32.xlu0 %v3503, 16
    %v3576 = vpop.permute.xlu0 %3575
    %3577 = vrot.lane.b32.xlu0 %v3504, 16
    %v3578 = vpop.permute.xlu0 %3577
    %3579 = vrot.lane.b32.xlu0 %v3505, 16
    %v3580 = vpop.permute.xlu0 %3579
    %3581 = vrot.lane.b32.xlu0 %v3506, 16
    %v3582 = vpop.permute.xlu0 %3581
    %3583 = vrot.lane.b32.xlu0 %v3507, 16
    %v3584 = vpop.permute.xlu0 %3583
    %3585 = vrot.lane.b32.xlu0 %v3508, 16
    %v3586 = vpop.permute.xlu0 %3585
    %3587 = vrot.lane.b32.xlu0 %v3509, 16
    %v3588 = vpop.permute.xlu0 %3587
    %3589 = vrot.lane.b32.xlu0 %v3510, 16
    %v3590 = vpop.permute.xlu0 %3589
    %3591 = vrot.lane.b32.xlu0 %v3511, 16
    %v3592 = vpop.permute.xlu0 %3591
    %3593 = vrot.lane.b32.xlu0 %v3512, 16
    %v3594 = vpop.permute.xlu0 %3593
    %3595 = vrot.lane.b32.xlu0 %v3513, 16
    %v3596 = vpop.permute.xlu0 %3595
    %3597 = vrot.lane.b32.xlu0 %v3514, 16
    %v3598 = vpop.permute.xlu0 %3597
    %3599 = vrot.lane.b32.xlu0 %v3515, 16
    %v3600 = vpop.permute.xlu0 %3599
    %3601 = vrot.lane.b32.xlu0 %v3516, 16
    %v3602 = vpop.permute.xlu0 %3601
    %3603 = vrot.lane.b32.xlu0 %v3517, 16
    %v3604 = vpop.permute.xlu0 %3603
    %3605 = vrot.lane.b32.xlu0 %v3518, 16
    %v3606 = vpop.permute.xlu0 %3605
    %3607 = vrot.lane.b32.xlu0 %v3519, 16
    %v3608 = vpop.permute.xlu0 %3607
    %3609 = vrot.lane.b32.xlu0 %v3520, 16
    %v3610 = vpop.permute.xlu0 %3609
    %3611 = vrot.lane.b32.xlu0 %v3521, 16
    %v3612 = vpop.permute.xlu0 %3611
    %3613 = vrot.lane.b32.xlu0 %v3522, 16
    %v3614 = vpop.permute.xlu0 %3613
    %3615 = vrot.lane.b32.xlu0 %v3523, 16
    %v3616 = vpop.permute.xlu0 %3615
    %3617 = vrot.lane.b32.xlu0 %v3524, 16
    %v3618 = vpop.permute.xlu0 %3617
    %3619 = vrot.lane.b32.xlu0 %v3525, 16
    %v3620 = vpop.permute.xlu0 %3619
    %3621 = vrot.lane.b32.xlu0 %v3526, 16
    %v3622 = vpop.permute.xlu0 %3621
    %3655 = vst.msk [vmem:[#allocation2 + $0x4] sm:$0xf] %vm698, %v3560
    %3656 = vst.msk [vmem:[#allocation2 + $0x14] sm:$0xf] %vm698, %v3562
    %3657 = vst.msk [vmem:[#allocation2 + $0x24] sm:$0xf] %vm698, %v3564
    %3658 = vst.msk [vmem:[#allocation2 + $0x34] sm:$0xf] %vm698, %v3566
    %3659 = vst.msk [vmem:[#allocation2 + $0x44] sm:$0xf] %vm698, %v3568
    %3660 = vst.msk [vmem:[#allocation2 + $0x54] sm:$0xf] %vm698, %v3570
    %3661 = vst.msk [vmem:[#allocation2 + $0x64] sm:$0xf] %vm698, %v3572
    %3662 = vst.msk [vmem:[#allocation2 + $0x74] sm:$0xf] %vm698, %v3574
    %3663 = vst.msk [vmem:[#allocation2 + $0x84] sm:$0xf] %vm698, %v3576
    %3664 = vst.msk [vmem:[#allocation2 + $0x94] sm:$0xf] %vm698, %v3578
    %3665 = vst.msk [vmem:[#allocation2 + $0xa4] sm:$0xf] %vm698, %v3580
    %3666 = vst.msk [vmem:[#allocation2 + $0xb4] sm:$0xf] %vm698, %v3582
    %3667 = vst.msk [vmem:[#allocation2 + $0xc4] sm:$0xf] %vm698, %v3584
    %3668 = vst.msk [vmem:[#allocation2 + $0xd4] sm:$0xf] %vm698, %v3586
    %3669 = vst.msk [vmem:[#allocation2 + $0xe4] sm:$0xf] %vm698, %v3588
    %3670 = vst.msk [vmem:[#allocation2 + $0xf4] sm:$0xf] %vm698, %v3590
    %3671 = vst.msk [vmem:[#allocation2 + $0x104] sm:$0xf] %vm698, %v3592
    %3672 = vst.msk [vmem:[#allocation2 + $0x114] sm:$0xf] %vm698, %v3594
    %3673 = vst.msk [vmem:[#allocation2 + $0x124] sm:$0xf] %vm698, %v3596
    %3674 = vst.msk [vmem:[#allocation2 + $0x134] sm:$0xf] %vm698, %v3598
    %3675 = vst.msk [vmem:[#allocation2 + $0x144] sm:$0xf] %vm698, %v3600
    %3676 = vst.msk [vmem:[#allocation2 + $0x154] sm:$0xf] %vm698, %v3602
    %3677 = vst.msk [vmem:[#allocation2 + $0x164] sm:$0xf] %vm698, %v3604
    %3678 = vst.msk [vmem:[#allocation2 + $0x174] sm:$0xf] %vm698, %v3606
    %3679 = vst.msk [vmem:[#allocation2 + $0x184] sm:$0xf] %vm698, %v3608
    %3680 = vst.msk [vmem:[#allocation2 + $0x194] sm:$0xf] %vm698, %v3610
    %3681 = vst.msk [vmem:[#allocation2 + $0x1a4] sm:$0xf] %vm698, %v3612
    %3682 = vst.msk [vmem:[#allocation2 + $0x1b4] sm:$0xf] %vm698, %v3614
    %3683 = vst.msk [vmem:[#allocation2 + $0x1c4] sm:$0xf] %vm698, %v3616
    %3684 = vst.msk [vmem:[#allocation2 + $0x1d4] sm:$0xf] %vm698, %v3618
    %3685 = vst.msk [vmem:[#allocation2 + $0x1e4] sm:$0xf] %vm698, %v3620
    %3686 = vst.msk [vmem:[#allocation2 + $0x1f4] sm:$0xf] %vm698, %v3622
    %v3687 = vld [vmem:[%s3494] sm:$0xf]
    %v3688 = vld [vmem:[%s3494 + $0x4] sm:$0x1]
    %v3689 = vld [vmem:[%s3494 + $0x8] sm:$0xf]
    %v3690 = vld [vmem:[%s3494 + $0xc] sm:$0x1]
    %v3691 = vld [vmem:[%s3494 + $0x10] sm:$0xf]
    %v3692 = vld [vmem:[%s3494 + $0x14] sm:$0x1]
    %v3693 = vld [vmem:[%s3494 + $0x18] sm:$0xf]
    %v3694 = vld [vmem:[%s3494 + $0x1c] sm:$0x1]
    %v3695 = vld [vmem:[%s3494 + $0x20] sm:$0xf]
    %v3696 = vld [vmem:[%s3494 + $0x24] sm:$0x1]
    %v3697 = vld [vmem:[%s3494 + $0x28] sm:$0xf]
    %v3698 = vld [vmem:[%s3494 + $0x2c] sm:$0x1]
    %v3699 = vld [vmem:[%s3494 + $0x30] sm:$0xf]
    %v3700 = vld [vmem:[%s3494 + $0x34] sm:$0x1]
    %v3701 = vld [vmem:[%s3494 + $0x38] sm:$0xf]
    %v3702 = vld [vmem:[%s3494 + $0x3c] sm:$0x1]
    %v3703 = vld [vmem:[%s3494 + $0x50] sm:$0xf]
    %v3704 = vld [vmem:[%s3494 + $0x54] sm:$0x1]
    %v3705 = vld [vmem:[%s3494 + $0x58] sm:$0xf]
    %v3706 = vld [vmem:[%s3494 + $0x5c] sm:$0x1]
    %v3707 = vld [vmem:[%s3494 + $0x60] sm:$0xf]
    %v3708 = vld [vmem:[%s3494 + $0x64] sm:$0x1]
    %v3709 = vld [vmem:[%s3494 + $0x68] sm:$0xf]
    %v3710 = vld [vmem:[%s3494 + $0x6c] sm:$0x1]
    %v3711 = vld [vmem:[%s3494 + $0x70] sm:$0xf]
    %v3712 = vld [vmem:[%s3494 + $0x74] sm:$0x1]
    %v3713 = vld [vmem:[%s3494 + $0x78] sm:$0xf]
    %v3714 = vld [vmem:[%s3494 + $0x7c] sm:$0x1]
    %v3715 = vld [vmem:[%s3494 + $0x80] sm:$0xf]
    %v3716 = vld [vmem:[%s3494 + $0x84] sm:$0x1]
    %v3717 = vld [vmem:[%s3494 + $0x88] sm:$0xf]
    %v3718 = vld [vmem:[%s3494 + $0x8c] sm:$0x1]
    %v3719 = vld [vmem:[%s3494 + $0xa0] sm:$0xf]
    %v3720 = vld [vmem:[%s3494 + $0xa4] sm:$0x1]
    %v3721 = vld [vmem:[%s3494 + $0xa8] sm:$0xf]
    %v3722 = vld [vmem:[%s3494 + $0xac] sm:$0x1]
    %v3723 = vld [vmem:[%s3494 + $0xb0] sm:$0xf]
    %v3724 = vld [vmem:[%s3494 + $0xb4] sm:$0x1]
    %v3725 = vld [vmem:[%s3494 + $0xb8] sm:$0xf]
    %v3726 = vld [vmem:[%s3494 + $0xbc] sm:$0x1]
    %v3727 = vld [vmem:[%s3494 + $0xc0] sm:$0xf]
    %v3728 = vld [vmem:[%s3494 + $0xc4] sm:$0x1]
    %v3729 = vld [vmem:[%s3494 + $0xc8] sm:$0xf]
    %v3730 = vld [vmem:[%s3494 + $0xcc] sm:$0x1]
    %v3731 = vld [vmem:[%s3494 + $0xd0] sm:$0xf]
    %v3732 = vld [vmem:[%s3494 + $0xd4] sm:$0x1]
    %v3733 = vld [vmem:[%s3494 + $0xd8] sm:$0xf]
    %v3734 = vld [vmem:[%s3494 + $0xdc] sm:$0x1]
    %v3735 = vld [vmem:[%s3494 + $0xf0] sm:$0xf]
    %v3736 = vld [vmem:[%s3494 + $0xf4] sm:$0x1]
    %v3737 = vld [vmem:[%s3494 + $0xf8] sm:$0xf]
    %v3738 = vld [vmem:[%s3494 + $0xfc] sm:$0x1]
    %v3739 = vld [vmem:[%s3494 + $0x100] sm:$0xf]
    %v3740 = vld [vmem:[%s3494 + $0x104] sm:$0x1]
    %v3741 = vld [vmem:[%s3494 + $0x108] sm:$0xf]
    %v3742 = vld [vmem:[%s3494 + $0x10c] sm:$0x1]
    %v3743 = vld [vmem:[%s3494 + $0x110] sm:$0xf]
    %v3744 = vld [vmem:[%s3494 + $0x114] sm:$0x1]
    %v3745 = vld [vmem:[%s3494 + $0x118] sm:$0xf]
    %v3746 = vld [vmem:[%s3494 + $0x11c] sm:$0x1]
    %v3747 = vld [vmem:[%s3494 + $0x120] sm:$0xf]
    %v3748 = vld [vmem:[%s3494 + $0x124] sm:$0x1]
    %v3749 = vld [vmem:[%s3494 + $0x128] sm:$0xf]
    %v3750 = vld [vmem:[%s3494 + $0x12c] sm:$0x1]
    %v3752 = vshrl.u32 %v3687, 16
    %v3754 = vrot.slane %v3752, 4
    %v3755 = vshll.u32 %v3687, 16
    %v3757 = vrot.slane %v3755, 5
    %v3758 = vor.u32 %v3754, %v3757
    %v3759 = vrot.slane %v3758, 4
    %v3761 = vshll.u32 %v3688, 16
    %v3763 = vrot.slane %v3761, 5
    %v3764 = vsel %vm153, %v3759, %v3763
    %v3766 = vshrl.u32 %v3689, 16
    %v3768 = vrot.slane %v3766, 4
    %v3769 = vshll.u32 %v3689, 16
    %v3771 = vrot.slane %v3769, 5
    %v3772 = vor.u32 %v3768, %v3771
    %v3773 = vrot.slane %v3772, 4
    %v3775 = vshll.u32 %v3690, 16
    %v3777 = vrot.slane %v3775, 5
    %v3778 = vsel %vm153, %v3773, %v3777
    %v3780 = vshrl.u32 %v3691, 16
    %v3782 = vrot.slane %v3780, 4
    %v3783 = vshll.u32 %v3691, 16
    %v3785 = vrot.slane %v3783, 5
    %v3786 = vor.u32 %v3782, %v3785
    %v3787 = vrot.slane %v3786, 4
    %v3789 = vshll.u32 %v3692, 16
    %v3791 = vrot.slane %v3789, 5
    %v3792 = vsel %vm153, %v3787, %v3791
    %v3794 = vshrl.u32 %v3693, 16
    %v3796 = vrot.slane %v3794, 4
    %v3797 = vshll.u32 %v3693, 16
    %v3799 = vrot.slane %v3797, 5
    %v3800 = vor.u32 %v3796, %v3799
    %v3801 = vrot.slane %v3800, 4
    %v3803 = vshll.u32 %v3694, 16
    %v3805 = vrot.slane %v3803, 5
    %v3806 = vsel %vm153, %v3801, %v3805
    %v3808 = vshrl.u32 %v3695, 16
    %v3810 = vrot.slane %v3808, 4
    %v3811 = vshll.u32 %v3695, 16
    %v3813 = vrot.slane %v3811, 5
    %v3814 = vor.u32 %v3810, %v3813
    %v3815 = vrot.slane %v3814, 4
    %v3817 = vshll.u32 %v3696, 16
    %v3819 = vrot.slane %v3817, 5
    %v3820 = vsel %vm153, %v3815, %v3819
    %v3822 = vshrl.u32 %v3697, 16
    %v3824 = vrot.slane %v3822, 4
    %v3825 = vshll.u32 %v3697, 16
    %v3827 = vrot.slane %v3825, 5
    %v3828 = vor.u32 %v3824, %v3827
    %v3829 = vrot.slane %v3828, 4
    %v3831 = vshll.u32 %v3698, 16
    %v3833 = vrot.slane %v3831, 5
    %v3834 = vsel %vm153, %v3829, %v3833
    %v3836 = vshrl.u32 %v3699, 16
    %v3838 = vrot.slane %v3836, 4
    %v3839 = vshll.u32 %v3699, 16
    %v3841 = vrot.slane %v3839, 5
    %v3842 = vor.u32 %v3838, %v3841
    %v3843 = vrot.slane %v3842, 4
    %v3845 = vshll.u32 %v3700, 16
    %v3847 = vrot.slane %v3845, 5
    %v3848 = vsel %vm153, %v3843, %v3847
    %v3850 = vshrl.u32 %v3701, 16
    %v3852 = vrot.slane %v3850, 4
    %v3853 = vshll.u32 %v3701, 16
    %v3855 = vrot.slane %v3853, 5
    %v3856 = vor.u32 %v3852, %v3855
    %v3857 = vrot.slane %v3856, 4
    %v3859 = vshll.u32 %v3702, 16
    %v3861 = vrot.slane %v3859, 5
    %v3862 = vsel %vm153, %v3857, %v3861
    %v3864 = vshrl.u32 %v3703, 16
    %v3866 = vrot.slane %v3864, 4
    %v3867 = vshll.u32 %v3703, 16
    %v3869 = vrot.slane %v3867, 5
    %v3870 = vor.u32 %v3866, %v3869
    %v3871 = vrot.slane %v3870, 4
    %v3873 = vshll.u32 %v3704, 16
    %v3875 = vrot.slane %v3873, 5
    %v3876 = vsel %vm153, %v3871, %v3875
    %v3878 = vshrl.u32 %v3705, 16
    %v3880 = vrot.slane %v3878, 4
    %v3881 = vshll.u32 %v3705, 16
    %v3883 = vrot.slane %v3881, 5
    %v3884 = vor.u32 %v3880, %v3883
    %v3885 = vrot.slane %v3884, 4
    %v3887 = vshll.u32 %v3706, 16
    %v3889 = vrot.slane %v3887, 5
    %v3890 = vsel %vm153, %v3885, %v3889
    %v3892 = vshrl.u32 %v3707, 16
    %v3894 = vrot.slane %v3892, 4
    %v3895 = vshll.u32 %v3707, 16
    %v3897 = vrot.slane %v3895, 5
    %v3898 = vor.u32 %v3894, %v3897
    %v3899 = vrot.slane %v3898, 4
    %v3901 = vshll.u32 %v3708, 16
    %v3903 = vrot.slane %v3901, 5
    %v3904 = vsel %vm153, %v3899, %v3903
    %v3906 = vshrl.u32 %v3709, 16
    %v3908 = vrot.slane %v3906, 4
    %v3909 = vshll.u32 %v3709, 16
    %v3911 = vrot.slane %v3909, 5
    %v3912 = vor.u32 %v3908, %v3911
    %v3913 = vrot.slane %v3912, 4
    %v3915 = vshll.u32 %v3710, 16
    %v3917 = vrot.slane %v3915, 5
    %v3918 = vsel %vm153, %v3913, %v3917
    %v3920 = vshrl.u32 %v3711, 16
    %v3922 = vrot.slane %v3920, 4
    %v3923 = vshll.u32 %v3711, 16
    %v3925 = vrot.slane %v3923, 5
    %v3926 = vor.u32 %v3922, %v3925
    %v3927 = vrot.slane %v3926, 4
    %v3929 = vshll.u32 %v3712, 16
    %v3931 = vrot.slane %v3929, 5
    %v3932 = vsel %vm153, %v3927, %v3931
    %v3934 = vshrl.u32 %v3713, 16
    %v3936 = vrot.slane %v3934, 4
    %v3937 = vshll.u32 %v3713, 16
    %v3939 = vrot.slane %v3937, 5
    %v3940 = vor.u32 %v3936, %v3939
    %v3941 = vrot.slane %v3940, 4
    %v3943 = vshll.u32 %v3714, 16
    %v3945 = vrot.slane %v3943, 5
    %v3946 = vsel %vm153, %v3941, %v3945
    %v3948 = vshrl.u32 %v3715, 16
    %v3950 = vrot.slane %v3948, 4
    %v3951 = vshll.u32 %v3715, 16
    %v3953 = vrot.slane %v3951, 5
    %v3954 = vor.u32 %v3950, %v3953
    %v3955 = vrot.slane %v3954, 4
    %v3957 = vshll.u32 %v3716, 16
    %v3959 = vrot.slane %v3957, 5
    %v3960 = vsel %vm153, %v3955, %v3959
    %v3962 = vshrl.u32 %v3717, 16
    %v3964 = vrot.slane %v3962, 4
    %v3965 = vshll.u32 %v3717, 16
    %v3967 = vrot.slane %v3965, 5
    %v3968 = vor.u32 %v3964, %v3967
    %v3969 = vrot.slane %v3968, 4
    %v3971 = vshll.u32 %v3718, 16
    %v3973 = vrot.slane %v3971, 5
    %v3974 = vsel %vm153, %v3969, %v3973
    %v3976 = vshrl.u32 %v3719, 16
    %v3978 = vrot.slane %v3976, 4
    %v3979 = vshll.u32 %v3719, 16
    %v3981 = vrot.slane %v3979, 5
    %v3982 = vor.u32 %v3978, %v3981
    %v3983 = vrot.slane %v3982, 4
    %v3985 = vshll.u32 %v3720, 16
    %v3987 = vrot.slane %v3985, 5
    %v3988 = vsel %vm153, %v3983, %v3987
    %v3990 = vshrl.u32 %v3721, 16
    %v3992 = vrot.slane %v3990, 4
    %v3993 = vshll.u32 %v3721, 16
    %v3995 = vrot.slane %v3993, 5
    %v3996 = vor.u32 %v3992, %v3995
    %v3997 = vrot.slane %v3996, 4
    %v3999 = vshll.u32 %v3722, 16
    %v4001 = vrot.slane %v3999, 5
    %v4002 = vsel %vm153, %v3997, %v4001
    %v4004 = vshrl.u32 %v3723, 16
    %v4006 = vrot.slane %v4004, 4
    %v4007 = vshll.u32 %v3723, 16
    %v4009 = vrot.slane %v4007, 5
    %v4010 = vor.u32 %v4006, %v4009
    %v4011 = vrot.slane %v4010, 4
    %v4013 = vshll.u32 %v3724, 16
    %v4015 = vrot.slane %v4013, 5
    %v4016 = vsel %vm153, %v4011, %v4015
    %v4018 = vshrl.u32 %v3725, 16
    %v4020 = vrot.slane %v4018, 4
    %v4021 = vshll.u32 %v3725, 16
    %v4023 = vrot.slane %v4021, 5
    %v4024 = vor.u32 %v4020, %v4023
    %v4025 = vrot.slane %v4024, 4
    %v4027 = vshll.u32 %v3726, 16
    %v4029 = vrot.slane %v4027, 5
    %v4030 = vsel %vm153, %v4025, %v4029
    %v4032 = vshrl.u32 %v3727, 16
    %v4034 = vrot.slane %v4032, 4
    %v4035 = vshll.u32 %v3727, 16
    %v4037 = vrot.slane %v4035, 5
    %v4038 = vor.u32 %v4034, %v4037
    %v4039 = vrot.slane %v4038, 4
    %v4041 = vshll.u32 %v3728, 16
    %v4043 = vrot.slane %v4041, 5
    %v4044 = vsel %vm153, %v4039, %v4043
    %v4046 = vshrl.u32 %v3729, 16
    %v4048 = vrot.slane %v4046, 4
    %v4049 = vshll.u32 %v3729, 16
    %v4051 = vrot.slane %v4049, 5
    %v4052 = vor.u32 %v4048, %v4051
    %v4053 = vrot.slane %v4052, 4
    %v4055 = vshll.u32 %v3730, 16
    %v4057 = vrot.slane %v4055, 5
    %v4058 = vsel %vm153, %v4053, %v4057
    %v4060 = vshrl.u32 %v3731, 16
    %v4062 = vrot.slane %v4060, 4
    %v4063 = vshll.u32 %v3731, 16
    %v4065 = vrot.slane %v4063, 5
    %v4066 = vor.u32 %v4062, %v4065
    %v4067 = vrot.slane %v4066, 4
    %v4069 = vshll.u32 %v3732, 16
    %v4071 = vrot.slane %v4069, 5
    %v4072 = vsel %vm153, %v4067, %v4071
    %v4074 = vshrl.u32 %v3733, 16
    %v4076 = vrot.slane %v4074, 4
    %v4077 = vshll.u32 %v3733, 16
    %v4079 = vrot.slane %v4077, 5
    %v4080 = vor.u32 %v4076, %v4079
    %v4081 = vrot.slane %v4080, 4
    %v4083 = vshll.u32 %v3734, 16
    %v4085 = vrot.slane %v4083, 5
    %v4086 = vsel %vm153, %v4081, %v4085
    %v4088 = vshrl.u32 %v3735, 16
    %v4090 = vrot.slane %v4088, 4
    %v4091 = vshll.u32 %v3735, 16
    %v4093 = vrot.slane %v4091, 5
    %v4094 = vor.u32 %v4090, %v4093
    %v4095 = vrot.slane %v4094, 4
    %v4097 = vshll.u32 %v3736, 16
    %v4099 = vrot.slane %v4097, 5
    %v4100 = vsel %vm153, %v4095, %v4099
    %v4102 = vshrl.u32 %v3737, 16
    %v4104 = vrot.slane %v4102, 4
    %v4105 = vshll.u32 %v3737, 16
    %v4107 = vrot.slane %v4105, 5
    %v4108 = vor.u32 %v4104, %v4107
    %v4109 = vrot.slane %v4108, 4
    %v4111 = vshll.u32 %v3738, 16
    %v4113 = vrot.slane %v4111, 5
    %v4114 = vsel %vm153, %v4109, %v4113
    %v4116 = vshrl.u32 %v3739, 16
    %v4118 = vrot.slane %v4116, 4
    %v4119 = vshll.u32 %v3739, 16
    %v4121 = vrot.slane %v4119, 5
    %v4122 = vor.u32 %v4118, %v4121
    %v4123 = vrot.slane %v4122, 4
    %v4125 = vshll.u32 %v3740, 16
    %v4127 = vrot.slane %v4125, 5
    %v4128 = vsel %vm153, %v4123, %v4127
    %v4130 = vshrl.u32 %v3741, 16
    %v4132 = vrot.slane %v4130, 4
    %v4133 = vshll.u32 %v3741, 16
    %v4135 = vrot.slane %v4133, 5
    %v4136 = vor.u32 %v4132, %v4135
    %v4137 = vrot.slane %v4136, 4
    %v4139 = vshll.u32 %v3742, 16
    %v4141 = vrot.slane %v4139, 5
    %v4142 = vsel %vm153, %v4137, %v4141
    %v4144 = vshrl.u32 %v3743, 16
    %v4146 = vrot.slane %v4144, 4
    %v4147 = vshll.u32 %v3743, 16
    %v4149 = vrot.slane %v4147, 5
    %v4150 = vor.u32 %v4146, %v4149
    %v4151 = vrot.slane %v4150, 4
    %v4153 = vshll.u32 %v3744, 16
    %v4155 = vrot.slane %v4153, 5
    %v4156 = vsel %vm153, %v4151, %v4155
    %v4158 = vshrl.u32 %v3745, 16
    %v4160 = vrot.slane %v4158, 4
    %v4161 = vshll.u32 %v3745, 16
    %v4163 = vrot.slane %v4161, 5
    %v4164 = vor.u32 %v4160, %v4163
    %v4165 = vrot.slane %v4164, 4
    %v4167 = vshll.u32 %v3746, 16
    %v4169 = vrot.slane %v4167, 5
    %v4170 = vsel %vm153, %v4165, %v4169
    %v4172 = vshrl.u32 %v3747, 16
    %v4174 = vrot.slane %v4172, 4
    %v4175 = vshll.u32 %v3747, 16
    %v4177 = vrot.slane %v4175, 5
    %v4178 = vor.u32 %v4174, %v4177
    %v4179 = vrot.slane %v4178, 4
    %v4181 = vshll.u32 %v3748, 16
    %v4183 = vrot.slane %v4181, 5
    %v4184 = vsel %vm153, %v4179, %v4183
    %v4186 = vshrl.u32 %v3749, 16
    %v4188 = vrot.slane %v4186, 4
    %v4189 = vshll.u32 %v3749, 16
    %v4191 = vrot.slane %v4189, 5
    %v4192 = vor.u32 %v4188, %v4191
    %v4193 = vrot.slane %v4192, 4
    %v4195 = vshll.u32 %v3750, 16
    %v4197 = vrot.slane %v4195, 5
    %v4198 = vsel %vm153, %v4193, %v4197
    %4199 = vrot.lane.b32.xlu0 %v3764, 32
    %v4200 = vpop.permute.xlu0 %4199
    %4201 = vrot.lane.b32.xlu0 %v3778, 32
    %v4202 = vpop.permute.xlu0 %4201
    %4203 = vrot.lane.b32.xlu0 %v3792, 32
    %v4204 = vpop.permute.xlu0 %4203
    %4205 = vrot.lane.b32.xlu0 %v3806, 32
    %v4206 = vpop.permute.xlu0 %4205
    %4207 = vrot.lane.b32.xlu0 %v3820, 32
    %v4208 = vpop.permute.xlu0 %4207
    %4209 = vrot.lane.b32.xlu0 %v3834, 32
    %v4210 = vpop.permute.xlu0 %4209
    %4211 = vrot.lane.b32.xlu0 %v3848, 32
    %v4212 = vpop.permute.xlu0 %4211
    %4213 = vrot.lane.b32.xlu0 %v3862, 32
    %v4214 = vpop.permute.xlu0 %4213
    %4215 = vrot.lane.b32.xlu0 %v3876, 32
    %v4216 = vpop.permute.xlu0 %4215
    %4217 = vrot.lane.b32.xlu0 %v3890, 32
    %v4218 = vpop.permute.xlu0 %4217
    %4219 = vrot.lane.b32.xlu0 %v3904, 32
    %v4220 = vpop.permute.xlu0 %4219
    %4221 = vrot.lane.b32.xlu0 %v3918, 32
    %v4222 = vpop.permute.xlu0 %4221
    %4223 = vrot.lane.b32.xlu0 %v3932, 32
    %v4224 = vpop.permute.xlu0 %4223
    %4225 = vrot.lane.b32.xlu0 %v3946, 32
    %v4226 = vpop.permute.xlu0 %4225
    %4227 = vrot.lane.b32.xlu0 %v3960, 32
    %v4228 = vpop.permute.xlu0 %4227
    %4229 = vrot.lane.b32.xlu0 %v3974, 32
    %v4230 = vpop.permute.xlu0 %4229
    %4231 = vrot.lane.b32.xlu0 %v3988, 32
    %v4232 = vpop.permute.xlu0 %4231
    %4233 = vrot.lane.b32.xlu0 %v4002, 32
    %v4234 = vpop.permute.xlu0 %4233
    %4235 = vrot.lane.b32.xlu0 %v4016, 32
    %v4236 = vpop.permute.xlu0 %4235
    %4237 = vrot.lane.b32.xlu0 %v4030, 32
    %v4238 = vpop.permute.xlu0 %4237
    %4239 = vrot.lane.b32.xlu0 %v4044, 32
    %v4240 = vpop.permute.xlu0 %4239
    %4241 = vrot.lane.b32.xlu0 %v4058, 32
    %v4242 = vpop.permute.xlu0 %4241
    %4243 = vrot.lane.b32.xlu0 %v4072, 32
    %v4244 = vpop.permute.xlu0 %4243
    %4245 = vrot.lane.b32.xlu0 %v4086, 32
    %v4246 = vpop.permute.xlu0 %4245
    %4247 = vrot.lane.b32.xlu0 %v4100, 32
    %v4248 = vpop.permute.xlu0 %4247
    %4249 = vrot.lane.b32.xlu0 %v4114, 32
    %v4250 = vpop.permute.xlu0 %4249
    %4251 = vrot.lane.b32.xlu0 %v4128, 32
    %v4252 = vpop.permute.xlu0 %4251
    %4253 = vrot.lane.b32.xlu0 %v4142, 32
    %v4254 = vpop.permute.xlu0 %4253
    %4255 = vrot.lane.b32.xlu0 %v4156, 32
    %v4256 = vpop.permute.xlu0 %4255
    %4257 = vrot.lane.b32.xlu0 %v4170, 32
    %v4258 = vpop.permute.xlu0 %4257
    %4259 = vrot.lane.b32.xlu0 %v4184, 32
    %v4260 = vpop.permute.xlu0 %4259
    %4261 = vrot.lane.b32.xlu0 %v4198, 32
    %v4262 = vpop.permute.xlu0 %4261
    %4295 = vst.msk [vmem:[#allocation2 + $0x4] sm:$0xf] %vm1086, %v4200
    %4296 = vst.msk [vmem:[#allocation2 + $0x14] sm:$0xf] %vm1086, %v4202
    %4297 = vst.msk [vmem:[#allocation2 + $0x24] sm:$0xf] %vm1086, %v4204
    %4298 = vst.msk [vmem:[#allocation2 + $0x34] sm:$0xf] %vm1086, %v4206
    %4299 = vst.msk [vmem:[#allocation2 + $0x44] sm:$0xf] %vm1086, %v4208
    %4300 = vst.msk [vmem:[#allocation2 + $0x54] sm:$0xf] %vm1086, %v4210
    %4301 = vst.msk [vmem:[#allocation2 + $0x64] sm:$0xf] %vm1086, %v4212
    %4302 = vst.msk [vmem:[#allocation2 + $0x74] sm:$0xf] %vm1086, %v4214
    %4303 = vst.msk [vmem:[#allocation2 + $0x84] sm:$0xf] %vm1086, %v4216
    %4304 = vst.msk [vmem:[#allocation2 + $0x94] sm:$0xf] %vm1086, %v4218
    %4305 = vst.msk [vmem:[#allocation2 + $0xa4] sm:$0xf] %vm1086, %v4220
    %4306 = vst.msk [vmem:[#allocation2 + $0xb4] sm:$0xf] %vm1086, %v4222
    %4307 = vst.msk [vmem:[#allocation2 + $0xc4] sm:$0xf] %vm1086, %v4224
    %4308 = vst.msk [vmem:[#allocation2 + $0xd4] sm:$0xf] %vm1086, %v4226
    %4309 = vst.msk [vmem:[#allocation2 + $0xe4] sm:$0xf] %vm1086, %v4228
    %4310 = vst.msk [vmem:[#allocation2 + $0xf4] sm:$0xf] %vm1086, %v4230
    %4311 = vst.msk [vmem:[#allocation2 + $0x104] sm:$0xf] %vm1086, %v4232
    %4312 = vst.msk [vmem:[#allocation2 + $0x114] sm:$0xf] %vm1086, %v4234
    %4313 = vst.msk [vmem:[#allocation2 + $0x124] sm:$0xf] %vm1086, %v4236
    %4314 = vst.msk [vmem:[#allocation2 + $0x134] sm:$0xf] %vm1086, %v4238
    %4315 = vst.msk [vmem:[#allocation2 + $0x144] sm:$0xf] %vm1086, %v4240
    %4316 = vst.msk [vmem:[#allocation2 + $0x154] sm:$0xf] %vm1086, %v4242
    %4317 = vst.msk [vmem:[#allocation2 + $0x164] sm:$0xf] %vm1086, %v4244
    %4318 = vst.msk [vmem:[#allocation2 + $0x174] sm:$0xf] %vm1086, %v4246
    %4319 = vst.msk [vmem:[#allocation2 + $0x184] sm:$0xf] %vm1086, %v4248
    %4320 = vst.msk [vmem:[#allocation2 + $0x194] sm:$0xf] %vm1086, %v4250
    %4321 = vst.msk [vmem:[#allocation2 + $0x1a4] sm:$0xf] %vm1086, %v4252
    %4322 = vst.msk [vmem:[#allocation2 + $0x1b4] sm:$0xf] %vm1086, %v4254
    %4323 = vst.msk [vmem:[#allocation2 + $0x1c4] sm:$0xf] %vm1086, %v4256
    %4324 = vst.msk [vmem:[#allocation2 + $0x1d4] sm:$0xf] %vm1086, %v4258
    %4325 = vst.msk [vmem:[#allocation2 + $0x1e4] sm:$0xf] %vm1086, %v4260
    %4326 = vst.msk [vmem:[#allocation2 + $0x1f4] sm:$0xf] %vm1086, %v4262
    %v4327 = vld [vmem:[%s3494] sm:$0xe]
    %v4328 = vld [vmem:[%s3494 + $0x4] sm:$0x1]
    %v4329 = vld [vmem:[%s3494 + $0x8] sm:$0xe]
    %v4330 = vld [vmem:[%s3494 + $0xc] sm:$0x1]
    %v4331 = vld [vmem:[%s3494 + $0x10] sm:$0xe]
    %v4332 = vld [vmem:[%s3494 + $0x14] sm:$0x1]
    %v4333 = vld [vmem:[%s3494 + $0x18] sm:$0xe]
    %v4334 = vld [vmem:[%s3494 + $0x1c] sm:$0x1]
    %v4335 = vld [vmem:[%s3494 + $0x20] sm:$0xe]
    %v4336 = vld [vmem:[%s3494 + $0x24] sm:$0x1]
    %v4337 = vld [vmem:[%s3494 + $0x28] sm:$0xe]
    %v4338 = vld [vmem:[%s3494 + $0x2c] sm:$0x1]
    %v4339 = vld [vmem:[%s3494 + $0x30] sm:$0xe]
    %v4340 = vld [vmem:[%s3494 + $0x34] sm:$0x1]
    %v4341 = vld [vmem:[%s3494 + $0x38] sm:$0xe]
    %v4342 = vld [vmem:[%s3494 + $0x3c] sm:$0x1]
    %v4343 = vld [vmem:[%s3494 + $0x50] sm:$0xe]
    %v4344 = vld [vmem:[%s3494 + $0x54] sm:$0x1]
    %v4345 = vld [vmem:[%s3494 + $0x58] sm:$0xe]
    %v4346 = vld [vmem:[%s3494 + $0x5c] sm:$0x1]
    %v4347 = vld [vmem:[%s3494 + $0x60] sm:$0xe]
    %v4348 = vld [vmem:[%s3494 + $0x64] sm:$0x1]
    %v4349 = vld [vmem:[%s3494 + $0x68] sm:$0xe]
    %v4350 = vld [vmem:[%s3494 + $0x6c] sm:$0x1]
    %v4351 = vld [vmem:[%s3494 + $0x70] sm:$0xe]
    %v4352 = vld [vmem:[%s3494 + $0x74] sm:$0x1]
    %v4353 = vld [vmem:[%s3494 + $0x78] sm:$0xe]
    %v4354 = vld [vmem:[%s3494 + $0x7c] sm:$0x1]
    %v4355 = vld [vmem:[%s3494 + $0x80] sm:$0xe]
    %v4356 = vld [vmem:[%s3494 + $0x84] sm:$0x1]
    %v4357 = vld [vmem:[%s3494 + $0x88] sm:$0xe]
    %v4358 = vld [vmem:[%s3494 + $0x8c] sm:$0x1]
    %v4359 = vld [vmem:[%s3494 + $0xa0] sm:$0xe]
    %v4360 = vld [vmem:[%s3494 + $0xa4] sm:$0x1]
    %v4361 = vld [vmem:[%s3494 + $0xa8] sm:$0xe]
    %v4362 = vld [vmem:[%s3494 + $0xac] sm:$0x1]
    %v4363 = vld [vmem:[%s3494 + $0xb0] sm:$0xe]
    %v4364 = vld [vmem:[%s3494 + $0xb4] sm:$0x1]
    %v4365 = vld [vmem:[%s3494 + $0xb8] sm:$0xe]
    %v4366 = vld [vmem:[%s3494 + $0xbc] sm:$0x1]
    %v4367 = vld [vmem:[%s3494 + $0xc0] sm:$0xe]
    %v4368 = vld [vmem:[%s3494 + $0xc4] sm:$0x1]
    %v4369 = vld [vmem:[%s3494 + $0xc8] sm:$0xe]
    %v4370 = vld [vmem:[%s3494 + $0xcc] sm:$0x1]
    %v4371 = vld [vmem:[%s3494 + $0xd0] sm:$0xe]
    %v4372 = vld [vmem:[%s3494 + $0xd4] sm:$0x1]
    %v4373 = vld [vmem:[%s3494 + $0xd8] sm:$0xe]
    %v4374 = vld [vmem:[%s3494 + $0xdc] sm:$0x1]
    %v4375 = vld [vmem:[%s3494 + $0xf0] sm:$0xe]
    %v4376 = vld [vmem:[%s3494 + $0xf4] sm:$0x1]
    %v4377 = vld [vmem:[%s3494 + $0xf8] sm:$0xe]
    %v4378 = vld [vmem:[%s3494 + $0xfc] sm:$0x1]
    %v4379 = vld [vmem:[%s3494 + $0x100] sm:$0xe]
    %v4380 = vld [vmem:[%s3494 + $0x104] sm:$0x1]
    %v4381 = vld [vmem:[%s3494 + $0x108] sm:$0xe]
    %v4382 = vld [vmem:[%s3494 + $0x10c] sm:$0x1]
    %v4383 = vld [vmem:[%s3494 + $0x110] sm:$0xe]
    %v4384 = vld [vmem:[%s3494 + $0x114] sm:$0x1]
    %v4385 = vld [vmem:[%s3494 + $0x118] sm:$0xe]
    %v4386 = vld [vmem:[%s3494 + $0x11c] sm:$0x1]
    %v4387 = vld [vmem:[%s3494 + $0x120] sm:$0xe]
    %v4388 = vld [vmem:[%s3494 + $0x124] sm:$0x1]
    %v4389 = vld [vmem:[%s3494 + $0x128] sm:$0xe]
    %v4390 = vld [vmem:[%s3494 + $0x12c] sm:$0x1]
    %v4455 = vrot.slane %v4327, 5
    %v4456 = vrot.slane %v4455, 4
    %v4457 = vrot.slane %v4328, 5
    %v4458 = vsel %vm861, %v4456, %v4457
    %v4459 = vrot.slane %v4329, 5
    %v4460 = vrot.slane %v4459, 4
    %v4461 = vrot.slane %v4330, 5
    %v4462 = vsel %vm861, %v4460, %v4461
    %v4463 = vrot.slane %v4331, 5
    %v4464 = vrot.slane %v4463, 4
    %v4465 = vrot.slane %v4332, 5
    %v4466 = vsel %vm861, %v4464, %v4465
    %v4467 = vrot.slane %v4333, 5
    %v4468 = vrot.slane %v4467, 4
    %v4469 = vrot.slane %v4334, 5
    %v4470 = vsel %vm861, %v4468, %v4469
    %v4471 = vrot.slane %v4335, 5
    %v4472 = vrot.slane %v4471, 4
    %v4473 = vrot.slane %v4336, 5
    %v4474 = vsel %vm861, %v4472, %v4473
    %v4475 = vrot.slane %v4337, 5
    %v4476 = vrot.slane %v4475, 4
    %v4477 = vrot.slane %v4338, 5
    %v4478 = vsel %vm861, %v4476, %v4477
    %v4479 = vrot.slane %v4339, 5
    %v4480 = vrot.slane %v4479, 4
    %v4481 = vrot.slane %v4340, 5
    %v4482 = vsel %vm861, %v4480, %v4481
    %v4483 = vrot.slane %v4341, 5
    %v4484 = vrot.slane %v4483, 4
    %v4485 = vrot.slane %v4342, 5
    %v4486 = vsel %vm861, %v4484, %v4485
    %v4487 = vrot.slane %v4343, 5
    %v4488 = vrot.slane %v4487, 4
    %v4489 = vrot.slane %v4344, 5
    %v4490 = vsel %vm861, %v4488, %v4489
    %v4491 = vrot.slane %v4345, 5
    %v4492 = vrot.slane %v4491, 4
    %v4493 = vrot.slane %v4346, 5
    %v4494 = vsel %vm861, %v4492, %v4493
    %v4495 = vrot.slane %v4347, 5
    %v4496 = vrot.slane %v4495, 4
    %v4497 = vrot.slane %v4348, 5
    %v4498 = vsel %vm861, %v4496, %v4497
    %v4499 = vrot.slane %v4349, 5
    %v4500 = vrot.slane %v4499, 4
    %v4501 = vrot.slane %v4350, 5
    %v4502 = vsel %vm861, %v4500, %v4501
    %v4503 = vrot.slane %v4351, 5
    %v4504 = vrot.slane %v4503, 4
    %v4505 = vrot.slane %v4352, 5
    %v4506 = vsel %vm861, %v4504, %v4505
    %v4507 = vrot.slane %v4353, 5
    %v4508 = vrot.slane %v4507, 4
    %v4509 = vrot.slane %v4354, 5
    %v4510 = vsel %vm861, %v4508, %v4509
    %v4511 = vrot.slane %v4355, 5
    %v4512 = vrot.slane %v4511, 4
    %v4513 = vrot.slane %v4356, 5
    %v4514 = vsel %vm861, %v4512, %v4513
    %v4515 = vrot.slane %v4357, 5
    %v4516 = vrot.slane %v4515, 4
    %v4517 = vrot.slane %v4358, 5
    %v4518 = vsel %vm861, %v4516, %v4517
    %v4519 = vrot.slane %v4359, 5
    %v4520 = vrot.slane %v4519, 4
    %v4521 = vrot.slane %v4360, 5
    %v4522 = vsel %vm861, %v4520, %v4521
    %v4523 = vrot.slane %v4361, 5
    %v4524 = vrot.slane %v4523, 4
    %v4525 = vrot.slane %v4362, 5
    %v4526 = vsel %vm861, %v4524, %v4525
    %v4527 = vrot.slane %v4363, 5
    %v4528 = vrot.slane %v4527, 4
    %v4529 = vrot.slane %v4364, 5
    %v4530 = vsel %vm861, %v4528, %v4529
    %v4531 = vrot.slane %v4365, 5
    %v4532 = vrot.slane %v4531, 4
    %v4533 = vrot.slane %v4366, 5
    %v4534 = vsel %vm861, %v4532, %v4533
    %v4535 = vrot.slane %v4367, 5
    %v4536 = vrot.slane %v4535, 4
    %v4537 = vrot.slane %v4368, 5
    %v4538 = vsel %vm861, %v4536, %v4537
    %v4539 = vrot.slane %v4369, 5
    %v4540 = vrot.slane %v4539, 4
    %v4541 = vrot.slane %v4370, 5
    %v4542 = vsel %vm861, %v4540, %v4541
    %v4543 = vrot.slane %v4371, 5
    %v4544 = vrot.slane %v4543, 4
    %v4545 = vrot.slane %v4372, 5
    %v4546 = vsel %vm861, %v4544, %v4545
    %v4547 = vrot.slane %v4373, 5
    %v4548 = vrot.slane %v4547, 4
    %v4549 = vrot.slane %v4374, 5
    %v4550 = vsel %vm861, %v4548, %v4549
    %v4551 = vrot.slane %v4375, 5
    %v4552 = vrot.slane %v4551, 4
    %v4553 = vrot.slane %v4376, 5
    %v4554 = vsel %vm861, %v4552, %v4553
    %v4555 = vrot.slane %v4377, 5
    %v4556 = vrot.slane %v4555, 4
    %v4557 = vrot.slane %v4378, 5
    %v4558 = vsel %vm861, %v4556, %v4557
    %v4559 = vrot.slane %v4379, 5
    %v4560 = vrot.slane %v4559, 4
    %v4561 = vrot.slane %v4380, 5
    %v4562 = vsel %vm861, %v4560, %v4561
    %v4563 = vrot.slane %v4381, 5
    %v4564 = vrot.slane %v4563, 4
    %v4565 = vrot.slane %v4382, 5
    %v4566 = vsel %vm861, %v4564, %v4565
    %v4567 = vrot.slane %v4383, 5
    %v4568 = vrot.slane %v4567, 4
    %v4569 = vrot.slane %v4384, 5
    %v4570 = vsel %vm861, %v4568, %v4569
    %v4571 = vrot.slane %v4385, 5
    %v4572 = vrot.slane %v4571, 4
    %v4573 = vrot.slane %v4386, 5
    %v4574 = vsel %vm861, %v4572, %v4573
    %v4575 = vrot.slane %v4387, 5
    %v4576 = vrot.slane %v4575, 4
    %v4577 = vrot.slane %v4388, 5
    %v4578 = vsel %vm861, %v4576, %v4577
    %v4579 = vrot.slane %v4389, 5
    %v4580 = vrot.slane %v4579, 4
    %v4581 = vrot.slane %v4390, 5
    %v4582 = vsel %vm861, %v4580, %v4581
    %4583 = vrot.lane.b32.xlu0 %v4458, 48
    %v4584 = vpop.permute.xlu0 %4583
    %4585 = vrot.lane.b32.xlu0 %v4462, 48
    %v4586 = vpop.permute.xlu0 %4585
    %4587 = vrot.lane.b32.xlu0 %v4466, 48
    %v4588 = vpop.permute.xlu0 %4587
    %4589 = vrot.lane.b32.xlu0 %v4470, 48
    %v4590 = vpop.permute.xlu0 %4589
    %4591 = vrot.lane.b32.xlu0 %v4474, 48
    %v4592 = vpop.permute.xlu0 %4591
    %4593 = vrot.lane.b32.xlu0 %v4478, 48
    %v4594 = vpop.permute.xlu0 %4593
    %4595 = vrot.lane.b32.xlu0 %v4482, 48
    %v4596 = vpop.permute.xlu0 %4595
    %4597 = vrot.lane.b32.xlu0 %v4486, 48
    %v4598 = vpop.permute.xlu0 %4597
    %4599 = vrot.lane.b32.xlu0 %v4490, 48
    %v4600 = vpop.permute.xlu0 %4599
    %4601 = vrot.lane.b32.xlu0 %v4494, 48
    %v4602 = vpop.permute.xlu0 %4601
    %4603 = vrot.lane.b32.xlu0 %v4498, 48
    %v4604 = vpop.permute.xlu0 %4603
    %4605 = vrot.lane.b32.xlu0 %v4502, 48
    %v4606 = vpop.permute.xlu0 %4605
    %4607 = vrot.lane.b32.xlu0 %v4506, 48
    %v4608 = vpop.permute.xlu0 %4607
    %4609 = vrot.lane.b32.xlu0 %v4510, 48
    %v4610 = vpop.permute.xlu0 %4609
    %4611 = vrot.lane.b32.xlu0 %v4514, 48
    %v4612 = vpop.permute.xlu0 %4611
    %4613 = vrot.lane.b32.xlu0 %v4518, 48
    %v4614 = vpop.permute.xlu0 %4613
    %4615 = vrot.lane.b32.xlu0 %v4522, 48
    %v4616 = vpop.permute.xlu0 %4615
    %4617 = vrot.lane.b32.xlu0 %v4526, 48
    %v4618 = vpop.permute.xlu0 %4617
    %4619 = vrot.lane.b32.xlu0 %v4530, 48
    %v4620 = vpop.permute.xlu0 %4619
    %4621 = vrot.lane.b32.xlu0 %v4534, 48
    %v4622 = vpop.permute.xlu0 %4621
    %4623 = vrot.lane.b32.xlu0 %v4538, 48
    %v4624 = vpop.permute.xlu0 %4623
    %4625 = vrot.lane.b32.xlu0 %v4542, 48
    %v4626 = vpop.permute.xlu0 %4625
    %4627 = vrot.lane.b32.xlu0 %v4546, 48
    %v4628 = vpop.permute.xlu0 %4627
    %4629 = vrot.lane.b32.xlu0 %v4550, 48
    %v4630 = vpop.permute.xlu0 %4629
    %4631 = vrot.lane.b32.xlu0 %v4554, 48
    %v4632 = vpop.permute.xlu0 %4631
    %4633 = vrot.lane.b32.xlu0 %v4558, 48
    %v4634 = vpop.permute.xlu0 %4633
    %4635 = vrot.lane.b32.xlu0 %v4562, 48
    %v4636 = vpop.permute.xlu0 %4635
    %4637 = vrot.lane.b32.xlu0 %v4566, 48
    %v4638 = vpop.permute.xlu0 %4637
    %4639 = vrot.lane.b32.xlu0 %v4570, 48
    %v4640 = vpop.permute.xlu0 %4639
    %4641 = vrot.lane.b32.xlu0 %v4574, 48
    %v4642 = vpop.permute.xlu0 %4641
    %4643 = vrot.lane.b32.xlu0 %v4578, 48
    %v4644 = vpop.permute.xlu0 %4643
    %4645 = vrot.lane.b32.xlu0 %v4582, 48
    %v4646 = vpop.permute.xlu0 %4645
    %4679 = vst.msk [vmem:[#allocation2 + $0x4] sm:$0xf] %vm1280, %v4584
    %4680 = vst.msk [vmem:[#allocation2 + $0x14] sm:$0xf] %vm1280, %v4586
    %4681 = vst.msk [vmem:[#allocation2 + $0x24] sm:$0xf] %vm1280, %v4588
    %4682 = vst.msk [vmem:[#allocation2 + $0x34] sm:$0xf] %vm1280, %v4590
    %4683 = vst.msk [vmem:[#allocation2 + $0x44] sm:$0xf] %vm1280, %v4592
    %4684 = vst.msk [vmem:[#allocation2 + $0x54] sm:$0xf] %vm1280, %v4594
    %4685 = vst.msk [vmem:[#allocation2 + $0x64] sm:$0xf] %vm1280, %v4596
    %4686 = vst.msk [vmem:[#allocation2 + $0x74] sm:$0xf] %vm1280, %v4598
    %4687 = vst.msk [vmem:[#allocation2 + $0x84] sm:$0xf] %vm1280, %v4600
    %4688 = vst.msk [vmem:[#allocation2 + $0x94] sm:$0xf] %vm1280, %v4602
    %4689 = vst.msk [vmem:[#allocation2 + $0xa4] sm:$0xf] %vm1280, %v4604
    %4690 = vst.msk [vmem:[#allocation2 + $0xb4] sm:$0xf] %vm1280, %v4606
    %4691 = vst.msk [vmem:[#allocation2 + $0xc4] sm:$0xf] %vm1280, %v4608
    %4692 = vst.msk [vmem:[#allocation2 + $0xd4] sm:$0xf] %vm1280, %v4610
    %4693 = vst.msk [vmem:[#allocation2 + $0xe4] sm:$0xf] %vm1280, %v4612
    %4694 = vst.msk [vmem:[#allocation2 + $0xf4] sm:$0xf] %vm1280, %v4614
    %4695 = vst.msk [vmem:[#allocation2 + $0x104] sm:$0xf] %vm1280, %v4616
    %4696 = vst.msk [vmem:[#allocation2 + $0x114] sm:$0xf] %vm1280, %v4618
    %4697 = vst.msk [vmem:[#allocation2 + $0x124] sm:$0xf] %vm1280, %v4620
    %4698 = vst.msk [vmem:[#allocation2 + $0x134] sm:$0xf] %vm1280, %v4622
    %4699 = vst.msk [vmem:[#allocation2 + $0x144] sm:$0xf] %vm1280, %v4624
    %4700 = vst.msk [vmem:[#allocation2 + $0x154] sm:$0xf] %vm1280, %v4626
    %4701 = vst.msk [vmem:[#allocation2 + $0x164] sm:$0xf] %vm1280, %v4628
    %4702 = vst.msk [vmem:[#allocation2 + $0x174] sm:$0xf] %vm1280, %v4630
    %4703 = vst.msk [vmem:[#allocation2 + $0x184] sm:$0xf] %vm1280, %v4632
    %4704 = vst.msk [vmem:[#allocation2 + $0x194] sm:$0xf] %vm1280, %v4634
    %4705 = vst.msk [vmem:[#allocation2 + $0x1a4] sm:$0xf] %vm1280, %v4636
    %4706 = vst.msk [vmem:[#allocation2 + $0x1b4] sm:$0xf] %vm1280, %v4638
    %4707 = vst.msk [vmem:[#allocation2 + $0x1c4] sm:$0xf] %vm1280, %v4640
    %4708 = vst.msk [vmem:[#allocation2 + $0x1d4] sm:$0xf] %vm1280, %v4642
    %4709 = vst.msk [vmem:[#allocation2 + $0x1e4] sm:$0xf] %vm1280, %v4644
    %4710 = vst.msk [vmem:[#allocation2 + $0x1f4] sm:$0xf] %vm1280, %v4646
    %s4711 = scalar_lea.vmem %s0, 88
    %v4712 = vld [vmem:[%s4711] sm:$0xf]
    %v4713 = vld [vmem:[%s4711 + $0x8] sm:$0xf]
    %v4714 = vld [vmem:[%s4711 + $0x10] sm:$0xf]
    %v4715 = vld [vmem:[%s4711 + $0x18] sm:$0xf]
    %v4716 = vld [vmem:[%s4711 + $0x20] sm:$0xf]
    %v4717 = vld [vmem:[%s4711 + $0x28] sm:$0xf]
    %v4718 = vld [vmem:[%s4711 + $0x30] sm:$0xf]
    %v4719 = vld [vmem:[%s4711 + $0x38] sm:$0xf]
    %v4720 = vld [vmem:[%s4711 + $0x50] sm:$0xf]
    %v4721 = vld [vmem:[%s4711 + $0x58] sm:$0xf]
    %v4722 = vld [vmem:[%s4711 + $0x60] sm:$0xf]
    %v4723 = vld [vmem:[%s4711 + $0x68] sm:$0xf]
    %v4724 = vld [vmem:[%s4711 + $0x70] sm:$0xf]
    %v4725 = vld [vmem:[%s4711 + $0x78] sm:$0xf]
    %v4726 = vld [vmem:[%s4711 + $0x80] sm:$0xf]
    %v4727 = vld [vmem:[%s4711 + $0x88] sm:$0xf]
    %v4728 = vld [vmem:[%s4711 + $0xa0] sm:$0xf]
    %v4729 = vld [vmem:[%s4711 + $0xa8] sm:$0xf]
    %v4730 = vld [vmem:[%s4711 + $0xb0] sm:$0xf]
    %v4731 = vld [vmem:[%s4711 + $0xb8] sm:$0xf]
    %v4732 = vld [vmem:[%s4711 + $0xc0] sm:$0xf]
    %v4733 = vld [vmem:[%s4711 + $0xc8] sm:$0xf]
    %v4734 = vld [vmem:[%s4711 + $0xd0] sm:$0xf]
    %v4735 = vld [vmem:[%s4711 + $0xd8] sm:$0xf]
    %v4736 = vld [vmem:[%s4711 + $0xf0] sm:$0xf]
    %v4737 = vld [vmem:[%s4711 + $0xf8] sm:$0xf]
    %v4738 = vld [vmem:[%s4711 + $0x100] sm:$0xf]
    %v4739 = vld [vmem:[%s4711 + $0x108] sm:$0xf]
    %v4740 = vld [vmem:[%s4711 + $0x110] sm:$0xf]
    %v4741 = vld [vmem:[%s4711 + $0x118] sm:$0xf]
    %v4742 = vld [vmem:[%s4711 + $0x120] sm:$0xf]
    %v4743 = vld [vmem:[%s4711 + $0x128] sm:$0xf]
    %4776 = vrot.lane.b32.xlu0 %v4712, 64
    %v4777 = vpop.permute.xlu0 %4776
    %4778 = vrot.lane.b32.xlu0 %v4713, 64
    %v4779 = vpop.permute.xlu0 %4778
    %4780 = vrot.lane.b32.xlu0 %v4714, 64
    %v4781 = vpop.permute.xlu0 %4780
    %4782 = vrot.lane.b32.xlu0 %v4715, 64
    %v4783 = vpop.permute.xlu0 %4782
    %4784 = vrot.lane.b32.xlu0 %v4716, 64
    %v4785 = vpop.permute.xlu0 %4784
    %4786 = vrot.lane.b32.xlu0 %v4717, 64
    %v4787 = vpop.permute.xlu0 %4786
    %4788 = vrot.lane.b32.xlu0 %v4718, 64
    %v4789 = vpop.permute.xlu0 %4788
    %4790 = vrot.lane.b32.xlu0 %v4719, 64
    %v4791 = vpop.permute.xlu0 %4790
    %4792 = vrot.lane.b32.xlu0 %v4720, 64
    %v4793 = vpop.permute.xlu0 %4792
    %4794 = vrot.lane.b32.xlu0 %v4721, 64
    %v4795 = vpop.permute.xlu0 %4794
    %4796 = vrot.lane.b32.xlu0 %v4722, 64
    %v4797 = vpop.permute.xlu0 %4796
    %4798 = vrot.lane.b32.xlu0 %v4723, 64
    %v4799 = vpop.permute.xlu0 %4798
    %4800 = vrot.lane.b32.xlu0 %v4724, 64
    %v4801 = vpop.permute.xlu0 %4800
    %4802 = vrot.lane.b32.xlu0 %v4725, 64
    %v4803 = vpop.permute.xlu0 %4802
    %4804 = vrot.lane.b32.xlu0 %v4726, 64
    %v4805 = vpop.permute.xlu0 %4804
    %4806 = vrot.lane.b32.xlu0 %v4727, 64
    %v4807 = vpop.permute.xlu0 %4806
    %4808 = vrot.lane.b32.xlu0 %v4728, 64
    %v4809 = vpop.permute.xlu0 %4808
    %4810 = vrot.lane.b32.xlu0 %v4729, 64
    %v4811 = vpop.permute.xlu0 %4810
    %4812 = vrot.lane.b32.xlu0 %v4730, 64
    %v4813 = vpop.permute.xlu0 %4812
    %4814 = vrot.lane.b32.xlu0 %v4731, 64
    %v4815 = vpop.permute.xlu0 %4814
    %4816 = vrot.lane.b32.xlu0 %v4732, 64
    %v4817 = vpop.permute.xlu0 %4816
    %4818 = vrot.lane.b32.xlu0 %v4733, 64
    %v4819 = vpop.permute.xlu0 %4818
    %4820 = vrot.lane.b32.xlu0 %v4734, 64
    %v4821 = vpop.permute.xlu0 %4820
    %4822 = vrot.lane.b32.xlu0 %v4735, 64
    %v4823 = vpop.permute.xlu0 %4822
    %4824 = vrot.lane.b32.xlu0 %v4736, 64
    %v4825 = vpop.permute.xlu0 %4824
    %4826 = vrot.lane.b32.xlu0 %v4737, 64
    %v4827 = vpop.permute.xlu0 %4826
    %4828 = vrot.lane.b32.xlu0 %v4738, 64
    %v4829 = vpop.permute.xlu0 %4828
    %4830 = vrot.lane.b32.xlu0 %v4739, 64
    %v4831 = vpop.permute.xlu0 %4830
    %4832 = vrot.lane.b32.xlu0 %v4740, 64
    %v4833 = vpop.permute.xlu0 %4832
    %4834 = vrot.lane.b32.xlu0 %v4741, 64
    %v4835 = vpop.permute.xlu0 %4834
    %4836 = vrot.lane.b32.xlu0 %v4742, 64
    %v4837 = vpop.permute.xlu0 %4836
    %4838 = vrot.lane.b32.xlu0 %v4743, 64
    %v4839 = vpop.permute.xlu0 %4838
    %4872 = vst.msk [vmem:[#allocation2 + $0x4] sm:$0xf] %vm1921, %v4777
    %4873 = vst.msk [vmem:[#allocation2 + $0x14] sm:$0xf] %vm1921, %v4779
    %4874 = vst.msk [vmem:[#allocation2 + $0x24] sm:$0xf] %vm1921, %v4781
    %4875 = vst.msk [vmem:[#allocation2 + $0x34] sm:$0xf] %vm1921, %v4783
    %4876 = vst.msk [vmem:[#allocation2 + $0x44] sm:$0xf] %vm1921, %v4785
    %4877 = vst.msk [vmem:[#allocation2 + $0x54] sm:$0xf] %vm1921, %v4787
    %4878 = vst.msk [vmem:[#allocation2 + $0x64] sm:$0xf] %vm1921, %v4789
    %4879 = vst.msk [vmem:[#allocation2 + $0x74] sm:$0xf] %vm1921, %v4791
    %4880 = vst.msk [vmem:[#allocation2 + $0x84] sm:$0xf] %vm1921, %v4793
    %4881 = vst.msk [vmem:[#allocation2 + $0x94] sm:$0xf] %vm1921, %v4795
    %4882 = vst.msk [vmem:[#allocation2 + $0xa4] sm:$0xf] %vm1921, %v4797
    %4883 = vst.msk [vmem:[#allocation2 + $0xb4] sm:$0xf] %vm1921, %v4799
    %4884 = vst.msk [vmem:[#allocation2 + $0xc4] sm:$0xf] %vm1921, %v4801
    %4885 = vst.msk [vmem:[#allocation2 + $0xd4] sm:$0xf] %vm1921, %v4803
    %4886 = vst.msk [vmem:[#allocation2 + $0xe4] sm:$0xf] %vm1921, %v4805
    %4887 = vst.msk [vmem:[#allocation2 + $0xf4] sm:$0xf] %vm1921, %v4807
    %4888 = vst.msk [vmem:[#allocation2 + $0x104] sm:$0xf] %vm1921, %v4809
    %4889 = vst.msk [vmem:[#allocation2 + $0x114] sm:$0xf] %vm1921, %v4811
    %4890 = vst.msk [vmem:[#allocation2 + $0x124] sm:$0xf] %vm1921, %v4813
    %4891 = vst.msk [vmem:[#allocation2 + $0x134] sm:$0xf] %vm1921, %v4815
    %4892 = vst.msk [vmem:[#allocation2 + $0x144] sm:$0xf] %vm1921, %v4817
    %4893 = vst.msk [vmem:[#allocation2 + $0x154] sm:$0xf] %vm1921, %v4819
    %4894 = vst.msk [vmem:[#allocation2 + $0x164] sm:$0xf] %vm1921, %v4821
    %4895 = vst.msk [vmem:[#allocation2 + $0x174] sm:$0xf] %vm1921, %v4823
    %4896 = vst.msk [vmem:[#allocation2 + $0x184] sm:$0xf] %vm1921, %v4825
    %4897 = vst.msk [vmem:[#allocation2 + $0x194] sm:$0xf] %vm1921, %v4827
    %4898 = vst.msk [vmem:[#allocation2 + $0x1a4] sm:$0xf] %vm1921, %v4829
    %4899 = vst.msk [vmem:[#allocation2 + $0x1b4] sm:$0xf] %vm1921, %v4831
    %4900 = vst.msk [vmem:[#allocation2 + $0x1c4] sm:$0xf] %vm1921, %v4833
    %4901 = vst.msk [vmem:[#allocation2 + $0x1d4] sm:$0xf] %vm1921, %v4835
    %4902 = vst.msk [vmem:[#allocation2 + $0x1e4] sm:$0xf] %vm1921, %v4837
    %4903 = vst.msk [vmem:[#allocation2 + $0x1f4] sm:$0xf] %vm1921, %v4839
    %v4904 = vld [vmem:[%s4711] sm:$0xf]
    %v4905 = vld [vmem:[%s4711 + $0x4] sm:$0x1]
    %v4906 = vld [vmem:[%s4711 + $0x8] sm:$0xf]
    %v4907 = vld [vmem:[%s4711 + $0xc] sm:$0x1]
    %v4908 = vld [vmem:[%s4711 + $0x10] sm:$0xf]
    %v4909 = vld [vmem:[%s4711 + $0x14] sm:$0x1]
    %v4910 = vld [vmem:[%s4711 + $0x18] sm:$0xf]
    %v4911 = vld [vmem:[%s4711 + $0x1c] sm:$0x1]
    %v4912 = vld [vmem:[%s4711 + $0x20] sm:$0xf]
    %v4913 = vld [vmem:[%s4711 + $0x24] sm:$0x1]
    %v4914 = vld [vmem:[%s4711 + $0x28] sm:$0xf]
    %v4915 = vld [vmem:[%s4711 + $0x2c] sm:$0x1]
    %v4916 = vld [vmem:[%s4711 + $0x30] sm:$0xf]
    %v4917 = vld [vmem:[%s4711 + $0x34] sm:$0x1]
    %v4918 = vld [vmem:[%s4711 + $0x38] sm:$0xf]
    %v4919 = vld [vmem:[%s4711 + $0x3c] sm:$0x1]
    %v4920 = vld [vmem:[%s4711 + $0x50] sm:$0xf]
    %v4921 = vld [vmem:[%s4711 + $0x54] sm:$0x1]
    %v4922 = vld [vmem:[%s4711 + $0x58] sm:$0xf]
    %v4923 = vld [vmem:[%s4711 + $0x5c] sm:$0x1]
    %v4924 = vld [vmem:[%s4711 + $0x60] sm:$0xf]
    %v4925 = vld [vmem:[%s4711 + $0x64] sm:$0x1]
    %v4926 = vld [vmem:[%s4711 + $0x68] sm:$0xf]
    %v4927 = vld [vmem:[%s4711 + $0x6c] sm:$0x1]
    %v4928 = vld [vmem:[%s4711 + $0x70] sm:$0xf]
    %v4929 = vld [vmem:[%s4711 + $0x74] sm:$0x1]
    %v4930 = vld [vmem:[%s4711 + $0x78] sm:$0xf]
    %v4931 = vld [vmem:[%s4711 + $0x7c] sm:$0x1]
    %v4932 = vld [vmem:[%s4711 + $0x80] sm:$0xf]
    %v4933 = vld [vmem:[%s4711 + $0x84] sm:$0x1]
    %v4934 = vld [vmem:[%s4711 + $0x88] sm:$0xf]
    %v4935 = vld [vmem:[%s4711 + $0x8c] sm:$0x1]
    %v4936 = vld [vmem:[%s4711 + $0xa0] sm:$0xf]
    %v4937 = vld [vmem:[%s4711 + $0xa4] sm:$0x1]
    %v4938 = vld [vmem:[%s4711 + $0xa8] sm:$0xf]
    %v4939 = vld [vmem:[%s4711 + $0xac] sm:$0x1]
    %v4940 = vld [vmem:[%s4711 + $0xb0] sm:$0xf]
    %v4941 = vld [vmem:[%s4711 + $0xb4] sm:$0x1]
    %v4942 = vld [vmem:[%s4711 + $0xb8] sm:$0xf]
    %v4943 = vld [vmem:[%s4711 + $0xbc] sm:$0x1]
    %v4944 = vld [vmem:[%s4711 + $0xc0] sm:$0xf]
    %v4945 = vld [vmem:[%s4711 + $0xc4] sm:$0x1]
    %v4946 = vld [vmem:[%s4711 + $0xc8] sm:$0xf]
    %v4947 = vld [vmem:[%s4711 + $0xcc] sm:$0x1]
    %v4948 = vld [vmem:[%s4711 + $0xd0] sm:$0xf]
    %v4949 = vld [vmem:[%s4711 + $0xd4] sm:$0x1]
    %v4950 = vld [vmem:[%s4711 + $0xd8] sm:$0xf]
    %v4951 = vld [vmem:[%s4711 + $0xdc] sm:$0x1]
    %v4952 = vld [vmem:[%s4711 + $0xf0] sm:$0xf]
    %v4953 = vld [vmem:[%s4711 + $0xf4] sm:$0x1]
    %v4954 = vld [vmem:[%s4711 + $0xf8] sm:$0xf]
    %v4955 = vld [vmem:[%s4711 + $0xfc] sm:$0x1]
    %v4956 = vld [vmem:[%s4711 + $0x100] sm:$0xf]
    %v4957 = vld [vmem:[%s4711 + $0x104] sm:$0x1]
    %v4958 = vld [vmem:[%s4711 + $0x108] sm:$0xf]
    %v4959 = vld [vmem:[%s4711 + $0x10c] sm:$0x1]
    %v4960 = vld [vmem:[%s4711 + $0x110] sm:$0xf]
    %v4961 = vld [vmem:[%s4711 + $0x114] sm:$0x1]
    %v4962 = vld [vmem:[%s4711 + $0x118] sm:$0xf]
    %v4963 = vld [vmem:[%s4711 + $0x11c] sm:$0x1]
    %v4964 = vld [vmem:[%s4711 + $0x120] sm:$0xf]
    %v4965 = vld [vmem:[%s4711 + $0x124] sm:$0x1]
    %v4966 = vld [vmem:[%s4711 + $0x128] sm:$0xf]
    %v4967 = vld [vmem:[%s4711 + $0x12c] sm:$0x1]
    %v4969 = vshrl.u32 %v4904, 16
    %v4971 = vrot.slane %v4969, 4
    %v4972 = vshll.u32 %v4904, 16
    %v4974 = vrot.slane %v4972, 5
    %v4975 = vor.u32 %v4971, %v4974
    %v4976 = vrot.slane %v4975, 4
    %v4978 = vshll.u32 %v4905, 16
    %v4980 = vrot.slane %v4978, 5
    %v4981 = vsel %vm153, %v4976, %v4980
    %v4983 = vshrl.u32 %v4906, 16
    %v4985 = vrot.slane %v4983, 4
    %v4986 = vshll.u32 %v4906, 16
    %v4988 = vrot.slane %v4986, 5
    %v4989 = vor.u32 %v4985, %v4988
    %v4990 = vrot.slane %v4989, 4
    %v4992 = vshll.u32 %v4907, 16
    %v4994 = vrot.slane %v4992, 5
    %v4995 = vsel %vm153, %v4990, %v4994
    %v4997 = vshrl.u32 %v4908, 16
    %v4999 = vrot.slane %v4997, 4
    %v5000 = vshll.u32 %v4908, 16
    %v5002 = vrot.slane %v5000, 5
    %v5003 = vor.u32 %v4999, %v5002
    %v5004 = vrot.slane %v5003, 4
    %v5006 = vshll.u32 %v4909, 16
    %v5008 = vrot.slane %v5006, 5
    %v5009 = vsel %vm153, %v5004, %v5008
    %v5011 = vshrl.u32 %v4910, 16
    %v5013 = vrot.slane %v5011, 4
    %v5014 = vshll.u32 %v4910, 16
    %v5016 = vrot.slane %v5014, 5
    %v5017 = vor.u32 %v5013, %v5016
    %v5018 = vrot.slane %v5017, 4
    %v5020 = vshll.u32 %v4911, 16
    %v5022 = vrot.slane %v5020, 5
    %v5023 = vsel %vm153, %v5018, %v5022
    %v5025 = vshrl.u32 %v4912, 16
    %v5027 = vrot.slane %v5025, 4
    %v5028 = vshll.u32 %v4912, 16
    %v5030 = vrot.slane %v5028, 5
    %v5031 = vor.u32 %v5027, %v5030
    %v5032 = vrot.slane %v5031, 4
    %v5034 = vshll.u32 %v4913, 16
    %v5036 = vrot.slane %v5034, 5
    %v5037 = vsel %vm153, %v5032, %v5036
    %v5039 = vshrl.u32 %v4914, 16
    %v5041 = vrot.slane %v5039, 4
    %v5042 = vshll.u32 %v4914, 16
    %v5044 = vrot.slane %v5042, 5
    %v5045 = vor.u32 %v5041, %v5044
    %v5046 = vrot.slane %v5045, 4
    %v5048 = vshll.u32 %v4915, 16
    %v5050 = vrot.slane %v5048, 5
    %v5051 = vsel %vm153, %v5046, %v5050
    %v5053 = vshrl.u32 %v4916, 16
    %v5055 = vrot.slane %v5053, 4
    %v5056 = vshll.u32 %v4916, 16
    %v5058 = vrot.slane %v5056, 5
    %v5059 = vor.u32 %v5055, %v5058
    %v5060 = vrot.slane %v5059, 4
    %v5062 = vshll.u32 %v4917, 16
    %v5064 = vrot.slane %v5062, 5
    %v5065 = vsel %vm153, %v5060, %v5064
    %v5067 = vshrl.u32 %v4918, 16
    %v5069 = vrot.slane %v5067, 4
    %v5070 = vshll.u32 %v4918, 16
    %v5072 = vrot.slane %v5070, 5
    %v5073 = vor.u32 %v5069, %v5072
    %v5074 = vrot.slane %v5073, 4
    %v5076 = vshll.u32 %v4919, 16
    %v5078 = vrot.slane %v5076, 5
    %v5079 = vsel %vm153, %v5074, %v5078
    %v5081 = vshrl.u32 %v4920, 16
    %v5083 = vrot.slane %v5081, 4
    %v5084 = vshll.u32 %v4920, 16
    %v5086 = vrot.slane %v5084, 5
    %v5087 = vor.u32 %v5083, %v5086
    %v5088 = vrot.slane %v5087, 4
    %v5090 = vshll.u32 %v4921, 16
    %v5092 = vrot.slane %v5090, 5
    %v5093 = vsel %vm153, %v5088, %v5092
    %v5095 = vshrl.u32 %v4922, 16
    %v5097 = vrot.slane %v5095, 4
    %v5098 = vshll.u32 %v4922, 16
    %v5100 = vrot.slane %v5098, 5
    %v5101 = vor.u32 %v5097, %v5100
    %v5102 = vrot.slane %v5101, 4
    %v5104 = vshll.u32 %v4923, 16
    %v5106 = vrot.slane %v5104, 5
    %v5107 = vsel %vm153, %v5102, %v5106
    %v5109 = vshrl.u32 %v4924, 16
    %v5111 = vrot.slane %v5109, 4
    %v5112 = vshll.u32 %v4924, 16
    %v5114 = vrot.slane %v5112, 5
    %v5115 = vor.u32 %v5111, %v5114
    %v5116 = vrot.slane %v5115, 4
    %v5118 = vshll.u32 %v4925, 16
    %v5120 = vrot.slane %v5118, 5
    %v5121 = vsel %vm153, %v5116, %v5120
    %v5123 = vshrl.u32 %v4926, 16
    %v5125 = vrot.slane %v5123, 4
    %v5126 = vshll.u32 %v4926, 16
    %v5128 = vrot.slane %v5126, 5
    %v5129 = vor.u32 %v5125, %v5128
    %v5130 = vrot.slane %v5129, 4
    %v5132 = vshll.u32 %v4927, 16
    %v5134 = vrot.slane %v5132, 5
    %v5135 = vsel %vm153, %v5130, %v5134
    %v5137 = vshrl.u32 %v4928, 16
    %v5139 = vrot.slane %v5137, 4
    %v5140 = vshll.u32 %v4928, 16
    %v5142 = vrot.slane %v5140, 5
    %v5143 = vor.u32 %v5139, %v5142
    %v5144 = vrot.slane %v5143, 4
    %v5146 = vshll.u32 %v4929, 16
    %v5148 = vrot.slane %v5146, 5
    %v5149 = vsel %vm153, %v5144, %v5148
    %v5151 = vshrl.u32 %v4930, 16
    %v5153 = vrot.slane %v5151, 4
    %v5154 = vshll.u32 %v4930, 16
    %v5156 = vrot.slane %v5154, 5
    %v5157 = vor.u32 %v5153, %v5156
    %v5158 = vrot.slane %v5157, 4
    %v5160 = vshll.u32 %v4931, 16
    %v5162 = vrot.slane %v5160, 5
    %v5163 = vsel %vm153, %v5158, %v5162
    %v5165 = vshrl.u32 %v4932, 16
    %v5167 = vrot.slane %v5165, 4
    %v5168 = vshll.u32 %v4932, 16
    %v5170 = vrot.slane %v5168, 5
    %v5171 = vor.u32 %v5167, %v5170
    %v5172 = vrot.slane %v5171, 4
    %v5174 = vshll.u32 %v4933, 16
    %v5176 = vrot.slane %v5174, 5
    %v5177 = vsel %vm153, %v5172, %v5176
    %v5179 = vshrl.u32 %v4934, 16
    %v5181 = vrot.slane %v5179, 4
    %v5182 = vshll.u32 %v4934, 16
    %v5184 = vrot.slane %v5182, 5
    %v5185 = vor.u32 %v5181, %v5184
    %v5186 = vrot.slane %v5185, 4
    %v5188 = vshll.u32 %v4935, 16
    %v5190 = vrot.slane %v5188, 5
    %v5191 = vsel %vm153, %v5186, %v5190
    %v5193 = vshrl.u32 %v4936, 16
    %v5195 = vrot.slane %v5193, 4
    %v5196 = vshll.u32 %v4936, 16
    %v5198 = vrot.slane %v5196, 5
    %v5199 = vor.u32 %v5195, %v5198
    %v5200 = vrot.slane %v5199, 4
    %v5202 = vshll.u32 %v4937, 16
    %v5204 = vrot.slane %v5202, 5
    %v5205 = vsel %vm153, %v5200, %v5204
    %v5207 = vshrl.u32 %v4938, 16
    %v5209 = vrot.slane %v5207, 4
    %v5210 = vshll.u32 %v4938, 16
    %v5212 = vrot.slane %v5210, 5
    %v5213 = vor.u32 %v5209, %v5212
    %v5214 = vrot.slane %v5213, 4
    %v5216 = vshll.u32 %v4939, 16
    %v5218 = vrot.slane %v5216, 5
    %v5219 = vsel %vm153, %v5214, %v5218
    %v5221 = vshrl.u32 %v4940, 16
    %v5223 = vrot.slane %v5221, 4
    %v5224 = vshll.u32 %v4940, 16
    %v5226 = vrot.slane %v5224, 5
    %v5227 = vor.u32 %v5223, %v5226
    %v5228 = vrot.slane %v5227, 4
    %v5230 = vshll.u32 %v4941, 16
    %v5232 = vrot.slane %v5230, 5
    %v5233 = vsel %vm153, %v5228, %v5232
    %v5235 = vshrl.u32 %v4942, 16
    %v5237 = vrot.slane %v5235, 4
    %v5238 = vshll.u32 %v4942, 16
    %v5240 = vrot.slane %v5238, 5
    %v5241 = vor.u32 %v5237, %v5240
    %v5242 = vrot.slane %v5241, 4
    %v5244 = vshll.u32 %v4943, 16
    %v5246 = vrot.slane %v5244, 5
    %v5247 = vsel %vm153, %v5242, %v5246
    %v5249 = vshrl.u32 %v4944, 16
    %v5251 = vrot.slane %v5249, 4
    %v5252 = vshll.u32 %v4944, 16
    %v5254 = vrot.slane %v5252, 5
    %v5255 = vor.u32 %v5251, %v5254
    %v5256 = vrot.slane %v5255, 4
    %v5258 = vshll.u32 %v4945, 16
    %v5260 = vrot.slane %v5258, 5
    %v5261 = vsel %vm153, %v5256, %v5260
    %v5263 = vshrl.u32 %v4946, 16
    %v5265 = vrot.slane %v5263, 4
    %v5266 = vshll.u32 %v4946, 16
    %v5268 = vrot.slane %v5266, 5
    %v5269 = vor.u32 %v5265, %v5268
    %v5270 = vrot.slane %v5269, 4
    %v5272 = vshll.u32 %v4947, 16
    %v5274 = vrot.slane %v5272, 5
    %v5275 = vsel %vm153, %v5270, %v5274
    %v5277 = vshrl.u32 %v4948, 16
    %v5279 = vrot.slane %v5277, 4
    %v5280 = vshll.u32 %v4948, 16
    %v5282 = vrot.slane %v5280, 5
    %v5283 = vor.u32 %v5279, %v5282
    %v5284 = vrot.slane %v5283, 4
    %v5286 = vshll.u32 %v4949, 16
    %v5288 = vrot.slane %v5286, 5
    %v5289 = vsel %vm153, %v5284, %v5288
    %v5291 = vshrl.u32 %v4950, 16
    %v5293 = vrot.slane %v5291, 4
    %v5294 = vshll.u32 %v4950, 16
    %v5296 = vrot.slane %v5294, 5
    %v5297 = vor.u32 %v5293, %v5296
    %v5298 = vrot.slane %v5297, 4
    %v5300 = vshll.u32 %v4951, 16
    %v5302 = vrot.slane %v5300, 5
    %v5303 = vsel %vm153, %v5298, %v5302
    %v5305 = vshrl.u32 %v4952, 16
    %v5307 = vrot.slane %v5305, 4
    %v5308 = vshll.u32 %v4952, 16
    %v5310 = vrot.slane %v5308, 5
    %v5311 = vor.u32 %v5307, %v5310
    %v5312 = vrot.slane %v5311, 4
    %v5314 = vshll.u32 %v4953, 16
    %v5316 = vrot.slane %v5314, 5
    %v5317 = vsel %vm153, %v5312, %v5316
    %v5319 = vshrl.u32 %v4954, 16
    %v5321 = vrot.slane %v5319, 4
    %v5322 = vshll.u32 %v4954, 16
    %v5324 = vrot.slane %v5322, 5
    %v5325 = vor.u32 %v5321, %v5324
    %v5326 = vrot.slane %v5325, 4
    %v5328 = vshll.u32 %v4955, 16
    %v5330 = vrot.slane %v5328, 5
    %v5331 = vsel %vm153, %v5326, %v5330
    %v5333 = vshrl.u32 %v4956, 16
    %v5335 = vrot.slane %v5333, 4
    %v5336 = vshll.u32 %v4956, 16
    %v5338 = vrot.slane %v5336, 5
    %v5339 = vor.u32 %v5335, %v5338
    %v5340 = vrot.slane %v5339, 4
    %v5342 = vshll.u32 %v4957, 16
    %v5344 = vrot.slane %v5342, 5
    %v5345 = vsel %vm153, %v5340, %v5344
    %v5347 = vshrl.u32 %v4958, 16
    %v5349 = vrot.slane %v5347, 4
    %v5350 = vshll.u32 %v4958, 16
    %v5352 = vrot.slane %v5350, 5
    %v5353 = vor.u32 %v5349, %v5352
    %v5354 = vrot.slane %v5353, 4
    %v5356 = vshll.u32 %v4959, 16
    %v5358 = vrot.slane %v5356, 5
    %v5359 = vsel %vm153, %v5354, %v5358
    %v5361 = vshrl.u32 %v4960, 16
    %v5363 = vrot.slane %v5361, 4
    %v5364 = vshll.u32 %v4960, 16
    %v5366 = vrot.slane %v5364, 5
    %v5367 = vor.u32 %v5363, %v5366
    %v5368 = vrot.slane %v5367, 4
    %v5370 = vshll.u32 %v4961, 16
    %v5372 = vrot.slane %v5370, 5
    %v5373 = vsel %vm153, %v5368, %v5372
    %v5375 = vshrl.u32 %v4962, 16
    %v5377 = vrot.slane %v5375, 4
    %v5378 = vshll.u32 %v4962, 16
    %v5380 = vrot.slane %v5378, 5
    %v5381 = vor.u32 %v5377, %v5380
    %v5382 = vrot.slane %v5381, 4
    %v5384 = vshll.u32 %v4963, 16
    %v5386 = vrot.slane %v5384, 5
    %v5387 = vsel %vm153, %v5382, %v5386
    %v5389 = vshrl.u32 %v4964, 16
    %v5391 = vrot.slane %v5389, 4
    %v5392 = vshll.u32 %v4964, 16
    %v5394 = vrot.slane %v5392, 5
    %v5395 = vor.u32 %v5391, %v5394
    %v5396 = vrot.slane %v5395, 4
    %v5398 = vshll.u32 %v4965, 16
    %v5400 = vrot.slane %v5398, 5
    %v5401 = vsel %vm153, %v5396, %v5400
    %v5403 = vshrl.u32 %v4966, 16
    %v5405 = vrot.slane %v5403, 4
    %v5406 = vshll.u32 %v4966, 16
    %v5408 = vrot.slane %v5406, 5
    %v5409 = vor.u32 %v5405, %v5408
    %v5410 = vrot.slane %v5409, 4
    %v5412 = vshll.u32 %v4967, 16
    %v5414 = vrot.slane %v5412, 5
    %v5415 = vsel %vm153, %v5410, %v5414
    %5416 = vrot.lane.b32.xlu0 %v4981, 80
    %v5417 = vpop.permute.xlu0 %5416
    %5418 = vrot.lane.b32.xlu0 %v4995, 80
    %v5419 = vpop.permute.xlu0 %5418
    %5420 = vrot.lane.b32.xlu0 %v5009, 80
    %v5421 = vpop.permute.xlu0 %5420
    %5422 = vrot.lane.b32.xlu0 %v5023, 80
    %v5423 = vpop.permute.xlu0 %5422
    %5424 = vrot.lane.b32.xlu0 %v5037, 80
    %v5425 = vpop.permute.xlu0 %5424
    %5426 = vrot.lane.b32.xlu0 %v5051, 80
    %v5427 = vpop.permute.xlu0 %5426
    %5428 = vrot.lane.b32.xlu0 %v5065, 80
    %v5429 = vpop.permute.xlu0 %5428
    %5430 = vrot.lane.b32.xlu0 %v5079, 80
    %v5431 = vpop.permute.xlu0 %5430
    %5432 = vrot.lane.b32.xlu0 %v5093, 80
    %v5433 = vpop.permute.xlu0 %5432
    %5434 = vrot.lane.b32.xlu0 %v5107, 80
    %v5435 = vpop.permute.xlu0 %5434
    %5436 = vrot.lane.b32.xlu0 %v5121, 80
    %v5437 = vpop.permute.xlu0 %5436
    %5438 = vrot.lane.b32.xlu0 %v5135, 80
    %v5439 = vpop.permute.xlu0 %5438
    %5440 = vrot.lane.b32.xlu0 %v5149, 80
    %v5441 = vpop.permute.xlu0 %5440
    %5442 = vrot.lane.b32.xlu0 %v5163, 80
    %v5443 = vpop.permute.xlu0 %5442
    %5444 = vrot.lane.b32.xlu0 %v5177, 80
    %v5445 = vpop.permute.xlu0 %5444
    %5446 = vrot.lane.b32.xlu0 %v5191, 80
    %v5447 = vpop.permute.xlu0 %5446
    %5448 = vrot.lane.b32.xlu0 %v5205, 80
    %v5449 = vpop.permute.xlu0 %5448
    %5450 = vrot.lane.b32.xlu0 %v5219, 80
    %v5451 = vpop.permute.xlu0 %5450
    %5452 = vrot.lane.b32.xlu0 %v5233, 80
    %v5453 = vpop.permute.xlu0 %5452
    %5454 = vrot.lane.b32.xlu0 %v5247, 80
    %v5455 = vpop.permute.xlu0 %5454
    %5456 = vrot.lane.b32.xlu0 %v5261, 80
    %v5457 = vpop.permute.xlu0 %5456
    %5458 = vrot.lane.b32.xlu0 %v5275, 80
    %v5459 = vpop.permute.xlu0 %5458
    %5460 = vrot.lane.b32.xlu0 %v5289, 80
    %v5461 = vpop.permute.xlu0 %5460
    %5462 = vrot.lane.b32.xlu0 %v5303, 80
    %v5463 = vpop.permute.xlu0 %5462
    %5464 = vrot.lane.b32.xlu0 %v5317, 80
    %v5465 = vpop.permute.xlu0 %5464
    %5466 = vrot.lane.b32.xlu0 %v5331, 80
    %v5467 = vpop.permute.xlu0 %5466
    %5468 = vrot.lane.b32.xlu0 %v5345, 80
    %v5469 = vpop.permute.xlu0 %5468
    %5470 = vrot.lane.b32.xlu0 %v5359, 80
    %v5471 = vpop.permute.xlu0 %5470
    %5472 = vrot.lane.b32.xlu0 %v5373, 80
    %v5473 = vpop.permute.xlu0 %5472
    %5474 = vrot.lane.b32.xlu0 %v5387, 80
    %v5475 = vpop.permute.xlu0 %5474
    %5476 = vrot.lane.b32.xlu0 %v5401, 80
    %v5477 = vpop.permute.xlu0 %5476
    %5478 = vrot.lane.b32.xlu0 %v5415, 80
    %v5479 = vpop.permute.xlu0 %5478
    %5512 = vst.msk [vmem:[#allocation2 + $0x4] sm:$0xf] %vm2306, %v5417
    %5513 = vst.msk [vmem:[#allocation2 + $0x14] sm:$0xf] %vm2306, %v5419
    %5514 = vst.msk [vmem:[#allocation2 + $0x24] sm:$0xf] %vm2306, %v5421
    %5515 = vst.msk [vmem:[#allocation2 + $0x34] sm:$0xf] %vm2306, %v5423
    %5516 = vst.msk [vmem:[#allocation2 + $0x44] sm:$0xf] %vm2306, %v5425
    %5517 = vst.msk [vmem:[#allocation2 + $0x54] sm:$0xf] %vm2306, %v5427
    %5518 = vst.msk [vmem:[#allocation2 + $0x64] sm:$0xf] %vm2306, %v5429
    %5519 = vst.msk [vmem:[#allocation2 + $0x74] sm:$0xf] %vm2306, %v5431
    %5520 = vst.msk [vmem:[#allocation2 + $0x84] sm:$0xf] %vm2306, %v5433
    %5521 = vst.msk [vmem:[#allocation2 + $0x94] sm:$0xf] %vm2306, %v5435
    %5522 = vst.msk [vmem:[#allocation2 + $0xa4] sm:$0xf] %vm2306, %v5437
    %5523 = vst.msk [vmem:[#allocation2 + $0xb4] sm:$0xf] %vm2306, %v5439
    %5524 = vst.msk [vmem:[#allocation2 + $0xc4] sm:$0xf] %vm2306, %v5441
    %5525 = vst.msk [vmem:[#allocation2 + $0xd4] sm:$0xf] %vm2306, %v5443
    %5526 = vst.msk [vmem:[#allocation2 + $0xe4] sm:$0xf] %vm2306, %v5445
    %5527 = vst.msk [vmem:[#allocation2 + $0xf4] sm:$0xf] %vm2306, %v5447
    %5528 = vst.msk [vmem:[#allocation2 + $0x104] sm:$0xf] %vm2306, %v5449
    %5529 = vst.msk [vmem:[#allocation2 + $0x114] sm:$0xf] %vm2306, %v5451
    %5530 = vst.msk [vmem:[#allocation2 + $0x124] sm:$0xf] %vm2306, %v5453
    %5531 = vst.msk [vmem:[#allocation2 + $0x134] sm:$0xf] %vm2306, %v5455
    %5532 = vst.msk [vmem:[#allocation2 + $0x144] sm:$0xf] %vm2306, %v5457
    %5533 = vst.msk [vmem:[#allocation2 + $0x154] sm:$0xf] %vm2306, %v5459
    %5534 = vst.msk [vmem:[#allocation2 + $0x164] sm:$0xf] %vm2306, %v5461
    %5535 = vst.msk [vmem:[#allocation2 + $0x174] sm:$0xf] %vm2306, %v5463
    %5536 = vst.msk [vmem:[#allocation2 + $0x184] sm:$0xf] %vm2306, %v5465
    %5537 = vst.msk [vmem:[#allocation2 + $0x194] sm:$0xf] %vm2306, %v5467
    %5538 = vst.msk [vmem:[#allocation2 + $0x1a4] sm:$0xf] %vm2306, %v5469
    %5539 = vst.msk [vmem:[#allocation2 + $0x1b4] sm:$0xf] %vm2306, %v5471
    %5540 = vst.msk [vmem:[#allocation2 + $0x1c4] sm:$0xf] %vm2306, %v5473
    %5541 = vst.msk [vmem:[#allocation2 + $0x1d4] sm:$0xf] %vm2306, %v5475
    %5542 = vst.msk [vmem:[#allocation2 + $0x1e4] sm:$0xf] %vm2306, %v5477
    %5543 = vst.msk [vmem:[#allocation2 + $0x1f4] sm:$0xf] %vm2306, %v5479
    %v5544 = vld [vmem:[%s4711] sm:$0xe]
    %v5545 = vld [vmem:[%s4711 + $0x4] sm:$0x1]
    %v5546 = vld [vmem:[%s4711 + $0x8] sm:$0xe]
    %v5547 = vld [vmem:[%s4711 + $0xc] sm:$0x1]
    %v5548 = vld [vmem:[%s4711 + $0x10] sm:$0xe]
    %v5549 = vld [vmem:[%s4711 + $0x14] sm:$0x1]
    %v5550 = vld [vmem:[%s4711 + $0x18] sm:$0xe]
    %v5551 = vld [vmem:[%s4711 + $0x1c] sm:$0x1]
    %v5552 = vld [vmem:[%s4711 + $0x20] sm:$0xe]
    %v5553 = vld [vmem:[%s4711 + $0x24] sm:$0x1]
    %v5554 = vld [vmem:[%s4711 + $0x28] sm:$0xe]
    %v5555 = vld [vmem:[%s4711 + $0x2c] sm:$0x1]
    %v5556 = vld [vmem:[%s4711 + $0x30] sm:$0xe]
    %v5557 = vld [vmem:[%s4711 + $0x34] sm:$0x1]
    %v5558 = vld [vmem:[%s4711 + $0x38] sm:$0xe]
    %v5559 = vld [vmem:[%s4711 + $0x3c] sm:$0x1]
    %v5560 = vld [vmem:[%s4711 + $0x50] sm:$0xe]
    %v5561 = vld [vmem:[%s4711 + $0x54] sm:$0x1]
    %v5562 = vld [vmem:[%s4711 + $0x58] sm:$0xe]
    %v5563 = vld [vmem:[%s4711 + $0x5c] sm:$0x1]
    %v5564 = vld [vmem:[%s4711 + $0x60] sm:$0xe]
    %v5565 = vld [vmem:[%s4711 + $0x64] sm:$0x1]
    %v5566 = vld [vmem:[%s4711 + $0x68] sm:$0xe]
    %v5567 = vld [vmem:[%s4711 + $0x6c] sm:$0x1]
    %v5568 = vld [vmem:[%s4711 + $0x70] sm:$0xe]
    %v5569 = vld [vmem:[%s4711 + $0x74] sm:$0x1]
    %v5570 = vld [vmem:[%s4711 + $0x78] sm:$0xe]
    %v5571 = vld [vmem:[%s4711 + $0x7c] sm:$0x1]
    %v5572 = vld [vmem:[%s4711 + $0x80] sm:$0xe]
    %v5573 = vld [vmem:[%s4711 + $0x84] sm:$0x1]
    %v5574 = vld [vmem:[%s4711 + $0x88] sm:$0xe]
    %v5575 = vld [vmem:[%s4711 + $0x8c] sm:$0x1]
    %v5576 = vld [vmem:[%s4711 + $0xa0] sm:$0xe]
    %v5577 = vld [vmem:[%s4711 + $0xa4] sm:$0x1]
    %v5578 = vld [vmem:[%s4711 + $0xa8] sm:$0xe]
    %v5579 = vld [vmem:[%s4711 + $0xac] sm:$0x1]
    %v5580 = vld [vmem:[%s4711 + $0xb0] sm:$0xe]
    %v5581 = vld [vmem:[%s4711 + $0xb4] sm:$0x1]
    %v5582 = vld [vmem:[%s4711 + $0xb8] sm:$0xe]
    %v5583 = vld [vmem:[%s4711 + $0xbc] sm:$0x1]
    %v5584 = vld [vmem:[%s4711 + $0xc0] sm:$0xe]
    %v5585 = vld [vmem:[%s4711 + $0xc4] sm:$0x1]
    %v5586 = vld [vmem:[%s4711 + $0xc8] sm:$0xe]
    %v5587 = vld [vmem:[%s4711 + $0xcc] sm:$0x1]
    %v5588 = vld [vmem:[%s4711 + $0xd0] sm:$0xe]
    %v5589 = vld [vmem:[%s4711 + $0xd4] sm:$0x1]
    %v5590 = vld [vmem:[%s4711 + $0xd8] sm:$0xe]
    %v5591 = vld [vmem:[%s4711 + $0xdc] sm:$0x1]
    %v5592 = vld [vmem:[%s4711 + $0xf0] sm:$0xe]
    %v5593 = vld [vmem:[%s4711 + $0xf4] sm:$0x1]
    %v5594 = vld [vmem:[%s4711 + $0xf8] sm:$0xe]
    %v5595 = vld [vmem:[%s4711 + $0xfc] sm:$0x1]
    %v5596 = vld [vmem:[%s4711 + $0x100] sm:$0xe]
    %v5597 = vld [vmem:[%s4711 + $0x104] sm:$0x1]
    %v5598 = vld [vmem:[%s4711 + $0x108] sm:$0xe]
    %v5599 = vld [vmem:[%s4711 + $0x10c] sm:$0x1]
    %v5600 = vld [vmem:[%s4711 + $0x110] sm:$0xe]
    %v5601 = vld [vmem:[%s4711 + $0x114] sm:$0x1]
    %v5602 = vld [vmem:[%s4711 + $0x118] sm:$0xe]
    %v5603 = vld [vmem:[%s4711 + $0x11c] sm:$0x1]
    %v5604 = vld [vmem:[%s4711 + $0x120] sm:$0xe]
    %v5605 = vld [vmem:[%s4711 + $0x124] sm:$0x1]
    %v5606 = vld [vmem:[%s4711 + $0x128] sm:$0xe]
    %v5607 = vld [vmem:[%s4711 + $0x12c] sm:$0x1]
    %v5672 = vrot.slane %v5544, 5
    %v5673 = vrot.slane %v5672, 4
    %v5674 = vrot.slane %v5545, 5
    %v5675 = vsel %vm861, %v5673, %v5674
    %v5676 = vrot.slane %v5546, 5
    %v5677 = vrot.slane %v5676, 4
    %v5678 = vrot.slane %v5547, 5
    %v5679 = vsel %vm861, %v5677, %v5678
    %v5680 = vrot.slane %v5548, 5
    %v5681 = vrot.slane %v5680, 4
    %v5682 = vrot.slane %v5549, 5
    %v5683 = vsel %vm861, %v5681, %v5682
    %v5684 = vrot.slane %v5550, 5
    %v5685 = vrot.slane %v5684, 4
    %v5686 = vrot.slane %v5551, 5
    %v5687 = vsel %vm861, %v5685, %v5686
    %v5688 = vrot.slane %v5552, 5
    %v5689 = vrot.slane %v5688, 4
    %v5690 = vrot.slane %v5553, 5
    %v5691 = vsel %vm861, %v5689, %v5690
    %v5692 = vrot.slane %v5554, 5
    %v5693 = vrot.slane %v5692, 4
    %v5694 = vrot.slane %v5555, 5
    %v5695 = vsel %vm861, %v5693, %v5694
    %v5696 = vrot.slane %v5556, 5
    %v5697 = vrot.slane %v5696, 4
    %v5698 = vrot.slane %v5557, 5
    %v5699 = vsel %vm861, %v5697, %v5698
    %v5700 = vrot.slane %v5558, 5
    %v5701 = vrot.slane %v5700, 4
    %v5702 = vrot.slane %v5559, 5
    %v5703 = vsel %vm861, %v5701, %v5702
    %v5704 = vrot.slane %v5560, 5
    %v5705 = vrot.slane %v5704, 4
    %v5706 = vrot.slane %v5561, 5
    %v5707 = vsel %vm861, %v5705, %v5706
    %v5708 = vrot.slane %v5562, 5
    %v5709 = vrot.slane %v5708, 4
    %v5710 = vrot.slane %v5563, 5
    %v5711 = vsel %vm861, %v5709, %v5710
    %v5712 = vrot.slane %v5564, 5
    %v5713 = vrot.slane %v5712, 4
    %v5714 = vrot.slane %v5565, 5
    %v5715 = vsel %vm861, %v5713, %v5714
    %v5716 = vrot.slane %v5566, 5
    %v5717 = vrot.slane %v5716, 4
    %v5718 = vrot.slane %v5567, 5
    %v5719 = vsel %vm861, %v5717, %v5718
    %v5720 = vrot.slane %v5568, 5
    %v5721 = vrot.slane %v5720, 4
    %v5722 = vrot.slane %v5569, 5
    %v5723 = vsel %vm861, %v5721, %v5722
    %v5724 = vrot.slane %v5570, 5
    %v5725 = vrot.slane %v5724, 4
    %v5726 = vrot.slane %v5571, 5
    %v5727 = vsel %vm861, %v5725, %v5726
    %v5728 = vrot.slane %v5572, 5
    %v5729 = vrot.slane %v5728, 4
    %v5730 = vrot.slane %v5573, 5
    %v5731 = vsel %vm861, %v5729, %v5730
    %v5732 = vrot.slane %v5574, 5
    %v5733 = vrot.slane %v5732, 4
    %v5734 = vrot.slane %v5575, 5
    %v5735 = vsel %vm861, %v5733, %v5734
    %v5736 = vrot.slane %v5576, 5
    %v5737 = vrot.slane %v5736, 4
    %v5738 = vrot.slane %v5577, 5
    %v5739 = vsel %vm861, %v5737, %v5738
    %v5740 = vrot.slane %v5578, 5
    %v5741 = vrot.slane %v5740, 4
    %v5742 = vrot.slane %v5579, 5
    %v5743 = vsel %vm861, %v5741, %v5742
    %v5744 = vrot.slane %v5580, 5
    %v5745 = vrot.slane %v5744, 4
    %v5746 = vrot.slane %v5581, 5
    %v5747 = vsel %vm861, %v5745, %v5746
    %v5748 = vrot.slane %v5582, 5
    %v5749 = vrot.slane %v5748, 4
    %v5750 = vrot.slane %v5583, 5
    %v5751 = vsel %vm861, %v5749, %v5750
    %v5752 = vrot.slane %v5584, 5
    %v5753 = vrot.slane %v5752, 4
    %v5754 = vrot.slane %v5585, 5
    %v5755 = vsel %vm861, %v5753, %v5754
    %v5756 = vrot.slane %v5586, 5
    %v5757 = vrot.slane %v5756, 4
    %v5758 = vrot.slane %v5587, 5
    %v5759 = vsel %vm861, %v5757, %v5758
    %v5760 = vrot.slane %v5588, 5
    %v5761 = vrot.slane %v5760, 4
    %v5762 = vrot.slane %v5589, 5
    %v5763 = vsel %vm861, %v5761, %v5762
    %v5764 = vrot.slane %v5590, 5
    %v5765 = vrot.slane %v5764, 4
    %v5766 = vrot.slane %v5591, 5
    %v5767 = vsel %vm861, %v5765, %v5766
    %v5768 = vrot.slane %v5592, 5
    %v5769 = vrot.slane %v5768, 4
    %v5770 = vrot.slane %v5593, 5
    %v5771 = vsel %vm861, %v5769, %v5770
    %v5772 = vrot.slane %v5594, 5
    %v5773 = vrot.slane %v5772, 4
    %v5774 = vrot.slane %v5595, 5
    %v5775 = vsel %vm861, %v5773, %v5774
    %v5776 = vrot.slane %v5596, 5
    %v5777 = vrot.slane %v5776, 4
    %v5778 = vrot.slane %v5597, 5
    %v5779 = vsel %vm861, %v5777, %v5778
    %v5780 = vrot.slane %v5598, 5
    %v5781 = vrot.slane %v5780, 4
    %v5782 = vrot.slane %v5599, 5
    %v5783 = vsel %vm861, %v5781, %v5782
    %v5784 = vrot.slane %v5600, 5
    %v5785 = vrot.slane %v5784, 4
    %v5786 = vrot.slane %v5601, 5
    %v5787 = vsel %vm861, %v5785, %v5786
    %v5788 = vrot.slane %v5602, 5
    %v5789 = vrot.slane %v5788, 4
    %v5790 = vrot.slane %v5603, 5
    %v5791 = vsel %vm861, %v5789, %v5790
    %v5792 = vrot.slane %v5604, 5
    %v5793 = vrot.slane %v5792, 4
    %v5794 = vrot.slane %v5605, 5
    %v5795 = vsel %vm861, %v5793, %v5794
    %v5796 = vrot.slane %v5606, 5
    %v5797 = vrot.slane %v5796, 4
    %v5798 = vrot.slane %v5607, 5
    %v5799 = vsel %vm861, %v5797, %v5798
    %5800 = vrot.lane.b32.xlu0 %v5675, 96
    %v5801 = vpop.permute.xlu0 %5800
    %5802 = vrot.lane.b32.xlu0 %v5679, 96
    %v5803 = vpop.permute.xlu0 %5802
    %5804 = vrot.lane.b32.xlu0 %v5683, 96
    %v5805 = vpop.permute.xlu0 %5804
    %5806 = vrot.lane.b32.xlu0 %v5687, 96
    %v5807 = vpop.permute.xlu0 %5806
    %5808 = vrot.lane.b32.xlu0 %v5691, 96
    %v5809 = vpop.permute.xlu0 %5808
    %5810 = vrot.lane.b32.xlu0 %v5695, 96
    %v5811 = vpop.permute.xlu0 %5810
    %5812 = vrot.lane.b32.xlu0 %v5699, 96
    %v5813 = vpop.permute.xlu0 %5812
    %5814 = vrot.lane.b32.xlu0 %v5703, 96
    %v5815 = vpop.permute.xlu0 %5814
    %5816 = vrot.lane.b32.xlu0 %v5707, 96
    %v5817 = vpop.permute.xlu0 %5816
    %5818 = vrot.lane.b32.xlu0 %v5711, 96
    %v5819 = vpop.permute.xlu0 %5818
    %5820 = vrot.lane.b32.xlu0 %v5715, 96
    %v5821 = vpop.permute.xlu0 %5820
    %5822 = vrot.lane.b32.xlu0 %v5719, 96
    %v5823 = vpop.permute.xlu0 %5822
    %5824 = vrot.lane.b32.xlu0 %v5723, 96
    %v5825 = vpop.permute.xlu0 %5824
    %5826 = vrot.lane.b32.xlu0 %v5727, 96
    %v5827 = vpop.permute.xlu0 %5826
    %5828 = vrot.lane.b32.xlu0 %v5731, 96
    %v5829 = vpop.permute.xlu0 %5828
    %5830 = vrot.lane.b32.xlu0 %v5735, 96
    %v5831 = vpop.permute.xlu0 %5830
    %5832 = vrot.lane.b32.xlu0 %v5739, 96
    %v5833 = vpop.permute.xlu0 %5832
    %5834 = vrot.lane.b32.xlu0 %v5743, 96
    %v5835 = vpop.permute.xlu0 %5834
    %5836 = vrot.lane.b32.xlu0 %v5747, 96
    %v5837 = vpop.permute.xlu0 %5836
    %5838 = vrot.lane.b32.xlu0 %v5751, 96
    %v5839 = vpop.permute.xlu0 %5838
    %5840 = vrot.lane.b32.xlu0 %v5755, 96
    %v5841 = vpop.permute.xlu0 %5840
    %5842 = vrot.lane.b32.xlu0 %v5759, 96
    %v5843 = vpop.permute.xlu0 %5842
    %5844 = vrot.lane.b32.xlu0 %v5763, 96
    %v5845 = vpop.permute.xlu0 %5844
    %5846 = vrot.lane.b32.xlu0 %v5767, 96
    %v5847 = vpop.permute.xlu0 %5846
    %5848 = vrot.lane.b32.xlu0 %v5771, 96
    %v5849 = vpop.permute.xlu0 %5848
    %5850 = vrot.lane.b32.xlu0 %v5775, 96
    %v5851 = vpop.permute.xlu0 %5850
    %5852 = vrot.lane.b32.xlu0 %v5779, 96
    %v5853 = vpop.permute.xlu0 %5852
    %5854 = vrot.lane.b32.xlu0 %v5783, 96
    %v5855 = vpop.permute.xlu0 %5854
    %5856 = vrot.lane.b32.xlu0 %v5787, 96
    %v5857 = vpop.permute.xlu0 %5856
    %5858 = vrot.lane.b32.xlu0 %v5791, 96
    %v5859 = vpop.permute.xlu0 %5858
    %5860 = vrot.lane.b32.xlu0 %v5795, 96
    %v5861 = vpop.permute.xlu0 %5860
    %5862 = vrot.lane.b32.xlu0 %v5799, 96
    %v5863 = vpop.permute.xlu0 %5862
    %5896 = vst.msk [vmem:[#allocation2 + $0x4] sm:$0xf] %vm2500, %v5801
    %5897 = vst.msk [vmem:[#allocation2 + $0x14] sm:$0xf] %vm2500, %v5803
    %5898 = vst.msk [vmem:[#allocation2 + $0x24] sm:$0xf] %vm2500, %v5805
    %5899 = vst.msk [vmem:[#allocation2 + $0x34] sm:$0xf] %vm2500, %v5807
    %5900 = vst.msk [vmem:[#allocation2 + $0x44] sm:$0xf] %vm2500, %v5809
    %5901 = vst.msk [vmem:[#allocation2 + $0x54] sm:$0xf] %vm2500, %v5811
    %5902 = vst.msk [vmem:[#allocation2 + $0x64] sm:$0xf] %vm2500, %v5813
    %5903 = vst.msk [vmem:[#allocation2 + $0x74] sm:$0xf] %vm2500, %v5815
    %5904 = vst.msk [vmem:[#allocation2 + $0x84] sm:$0xf] %vm2500, %v5817
    %5905 = vst.msk [vmem:[#allocation2 + $0x94] sm:$0xf] %vm2500, %v5819
    %5906 = vst.msk [vmem:[#allocation2 + $0xa4] sm:$0xf] %vm2500, %v5821
    %5907 = vst.msk [vmem:[#allocation2 + $0xb4] sm:$0xf] %vm2500, %v5823
    %5908 = vst.msk [vmem:[#allocation2 + $0xc4] sm:$0xf] %vm2500, %v5825
    %5909 = vst.msk [vmem:[#allocation2 + $0xd4] sm:$0xf] %vm2500, %v5827
    %5910 = vst.msk [vmem:[#allocation2 + $0xe4] sm:$0xf] %vm2500, %v5829
    %5911 = vst.msk [vmem:[#allocation2 + $0xf4] sm:$0xf] %vm2500, %v5831
    %5912 = vst.msk [vmem:[#allocation2 + $0x104] sm:$0xf] %vm2500, %v5833
    %5913 = vst.msk [vmem:[#allocation2 + $0x114] sm:$0xf] %vm2500, %v5835
    %5914 = vst.msk [vmem:[#allocation2 + $0x124] sm:$0xf] %vm2500, %v5837
    %5915 = vst.msk [vmem:[#allocation2 + $0x134] sm:$0xf] %vm2500, %v5839
    %5916 = vst.msk [vmem:[#allocation2 + $0x144] sm:$0xf] %vm2500, %v5841
    %5917 = vst.msk [vmem:[#allocation2 + $0x154] sm:$0xf] %vm2500, %v5843
    %5918 = vst.msk [vmem:[#allocation2 + $0x164] sm:$0xf] %vm2500, %v5845
    %5919 = vst.msk [vmem:[#allocation2 + $0x174] sm:$0xf] %vm2500, %v5847
    %5920 = vst.msk [vmem:[#allocation2 + $0x184] sm:$0xf] %vm2500, %v5849
    %5921 = vst.msk [vmem:[#allocation2 + $0x194] sm:$0xf] %vm2500, %v5851
    %5922 = vst.msk [vmem:[#allocation2 + $0x1a4] sm:$0xf] %vm2500, %v5853
    %5923 = vst.msk [vmem:[#allocation2 + $0x1b4] sm:$0xf] %vm2500, %v5855
    %5924 = vst.msk [vmem:[#allocation2 + $0x1c4] sm:$0xf] %vm2500, %v5857
    %5925 = vst.msk [vmem:[#allocation2 + $0x1d4] sm:$0xf] %vm2500, %v5859
    %5926 = vst.msk [vmem:[#allocation2 + $0x1e4] sm:$0xf] %vm2500, %v5861
    %5927 = vst.msk [vmem:[#allocation2 + $0x1f4] sm:$0xf] %vm2500, %v5863
    %s5928 = scalar_lea.vmem %s0, 96
    %v5929 = vld [vmem:[%s5928] sm:$0xf]
    %v5930 = vld [vmem:[%s5928 + $0x8] sm:$0xf]
    %v5931 = vld [vmem:[%s5928 + $0x10] sm:$0xf]
    %v5932 = vld [vmem:[%s5928 + $0x18] sm:$0xf]
    %v5933 = vld [vmem:[%s5928 + $0x20] sm:$0xf]
    %v5934 = vld [vmem:[%s5928 + $0x28] sm:$0xf]
    %v5935 = vld [vmem:[%s5928 + $0x30] sm:$0xf]
    %v5936 = vld [vmem:[%s5928 + $0x38] sm:$0xf]
    %v5937 = vld [vmem:[%s5928 + $0x50] sm:$0xf]
    %v5938 = vld [vmem:[%s5928 + $0x58] sm:$0xf]
    %v5939 = vld [vmem:[%s5928 + $0x60] sm:$0xf]
    %v5940 = vld [vmem:[%s5928 + $0x68] sm:$0xf]
    %v5941 = vld [vmem:[%s5928 + $0x70] sm:$0xf]
    %v5942 = vld [vmem:[%s5928 + $0x78] sm:$0xf]
    %v5943 = vld [vmem:[%s5928 + $0x80] sm:$0xf]
    %v5944 = vld [vmem:[%s5928 + $0x88] sm:$0xf]
    %v5945 = vld [vmem:[%s5928 + $0xa0] sm:$0xf]
    %v5946 = vld [vmem:[%s5928 + $0xa8] sm:$0xf]
    %v5947 = vld [vmem:[%s5928 + $0xb0] sm:$0xf]
    %v5948 = vld [vmem:[%s5928 + $0xb8] sm:$0xf]
    %v5949 = vld [vmem:[%s5928 + $0xc0] sm:$0xf]
    %v5950 = vld [vmem:[%s5928 + $0xc8] sm:$0xf]
    %v5951 = vld [vmem:[%s5928 + $0xd0] sm:$0xf]
    %v5952 = vld [vmem:[%s5928 + $0xd8] sm:$0xf]
    %v5953 = vld [vmem:[%s5928 + $0xf0] sm:$0xf]
    %v5954 = vld [vmem:[%s5928 + $0xf8] sm:$0xf]
    %v5955 = vld [vmem:[%s5928 + $0x100] sm:$0xf]
    %v5956 = vld [vmem:[%s5928 + $0x108] sm:$0xf]
    %v5957 = vld [vmem:[%s5928 + $0x110] sm:$0xf]
    %v5958 = vld [vmem:[%s5928 + $0x118] sm:$0xf]
    %v5959 = vld [vmem:[%s5928 + $0x120] sm:$0xf]
    %v5960 = vld [vmem:[%s5928 + $0x128] sm:$0xf]
    %5993 = vrot.lane.b32.xlu0 %v5929, 112
    %v5994 = vpop.permute.xlu0 %5993
    %5995 = vrot.lane.b32.xlu0 %v5930, 112
    %v5996 = vpop.permute.xlu0 %5995
    %5997 = vrot.lane.b32.xlu0 %v5931, 112
    %v5998 = vpop.permute.xlu0 %5997
    %5999 = vrot.lane.b32.xlu0 %v5932, 112
    %v6000 = vpop.permute.xlu0 %5999
    %6001 = vrot.lane.b32.xlu0 %v5933, 112
    %v6002 = vpop.permute.xlu0 %6001
    %6003 = vrot.lane.b32.xlu0 %v5934, 112
    %v6004 = vpop.permute.xlu0 %6003
    %6005 = vrot.lane.b32.xlu0 %v5935, 112
    %v6006 = vpop.permute.xlu0 %6005
    %6007 = vrot.lane.b32.xlu0 %v5936, 112
    %v6008 = vpop.permute.xlu0 %6007
    %6009 = vrot.lane.b32.xlu0 %v5937, 112
    %v6010 = vpop.permute.xlu0 %6009
    %6011 = vrot.lane.b32.xlu0 %v5938, 112
    %v6012 = vpop.permute.xlu0 %6011
    %6013 = vrot.lane.b32.xlu0 %v5939, 112
    %v6014 = vpop.permute.xlu0 %6013
    %6015 = vrot.lane.b32.xlu0 %v5940, 112
    %v6016 = vpop.permute.xlu0 %6015
    %6017 = vrot.lane.b32.xlu0 %v5941, 112
    %v6018 = vpop.permute.xlu0 %6017
    %6019 = vrot.lane.b32.xlu0 %v5942, 112
    %v6020 = vpop.permute.xlu0 %6019
    %6021 = vrot.lane.b32.xlu0 %v5943, 112
    %v6022 = vpop.permute.xlu0 %6021
    %6023 = vrot.lane.b32.xlu0 %v5944, 112
    %v6024 = vpop.permute.xlu0 %6023
    %6025 = vrot.lane.b32.xlu0 %v5945, 112
    %v6026 = vpop.permute.xlu0 %6025
    %6027 = vrot.lane.b32.xlu0 %v5946, 112
    %v6028 = vpop.permute.xlu0 %6027
    %6029 = vrot.lane.b32.xlu0 %v5947, 112
    %v6030 = vpop.permute.xlu0 %6029
    %6031 = vrot.lane.b32.xlu0 %v5948, 112
    %v6032 = vpop.permute.xlu0 %6031
    %6033 = vrot.lane.b32.xlu0 %v5949, 112
    %v6034 = vpop.permute.xlu0 %6033
    %6035 = vrot.lane.b32.xlu0 %v5950, 112
    %v6036 = vpop.permute.xlu0 %6035
    %6037 = vrot.lane.b32.xlu0 %v5951, 112
    %v6038 = vpop.permute.xlu0 %6037
    %6039 = vrot.lane.b32.xlu0 %v5952, 112
    %v6040 = vpop.permute.xlu0 %6039
    %6041 = vrot.lane.b32.xlu0 %v5953, 112
    %v6042 = vpop.permute.xlu0 %6041
    %6043 = vrot.lane.b32.xlu0 %v5954, 112
    %v6044 = vpop.permute.xlu0 %6043
    %6045 = vrot.lane.b32.xlu0 %v5955, 112
    %v6046 = vpop.permute.xlu0 %6045
    %6047 = vrot.lane.b32.xlu0 %v5956, 112
    %v6048 = vpop.permute.xlu0 %6047
    %6049 = vrot.lane.b32.xlu0 %v5957, 112
    %v6050 = vpop.permute.xlu0 %6049
    %6051 = vrot.lane.b32.xlu0 %v5958, 112
    %v6052 = vpop.permute.xlu0 %6051
    %6053 = vrot.lane.b32.xlu0 %v5959, 112
    %v6054 = vpop.permute.xlu0 %6053
    %6055 = vrot.lane.b32.xlu0 %v5960, 112
    %v6056 = vpop.permute.xlu0 %6055
    %6089 = vst.msk [vmem:[#allocation2 + $0x4] sm:$0xf] %vm3141, %v5994
    %6090 = vst.msk [vmem:[#allocation2 + $0x14] sm:$0xf] %vm3141, %v5996
    %6091 = vst.msk [vmem:[#allocation2 + $0x24] sm:$0xf] %vm3141, %v5998
    %6092 = vst.msk [vmem:[#allocation2 + $0x34] sm:$0xf] %vm3141, %v6000
    %6093 = vst.msk [vmem:[#allocation2 + $0x44] sm:$0xf] %vm3141, %v6002
    %6094 = vst.msk [vmem:[#allocation2 + $0x54] sm:$0xf] %vm3141, %v6004
    %6095 = vst.msk [vmem:[#allocation2 + $0x64] sm:$0xf] %vm3141, %v6006
    %6096 = vst.msk [vmem:[#allocation2 + $0x74] sm:$0xf] %vm3141, %v6008
    %6097 = vst.msk [vmem:[#allocation2 + $0x84] sm:$0xf] %vm3141, %v6010
    %6098 = vst.msk [vmem:[#allocation2 + $0x94] sm:$0xf] %vm3141, %v6012
    %6099 = vst.msk [vmem:[#allocation2 + $0xa4] sm:$0xf] %vm3141, %v6014
    %6100 = vst.msk [vmem:[#allocation2 + $0xb4] sm:$0xf] %vm3141, %v6016
    %6101 = vst.msk [vmem:[#allocation2 + $0xc4] sm:$0xf] %vm3141, %v6018
    %6102 = vst.msk [vmem:[#allocation2 + $0xd4] sm:$0xf] %vm3141, %v6020
    %6103 = vst.msk [vmem:[#allocation2 + $0xe4] sm:$0xf] %vm3141, %v6022
    %6104 = vst.msk [vmem:[#allocation2 + $0xf4] sm:$0xf] %vm3141, %v6024
    %6105 = vst.msk [vmem:[#allocation2 + $0x104] sm:$0xf] %vm3141, %v6026
    %6106 = vst.msk [vmem:[#allocation2 + $0x114] sm:$0xf] %vm3141, %v6028
    %6107 = vst.msk [vmem:[#allocation2 + $0x124] sm:$0xf] %vm3141, %v6030
    %6108 = vst.msk [vmem:[#allocation2 + $0x134] sm:$0xf] %vm3141, %v6032
    %6109 = vst.msk [vmem:[#allocation2 + $0x144] sm:$0xf] %vm3141, %v6034
    %6110 = vst.msk [vmem:[#allocation2 + $0x154] sm:$0xf] %vm3141, %v6036
    %6111 = vst.msk [vmem:[#allocation2 + $0x164] sm:$0xf] %vm3141, %v6038
    %6112 = vst.msk [vmem:[#allocation2 + $0x174] sm:$0xf] %vm3141, %v6040
    %6113 = vst.msk [vmem:[#allocation2 + $0x184] sm:$0xf] %vm3141, %v6042
    %6114 = vst.msk [vmem:[#allocation2 + $0x194] sm:$0xf] %vm3141, %v6044
    %6115 = vst.msk [vmem:[#allocation2 + $0x1a4] sm:$0xf] %vm3141, %v6046
    %6116 = vst.msk [vmem:[#allocation2 + $0x1b4] sm:$0xf] %vm3141, %v6048
    %6117 = vst.msk [vmem:[#allocation2 + $0x1c4] sm:$0xf] %vm3141, %v6050
    %6118 = vst.msk [vmem:[#allocation2 + $0x1d4] sm:$0xf] %vm3141, %v6052
    %6119 = vst.msk [vmem:[#allocation2 + $0x1e4] sm:$0xf] %vm3141, %v6054
    %6120 = vst.msk [vmem:[#allocation2 + $0x1f4] sm:$0xf] %vm3141, %v6056
    %v6121 = vld [vmem:[%s5928] sm:$0xf]
    %v6122 = vld [vmem:[%s5928 + $0x4] sm:$0x1]
    %v6123 = vld [vmem:[%s5928 + $0x8] sm:$0xf]
    %v6124 = vld [vmem:[%s5928 + $0xc] sm:$0x1]
    %v6125 = vld [vmem:[%s5928 + $0x10] sm:$0xf]
    %v6126 = vld [vmem:[%s5928 + $0x14] sm:$0x1]
    %v6127 = vld [vmem:[%s5928 + $0x18] sm:$0xf]
    %v6128 = vld [vmem:[%s5928 + $0x1c] sm:$0x1]
    %v6129 = vld [vmem:[%s5928 + $0x20] sm:$0xf]
    %v6130 = vld [vmem:[%s5928 + $0x24] sm:$0x1]
    %v6131 = vld [vmem:[%s5928 + $0x28] sm:$0xf]
    %v6132 = vld [vmem:[%s5928 + $0x2c] sm:$0x1]
    %v6133 = vld [vmem:[%s5928 + $0x30] sm:$0xf]
    %v6134 = vld [vmem:[%s5928 + $0x34] sm:$0x1]
    %v6135 = vld [vmem:[%s5928 + $0x38] sm:$0xf]
    %v6136 = vld [vmem:[%s5928 + $0x3c] sm:$0x1]
    %v6137 = vld [vmem:[%s5928 + $0x50] sm:$0xf]
    %v6138 = vld [vmem:[%s5928 + $0x54] sm:$0x1]
    %v6139 = vld [vmem:[%s5928 + $0x58] sm:$0xf]
    %v6140 = vld [vmem:[%s5928 + $0x5c] sm:$0x1]
    %v6141 = vld [vmem:[%s5928 + $0x60] sm:$0xf]
    %v6142 = vld [vmem:[%s5928 + $0x64] sm:$0x1]
    %v6143 = vld [vmem:[%s5928 + $0x68] sm:$0xf]
    %v6144 = vld [vmem:[%s5928 + $0x6c] sm:$0x1]
    %v6145 = vld [vmem:[%s5928 + $0x70] sm:$0xf]
    %v6146 = vld [vmem:[%s5928 + $0x74] sm:$0x1]
    %v6147 = vld [vmem:[%s5928 + $0x78] sm:$0xf]
    %v6148 = vld [vmem:[%s5928 + $0x7c] sm:$0x1]
    %v6149 = vld [vmem:[%s5928 + $0x80] sm:$0xf]
    %v6150 = vld [vmem:[%s5928 + $0x84] sm:$0x1]
    %v6151 = vld [vmem:[%s5928 + $0x88] sm:$0xf]
    %v6152 = vld [vmem:[%s5928 + $0x8c] sm:$0x1]
    %v6153 = vld [vmem:[%s5928 + $0xa0] sm:$0xf]
    %v6154 = vld [vmem:[%s5928 + $0xa4] sm:$0x1]
    %v6155 = vld [vmem:[%s5928 + $0xa8] sm:$0xf]
    %v6156 = vld [vmem:[%s5928 + $0xac] sm:$0x1]
    %v6157 = vld [vmem:[%s5928 + $0xb0] sm:$0xf]
    %v6158 = vld [vmem:[%s5928 + $0xb4] sm:$0x1]
    %v6159 = vld [vmem:[%s5928 + $0xb8] sm:$0xf]
    %v6160 = vld [vmem:[%s5928 + $0xbc] sm:$0x1]
    %v6161 = vld [vmem:[%s5928 + $0xc0] sm:$0xf]
    %v6162 = vld [vmem:[%s5928 + $0xc4] sm:$0x1]
    %v6163 = vld [vmem:[%s5928 + $0xc8] sm:$0xf]
    %v6164 = vld [vmem:[%s5928 + $0xcc] sm:$0x1]
    %v6165 = vld [vmem:[%s5928 + $0xd0] sm:$0xf]
    %v6166 = vld [vmem:[%s5928 + $0xd4] sm:$0x1]
    %v6167 = vld [vmem:[%s5928 + $0xd8] sm:$0xf]
    %v6168 = vld [vmem:[%s5928 + $0xdc] sm:$0x1]
    %v6169 = vld [vmem:[%s5928 + $0xf0] sm:$0xf]
    %v6170 = vld [vmem:[%s5928 + $0xf4] sm:$0x1]
    %v6171 = vld [vmem:[%s5928 + $0xf8] sm:$0xf]
    %v6172 = vld [vmem:[%s5928 + $0xfc] sm:$0x1]
    %v6173 = vld [vmem:[%s5928 + $0x100] sm:$0xf]
    %v6174 = vld [vmem:[%s5928 + $0x104] sm:$0x1]
    %v6175 = vld [vmem:[%s5928 + $0x108] sm:$0xf]
    %v6176 = vld [vmem:[%s5928 + $0x10c] sm:$0x1]
    %v6177 = vld [vmem:[%s5928 + $0x110] sm:$0xf]
    %v6178 = vld [vmem:[%s5928 + $0x114] sm:$0x1]
    %v6179 = vld [vmem:[%s5928 + $0x118] sm:$0xf]
    %v6180 = vld [vmem:[%s5928 + $0x11c] sm:$0x1]
    %v6181 = vld [vmem:[%s5928 + $0x120] sm:$0xf]
    %v6182 = vld [vmem:[%s5928 + $0x124] sm:$0x1]
    %v6183 = vld [vmem:[%s5928 + $0x128] sm:$0xf]
    %v6184 = vld [vmem:[%s5928 + $0x12c] sm:$0x1]
    %v6186 = vshrl.u32 %v6121, 16
    %v6188 = vrot.slane %v6186, 4
    %v6189 = vshll.u32 %v6121, 16
    %v6191 = vrot.slane %v6189, 5
    %v6192 = vor.u32 %v6188, %v6191
    %v6193 = vrot.slane %v6192, 4
    %v6195 = vshll.u32 %v6122, 16
    %v6197 = vrot.slane %v6195, 5
    %v6198 = vsel %vm153, %v6193, %v6197
    %v6200 = vshrl.u32 %v6123, 16
    %v6202 = vrot.slane %v6200, 4
    %v6203 = vshll.u32 %v6123, 16
    %v6205 = vrot.slane %v6203, 5
    %v6206 = vor.u32 %v6202, %v6205
    %v6207 = vrot.slane %v6206, 4
    %v6209 = vshll.u32 %v6124, 16
    %v6211 = vrot.slane %v6209, 5
    %v6212 = vsel %vm153, %v6207, %v6211
    %v6214 = vshrl.u32 %v6125, 16
    %v6216 = vrot.slane %v6214, 4
    %v6217 = vshll.u32 %v6125, 16
    %v6219 = vrot.slane %v6217, 5
    %v6220 = vor.u32 %v6216, %v6219
    %v6221 = vrot.slane %v6220, 4
    %v6223 = vshll.u32 %v6126, 16
    %v6225 = vrot.slane %v6223, 5
    %v6226 = vsel %vm153, %v6221, %v6225
    %v6228 = vshrl.u32 %v6127, 16
    %v6230 = vrot.slane %v6228, 4
    %v6231 = vshll.u32 %v6127, 16
    %v6233 = vrot.slane %v6231, 5
    %v6234 = vor.u32 %v6230, %v6233
    %v6235 = vrot.slane %v6234, 4
    %v6237 = vshll.u32 %v6128, 16
    %v6239 = vrot.slane %v6237, 5
    %v6240 = vsel %vm153, %v6235, %v6239
    %v6242 = vshrl.u32 %v6129, 16
    %v6244 = vrot.slane %v6242, 4
    %v6245 = vshll.u32 %v6129, 16
    %v6247 = vrot.slane %v6245, 5
    %v6248 = vor.u32 %v6244, %v6247
    %v6249 = vrot.slane %v6248, 4
    %v6251 = vshll.u32 %v6130, 16
    %v6253 = vrot.slane %v6251, 5
    %v6254 = vsel %vm153, %v6249, %v6253
    %v6256 = vshrl.u32 %v6131, 16
    %v6258 = vrot.slane %v6256, 4
    %v6259 = vshll.u32 %v6131, 16
    %v6261 = vrot.slane %v6259, 5
    %v6262 = vor.u32 %v6258, %v6261
    %v6263 = vrot.slane %v6262, 4
    %v6265 = vshll.u32 %v6132, 16
    %v6267 = vrot.slane %v6265, 5
    %v6268 = vsel %vm153, %v6263, %v6267
    %v6270 = vshrl.u32 %v6133, 16
    %v6272 = vrot.slane %v6270, 4
    %v6273 = vshll.u32 %v6133, 16
    %v6275 = vrot.slane %v6273, 5
    %v6276 = vor.u32 %v6272, %v6275
    %v6277 = vrot.slane %v6276, 4
    %v6279 = vshll.u32 %v6134, 16
    %v6281 = vrot.slane %v6279, 5
    %v6282 = vsel %vm153, %v6277, %v6281
    %v6284 = vshrl.u32 %v6135, 16
    %v6286 = vrot.slane %v6284, 4
    %v6287 = vshll.u32 %v6135, 16
    %v6289 = vrot.slane %v6287, 5
    %v6290 = vor.u32 %v6286, %v6289
    %v6291 = vrot.slane %v6290, 4
    %v6293 = vshll.u32 %v6136, 16
    %v6295 = vrot.slane %v6293, 5
    %v6296 = vsel %vm153, %v6291, %v6295
    %v6298 = vshrl.u32 %v6137, 16
    %v6300 = vrot.slane %v6298, 4
    %v6301 = vshll.u32 %v6137, 16
    %v6303 = vrot.slane %v6301, 5
    %v6304 = vor.u32 %v6300, %v6303
    %v6305 = vrot.slane %v6304, 4
    %v6307 = vshll.u32 %v6138, 16
    %v6309 = vrot.slane %v6307, 5
    %v6310 = vsel %vm153, %v6305, %v6309
    %v6312 = vshrl.u32 %v6139, 16
    %v6314 = vrot.slane %v6312, 4
    %v6315 = vshll.u32 %v6139, 16
    %v6317 = vrot.slane %v6315, 5
    %v6318 = vor.u32 %v6314, %v6317
    %v6319 = vrot.slane %v6318, 4
    %v6321 = vshll.u32 %v6140, 16
    %v6323 = vrot.slane %v6321, 5
    %v6324 = vsel %vm153, %v6319, %v6323
    %v6326 = vshrl.u32 %v6141, 16
    %v6328 = vrot.slane %v6326, 4
    %v6329 = vshll.u32 %v6141, 16
    %v6331 = vrot.slane %v6329, 5
    %v6332 = vor.u32 %v6328, %v6331
    %v6333 = vrot.slane %v6332, 4
    %v6335 = vshll.u32 %v6142, 16
    %v6337 = vrot.slane %v6335, 5
    %v6338 = vsel %vm153, %v6333, %v6337
    %v6340 = vshrl.u32 %v6143, 16
    %v6342 = vrot.slane %v6340, 4
    %v6343 = vshll.u32 %v6143, 16
    %v6345 = vrot.slane %v6343, 5
    %v6346 = vor.u32 %v6342, %v6345
    %v6347 = vrot.slane %v6346, 4
    %v6349 = vshll.u32 %v6144, 16
    %v6351 = vrot.slane %v6349, 5
    %v6352 = vsel %vm153, %v6347, %v6351
    %v6354 = vshrl.u32 %v6145, 16
    %v6356 = vrot.slane %v6354, 4
    %v6357 = vshll.u32 %v6145, 16
    %v6359 = vrot.slane %v6357, 5
    %v6360 = vor.u32 %v6356, %v6359
    %v6361 = vrot.slane %v6360, 4
    %v6363 = vshll.u32 %v6146, 16
    %v6365 = vrot.slane %v6363, 5
    %v6366 = vsel %vm153, %v6361, %v6365
    %v6368 = vshrl.u32 %v6147, 16
    %v6370 = vrot.slane %v6368, 4
    %v6371 = vshll.u32 %v6147, 16
    %v6373 = vrot.slane %v6371, 5
    %v6374 = vor.u32 %v6370, %v6373
    %v6375 = vrot.slane %v6374, 4
    %v6377 = vshll.u32 %v6148, 16
    %v6379 = vrot.slane %v6377, 5
    %v6380 = vsel %vm153, %v6375, %v6379
    %v6382 = vshrl.u32 %v6149, 16
    %v6384 = vrot.slane %v6382, 4
    %v6385 = vshll.u32 %v6149, 16
    %v6387 = vrot.slane %v6385, 5
    %v6388 = vor.u32 %v6384, %v6387
    %v6389 = vrot.slane %v6388, 4
    %v6391 = vshll.u32 %v6150, 16
    %v6393 = vrot.slane %v6391, 5
    %v6394 = vsel %vm153, %v6389, %v6393
    %v6396 = vshrl.u32 %v6151, 16
    %v6398 = vrot.slane %v6396, 4
    %v6399 = vshll.u32 %v6151, 16
    %v6401 = vrot.slane %v6399, 5
    %v6402 = vor.u32 %v6398, %v6401
    %v6403 = vrot.slane %v6402, 4
    %v6405 = vshll.u32 %v6152, 16
    %v6407 = vrot.slane %v6405, 5
    %v6408 = vsel %vm153, %v6403, %v6407
    %v6410 = vshrl.u32 %v6153, 16
    %v6412 = vrot.slane %v6410, 4
    %v6413 = vshll.u32 %v6153, 16
    %v6415 = vrot.slane %v6413, 5
    %v6416 = vor.u32 %v6412, %v6415
    %v6417 = vrot.slane %v6416, 4
    %v6419 = vshll.u32 %v6154, 16
    %v6421 = vrot.slane %v6419, 5
    %v6422 = vsel %vm153, %v6417, %v6421
    %v6424 = vshrl.u32 %v6155, 16
    %v6426 = vrot.slane %v6424, 4
    %v6427 = vshll.u32 %v6155, 16
    %v6429 = vrot.slane %v6427, 5
    %v6430 = vor.u32 %v6426, %v6429
    %v6431 = vrot.slane %v6430, 4
    %v6433 = vshll.u32 %v6156, 16
    %v6435 = vrot.slane %v6433, 5
    %v6436 = vsel %vm153, %v6431, %v6435
    %v6438 = vshrl.u32 %v6157, 16
    %v6440 = vrot.slane %v6438, 4
    %v6441 = vshll.u32 %v6157, 16
    %v6443 = vrot.slane %v6441, 5
    %v6444 = vor.u32 %v6440, %v6443
    %v6445 = vrot.slane %v6444, 4
    %v6447 = vshll.u32 %v6158, 16
    %v6449 = vrot.slane %v6447, 5
    %v6450 = vsel %vm153, %v6445, %v6449
    %v6452 = vshrl.u32 %v6159, 16
    %v6454 = vrot.slane %v6452, 4
    %v6455 = vshll.u32 %v6159, 16
    %v6457 = vrot.slane %v6455, 5
    %v6458 = vor.u32 %v6454, %v6457
    %v6459 = vrot.slane %v6458, 4
    %v6461 = vshll.u32 %v6160, 16
    %v6463 = vrot.slane %v6461, 5
    %v6464 = vsel %vm153, %v6459, %v6463
    %v6466 = vshrl.u32 %v6161, 16
    %v6468 = vrot.slane %v6466, 4
    %v6469 = vshll.u32 %v6161, 16
    %v6471 = vrot.slane %v6469, 5
    %v6472 = vor.u32 %v6468, %v6471
    %v6473 = vrot.slane %v6472, 4
    %v6475 = vshll.u32 %v6162, 16
    %v6477 = vrot.slane %v6475, 5
    %v6478 = vsel %vm153, %v6473, %v6477
    %v6480 = vshrl.u32 %v6163, 16
    %v6482 = vrot.slane %v6480, 4
    %v6483 = vshll.u32 %v6163, 16
    %v6485 = vrot.slane %v6483, 5
    %v6486 = vor.u32 %v6482, %v6485
    %v6487 = vrot.slane %v6486, 4
    %v6489 = vshll.u32 %v6164, 16
    %v6491 = vrot.slane %v6489, 5
    %v6492 = vsel %vm153, %v6487, %v6491
    %v6494 = vshrl.u32 %v6165, 16
    %v6496 = vrot.slane %v6494, 4
    %v6497 = vshll.u32 %v6165, 16
    %v6499 = vrot.slane %v6497, 5
    %v6500 = vor.u32 %v6496, %v6499
    %v6501 = vrot.slane %v6500, 4
    %v6503 = vshll.u32 %v6166, 16
    %v6505 = vrot.slane %v6503, 5
    %v6506 = vsel %vm153, %v6501, %v6505
    %v6508 = vshrl.u32 %v6167, 16
    %v6510 = vrot.slane %v6508, 4
    %v6511 = vshll.u32 %v6167, 16
    %v6513 = vrot.slane %v6511, 5
    %v6514 = vor.u32 %v6510, %v6513
    %v6515 = vrot.slane %v6514, 4
    %v6517 = vshll.u32 %v6168, 16
    %v6519 = vrot.slane %v6517, 5
    %v6520 = vsel %vm153, %v6515, %v6519
    %v6522 = vshrl.u32 %v6169, 16
    %v6524 = vrot.slane %v6522, 4
    %v6525 = vshll.u32 %v6169, 16
    %v6527 = vrot.slane %v6525, 5
    %v6528 = vor.u32 %v6524, %v6527
    %v6529 = vrot.slane %v6528, 4
    %v6531 = vshll.u32 %v6170, 16
    %v6533 = vrot.slane %v6531, 5
    %v6534 = vsel %vm153, %v6529, %v6533
    %v6536 = vshrl.u32 %v6171, 16
    %v6538 = vrot.slane %v6536, 4
    %v6539 = vshll.u32 %v6171, 16
    %v6541 = vrot.slane %v6539, 5
    %v6542 = vor.u32 %v6538, %v6541
    %v6543 = vrot.slane %v6542, 4
    %v6545 = vshll.u32 %v6172, 16
    %v6547 = vrot.slane %v6545, 5
    %v6548 = vsel %vm153, %v6543, %v6547
    %v6550 = vshrl.u32 %v6173, 16
    %v6552 = vrot.slane %v6550, 4
    %v6553 = vshll.u32 %v6173, 16
    %v6555 = vrot.slane %v6553, 5
    %v6556 = vor.u32 %v6552, %v6555
    %v6557 = vrot.slane %v6556, 4
    %v6559 = vshll.u32 %v6174, 16
    %v6561 = vrot.slane %v6559, 5
    %v6562 = vsel %vm153, %v6557, %v6561
    %v6564 = vshrl.u32 %v6175, 16
    %v6566 = vrot.slane %v6564, 4
    %v6567 = vshll.u32 %v6175, 16
    %v6569 = vrot.slane %v6567, 5
    %v6570 = vor.u32 %v6566, %v6569
    %v6571 = vrot.slane %v6570, 4
    %v6573 = vshll.u32 %v6176, 16
    %v6575 = vrot.slane %v6573, 5
    %v6576 = vsel %vm153, %v6571, %v6575
    %v6578 = vshrl.u32 %v6177, 16
    %v6580 = vrot.slane %v6578, 4
    %v6581 = vshll.u32 %v6177, 16
    %v6583 = vrot.slane %v6581, 5
    %v6584 = vor.u32 %v6580, %v6583
    %v6585 = vrot.slane %v6584, 4
    %v6587 = vshll.u32 %v6178, 16
    %v6589 = vrot.slane %v6587, 5
    %v6590 = vsel %vm153, %v6585, %v6589
    %v6592 = vshrl.u32 %v6179, 16
    %v6594 = vrot.slane %v6592, 4
    %v6595 = vshll.u32 %v6179, 16
    %v6597 = vrot.slane %v6595, 5
    %v6598 = vor.u32 %v6594, %v6597
    %v6599 = vrot.slane %v6598, 4
    %v6601 = vshll.u32 %v6180, 16
    %v6603 = vrot.slane %v6601, 5
    %v6604 = vsel %vm153, %v6599, %v6603
    %v6606 = vshrl.u32 %v6181, 16
    %v6608 = vrot.slane %v6606, 4
    %v6609 = vshll.u32 %v6181, 16
    %v6611 = vrot.slane %v6609, 5
    %v6612 = vor.u32 %v6608, %v6611
    %v6613 = vrot.slane %v6612, 4
    %v6615 = vshll.u32 %v6182, 16
    %v6617 = vrot.slane %v6615, 5
    %v6618 = vsel %vm153, %v6613, %v6617
    %v6620 = vshrl.u32 %v6183, 16
    %v6622 = vrot.slane %v6620, 4
    %v6623 = vshll.u32 %v6183, 16
    %v6625 = vrot.slane %v6623, 5
    %v6626 = vor.u32 %v6622, %v6625
    %v6627 = vrot.slane %v6626, 4
    %v6629 = vshll.u32 %v6184, 16
    %v6631 = vrot.slane %v6629, 5
    %v6632 = vsel %vm153, %v6627, %v6631
    %6665 = vst.msk [vmem:[#allocation2 + $0x8] sm:$0xf] %vm54, %v6198
    %6666 = vst.msk [vmem:[#allocation2 + $0x18] sm:$0xf] %vm54, %v6212
    %6667 = vst.msk [vmem:[#allocation2 + $0x28] sm:$0xf] %vm54, %v6226
    %6668 = vst.msk [vmem:[#allocation2 + $0x38] sm:$0xf] %vm54, %v6240
    %6669 = vst.msk [vmem:[#allocation2 + $0x48] sm:$0xf] %vm54, %v6254
    %6670 = vst.msk [vmem:[#allocation2 + $0x58] sm:$0xf] %vm54, %v6268
    %6671 = vst.msk [vmem:[#allocation2 + $0x68] sm:$0xf] %vm54, %v6282
    %6672 = vst.msk [vmem:[#allocation2 + $0x78] sm:$0xf] %vm54, %v6296
    %6673 = vst.msk [vmem:[#allocation2 + $0x88] sm:$0xf] %vm54, %v6310
    %6674 = vst.msk [vmem:[#allocation2 + $0x98] sm:$0xf] %vm54, %v6324
    %6675 = vst.msk [vmem:[#allocation2 + $0xa8] sm:$0xf] %vm54, %v6338
    %6676 = vst.msk [vmem:[#allocation2 + $0xb8] sm:$0xf] %vm54, %v6352
    %6677 = vst.msk [vmem:[#allocation2 + $0xc8] sm:$0xf] %vm54, %v6366
    %6678 = vst.msk [vmem:[#allocation2 + $0xd8] sm:$0xf] %vm54, %v6380
    %6679 = vst.msk [vmem:[#allocation2 + $0xe8] sm:$0xf] %vm54, %v6394
    %6680 = vst.msk [vmem:[#allocation2 + $0xf8] sm:$0xf] %vm54, %v6408
    %6681 = vst.msk [vmem:[#allocation2 + $0x108] sm:$0xf] %vm54, %v6422
    %6682 = vst.msk [vmem:[#allocation2 + $0x118] sm:$0xf] %vm54, %v6436
    %6683 = vst.msk [vmem:[#allocation2 + $0x128] sm:$0xf] %vm54, %v6450
    %6684 = vst.msk [vmem:[#allocation2 + $0x138] sm:$0xf] %vm54, %v6464
    %6685 = vst.msk [vmem:[#allocation2 + $0x148] sm:$0xf] %vm54, %v6478
    %6686 = vst.msk [vmem:[#allocation2 + $0x158] sm:$0xf] %vm54, %v6492
    %6687 = vst.msk [vmem:[#allocation2 + $0x168] sm:$0xf] %vm54, %v6506
    %6688 = vst.msk [vmem:[#allocation2 + $0x178] sm:$0xf] %vm54, %v6520
    %6689 = vst.msk [vmem:[#allocation2 + $0x188] sm:$0xf] %vm54, %v6534
    %6690 = vst.msk [vmem:[#allocation2 + $0x198] sm:$0xf] %vm54, %v6548
    %6691 = vst.msk [vmem:[#allocation2 + $0x1a8] sm:$0xf] %vm54, %v6562
    %6692 = vst.msk [vmem:[#allocation2 + $0x1b8] sm:$0xf] %vm54, %v6576
    %6693 = vst.msk [vmem:[#allocation2 + $0x1c8] sm:$0xf] %vm54, %v6590
    %6694 = vst.msk [vmem:[#allocation2 + $0x1d8] sm:$0xf] %vm54, %v6604
    %6695 = vst.msk [vmem:[#allocation2 + $0x1e8] sm:$0xf] %vm54, %v6618
    %6696 = vst.msk [vmem:[#allocation2 + $0x1f8] sm:$0xf] %vm54, %v6632
    %v6697 = vld [vmem:[%s5928] sm:$0xe]
    %v6698 = vld [vmem:[%s5928 + $0x4] sm:$0x1]
    %v6699 = vld [vmem:[%s5928 + $0x8] sm:$0xe]
    %v6700 = vld [vmem:[%s5928 + $0xc] sm:$0x1]
    %v6701 = vld [vmem:[%s5928 + $0x10] sm:$0xe]
    %v6702 = vld [vmem:[%s5928 + $0x14] sm:$0x1]
    %v6703 = vld [vmem:[%s5928 + $0x18] sm:$0xe]
    %v6704 = vld [vmem:[%s5928 + $0x1c] sm:$0x1]
    %v6705 = vld [vmem:[%s5928 + $0x20] sm:$0xe]
    %v6706 = vld [vmem:[%s5928 + $0x24] sm:$0x1]
    %v6707 = vld [vmem:[%s5928 + $0x28] sm:$0xe]
    %v6708 = vld [vmem:[%s5928 + $0x2c] sm:$0x1]
    %v6709 = vld [vmem:[%s5928 + $0x30] sm:$0xe]
    %v6710 = vld [vmem:[%s5928 + $0x34] sm:$0x1]
    %v6711 = vld [vmem:[%s5928 + $0x38] sm:$0xe]
    %v6712 = vld [vmem:[%s5928 + $0x3c] sm:$0x1]
    %v6713 = vld [vmem:[%s5928 + $0x50] sm:$0xe]
    %v6714 = vld [vmem:[%s5928 + $0x54] sm:$0x1]
    %v6715 = vld [vmem:[%s5928 + $0x58] sm:$0xe]
    %v6716 = vld [vmem:[%s5928 + $0x5c] sm:$0x1]
    %v6717 = vld [vmem:[%s5928 + $0x60] sm:$0xe]
    %v6718 = vld [vmem:[%s5928 + $0x64] sm:$0x1]
    %v6719 = vld [vmem:[%s5928 + $0x68] sm:$0xe]
    %v6720 = vld [vmem:[%s5928 + $0x6c] sm:$0x1]
    %v6721 = vld [vmem:[%s5928 + $0x70] sm:$0xe]
    %v6722 = vld [vmem:[%s5928 + $0x74] sm:$0x1]
    %v6723 = vld [vmem:[%s5928 + $0x78] sm:$0xe]
    %v6724 = vld [vmem:[%s5928 + $0x7c] sm:$0x1]
    %v6725 = vld [vmem:[%s5928 + $0x80] sm:$0xe]
    %v6726 = vld [vmem:[%s5928 + $0x84] sm:$0x1]
    %v6727 = vld [vmem:[%s5928 + $0x88] sm:$0xe]
    %v6728 = vld [vmem:[%s5928 + $0x8c] sm:$0x1]
    %v6729 = vld [vmem:[%s5928 + $0xa0] sm:$0xe]
    %v6730 = vld [vmem:[%s5928 + $0xa4] sm:$0x1]
    %v6731 = vld [vmem:[%s5928 + $0xa8] sm:$0xe]
    %v6732 = vld [vmem:[%s5928 + $0xac] sm:$0x1]
    %v6733 = vld [vmem:[%s5928 + $0xb0] sm:$0xe]
    %v6734 = vld [vmem:[%s5928 + $0xb4] sm:$0x1]
    %v6735 = vld [vmem:[%s5928 + $0xb8] sm:$0xe]
    %v6736 = vld [vmem:[%s5928 + $0xbc] sm:$0x1]
    %v6737 = vld [vmem:[%s5928 + $0xc0] sm:$0xe]
    %v6738 = vld [vmem:[%s5928 + $0xc4] sm:$0x1]
    %v6739 = vld [vmem:[%s5928 + $0xc8] sm:$0xe]
    %v6740 = vld [vmem:[%s5928 + $0xcc] sm:$0x1]
    %v6741 = vld [vmem:[%s5928 + $0xd0] sm:$0xe]
    %v6742 = vld [vmem:[%s5928 + $0xd4] sm:$0x1]
    %v6743 = vld [vmem:[%s5928 + $0xd8] sm:$0xe]
    %v6744 = vld [vmem:[%s5928 + $0xdc] sm:$0x1]
    %v6745 = vld [vmem:[%s5928 + $0xf0] sm:$0xe]
    %v6746 = vld [vmem:[%s5928 + $0xf4] sm:$0x1]
    %v6747 = vld [vmem:[%s5928 + $0xf8] sm:$0xe]
    %v6748 = vld [vmem:[%s5928 + $0xfc] sm:$0x1]
    %v6749 = vld [vmem:[%s5928 + $0x100] sm:$0xe]
    %v6750 = vld [vmem:[%s5928 + $0x104] sm:$0x1]
    %v6751 = vld [vmem:[%s5928 + $0x108] sm:$0xe]
    %v6752 = vld [vmem:[%s5928 + $0x10c] sm:$0x1]
    %v6753 = vld [vmem:[%s5928 + $0x110] sm:$0xe]
    %v6754 = vld [vmem:[%s5928 + $0x114] sm:$0x1]
    %v6755 = vld [vmem:[%s5928 + $0x118] sm:$0xe]
    %v6756 = vld [vmem:[%s5928 + $0x11c] sm:$0x1]
    %v6757 = vld [vmem:[%s5928 + $0x120] sm:$0xe]
    %v6758 = vld [vmem:[%s5928 + $0x124] sm:$0x1]
    %v6759 = vld [vmem:[%s5928 + $0x128] sm:$0xe]
    %v6760 = vld [vmem:[%s5928 + $0x12c] sm:$0x1]
    %v6825 = vrot.slane %v6697, 5
    %v6826 = vrot.slane %v6825, 4
    %v6827 = vrot.slane %v6698, 5
    %v6828 = vsel %vm861, %v6826, %v6827
    %v6829 = vrot.slane %v6699, 5
    %v6830 = vrot.slane %v6829, 4
    %v6831 = vrot.slane %v6700, 5
    %v6832 = vsel %vm861, %v6830, %v6831
    %v6833 = vrot.slane %v6701, 5
    %v6834 = vrot.slane %v6833, 4
    %v6835 = vrot.slane %v6702, 5
    %v6836 = vsel %vm861, %v6834, %v6835
    %v6837 = vrot.slane %v6703, 5
    %v6838 = vrot.slane %v6837, 4
    %v6839 = vrot.slane %v6704, 5
    %v6840 = vsel %vm861, %v6838, %v6839
    %v6841 = vrot.slane %v6705, 5
    %v6842 = vrot.slane %v6841, 4
    %v6843 = vrot.slane %v6706, 5
    %v6844 = vsel %vm861, %v6842, %v6843
    %v6845 = vrot.slane %v6707, 5
    %v6846 = vrot.slane %v6845, 4
    %v6847 = vrot.slane %v6708, 5
    %v6848 = vsel %vm861, %v6846, %v6847
    %v6849 = vrot.slane %v6709, 5
    %v6850 = vrot.slane %v6849, 4
    %v6851 = vrot.slane %v6710, 5
    %v6852 = vsel %vm861, %v6850, %v6851
    %v6853 = vrot.slane %v6711, 5
    %v6854 = vrot.slane %v6853, 4
    %v6855 = vrot.slane %v6712, 5
    %v6856 = vsel %vm861, %v6854, %v6855
    %v6857 = vrot.slane %v6713, 5
    %v6858 = vrot.slane %v6857, 4
    %v6859 = vrot.slane %v6714, 5
    %v6860 = vsel %vm861, %v6858, %v6859
    %v6861 = vrot.slane %v6715, 5
    %v6862 = vrot.slane %v6861, 4
    %v6863 = vrot.slane %v6716, 5
    %v6864 = vsel %vm861, %v6862, %v6863
    %v6865 = vrot.slane %v6717, 5
    %v6866 = vrot.slane %v6865, 4
    %v6867 = vrot.slane %v6718, 5
    %v6868 = vsel %vm861, %v6866, %v6867
    %v6869 = vrot.slane %v6719, 5
    %v6870 = vrot.slane %v6869, 4
    %v6871 = vrot.slane %v6720, 5
    %v6872 = vsel %vm861, %v6870, %v6871
    %v6873 = vrot.slane %v6721, 5
    %v6874 = vrot.slane %v6873, 4
    %v6875 = vrot.slane %v6722, 5
    %v6876 = vsel %vm861, %v6874, %v6875
    %v6877 = vrot.slane %v6723, 5
    %v6878 = vrot.slane %v6877, 4
    %v6879 = vrot.slane %v6724, 5
    %v6880 = vsel %vm861, %v6878, %v6879
    %v6881 = vrot.slane %v6725, 5
    %v6882 = vrot.slane %v6881, 4
    %v6883 = vrot.slane %v6726, 5
    %v6884 = vsel %vm861, %v6882, %v6883
    %v6885 = vrot.slane %v6727, 5
    %v6886 = vrot.slane %v6885, 4
    %v6887 = vrot.slane %v6728, 5
    %v6888 = vsel %vm861, %v6886, %v6887
    %v6889 = vrot.slane %v6729, 5
    %v6890 = vrot.slane %v6889, 4
    %v6891 = vrot.slane %v6730, 5
    %v6892 = vsel %vm861, %v6890, %v6891
    %v6893 = vrot.slane %v6731, 5
    %v6894 = vrot.slane %v6893, 4
    %v6895 = vrot.slane %v6732, 5
    %v6896 = vsel %vm861, %v6894, %v6895
    %v6897 = vrot.slane %v6733, 5
    %v6898 = vrot.slane %v6897, 4
    %v6899 = vrot.slane %v6734, 5
    %v6900 = vsel %vm861, %v6898, %v6899
    %v6901 = vrot.slane %v6735, 5
    %v6902 = vrot.slane %v6901, 4
    %v6903 = vrot.slane %v6736, 5
    %v6904 = vsel %vm861, %v6902, %v6903
    %v6905 = vrot.slane %v6737, 5
    %v6906 = vrot.slane %v6905, 4
    %v6907 = vrot.slane %v6738, 5
    %v6908 = vsel %vm861, %v6906, %v6907
    %v6909 = vrot.slane %v6739, 5
    %v6910 = vrot.slane %v6909, 4
    %v6911 = vrot.slane %v6740, 5
    %v6912 = vsel %vm861, %v6910, %v6911
    %v6913 = vrot.slane %v6741, 5
    %v6914 = vrot.slane %v6913, 4
    %v6915 = vrot.slane %v6742, 5
    %v6916 = vsel %vm861, %v6914, %v6915
    %v6917 = vrot.slane %v6743, 5
    %v6918 = vrot.slane %v6917, 4
    %v6919 = vrot.slane %v6744, 5
    %v6920 = vsel %vm861, %v6918, %v6919
    %v6921 = vrot.slane %v6745, 5
    %v6922 = vrot.slane %v6921, 4
    %v6923 = vrot.slane %v6746, 5
    %v6924 = vsel %vm861, %v6922, %v6923
    %v6925 = vrot.slane %v6747, 5
    %v6926 = vrot.slane %v6925, 4
    %v6927 = vrot.slane %v6748, 5
    %v6928 = vsel %vm861, %v6926, %v6927
    %v6929 = vrot.slane %v6749, 5
    %v6930 = vrot.slane %v6929, 4
    %v6931 = vrot.slane %v6750, 5
    %v6932 = vsel %vm861, %v6930, %v6931
    %v6933 = vrot.slane %v6751, 5
    %v6934 = vrot.slane %v6933, 4
    %v6935 = vrot.slane %v6752, 5
    %v6936 = vsel %vm861, %v6934, %v6935
    %v6937 = vrot.slane %v6753, 5
    %v6938 = vrot.slane %v6937, 4
    %v6939 = vrot.slane %v6754, 5
    %v6940 = vsel %vm861, %v6938, %v6939
    %v6941 = vrot.slane %v6755, 5
    %v6942 = vrot.slane %v6941, 4
    %v6943 = vrot.slane %v6756, 5
    %v6944 = vsel %vm861, %v6942, %v6943
    %v6945 = vrot.slane %v6757, 5
    %v6946 = vrot.slane %v6945, 4
    %v6947 = vrot.slane %v6758, 5
    %v6948 = vsel %vm861, %v6946, %v6947
    %v6949 = vrot.slane %v6759, 5
    %v6950 = vrot.slane %v6949, 4
    %v6951 = vrot.slane %v6760, 5
    %v6952 = vsel %vm861, %v6950, %v6951
    %6953 = vrot.lane.b32.xlu0 %v6828, 16
    %v6954 = vpop.permute.xlu0 %6953
    %6955 = vrot.lane.b32.xlu0 %v6832, 16
    %v6956 = vpop.permute.xlu0 %6955
    %6957 = vrot.lane.b32.xlu0 %v6836, 16
    %v6958 = vpop.permute.xlu0 %6957
    %6959 = vrot.lane.b32.xlu0 %v6840, 16
    %v6960 = vpop.permute.xlu0 %6959
    %6961 = vrot.lane.b32.xlu0 %v6844, 16
    %v6962 = vpop.permute.xlu0 %6961
    %6963 = vrot.lane.b32.xlu0 %v6848, 16
    %v6964 = vpop.permute.xlu0 %6963
    %6965 = vrot.lane.b32.xlu0 %v6852, 16
    %v6966 = vpop.permute.xlu0 %6965
    %6967 = vrot.lane.b32.xlu0 %v6856, 16
    %v6968 = vpop.permute.xlu0 %6967
    %6969 = vrot.lane.b32.xlu0 %v6860, 16
    %v6970 = vpop.permute.xlu0 %6969
    %6971 = vrot.lane.b32.xlu0 %v6864, 16
    %v6972 = vpop.permute.xlu0 %6971
    %6973 = vrot.lane.b32.xlu0 %v6868, 16
    %v6974 = vpop.permute.xlu0 %6973
    %6975 = vrot.lane.b32.xlu0 %v6872, 16
    %v6976 = vpop.permute.xlu0 %6975
    %6977 = vrot.lane.b32.xlu0 %v6876, 16
    %v6978 = vpop.permute.xlu0 %6977
    %6979 = vrot.lane.b32.xlu0 %v6880, 16
    %v6980 = vpop.permute.xlu0 %6979
    %6981 = vrot.lane.b32.xlu0 %v6884, 16
    %v6982 = vpop.permute.xlu0 %6981
    %6983 = vrot.lane.b32.xlu0 %v6888, 16
    %v6984 = vpop.permute.xlu0 %6983
    %6985 = vrot.lane.b32.xlu0 %v6892, 16
    %v6986 = vpop.permute.xlu0 %6985
    %6987 = vrot.lane.b32.xlu0 %v6896, 16
    %v6988 = vpop.permute.xlu0 %6987
    %6989 = vrot.lane.b32.xlu0 %v6900, 16
    %v6990 = vpop.permute.xlu0 %6989
    %6991 = vrot.lane.b32.xlu0 %v6904, 16
    %v6992 = vpop.permute.xlu0 %6991
    %6993 = vrot.lane.b32.xlu0 %v6908, 16
    %v6994 = vpop.permute.xlu0 %6993
    %6995 = vrot.lane.b32.xlu0 %v6912, 16
    %v6996 = vpop.permute.xlu0 %6995
    %6997 = vrot.lane.b32.xlu0 %v6916, 16
    %v6998 = vpop.permute.xlu0 %6997
    %6999 = vrot.lane.b32.xlu0 %v6920, 16
    %v7000 = vpop.permute.xlu0 %6999
    %7001 = vrot.lane.b32.xlu0 %v6924, 16
    %v7002 = vpop.permute.xlu0 %7001
    %7003 = vrot.lane.b32.xlu0 %v6928, 16
    %v7004 = vpop.permute.xlu0 %7003
    %7005 = vrot.lane.b32.xlu0 %v6932, 16
    %v7006 = vpop.permute.xlu0 %7005
    %7007 = vrot.lane.b32.xlu0 %v6936, 16
    %v7008 = vpop.permute.xlu0 %7007
    %7009 = vrot.lane.b32.xlu0 %v6940, 16
    %v7010 = vpop.permute.xlu0 %7009
    %7011 = vrot.lane.b32.xlu0 %v6944, 16
    %v7012 = vpop.permute.xlu0 %7011
    %7013 = vrot.lane.b32.xlu0 %v6948, 16
    %v7014 = vpop.permute.xlu0 %7013
    %7015 = vrot.lane.b32.xlu0 %v6952, 16
    %v7016 = vpop.permute.xlu0 %7015
    %7049 = vst.msk [vmem:[#allocation2 + $0x8] sm:$0xf] %vm698, %v6954
    %7050 = vst.msk [vmem:[#allocation2 + $0x18] sm:$0xf] %vm698, %v6956
    %7051 = vst.msk [vmem:[#allocation2 + $0x28] sm:$0xf] %vm698, %v6958
    %7052 = vst.msk [vmem:[#allocation2 + $0x38] sm:$0xf] %vm698, %v6960
    %7053 = vst.msk [vmem:[#allocation2 + $0x48] sm:$0xf] %vm698, %v6962
    %7054 = vst.msk [vmem:[#allocation2 + $0x58] sm:$0xf] %vm698, %v6964
    %7055 = vst.msk [vmem:[#allocation2 + $0x68] sm:$0xf] %vm698, %v6966
    %7056 = vst.msk [vmem:[#allocation2 + $0x78] sm:$0xf] %vm698, %v6968
    %7057 = vst.msk [vmem:[#allocation2 + $0x88] sm:$0xf] %vm698, %v6970
    %7058 = vst.msk [vmem:[#allocation2 + $0x98] sm:$0xf] %vm698, %v6972
    %7059 = vst.msk [vmem:[#allocation2 + $0xa8] sm:$0xf] %vm698, %v6974
    %7060 = vst.msk [vmem:[#allocation2 + $0xb8] sm:$0xf] %vm698, %v6976
    %7061 = vst.msk [vmem:[#allocation2 + $0xc8] sm:$0xf] %vm698, %v6978
    %7062 = vst.msk [vmem:[#allocation2 + $0xd8] sm:$0xf] %vm698, %v6980
    %7063 = vst.msk [vmem:[#allocation2 + $0xe8] sm:$0xf] %vm698, %v6982
    %7064 = vst.msk [vmem:[#allocation2 + $0xf8] sm:$0xf] %vm698, %v6984
    %7065 = vst.msk [vmem:[#allocation2 + $0x108] sm:$0xf] %vm698, %v6986
    %7066 = vst.msk [vmem:[#allocation2 + $0x118] sm:$0xf] %vm698, %v6988
    %7067 = vst.msk [vmem:[#allocation2 + $0x128] sm:$0xf] %vm698, %v6990
    %7068 = vst.msk [vmem:[#allocation2 + $0x138] sm:$0xf] %vm698, %v6992
    %7069 = vst.msk [vmem:[#allocation2 + $0x148] sm:$0xf] %vm698, %v6994
    %7070 = vst.msk [vmem:[#allocation2 + $0x158] sm:$0xf] %vm698, %v6996
    %7071 = vst.msk [vmem:[#allocation2 + $0x168] sm:$0xf] %vm698, %v6998
    %7072 = vst.msk [vmem:[#allocation2 + $0x178] sm:$0xf] %vm698, %v7000
    %7073 = vst.msk [vmem:[#allocation2 + $0x188] sm:$0xf] %vm698, %v7002
    %7074 = vst.msk [vmem:[#allocation2 + $0x198] sm:$0xf] %vm698, %v7004
    %7075 = vst.msk [vmem:[#allocation2 + $0x1a8] sm:$0xf] %vm698, %v7006
    %7076 = vst.msk [vmem:[#allocation2 + $0x1b8] sm:$0xf] %vm698, %v7008
    %7077 = vst.msk [vmem:[#allocation2 + $0x1c8] sm:$0xf] %vm698, %v7010
    %7078 = vst.msk [vmem:[#allocation2 + $0x1d8] sm:$0xf] %vm698, %v7012
    %7079 = vst.msk [vmem:[#allocation2 + $0x1e8] sm:$0xf] %vm698, %v7014
    %7080 = vst.msk [vmem:[#allocation2 + $0x1f8] sm:$0xf] %vm698, %v7016
    %s7081 = scalar_lea.vmem %s0, 160
    %v7082 = vld [vmem:[%s7081] sm:$0xf]
    %v7083 = vld [vmem:[%s7081 + $0x8] sm:$0xf]
    %v7084 = vld [vmem:[%s7081 + $0x10] sm:$0xf]
    %v7085 = vld [vmem:[%s7081 + $0x18] sm:$0xf]
    %v7086 = vld [vmem:[%s7081 + $0x20] sm:$0xf]
    %v7087 = vld [vmem:[%s7081 + $0x28] sm:$0xf]
    %v7088 = vld [vmem:[%s7081 + $0x30] sm:$0xf]
    %v7089 = vld [vmem:[%s7081 + $0x38] sm:$0xf]
    %v7090 = vld [vmem:[%s7081 + $0x50] sm:$0xf]
    %v7091 = vld [vmem:[%s7081 + $0x58] sm:$0xf]
    %v7092 = vld [vmem:[%s7081 + $0x60] sm:$0xf]
    %v7093 = vld [vmem:[%s7081 + $0x68] sm:$0xf]
    %v7094 = vld [vmem:[%s7081 + $0x70] sm:$0xf]
    %v7095 = vld [vmem:[%s7081 + $0x78] sm:$0xf]
    %v7096 = vld [vmem:[%s7081 + $0x80] sm:$0xf]
    %v7097 = vld [vmem:[%s7081 + $0x88] sm:$0xf]
    %v7098 = vld [vmem:[%s7081 + $0xa0] sm:$0xf]
    %v7099 = vld [vmem:[%s7081 + $0xa8] sm:$0xf]
    %v7100 = vld [vmem:[%s7081 + $0xb0] sm:$0xf]
    %v7101 = vld [vmem:[%s7081 + $0xb8] sm:$0xf]
    %v7102 = vld [vmem:[%s7081 + $0xc0] sm:$0xf]
    %v7103 = vld [vmem:[%s7081 + $0xc8] sm:$0xf]
    %v7104 = vld [vmem:[%s7081 + $0xd0] sm:$0xf]
    %v7105 = vld [vmem:[%s7081 + $0xd8] sm:$0xf]
    %v7106 = vld [vmem:[%s7081 + $0xf0] sm:$0xf]
    %v7107 = vld [vmem:[%s7081 + $0xf8] sm:$0xf]
    %v7108 = vld [vmem:[%s7081 + $0x100] sm:$0xf]
    %v7109 = vld [vmem:[%s7081 + $0x108] sm:$0xf]
    %v7110 = vld [vmem:[%s7081 + $0x110] sm:$0xf]
    %v7111 = vld [vmem:[%s7081 + $0x118] sm:$0xf]
    %v7112 = vld [vmem:[%s7081 + $0x120] sm:$0xf]
    %v7113 = vld [vmem:[%s7081 + $0x128] sm:$0xf]
    %7146 = vrot.lane.b32.xlu0 %v7082, 32
    %v7147 = vpop.permute.xlu0 %7146
    %7148 = vrot.lane.b32.xlu0 %v7083, 32
    %v7149 = vpop.permute.xlu0 %7148
    %7150 = vrot.lane.b32.xlu0 %v7084, 32
    %v7151 = vpop.permute.xlu0 %7150
    %7152 = vrot.lane.b32.xlu0 %v7085, 32
    %v7153 = vpop.permute.xlu0 %7152
    %7154 = vrot.lane.b32.xlu0 %v7086, 32
    %v7155 = vpop.permute.xlu0 %7154
    %7156 = vrot.lane.b32.xlu0 %v7087, 32
    %v7157 = vpop.permute.xlu0 %7156
    %7158 = vrot.lane.b32.xlu0 %v7088, 32
    %v7159 = vpop.permute.xlu0 %7158
    %7160 = vrot.lane.b32.xlu0 %v7089, 32
    %v7161 = vpop.permute.xlu0 %7160
    %7162 = vrot.lane.b32.xlu0 %v7090, 32
    %v7163 = vpop.permute.xlu0 %7162
    %7164 = vrot.lane.b32.xlu0 %v7091, 32
    %v7165 = vpop.permute.xlu0 %7164
    %7166 = vrot.lane.b32.xlu0 %v7092, 32
    %v7167 = vpop.permute.xlu0 %7166
    %7168 = vrot.lane.b32.xlu0 %v7093, 32
    %v7169 = vpop.permute.xlu0 %7168
    %7170 = vrot.lane.b32.xlu0 %v7094, 32
    %v7171 = vpop.permute.xlu0 %7170
    %7172 = vrot.lane.b32.xlu0 %v7095, 32
    %v7173 = vpop.permute.xlu0 %7172
    %7174 = vrot.lane.b32.xlu0 %v7096, 32
    %v7175 = vpop.permute.xlu0 %7174
    %7176 = vrot.lane.b32.xlu0 %v7097, 32
    %v7177 = vpop.permute.xlu0 %7176
    %7178 = vrot.lane.b32.xlu0 %v7098, 32
    %v7179 = vpop.permute.xlu0 %7178
    %7180 = vrot.lane.b32.xlu0 %v7099, 32
    %v7181 = vpop.permute.xlu0 %7180
    %7182 = vrot.lane.b32.xlu0 %v7100, 32
    %v7183 = vpop.permute.xlu0 %7182
    %7184 = vrot.lane.b32.xlu0 %v7101, 32
    %v7185 = vpop.permute.xlu0 %7184
    %7186 = vrot.lane.b32.xlu0 %v7102, 32
    %v7187 = vpop.permute.xlu0 %7186
    %7188 = vrot.lane.b32.xlu0 %v7103, 32
    %v7189 = vpop.permute.xlu0 %7188
    %7190 = vrot.lane.b32.xlu0 %v7104, 32
    %v7191 = vpop.permute.xlu0 %7190
    %7192 = vrot.lane.b32.xlu0 %v7105, 32
    %v7193 = vpop.permute.xlu0 %7192
    %7194 = vrot.lane.b32.xlu0 %v7106, 32
    %v7195 = vpop.permute.xlu0 %7194
    %7196 = vrot.lane.b32.xlu0 %v7107, 32
    %v7197 = vpop.permute.xlu0 %7196
    %7198 = vrot.lane.b32.xlu0 %v7108, 32
    %v7199 = vpop.permute.xlu0 %7198
    %7200 = vrot.lane.b32.xlu0 %v7109, 32
    %v7201 = vpop.permute.xlu0 %7200
    %7202 = vrot.lane.b32.xlu0 %v7110, 32
    %v7203 = vpop.permute.xlu0 %7202
    %7204 = vrot.lane.b32.xlu0 %v7111, 32
    %v7205 = vpop.permute.xlu0 %7204
    %7206 = vrot.lane.b32.xlu0 %v7112, 32
    %v7207 = vpop.permute.xlu0 %7206
    %7208 = vrot.lane.b32.xlu0 %v7113, 32
    %v7209 = vpop.permute.xlu0 %7208
    %7242 = vst.msk [vmem:[#allocation2 + $0x8] sm:$0xf] %vm1086, %v7147
    %7243 = vst.msk [vmem:[#allocation2 + $0x18] sm:$0xf] %vm1086, %v7149
    %7244 = vst.msk [vmem:[#allocation2 + $0x28] sm:$0xf] %vm1086, %v7151
    %7245 = vst.msk [vmem:[#allocation2 + $0x38] sm:$0xf] %vm1086, %v7153
    %7246 = vst.msk [vmem:[#allocation2 + $0x48] sm:$0xf] %vm1086, %v7155
    %7247 = vst.msk [vmem:[#allocation2 + $0x58] sm:$0xf] %vm1086, %v7157
    %7248 = vst.msk [vmem:[#allocation2 + $0x68] sm:$0xf] %vm1086, %v7159
    %7249 = vst.msk [vmem:[#allocation2 + $0x78] sm:$0xf] %vm1086, %v7161
    %7250 = vst.msk [vmem:[#allocation2 + $0x88] sm:$0xf] %vm1086, %v7163
    %7251 = vst.msk [vmem:[#allocation2 + $0x98] sm:$0xf] %vm1086, %v7165
    %7252 = vst.msk [vmem:[#allocation2 + $0xa8] sm:$0xf] %vm1086, %v7167
    %7253 = vst.msk [vmem:[#allocation2 + $0xb8] sm:$0xf] %vm1086, %v7169
    %7254 = vst.msk [vmem:[#allocation2 + $0xc8] sm:$0xf] %vm1086, %v7171
    %7255 = vst.msk [vmem:[#allocation2 + $0xd8] sm:$0xf] %vm1086, %v7173
    %7256 = vst.msk [vmem:[#allocation2 + $0xe8] sm:$0xf] %vm1086, %v7175
    %7257 = vst.msk [vmem:[#allocation2 + $0xf8] sm:$0xf] %vm1086, %v7177
    %7258 = vst.msk [vmem:[#allocation2 + $0x108] sm:$0xf] %vm1086, %v7179
    %7259 = vst.msk [vmem:[#allocation2 + $0x118] sm:$0xf] %vm1086, %v7181
    %7260 = vst.msk [vmem:[#allocation2 + $0x128] sm:$0xf] %vm1086, %v7183
    %7261 = vst.msk [vmem:[#allocation2 + $0x138] sm:$0xf] %vm1086, %v7185
    %7262 = vst.msk [vmem:[#allocation2 + $0x148] sm:$0xf] %vm1086, %v7187
    %7263 = vst.msk [vmem:[#allocation2 + $0x158] sm:$0xf] %vm1086, %v7189
    %7264 = vst.msk [vmem:[#allocation2 + $0x168] sm:$0xf] %vm1086, %v7191
    %7265 = vst.msk [vmem:[#allocation2 + $0x178] sm:$0xf] %vm1086, %v7193
    %7266 = vst.msk [vmem:[#allocation2 + $0x188] sm:$0xf] %vm1086, %v7195
    %7267 = vst.msk [vmem:[#allocation2 + $0x198] sm:$0xf] %vm1086, %v7197
    %7268 = vst.msk [vmem:[#allocation2 + $0x1a8] sm:$0xf] %vm1086, %v7199
    %7269 = vst.msk [vmem:[#allocation2 + $0x1b8] sm:$0xf] %vm1086, %v7201
    %7270 = vst.msk [vmem:[#allocation2 + $0x1c8] sm:$0xf] %vm1086, %v7203
    %7271 = vst.msk [vmem:[#allocation2 + $0x1d8] sm:$0xf] %vm1086, %v7205
    %7272 = vst.msk [vmem:[#allocation2 + $0x1e8] sm:$0xf] %vm1086, %v7207
    %7273 = vst.msk [vmem:[#allocation2 + $0x1f8] sm:$0xf] %vm1086, %v7209
    %v7274 = vld [vmem:[%s7081] sm:$0xf]
    %v7275 = vld [vmem:[%s7081 + $0x4] sm:$0x1]
    %v7276 = vld [vmem:[%s7081 + $0x8] sm:$0xf]
    %v7277 = vld [vmem:[%s7081 + $0xc] sm:$0x1]
    %v7278 = vld [vmem:[%s7081 + $0x10] sm:$0xf]
    %v7279 = vld [vmem:[%s7081 + $0x14] sm:$0x1]
    %v7280 = vld [vmem:[%s7081 + $0x18] sm:$0xf]
    %v7281 = vld [vmem:[%s7081 + $0x1c] sm:$0x1]
    %v7282 = vld [vmem:[%s7081 + $0x20] sm:$0xf]
    %v7283 = vld [vmem:[%s7081 + $0x24] sm:$0x1]
    %v7284 = vld [vmem:[%s7081 + $0x28] sm:$0xf]
    %v7285 = vld [vmem:[%s7081 + $0x2c] sm:$0x1]
    %v7286 = vld [vmem:[%s7081 + $0x30] sm:$0xf]
    %v7287 = vld [vmem:[%s7081 + $0x34] sm:$0x1]
    %v7288 = vld [vmem:[%s7081 + $0x38] sm:$0xf]
    %v7289 = vld [vmem:[%s7081 + $0x3c] sm:$0x1]
    %v7290 = vld [vmem:[%s7081 + $0x50] sm:$0xf]
    %v7291 = vld [vmem:[%s7081 + $0x54] sm:$0x1]
    %v7292 = vld [vmem:[%s7081 + $0x58] sm:$0xf]
    %v7293 = vld [vmem:[%s7081 + $0x5c] sm:$0x1]
    %v7294 = vld [vmem:[%s7081 + $0x60] sm:$0xf]
    %v7295 = vld [vmem:[%s7081 + $0x64] sm:$0x1]
    %v7296 = vld [vmem:[%s7081 + $0x68] sm:$0xf]
    %v7297 = vld [vmem:[%s7081 + $0x6c] sm:$0x1]
    %v7298 = vld [vmem:[%s7081 + $0x70] sm:$0xf]
    %v7299 = vld [vmem:[%s7081 + $0x74] sm:$0x1]
    %v7300 = vld [vmem:[%s7081 + $0x78] sm:$0xf]
    %v7301 = vld [vmem:[%s7081 + $0x7c] sm:$0x1]
    %v7302 = vld [vmem:[%s7081 + $0x80] sm:$0xf]
    %v7303 = vld [vmem:[%s7081 + $0x84] sm:$0x1]
    %v7304 = vld [vmem:[%s7081 + $0x88] sm:$0xf]
    %v7305 = vld [vmem:[%s7081 + $0x8c] sm:$0x1]
    %v7306 = vld [vmem:[%s7081 + $0xa0] sm:$0xf]
    %v7307 = vld [vmem:[%s7081 + $0xa4] sm:$0x1]
    %v7308 = vld [vmem:[%s7081 + $0xa8] sm:$0xf]
    %v7309 = vld [vmem:[%s7081 + $0xac] sm:$0x1]
    %v7310 = vld [vmem:[%s7081 + $0xb0] sm:$0xf]
    %v7311 = vld [vmem:[%s7081 + $0xb4] sm:$0x1]
    %v7312 = vld [vmem:[%s7081 + $0xb8] sm:$0xf]
    %v7313 = vld [vmem:[%s7081 + $0xbc] sm:$0x1]
    %v7314 = vld [vmem:[%s7081 + $0xc0] sm:$0xf]
    %v7315 = vld [vmem:[%s7081 + $0xc4] sm:$0x1]
    %v7316 = vld [vmem:[%s7081 + $0xc8] sm:$0xf]
    %v7317 = vld [vmem:[%s7081 + $0xcc] sm:$0x1]
    %v7318 = vld [vmem:[%s7081 + $0xd0] sm:$0xf]
    %v7319 = vld [vmem:[%s7081 + $0xd4] sm:$0x1]
    %v7320 = vld [vmem:[%s7081 + $0xd8] sm:$0xf]
    %v7321 = vld [vmem:[%s7081 + $0xdc] sm:$0x1]
    %v7322 = vld [vmem:[%s7081 + $0xf0] sm:$0xf]
    %v7323 = vld [vmem:[%s7081 + $0xf4] sm:$0x1]
    %v7324 = vld [vmem:[%s7081 + $0xf8] sm:$0xf]
    %v7325 = vld [vmem:[%s7081 + $0xfc] sm:$0x1]
    %v7326 = vld [vmem:[%s7081 + $0x100] sm:$0xf]
    %v7327 = vld [vmem:[%s7081 + $0x104] sm:$0x1]
    %v7328 = vld [vmem:[%s7081 + $0x108] sm:$0xf]
    %v7329 = vld [vmem:[%s7081 + $0x10c] sm:$0x1]
    %v7330 = vld [vmem:[%s7081 + $0x110] sm:$0xf]
    %v7331 = vld [vmem:[%s7081 + $0x114] sm:$0x1]
    %v7332 = vld [vmem:[%s7081 + $0x118] sm:$0xf]
    %v7333 = vld [vmem:[%s7081 + $0x11c] sm:$0x1]
    %v7334 = vld [vmem:[%s7081 + $0x120] sm:$0xf]
    %v7335 = vld [vmem:[%s7081 + $0x124] sm:$0x1]
    %v7336 = vld [vmem:[%s7081 + $0x128] sm:$0xf]
    %v7337 = vld [vmem:[%s7081 + $0x12c] sm:$0x1]
    %v7339 = vshrl.u32 %v7274, 16
    %v7341 = vrot.slane %v7339, 4
    %v7342 = vshll.u32 %v7274, 16
    %v7344 = vrot.slane %v7342, 5
    %v7345 = vor.u32 %v7341, %v7344
    %v7346 = vrot.slane %v7345, 4
    %v7348 = vshll.u32 %v7275, 16
    %v7350 = vrot.slane %v7348, 5
    %v7351 = vsel %vm153, %v7346, %v7350
    %v7353 = vshrl.u32 %v7276, 16
    %v7355 = vrot.slane %v7353, 4
    %v7356 = vshll.u32 %v7276, 16
    %v7358 = vrot.slane %v7356, 5
    %v7359 = vor.u32 %v7355, %v7358
    %v7360 = vrot.slane %v7359, 4
    %v7362 = vshll.u32 %v7277, 16
    %v7364 = vrot.slane %v7362, 5
    %v7365 = vsel %vm153, %v7360, %v7364
    %v7367 = vshrl.u32 %v7278, 16
    %v7369 = vrot.slane %v7367, 4
    %v7370 = vshll.u32 %v7278, 16
    %v7372 = vrot.slane %v7370, 5
    %v7373 = vor.u32 %v7369, %v7372
    %v7374 = vrot.slane %v7373, 4
    %v7376 = vshll.u32 %v7279, 16
    %v7378 = vrot.slane %v7376, 5
    %v7379 = vsel %vm153, %v7374, %v7378
    %v7381 = vshrl.u32 %v7280, 16
    %v7383 = vrot.slane %v7381, 4
    %v7384 = vshll.u32 %v7280, 16
    %v7386 = vrot.slane %v7384, 5
    %v7387 = vor.u32 %v7383, %v7386
    %v7388 = vrot.slane %v7387, 4
    %v7390 = vshll.u32 %v7281, 16
    %v7392 = vrot.slane %v7390, 5
    %v7393 = vsel %vm153, %v7388, %v7392
    %v7395 = vshrl.u32 %v7282, 16
    %v7397 = vrot.slane %v7395, 4
    %v7398 = vshll.u32 %v7282, 16
    %v7400 = vrot.slane %v7398, 5
    %v7401 = vor.u32 %v7397, %v7400
    %v7402 = vrot.slane %v7401, 4
    %v7404 = vshll.u32 %v7283, 16
    %v7406 = vrot.slane %v7404, 5
    %v7407 = vsel %vm153, %v7402, %v7406
    %v7409 = vshrl.u32 %v7284, 16
    %v7411 = vrot.slane %v7409, 4
    %v7412 = vshll.u32 %v7284, 16
    %v7414 = vrot.slane %v7412, 5
    %v7415 = vor.u32 %v7411, %v7414
    %v7416 = vrot.slane %v7415, 4
    %v7418 = vshll.u32 %v7285, 16
    %v7420 = vrot.slane %v7418, 5
    %v7421 = vsel %vm153, %v7416, %v7420
    %v7423 = vshrl.u32 %v7286, 16
    %v7425 = vrot.slane %v7423, 4
    %v7426 = vshll.u32 %v7286, 16
    %v7428 = vrot.slane %v7426, 5
    %v7429 = vor.u32 %v7425, %v7428
    %v7430 = vrot.slane %v7429, 4
    %v7432 = vshll.u32 %v7287, 16
    %v7434 = vrot.slane %v7432, 5
    %v7435 = vsel %vm153, %v7430, %v7434
    %v7437 = vshrl.u32 %v7288, 16
    %v7439 = vrot.slane %v7437, 4
    %v7440 = vshll.u32 %v7288, 16
    %v7442 = vrot.slane %v7440, 5
    %v7443 = vor.u32 %v7439, %v7442
    %v7444 = vrot.slane %v7443, 4
    %v7446 = vshll.u32 %v7289, 16
    %v7448 = vrot.slane %v7446, 5
    %v7449 = vsel %vm153, %v7444, %v7448
    %v7451 = vshrl.u32 %v7290, 16
    %v7453 = vrot.slane %v7451, 4
    %v7454 = vshll.u32 %v7290, 16
    %v7456 = vrot.slane %v7454, 5
    %v7457 = vor.u32 %v7453, %v7456
    %v7458 = vrot.slane %v7457, 4
    %v7460 = vshll.u32 %v7291, 16
    %v7462 = vrot.slane %v7460, 5
    %v7463 = vsel %vm153, %v7458, %v7462
    %v7465 = vshrl.u32 %v7292, 16
    %v7467 = vrot.slane %v7465, 4
    %v7468 = vshll.u32 %v7292, 16
    %v7470 = vrot.slane %v7468, 5
    %v7471 = vor.u32 %v7467, %v7470
    %v7472 = vrot.slane %v7471, 4
    %v7474 = vshll.u32 %v7293, 16
    %v7476 = vrot.slane %v7474, 5
    %v7477 = vsel %vm153, %v7472, %v7476
    %v7479 = vshrl.u32 %v7294, 16
    %v7481 = vrot.slane %v7479, 4
    %v7482 = vshll.u32 %v7294, 16
    %v7484 = vrot.slane %v7482, 5
    %v7485 = vor.u32 %v7481, %v7484
    %v7486 = vrot.slane %v7485, 4
    %v7488 = vshll.u32 %v7295, 16
    %v7490 = vrot.slane %v7488, 5
    %v7491 = vsel %vm153, %v7486, %v7490
    %v7493 = vshrl.u32 %v7296, 16
    %v7495 = vrot.slane %v7493, 4
    %v7496 = vshll.u32 %v7296, 16
    %v7498 = vrot.slane %v7496, 5
    %v7499 = vor.u32 %v7495, %v7498
    %v7500 = vrot.slane %v7499, 4
    %v7502 = vshll.u32 %v7297, 16
    %v7504 = vrot.slane %v7502, 5
    %v7505 = vsel %vm153, %v7500, %v7504
    %v7507 = vshrl.u32 %v7298, 16
    %v7509 = vrot.slane %v7507, 4
    %v7510 = vshll.u32 %v7298, 16
    %v7512 = vrot.slane %v7510, 5
    %v7513 = vor.u32 %v7509, %v7512
    %v7514 = vrot.slane %v7513, 4
    %v7516 = vshll.u32 %v7299, 16
    %v7518 = vrot.slane %v7516, 5
    %v7519 = vsel %vm153, %v7514, %v7518
    %v7521 = vshrl.u32 %v7300, 16
    %v7523 = vrot.slane %v7521, 4
    %v7524 = vshll.u32 %v7300, 16
    %v7526 = vrot.slane %v7524, 5
    %v7527 = vor.u32 %v7523, %v7526
    %v7528 = vrot.slane %v7527, 4
    %v7530 = vshll.u32 %v7301, 16
    %v7532 = vrot.slane %v7530, 5
    %v7533 = vsel %vm153, %v7528, %v7532
    %v7535 = vshrl.u32 %v7302, 16
    %v7537 = vrot.slane %v7535, 4
    %v7538 = vshll.u32 %v7302, 16
    %v7540 = vrot.slane %v7538, 5
    %v7541 = vor.u32 %v7537, %v7540
    %v7542 = vrot.slane %v7541, 4
    %v7544 = vshll.u32 %v7303, 16
    %v7546 = vrot.slane %v7544, 5
    %v7547 = vsel %vm153, %v7542, %v7546
    %v7549 = vshrl.u32 %v7304, 16
    %v7551 = vrot.slane %v7549, 4
    %v7552 = vshll.u32 %v7304, 16
    %v7554 = vrot.slane %v7552, 5
    %v7555 = vor.u32 %v7551, %v7554
    %v7556 = vrot.slane %v7555, 4
    %v7558 = vshll.u32 %v7305, 16
    %v7560 = vrot.slane %v7558, 5
    %v7561 = vsel %vm153, %v7556, %v7560
    %v7563 = vshrl.u32 %v7306, 16
    %v7565 = vrot.slane %v7563, 4
    %v7566 = vshll.u32 %v7306, 16
    %v7568 = vrot.slane %v7566, 5
    %v7569 = vor.u32 %v7565, %v7568
    %v7570 = vrot.slane %v7569, 4
    %v7572 = vshll.u32 %v7307, 16
    %v7574 = vrot.slane %v7572, 5
    %v7575 = vsel %vm153, %v7570, %v7574
    %v7577 = vshrl.u32 %v7308, 16
    %v7579 = vrot.slane %v7577, 4
    %v7580 = vshll.u32 %v7308, 16
    %v7582 = vrot.slane %v7580, 5
    %v7583 = vor.u32 %v7579, %v7582
    %v7584 = vrot.slane %v7583, 4
    %v7586 = vshll.u32 %v7309, 16
    %v7588 = vrot.slane %v7586, 5
    %v7589 = vsel %vm153, %v7584, %v7588
    %v7591 = vshrl.u32 %v7310, 16
    %v7593 = vrot.slane %v7591, 4
    %v7594 = vshll.u32 %v7310, 16
    %v7596 = vrot.slane %v7594, 5
    %v7597 = vor.u32 %v7593, %v7596
    %v7598 = vrot.slane %v7597, 4
    %v7600 = vshll.u32 %v7311, 16
    %v7602 = vrot.slane %v7600, 5
    %v7603 = vsel %vm153, %v7598, %v7602
    %v7605 = vshrl.u32 %v7312, 16
    %v7607 = vrot.slane %v7605, 4
    %v7608 = vshll.u32 %v7312, 16
    %v7610 = vrot.slane %v7608, 5
    %v7611 = vor.u32 %v7607, %v7610
    %v7612 = vrot.slane %v7611, 4
    %v7614 = vshll.u32 %v7313, 16
    %v7616 = vrot.slane %v7614, 5
    %v7617 = vsel %vm153, %v7612, %v7616
    %v7619 = vshrl.u32 %v7314, 16
    %v7621 = vrot.slane %v7619, 4
    %v7622 = vshll.u32 %v7314, 16
    %v7624 = vrot.slane %v7622, 5
    %v7625 = vor.u32 %v7621, %v7624
    %v7626 = vrot.slane %v7625, 4
    %v7628 = vshll.u32 %v7315, 16
    %v7630 = vrot.slane %v7628, 5
    %v7631 = vsel %vm153, %v7626, %v7630
    %v7633 = vshrl.u32 %v7316, 16
    %v7635 = vrot.slane %v7633, 4
    %v7636 = vshll.u32 %v7316, 16
    %v7638 = vrot.slane %v7636, 5
    %v7639 = vor.u32 %v7635, %v7638
    %v7640 = vrot.slane %v7639, 4
    %v7642 = vshll.u32 %v7317, 16
    %v7644 = vrot.slane %v7642, 5
    %v7645 = vsel %vm153, %v7640, %v7644
    %v7647 = vshrl.u32 %v7318, 16
    %v7649 = vrot.slane %v7647, 4
    %v7650 = vshll.u32 %v7318, 16
    %v7652 = vrot.slane %v7650, 5
    %v7653 = vor.u32 %v7649, %v7652
    %v7654 = vrot.slane %v7653, 4
    %v7656 = vshll.u32 %v7319, 16
    %v7658 = vrot.slane %v7656, 5
    %v7659 = vsel %vm153, %v7654, %v7658
    %v7661 = vshrl.u32 %v7320, 16
    %v7663 = vrot.slane %v7661, 4
    %v7664 = vshll.u32 %v7320, 16
    %v7666 = vrot.slane %v7664, 5
    %v7667 = vor.u32 %v7663, %v7666
    %v7668 = vrot.slane %v7667, 4
    %v7670 = vshll.u32 %v7321, 16
    %v7672 = vrot.slane %v7670, 5
    %v7673 = vsel %vm153, %v7668, %v7672
    %v7675 = vshrl.u32 %v7322, 16
    %v7677 = vrot.slane %v7675, 4
    %v7678 = vshll.u32 %v7322, 16
    %v7680 = vrot.slane %v7678, 5
    %v7681 = vor.u32 %v7677, %v7680
    %v7682 = vrot.slane %v7681, 4
    %v7684 = vshll.u32 %v7323, 16
    %v7686 = vrot.slane %v7684, 5
    %v7687 = vsel %vm153, %v7682, %v7686
    %v7689 = vshrl.u32 %v7324, 16
    %v7691 = vrot.slane %v7689, 4
    %v7692 = vshll.u32 %v7324, 16
    %v7694 = vrot.slane %v7692, 5
    %v7695 = vor.u32 %v7691, %v7694
    %v7696 = vrot.slane %v7695, 4
    %v7698 = vshll.u32 %v7325, 16
    %v7700 = vrot.slane %v7698, 5
    %v7701 = vsel %vm153, %v7696, %v7700
    %v7703 = vshrl.u32 %v7326, 16
    %v7705 = vrot.slane %v7703, 4
    %v7706 = vshll.u32 %v7326, 16
    %v7708 = vrot.slane %v7706, 5
    %v7709 = vor.u32 %v7705, %v7708
    %v7710 = vrot.slane %v7709, 4
    %v7712 = vshll.u32 %v7327, 16
    %v7714 = vrot.slane %v7712, 5
    %v7715 = vsel %vm153, %v7710, %v7714
    %v7717 = vshrl.u32 %v7328, 16
    %v7719 = vrot.slane %v7717, 4
    %v7720 = vshll.u32 %v7328, 16
    %v7722 = vrot.slane %v7720, 5
    %v7723 = vor.u32 %v7719, %v7722
    %v7724 = vrot.slane %v7723, 4
    %v7726 = vshll.u32 %v7329, 16
    %v7728 = vrot.slane %v7726, 5
    %v7729 = vsel %vm153, %v7724, %v7728
    %v7731 = vshrl.u32 %v7330, 16
    %v7733 = vrot.slane %v7731, 4
    %v7734 = vshll.u32 %v7330, 16
    %v7736 = vrot.slane %v7734, 5
    %v7737 = vor.u32 %v7733, %v7736
    %v7738 = vrot.slane %v7737, 4
    %v7740 = vshll.u32 %v7331, 16
    %v7742 = vrot.slane %v7740, 5
    %v7743 = vsel %vm153, %v7738, %v7742
    %v7745 = vshrl.u32 %v7332, 16
    %v7747 = vrot.slane %v7745, 4
    %v7748 = vshll.u32 %v7332, 16
    %v7750 = vrot.slane %v7748, 5
    %v7751 = vor.u32 %v7747, %v7750
    %v7752 = vrot.slane %v7751, 4
    %v7754 = vshll.u32 %v7333, 16
    %v7756 = vrot.slane %v7754, 5
    %v7757 = vsel %vm153, %v7752, %v7756
    %v7759 = vshrl.u32 %v7334, 16
    %v7761 = vrot.slane %v7759, 4
    %v7762 = vshll.u32 %v7334, 16
    %v7764 = vrot.slane %v7762, 5
    %v7765 = vor.u32 %v7761, %v7764
    %v7766 = vrot.slane %v7765, 4
    %v7768 = vshll.u32 %v7335, 16
    %v7770 = vrot.slane %v7768, 5
    %v7771 = vsel %vm153, %v7766, %v7770
    %v7773 = vshrl.u32 %v7336, 16
    %v7775 = vrot.slane %v7773, 4
    %v7776 = vshll.u32 %v7336, 16
    %v7778 = vrot.slane %v7776, 5
    %v7779 = vor.u32 %v7775, %v7778
    %v7780 = vrot.slane %v7779, 4
    %v7782 = vshll.u32 %v7337, 16
    %v7784 = vrot.slane %v7782, 5
    %v7785 = vsel %vm153, %v7780, %v7784
    %7786 = vrot.lane.b32.xlu0 %v7351, 48
    %v7787 = vpop.permute.xlu0 %7786
    %7788 = vrot.lane.b32.xlu0 %v7365, 48
    %v7789 = vpop.permute.xlu0 %7788
    %7790 = vrot.lane.b32.xlu0 %v7379, 48
    %v7791 = vpop.permute.xlu0 %7790
    %7792 = vrot.lane.b32.xlu0 %v7393, 48
    %v7793 = vpop.permute.xlu0 %7792
    %7794 = vrot.lane.b32.xlu0 %v7407, 48
    %v7795 = vpop.permute.xlu0 %7794
    %7796 = vrot.lane.b32.xlu0 %v7421, 48
    %v7797 = vpop.permute.xlu0 %7796
    %7798 = vrot.lane.b32.xlu0 %v7435, 48
    %v7799 = vpop.permute.xlu0 %7798
    %7800 = vrot.lane.b32.xlu0 %v7449, 48
    %v7801 = vpop.permute.xlu0 %7800
    %7802 = vrot.lane.b32.xlu0 %v7463, 48
    %v7803 = vpop.permute.xlu0 %7802
    %7804 = vrot.lane.b32.xlu0 %v7477, 48
    %v7805 = vpop.permute.xlu0 %7804
    %7806 = vrot.lane.b32.xlu0 %v7491, 48
    %v7807 = vpop.permute.xlu0 %7806
    %7808 = vrot.lane.b32.xlu0 %v7505, 48
    %v7809 = vpop.permute.xlu0 %7808
    %7810 = vrot.lane.b32.xlu0 %v7519, 48
    %v7811 = vpop.permute.xlu0 %7810
    %7812 = vrot.lane.b32.xlu0 %v7533, 48
    %v7813 = vpop.permute.xlu0 %7812
    %7814 = vrot.lane.b32.xlu0 %v7547, 48
    %v7815 = vpop.permute.xlu0 %7814
    %7816 = vrot.lane.b32.xlu0 %v7561, 48
    %v7817 = vpop.permute.xlu0 %7816
    %7818 = vrot.lane.b32.xlu0 %v7575, 48
    %v7819 = vpop.permute.xlu0 %7818
    %7820 = vrot.lane.b32.xlu0 %v7589, 48
    %v7821 = vpop.permute.xlu0 %7820
    %7822 = vrot.lane.b32.xlu0 %v7603, 48
    %v7823 = vpop.permute.xlu0 %7822
    %7824 = vrot.lane.b32.xlu0 %v7617, 48
    %v7825 = vpop.permute.xlu0 %7824
    %7826 = vrot.lane.b32.xlu0 %v7631, 48
    %v7827 = vpop.permute.xlu0 %7826
    %7828 = vrot.lane.b32.xlu0 %v7645, 48
    %v7829 = vpop.permute.xlu0 %7828
    %7830 = vrot.lane.b32.xlu0 %v7659, 48
    %v7831 = vpop.permute.xlu0 %7830
    %7832 = vrot.lane.b32.xlu0 %v7673, 48
    %v7833 = vpop.permute.xlu0 %7832
    %7834 = vrot.lane.b32.xlu0 %v7687, 48
    %v7835 = vpop.permute.xlu0 %7834
    %7836 = vrot.lane.b32.xlu0 %v7701, 48
    %v7837 = vpop.permute.xlu0 %7836
    %7838 = vrot.lane.b32.xlu0 %v7715, 48
    %v7839 = vpop.permute.xlu0 %7838
    %7840 = vrot.lane.b32.xlu0 %v7729, 48
    %v7841 = vpop.permute.xlu0 %7840
    %7842 = vrot.lane.b32.xlu0 %v7743, 48
    %v7843 = vpop.permute.xlu0 %7842
    %7844 = vrot.lane.b32.xlu0 %v7757, 48
    %v7845 = vpop.permute.xlu0 %7844
    %7846 = vrot.lane.b32.xlu0 %v7771, 48
    %v7847 = vpop.permute.xlu0 %7846
    %7848 = vrot.lane.b32.xlu0 %v7785, 48
    %v7849 = vpop.permute.xlu0 %7848
    %7882 = vst.msk [vmem:[#allocation2 + $0x8] sm:$0xf] %vm1280, %v7787
    %7883 = vst.msk [vmem:[#allocation2 + $0x18] sm:$0xf] %vm1280, %v7789
    %7884 = vst.msk [vmem:[#allocation2 + $0x28] sm:$0xf] %vm1280, %v7791
    %7885 = vst.msk [vmem:[#allocation2 + $0x38] sm:$0xf] %vm1280, %v7793
    %7886 = vst.msk [vmem:[#allocation2 + $0x48] sm:$0xf] %vm1280, %v7795
    %7887 = vst.msk [vmem:[#allocation2 + $0x58] sm:$0xf] %vm1280, %v7797
    %7888 = vst.msk [vmem:[#allocation2 + $0x68] sm:$0xf] %vm1280, %v7799
    %7889 = vst.msk [vmem:[#allocation2 + $0x78] sm:$0xf] %vm1280, %v7801
    %7890 = vst.msk [vmem:[#allocation2 + $0x88] sm:$0xf] %vm1280, %v7803
    %7891 = vst.msk [vmem:[#allocation2 + $0x98] sm:$0xf] %vm1280, %v7805
    %7892 = vst.msk [vmem:[#allocation2 + $0xa8] sm:$0xf] %vm1280, %v7807
    %7893 = vst.msk [vmem:[#allocation2 + $0xb8] sm:$0xf] %vm1280, %v7809
    %7894 = vst.msk [vmem:[#allocation2 + $0xc8] sm:$0xf] %vm1280, %v7811
    %7895 = vst.msk [vmem:[#allocation2 + $0xd8] sm:$0xf] %vm1280, %v7813
    %7896 = vst.msk [vmem:[#allocation2 + $0xe8] sm:$0xf] %vm1280, %v7815
    %7897 = vst.msk [vmem:[#allocation2 + $0xf8] sm:$0xf] %vm1280, %v7817
    %7898 = vst.msk [vmem:[#allocation2 + $0x108] sm:$0xf] %vm1280, %v7819
    %7899 = vst.msk [vmem:[#allocation2 + $0x118] sm:$0xf] %vm1280, %v7821
    %7900 = vst.msk [vmem:[#allocation2 + $0x128] sm:$0xf] %vm1280, %v7823
    %7901 = vst.msk [vmem:[#allocation2 + $0x138] sm:$0xf] %vm1280, %v7825
    %7902 = vst.msk [vmem:[#allocation2 + $0x148] sm:$0xf] %vm1280, %v7827
    %7903 = vst.msk [vmem:[#allocation2 + $0x158] sm:$0xf] %vm1280, %v7829
    %7904 = vst.msk [vmem:[#allocation2 + $0x168] sm:$0xf] %vm1280, %v7831
    %7905 = vst.msk [vmem:[#allocation2 + $0x178] sm:$0xf] %vm1280, %v7833
    %7906 = vst.msk [vmem:[#allocation2 + $0x188] sm:$0xf] %vm1280, %v7835
    %7907 = vst.msk [vmem:[#allocation2 + $0x198] sm:$0xf] %vm1280, %v7837
    %7908 = vst.msk [vmem:[#allocation2 + $0x1a8] sm:$0xf] %vm1280, %v7839
    %7909 = vst.msk [vmem:[#allocation2 + $0x1b8] sm:$0xf] %vm1280, %v7841
    %7910 = vst.msk [vmem:[#allocation2 + $0x1c8] sm:$0xf] %vm1280, %v7843
    %7911 = vst.msk [vmem:[#allocation2 + $0x1d8] sm:$0xf] %vm1280, %v7845
    %7912 = vst.msk [vmem:[#allocation2 + $0x1e8] sm:$0xf] %vm1280, %v7847
    %7913 = vst.msk [vmem:[#allocation2 + $0x1f8] sm:$0xf] %vm1280, %v7849
    %v7914 = vld [vmem:[%s7081] sm:$0xe]
    %v7915 = vld [vmem:[%s7081 + $0x4] sm:$0x1]
    %v7916 = vld [vmem:[%s7081 + $0x8] sm:$0xe]
    %v7917 = vld [vmem:[%s7081 + $0xc] sm:$0x1]
    %v7918 = vld [vmem:[%s7081 + $0x10] sm:$0xe]
    %v7919 = vld [vmem:[%s7081 + $0x14] sm:$0x1]
    %v7920 = vld [vmem:[%s7081 + $0x18] sm:$0xe]
    %v7921 = vld [vmem:[%s7081 + $0x1c] sm:$0x1]
    %v7922 = vld [vmem:[%s7081 + $0x20] sm:$0xe]
    %v7923 = vld [vmem:[%s7081 + $0x24] sm:$0x1]
    %v7924 = vld [vmem:[%s7081 + $0x28] sm:$0xe]
    %v7925 = vld [vmem:[%s7081 + $0x2c] sm:$0x1]
    %v7926 = vld [vmem:[%s7081 + $0x30] sm:$0xe]
    %v7927 = vld [vmem:[%s7081 + $0x34] sm:$0x1]
    %v7928 = vld [vmem:[%s7081 + $0x38] sm:$0xe]
    %v7929 = vld [vmem:[%s7081 + $0x3c] sm:$0x1]
    %v7930 = vld [vmem:[%s7081 + $0x50] sm:$0xe]
    %v7931 = vld [vmem:[%s7081 + $0x54] sm:$0x1]
    %v7932 = vld [vmem:[%s7081 + $0x58] sm:$0xe]
    %v7933 = vld [vmem:[%s7081 + $0x5c] sm:$0x1]
    %v7934 = vld [vmem:[%s7081 + $0x60] sm:$0xe]
    %v7935 = vld [vmem:[%s7081 + $0x64] sm:$0x1]
    %v7936 = vld [vmem:[%s7081 + $0x68] sm:$0xe]
    %v7937 = vld [vmem:[%s7081 + $0x6c] sm:$0x1]
    %v7938 = vld [vmem:[%s7081 + $0x70] sm:$0xe]
    %v7939 = vld [vmem:[%s7081 + $0x74] sm:$0x1]
    %v7940 = vld [vmem:[%s7081 + $0x78] sm:$0xe]
    %v7941 = vld [vmem:[%s7081 + $0x7c] sm:$0x1]
    %v7942 = vld [vmem:[%s7081 + $0x80] sm:$0xe]
    %v7943 = vld [vmem:[%s7081 + $0x84] sm:$0x1]
    %v7944 = vld [vmem:[%s7081 + $0x88] sm:$0xe]
    %v7945 = vld [vmem:[%s7081 + $0x8c] sm:$0x1]
    %v7946 = vld [vmem:[%s7081 + $0xa0] sm:$0xe]
    %v7947 = vld [vmem:[%s7081 + $0xa4] sm:$0x1]
    %v7948 = vld [vmem:[%s7081 + $0xa8] sm:$0xe]
    %v7949 = vld [vmem:[%s7081 + $0xac] sm:$0x1]
    %v7950 = vld [vmem:[%s7081 + $0xb0] sm:$0xe]
    %v7951 = vld [vmem:[%s7081 + $0xb4] sm:$0x1]
    %v7952 = vld [vmem:[%s7081 + $0xb8] sm:$0xe]
    %v7953 = vld [vmem:[%s7081 + $0xbc] sm:$0x1]
    %v7954 = vld [vmem:[%s7081 + $0xc0] sm:$0xe]
    %v7955 = vld [vmem:[%s7081 + $0xc4] sm:$0x1]
    %v7956 = vld [vmem:[%s7081 + $0xc8] sm:$0xe]
    %v7957 = vld [vmem:[%s7081 + $0xcc] sm:$0x1]
    %v7958 = vld [vmem:[%s7081 + $0xd0] sm:$0xe]
    %v7959 = vld [vmem:[%s7081 + $0xd4] sm:$0x1]
    %v7960 = vld [vmem:[%s7081 + $0xd8] sm:$0xe]
    %v7961 = vld [vmem:[%s7081 + $0xdc] sm:$0x1]
    %v7962 = vld [vmem:[%s7081 + $0xf0] sm:$0xe]
    %v7963 = vld [vmem:[%s7081 + $0xf4] sm:$0x1]
    %v7964 = vld [vmem:[%s7081 + $0xf8] sm:$0xe]
    %v7965 = vld [vmem:[%s7081 + $0xfc] sm:$0x1]
    %v7966 = vld [vmem:[%s7081 + $0x100] sm:$0xe]
    %v7967 = vld [vmem:[%s7081 + $0x104] sm:$0x1]
    %v7968 = vld [vmem:[%s7081 + $0x108] sm:$0xe]
    %v7969 = vld [vmem:[%s7081 + $0x10c] sm:$0x1]
    %v7970 = vld [vmem:[%s7081 + $0x110] sm:$0xe]
    %v7971 = vld [vmem:[%s7081 + $0x114] sm:$0x1]
    %v7972 = vld [vmem:[%s7081 + $0x118] sm:$0xe]
    %v7973 = vld [vmem:[%s7081 + $0x11c] sm:$0x1]
    %v7974 = vld [vmem:[%s7081 + $0x120] sm:$0xe]
    %v7975 = vld [vmem:[%s7081 + $0x124] sm:$0x1]
    %v7976 = vld [vmem:[%s7081 + $0x128] sm:$0xe]
    %v7977 = vld [vmem:[%s7081 + $0x12c] sm:$0x1]
    %v8042 = vrot.slane %v7914, 5
    %v8043 = vrot.slane %v8042, 4
    %v8044 = vrot.slane %v7915, 5
    %v8045 = vsel %vm861, %v8043, %v8044
    %v8046 = vrot.slane %v7916, 5
    %v8047 = vrot.slane %v8046, 4
    %v8048 = vrot.slane %v7917, 5
    %v8049 = vsel %vm861, %v8047, %v8048
    %v8050 = vrot.slane %v7918, 5
    %v8051 = vrot.slane %v8050, 4
    %v8052 = vrot.slane %v7919, 5
    %v8053 = vsel %vm861, %v8051, %v8052
    %v8054 = vrot.slane %v7920, 5
    %v8055 = vrot.slane %v8054, 4
    %v8056 = vrot.slane %v7921, 5
    %v8057 = vsel %vm861, %v8055, %v8056
    %v8058 = vrot.slane %v7922, 5
    %v8059 = vrot.slane %v8058, 4
    %v8060 = vrot.slane %v7923, 5
    %v8061 = vsel %vm861, %v8059, %v8060
    %v8062 = vrot.slane %v7924, 5
    %v8063 = vrot.slane %v8062, 4
    %v8064 = vrot.slane %v7925, 5
    %v8065 = vsel %vm861, %v8063, %v8064
    %v8066 = vrot.slane %v7926, 5
    %v8067 = vrot.slane %v8066, 4
    %v8068 = vrot.slane %v7927, 5
    %v8069 = vsel %vm861, %v8067, %v8068
    %v8070 = vrot.slane %v7928, 5
    %v8071 = vrot.slane %v8070, 4
    %v8072 = vrot.slane %v7929, 5
    %v8073 = vsel %vm861, %v8071, %v8072
    %v8074 = vrot.slane %v7930, 5
    %v8075 = vrot.slane %v8074, 4
    %v8076 = vrot.slane %v7931, 5
    %v8077 = vsel %vm861, %v8075, %v8076
    %v8078 = vrot.slane %v7932, 5
    %v8079 = vrot.slane %v8078, 4
    %v8080 = vrot.slane %v7933, 5
    %v8081 = vsel %vm861, %v8079, %v8080
    %v8082 = vrot.slane %v7934, 5
    %v8083 = vrot.slane %v8082, 4
    %v8084 = vrot.slane %v7935, 5
    %v8085 = vsel %vm861, %v8083, %v8084
    %v8086 = vrot.slane %v7936, 5
    %v8087 = vrot.slane %v8086, 4
    %v8088 = vrot.slane %v7937, 5
    %v8089 = vsel %vm861, %v8087, %v8088
    %v8090 = vrot.slane %v7938, 5
    %v8091 = vrot.slane %v8090, 4
    %v8092 = vrot.slane %v7939, 5
    %v8093 = vsel %vm861, %v8091, %v8092
    %v8094 = vrot.slane %v7940, 5
    %v8095 = vrot.slane %v8094, 4
    %v8096 = vrot.slane %v7941, 5
    %v8097 = vsel %vm861, %v8095, %v8096
    %v8098 = vrot.slane %v7942, 5
    %v8099 = vrot.slane %v8098, 4
    %v8100 = vrot.slane %v7943, 5
    %v8101 = vsel %vm861, %v8099, %v8100
    %v8102 = vrot.slane %v7944, 5
    %v8103 = vrot.slane %v8102, 4
    %v8104 = vrot.slane %v7945, 5
    %v8105 = vsel %vm861, %v8103, %v8104
    %v8106 = vrot.slane %v7946, 5
    %v8107 = vrot.slane %v8106, 4
    %v8108 = vrot.slane %v7947, 5
    %v8109 = vsel %vm861, %v8107, %v8108
    %v8110 = vrot.slane %v7948, 5
    %v8111 = vrot.slane %v8110, 4
    %v8112 = vrot.slane %v7949, 5
    %v8113 = vsel %vm861, %v8111, %v8112
    %v8114 = vrot.slane %v7950, 5
    %v8115 = vrot.slane %v8114, 4
    %v8116 = vrot.slane %v7951, 5
    %v8117 = vsel %vm861, %v8115, %v8116
    %v8118 = vrot.slane %v7952, 5
    %v8119 = vrot.slane %v8118, 4
    %v8120 = vrot.slane %v7953, 5
    %v8121 = vsel %vm861, %v8119, %v8120
    %v8122 = vrot.slane %v7954, 5
    %v8123 = vrot.slane %v8122, 4
    %v8124 = vrot.slane %v7955, 5
    %v8125 = vsel %vm861, %v8123, %v8124
    %v8126 = vrot.slane %v7956, 5
    %v8127 = vrot.slane %v8126, 4
    %v8128 = vrot.slane %v7957, 5
    %v8129 = vsel %vm861, %v8127, %v8128
    %v8130 = vrot.slane %v7958, 5
    %v8131 = vrot.slane %v8130, 4
    %v8132 = vrot.slane %v7959, 5
    %v8133 = vsel %vm861, %v8131, %v8132
    %v8134 = vrot.slane %v7960, 5
    %v8135 = vrot.slane %v8134, 4
    %v8136 = vrot.slane %v7961, 5
    %v8137 = vsel %vm861, %v8135, %v8136
    %v8138 = vrot.slane %v7962, 5
    %v8139 = vrot.slane %v8138, 4
    %v8140 = vrot.slane %v7963, 5
    %v8141 = vsel %vm861, %v8139, %v8140
    %v8142 = vrot.slane %v7964, 5
    %v8143 = vrot.slane %v8142, 4
    %v8144 = vrot.slane %v7965, 5
    %v8145 = vsel %vm861, %v8143, %v8144
    %v8146 = vrot.slane %v7966, 5
    %v8147 = vrot.slane %v8146, 4
    %v8148 = vrot.slane %v7967, 5
    %v8149 = vsel %vm861, %v8147, %v8148
    %v8150 = vrot.slane %v7968, 5
    %v8151 = vrot.slane %v8150, 4
    %v8152 = vrot.slane %v7969, 5
    %v8153 = vsel %vm861, %v8151, %v8152
    %v8154 = vrot.slane %v7970, 5
    %v8155 = vrot.slane %v8154, 4
    %v8156 = vrot.slane %v7971, 5
    %v8157 = vsel %vm861, %v8155, %v8156
    %v8158 = vrot.slane %v7972, 5
    %v8159 = vrot.slane %v8158, 4
    %v8160 = vrot.slane %v7973, 5
    %v8161 = vsel %vm861, %v8159, %v8160
    %v8162 = vrot.slane %v7974, 5
    %v8163 = vrot.slane %v8162, 4
    %v8164 = vrot.slane %v7975, 5
    %v8165 = vsel %vm861, %v8163, %v8164
    %v8166 = vrot.slane %v7976, 5
    %v8167 = vrot.slane %v8166, 4
    %v8168 = vrot.slane %v7977, 5
    %v8169 = vsel %vm861, %v8167, %v8168
    %8170 = vrot.lane.b32.xlu0 %v8045, 64
    %v8171 = vpop.permute.xlu0 %8170
    %8172 = vrot.lane.b32.xlu0 %v8049, 64
    %v8173 = vpop.permute.xlu0 %8172
    %8174 = vrot.lane.b32.xlu0 %v8053, 64
    %v8175 = vpop.permute.xlu0 %8174
    %8176 = vrot.lane.b32.xlu0 %v8057, 64
    %v8177 = vpop.permute.xlu0 %8176
    %8178 = vrot.lane.b32.xlu0 %v8061, 64
    %v8179 = vpop.permute.xlu0 %8178
    %8180 = vrot.lane.b32.xlu0 %v8065, 64
    %v8181 = vpop.permute.xlu0 %8180
    %8182 = vrot.lane.b32.xlu0 %v8069, 64
    %v8183 = vpop.permute.xlu0 %8182
    %8184 = vrot.lane.b32.xlu0 %v8073, 64
    %v8185 = vpop.permute.xlu0 %8184
    %8186 = vrot.lane.b32.xlu0 %v8077, 64
    %v8187 = vpop.permute.xlu0 %8186
    %8188 = vrot.lane.b32.xlu0 %v8081, 64
    %v8189 = vpop.permute.xlu0 %8188
    %8190 = vrot.lane.b32.xlu0 %v8085, 64
    %v8191 = vpop.permute.xlu0 %8190
    %8192 = vrot.lane.b32.xlu0 %v8089, 64
    %v8193 = vpop.permute.xlu0 %8192
    %8194 = vrot.lane.b32.xlu0 %v8093, 64
    %v8195 = vpop.permute.xlu0 %8194
    %8196 = vrot.lane.b32.xlu0 %v8097, 64
    %v8197 = vpop.permute.xlu0 %8196
    %8198 = vrot.lane.b32.xlu0 %v8101, 64
    %v8199 = vpop.permute.xlu0 %8198
    %8200 = vrot.lane.b32.xlu0 %v8105, 64
    %v8201 = vpop.permute.xlu0 %8200
    %8202 = vrot.lane.b32.xlu0 %v8109, 64
    %v8203 = vpop.permute.xlu0 %8202
    %8204 = vrot.lane.b32.xlu0 %v8113, 64
    %v8205 = vpop.permute.xlu0 %8204
    %8206 = vrot.lane.b32.xlu0 %v8117, 64
    %v8207 = vpop.permute.xlu0 %8206
    %8208 = vrot.lane.b32.xlu0 %v8121, 64
    %v8209 = vpop.permute.xlu0 %8208
    %8210 = vrot.lane.b32.xlu0 %v8125, 64
    %v8211 = vpop.permute.xlu0 %8210
    %8212 = vrot.lane.b32.xlu0 %v8129, 64
    %v8213 = vpop.permute.xlu0 %8212
    %8214 = vrot.lane.b32.xlu0 %v8133, 64
    %v8215 = vpop.permute.xlu0 %8214
    %8216 = vrot.lane.b32.xlu0 %v8137, 64
    %v8217 = vpop.permute.xlu0 %8216
    %8218 = vrot.lane.b32.xlu0 %v8141, 64
    %v8219 = vpop.permute.xlu0 %8218
    %8220 = vrot.lane.b32.xlu0 %v8145, 64
    %v8221 = vpop.permute.xlu0 %8220
    %8222 = vrot.lane.b32.xlu0 %v8149, 64
    %v8223 = vpop.permute.xlu0 %8222
    %8224 = vrot.lane.b32.xlu0 %v8153, 64
    %v8225 = vpop.permute.xlu0 %8224
    %8226 = vrot.lane.b32.xlu0 %v8157, 64
    %v8227 = vpop.permute.xlu0 %8226
    %8228 = vrot.lane.b32.xlu0 %v8161, 64
    %v8229 = vpop.permute.xlu0 %8228
    %8230 = vrot.lane.b32.xlu0 %v8165, 64
    %v8231 = vpop.permute.xlu0 %8230
    %8232 = vrot.lane.b32.xlu0 %v8169, 64
    %v8233 = vpop.permute.xlu0 %8232
    %8266 = vst.msk [vmem:[#allocation2 + $0x8] sm:$0xf] %vm1921, %v8171
    %8267 = vst.msk [vmem:[#allocation2 + $0x18] sm:$0xf] %vm1921, %v8173
    %8268 = vst.msk [vmem:[#allocation2 + $0x28] sm:$0xf] %vm1921, %v8175
    %8269 = vst.msk [vmem:[#allocation2 + $0x38] sm:$0xf] %vm1921, %v8177
    %8270 = vst.msk [vmem:[#allocation2 + $0x48] sm:$0xf] %vm1921, %v8179
    %8271 = vst.msk [vmem:[#allocation2 + $0x58] sm:$0xf] %vm1921, %v8181
    %8272 = vst.msk [vmem:[#allocation2 + $0x68] sm:$0xf] %vm1921, %v8183
    %8273 = vst.msk [vmem:[#allocation2 + $0x78] sm:$0xf] %vm1921, %v8185
    %8274 = vst.msk [vmem:[#allocation2 + $0x88] sm:$0xf] %vm1921, %v8187
    %8275 = vst.msk [vmem:[#allocation2 + $0x98] sm:$0xf] %vm1921, %v8189
    %8276 = vst.msk [vmem:[#allocation2 + $0xa8] sm:$0xf] %vm1921, %v8191
    %8277 = vst.msk [vmem:[#allocation2 + $0xb8] sm:$0xf] %vm1921, %v8193
    %8278 = vst.msk [vmem:[#allocation2 + $0xc8] sm:$0xf] %vm1921, %v8195
    %8279 = vst.msk [vmem:[#allocation2 + $0xd8] sm:$0xf] %vm1921, %v8197
    %8280 = vst.msk [vmem:[#allocation2 + $0xe8] sm:$0xf] %vm1921, %v8199
    %8281 = vst.msk [vmem:[#allocation2 + $0xf8] sm:$0xf] %vm1921, %v8201
    %8282 = vst.msk [vmem:[#allocation2 + $0x108] sm:$0xf] %vm1921, %v8203
    %8283 = vst.msk [vmem:[#allocation2 + $0x118] sm:$0xf] %vm1921, %v8205
    %8284 = vst.msk [vmem:[#allocation2 + $0x128] sm:$0xf] %vm1921, %v8207
    %8285 = vst.msk [vmem:[#allocation2 + $0x138] sm:$0xf] %vm1921, %v8209
    %8286 = vst.msk [vmem:[#allocation2 + $0x148] sm:$0xf] %vm1921, %v8211
    %8287 = vst.msk [vmem:[#allocation2 + $0x158] sm:$0xf] %vm1921, %v8213
    %8288 = vst.msk [vmem:[#allocation2 + $0x168] sm:$0xf] %vm1921, %v8215
    %8289 = vst.msk [vmem:[#allocation2 + $0x178] sm:$0xf] %vm1921, %v8217
    %8290 = vst.msk [vmem:[#allocation2 + $0x188] sm:$0xf] %vm1921, %v8219
    %8291 = vst.msk [vmem:[#allocation2 + $0x198] sm:$0xf] %vm1921, %v8221
    %8292 = vst.msk [vmem:[#allocation2 + $0x1a8] sm:$0xf] %vm1921, %v8223
    %8293 = vst.msk [vmem:[#allocation2 + $0x1b8] sm:$0xf] %vm1921, %v8225
    %8294 = vst.msk [vmem:[#allocation2 + $0x1c8] sm:$0xf] %vm1921, %v8227
    %8295 = vst.msk [vmem:[#allocation2 + $0x1d8] sm:$0xf] %vm1921, %v8229
    %8296 = vst.msk [vmem:[#allocation2 + $0x1e8] sm:$0xf] %vm1921, %v8231
    %8297 = vst.msk [vmem:[#allocation2 + $0x1f8] sm:$0xf] %vm1921, %v8233
    %s8298 = scalar_lea.vmem %s0, 168
    %v8299 = vld [vmem:[%s8298] sm:$0xf]
    %v8300 = vld [vmem:[%s8298 + $0x8] sm:$0xf]
    %v8301 = vld [vmem:[%s8298 + $0x10] sm:$0xf]
    %v8302 = vld [vmem:[%s8298 + $0x18] sm:$0xf]
    %v8303 = vld [vmem:[%s8298 + $0x20] sm:$0xf]
    %v8304 = vld [vmem:[%s8298 + $0x28] sm:$0xf]
    %v8305 = vld [vmem:[%s8298 + $0x30] sm:$0xf]
    %v8306 = vld [vmem:[%s8298 + $0x38] sm:$0xf]
    %v8307 = vld [vmem:[%s8298 + $0x50] sm:$0xf]
    %v8308 = vld [vmem:[%s8298 + $0x58] sm:$0xf]
    %v8309 = vld [vmem:[%s8298 + $0x60] sm:$0xf]
    %v8310 = vld [vmem:[%s8298 + $0x68] sm:$0xf]
    %v8311 = vld [vmem:[%s8298 + $0x70] sm:$0xf]
    %v8312 = vld [vmem:[%s8298 + $0x78] sm:$0xf]
    %v8313 = vld [vmem:[%s8298 + $0x80] sm:$0xf]
    %v8314 = vld [vmem:[%s8298 + $0x88] sm:$0xf]
    %v8315 = vld [vmem:[%s8298 + $0xa0] sm:$0xf]
    %v8316 = vld [vmem:[%s8298 + $0xa8] sm:$0xf]
    %v8317 = vld [vmem:[%s8298 + $0xb0] sm:$0xf]
    %v8318 = vld [vmem:[%s8298 + $0xb8] sm:$0xf]
    %v8319 = vld [vmem:[%s8298 + $0xc0] sm:$0xf]
    %v8320 = vld [vmem:[%s8298 + $0xc8] sm:$0xf]
    %v8321 = vld [vmem:[%s8298 + $0xd0] sm:$0xf]
    %v8322 = vld [vmem:[%s8298 + $0xd8] sm:$0xf]
    %v8323 = vld [vmem:[%s8298 + $0xf0] sm:$0xf]
    %v8324 = vld [vmem:[%s8298 + $0xf8] sm:$0xf]
    %v8325 = vld [vmem:[%s8298 + $0x100] sm:$0xf]
    %v8326 = vld [vmem:[%s8298 + $0x108] sm:$0xf]
    %v8327 = vld [vmem:[%s8298 + $0x110] sm:$0xf]
    %v8328 = vld [vmem:[%s8298 + $0x118] sm:$0xf]
    %v8329 = vld [vmem:[%s8298 + $0x120] sm:$0xf]
    %v8330 = vld [vmem:[%s8298 + $0x128] sm:$0xf]
    %8363 = vrot.lane.b32.xlu0 %v8299, 80
    %v8364 = vpop.permute.xlu0 %8363
    %8365 = vrot.lane.b32.xlu0 %v8300, 80
    %v8366 = vpop.permute.xlu0 %8365
    %8367 = vrot.lane.b32.xlu0 %v8301, 80
    %v8368 = vpop.permute.xlu0 %8367
    %8369 = vrot.lane.b32.xlu0 %v8302, 80
    %v8370 = vpop.permute.xlu0 %8369
    %8371 = vrot.lane.b32.xlu0 %v8303, 80
    %v8372 = vpop.permute.xlu0 %8371
    %8373 = vrot.lane.b32.xlu0 %v8304, 80
    %v8374 = vpop.permute.xlu0 %8373
    %8375 = vrot.lane.b32.xlu0 %v8305, 80
    %v8376 = vpop.permute.xlu0 %8375
    %8377 = vrot.lane.b32.xlu0 %v8306, 80
    %v8378 = vpop.permute.xlu0 %8377
    %8379 = vrot.lane.b32.xlu0 %v8307, 80
    %v8380 = vpop.permute.xlu0 %8379
    %8381 = vrot.lane.b32.xlu0 %v8308, 80
    %v8382 = vpop.permute.xlu0 %8381
    %8383 = vrot.lane.b32.xlu0 %v8309, 80
    %v8384 = vpop.permute.xlu0 %8383
    %8385 = vrot.lane.b32.xlu0 %v8310, 80
    %v8386 = vpop.permute.xlu0 %8385
    %8387 = vrot.lane.b32.xlu0 %v8311, 80
    %v8388 = vpop.permute.xlu0 %8387
    %8389 = vrot.lane.b32.xlu0 %v8312, 80
    %v8390 = vpop.permute.xlu0 %8389
    %8391 = vrot.lane.b32.xlu0 %v8313, 80
    %v8392 = vpop.permute.xlu0 %8391
    %8393 = vrot.lane.b32.xlu0 %v8314, 80
    %v8394 = vpop.permute.xlu0 %8393
    %8395 = vrot.lane.b32.xlu0 %v8315, 80
    %v8396 = vpop.permute.xlu0 %8395
    %8397 = vrot.lane.b32.xlu0 %v8316, 80
    %v8398 = vpop.permute.xlu0 %8397
    %8399 = vrot.lane.b32.xlu0 %v8317, 80
    %v8400 = vpop.permute.xlu0 %8399
    %8401 = vrot.lane.b32.xlu0 %v8318, 80
    %v8402 = vpop.permute.xlu0 %8401
    %8403 = vrot.lane.b32.xlu0 %v8319, 80
    %v8404 = vpop.permute.xlu0 %8403
    %8405 = vrot.lane.b32.xlu0 %v8320, 80
    %v8406 = vpop.permute.xlu0 %8405
    %8407 = vrot.lane.b32.xlu0 %v8321, 80
    %v8408 = vpop.permute.xlu0 %8407
    %8409 = vrot.lane.b32.xlu0 %v8322, 80
    %v8410 = vpop.permute.xlu0 %8409
    %8411 = vrot.lane.b32.xlu0 %v8323, 80
    %v8412 = vpop.permute.xlu0 %8411
    %8413 = vrot.lane.b32.xlu0 %v8324, 80
    %v8414 = vpop.permute.xlu0 %8413
    %8415 = vrot.lane.b32.xlu0 %v8325, 80
    %v8416 = vpop.permute.xlu0 %8415
    %8417 = vrot.lane.b32.xlu0 %v8326, 80
    %v8418 = vpop.permute.xlu0 %8417
    %8419 = vrot.lane.b32.xlu0 %v8327, 80
    %v8420 = vpop.permute.xlu0 %8419
    %8421 = vrot.lane.b32.xlu0 %v8328, 80
    %v8422 = vpop.permute.xlu0 %8421
    %8423 = vrot.lane.b32.xlu0 %v8329, 80
    %v8424 = vpop.permute.xlu0 %8423
    %8425 = vrot.lane.b32.xlu0 %v8330, 80
    %v8426 = vpop.permute.xlu0 %8425
    %8459 = vst.msk [vmem:[#allocation2 + $0x8] sm:$0xf] %vm2306, %v8364
    %8460 = vst.msk [vmem:[#allocation2 + $0x18] sm:$0xf] %vm2306, %v8366
    %8461 = vst.msk [vmem:[#allocation2 + $0x28] sm:$0xf] %vm2306, %v8368
    %8462 = vst.msk [vmem:[#allocation2 + $0x38] sm:$0xf] %vm2306, %v8370
    %8463 = vst.msk [vmem:[#allocation2 + $0x48] sm:$0xf] %vm2306, %v8372
    %8464 = vst.msk [vmem:[#allocation2 + $0x58] sm:$0xf] %vm2306, %v8374
    %8465 = vst.msk [vmem:[#allocation2 + $0x68] sm:$0xf] %vm2306, %v8376
    %8466 = vst.msk [vmem:[#allocation2 + $0x78] sm:$0xf] %vm2306, %v8378
    %8467 = vst.msk [vmem:[#allocation2 + $0x88] sm:$0xf] %vm2306, %v8380
    %8468 = vst.msk [vmem:[#allocation2 + $0x98] sm:$0xf] %vm2306, %v8382
    %8469 = vst.msk [vmem:[#allocation2 + $0xa8] sm:$0xf] %vm2306, %v8384
    %8470 = vst.msk [vmem:[#allocation2 + $0xb8] sm:$0xf] %vm2306, %v8386
    %8471 = vst.msk [vmem:[#allocation2 + $0xc8] sm:$0xf] %vm2306, %v8388
    %8472 = vst.msk [vmem:[#allocation2 + $0xd8] sm:$0xf] %vm2306, %v8390
    %8473 = vst.msk [vmem:[#allocation2 + $0xe8] sm:$0xf] %vm2306, %v8392
    %8474 = vst.msk [vmem:[#allocation2 + $0xf8] sm:$0xf] %vm2306, %v8394
    %8475 = vst.msk [vmem:[#allocation2 + $0x108] sm:$0xf] %vm2306, %v8396
    %8476 = vst.msk [vmem:[#allocation2 + $0x118] sm:$0xf] %vm2306, %v8398
    %8477 = vst.msk [vmem:[#allocation2 + $0x128] sm:$0xf] %vm2306, %v8400
    %8478 = vst.msk [vmem:[#allocation2 + $0x138] sm:$0xf] %vm2306, %v8402
    %8479 = vst.msk [vmem:[#allocation2 + $0x148] sm:$0xf] %vm2306, %v8404
    %8480 = vst.msk [vmem:[#allocation2 + $0x158] sm:$0xf] %vm2306, %v8406
    %8481 = vst.msk [vmem:[#allocation2 + $0x168] sm:$0xf] %vm2306, %v8408
    %8482 = vst.msk [vmem:[#allocation2 + $0x178] sm:$0xf] %vm2306, %v8410
    %8483 = vst.msk [vmem:[#allocation2 + $0x188] sm:$0xf] %vm2306, %v8412
    %8484 = vst.msk [vmem:[#allocation2 + $0x198] sm:$0xf] %vm2306, %v8414
    %8485 = vst.msk [vmem:[#allocation2 + $0x1a8] sm:$0xf] %vm2306, %v8416
    %8486 = vst.msk [vmem:[#allocation2 + $0x1b8] sm:$0xf] %vm2306, %v8418
    %8487 = vst.msk [vmem:[#allocation2 + $0x1c8] sm:$0xf] %vm2306, %v8420
    %8488 = vst.msk [vmem:[#allocation2 + $0x1d8] sm:$0xf] %vm2306, %v8422
    %8489 = vst.msk [vmem:[#allocation2 + $0x1e8] sm:$0xf] %vm2306, %v8424
    %8490 = vst.msk [vmem:[#allocation2 + $0x1f8] sm:$0xf] %vm2306, %v8426
    %v8491 = vld [vmem:[%s8298] sm:$0xf]
    %v8492 = vld [vmem:[%s8298 + $0x4] sm:$0x1]
    %v8493 = vld [vmem:[%s8298 + $0x8] sm:$0xf]
    %v8494 = vld [vmem:[%s8298 + $0xc] sm:$0x1]
    %v8495 = vld [vmem:[%s8298 + $0x10] sm:$0xf]
    %v8496 = vld [vmem:[%s8298 + $0x14] sm:$0x1]
    %v8497 = vld [vmem:[%s8298 + $0x18] sm:$0xf]
    %v8498 = vld [vmem:[%s8298 + $0x1c] sm:$0x1]
    %v8499 = vld [vmem:[%s8298 + $0x20] sm:$0xf]
    %v8500 = vld [vmem:[%s8298 + $0x24] sm:$0x1]
    %v8501 = vld [vmem:[%s8298 + $0x28] sm:$0xf]
    %v8502 = vld [vmem:[%s8298 + $0x2c] sm:$0x1]
    %v8503 = vld [vmem:[%s8298 + $0x30] sm:$0xf]
    %v8504 = vld [vmem:[%s8298 + $0x34] sm:$0x1]
    %v8505 = vld [vmem:[%s8298 + $0x38] sm:$0xf]
    %v8506 = vld [vmem:[%s8298 + $0x3c] sm:$0x1]
    %v8507 = vld [vmem:[%s8298 + $0x50] sm:$0xf]
    %v8508 = vld [vmem:[%s8298 + $0x54] sm:$0x1]
    %v8509 = vld [vmem:[%s8298 + $0x58] sm:$0xf]
    %v8510 = vld [vmem:[%s8298 + $0x5c] sm:$0x1]
    %v8511 = vld [vmem:[%s8298 + $0x60] sm:$0xf]
    %v8512 = vld [vmem:[%s8298 + $0x64] sm:$0x1]
    %v8513 = vld [vmem:[%s8298 + $0x68] sm:$0xf]
    %v8514 = vld [vmem:[%s8298 + $0x6c] sm:$0x1]
    %v8515 = vld [vmem:[%s8298 + $0x70] sm:$0xf]
    %v8516 = vld [vmem:[%s8298 + $0x74] sm:$0x1]
    %v8517 = vld [vmem:[%s8298 + $0x78] sm:$0xf]
    %v8518 = vld [vmem:[%s8298 + $0x7c] sm:$0x1]
    %v8519 = vld [vmem:[%s8298 + $0x80] sm:$0xf]
    %v8520 = vld [vmem:[%s8298 + $0x84] sm:$0x1]
    %v8521 = vld [vmem:[%s8298 + $0x88] sm:$0xf]
    %v8522 = vld [vmem:[%s8298 + $0x8c] sm:$0x1]
    %v8523 = vld [vmem:[%s8298 + $0xa0] sm:$0xf]
    %v8524 = vld [vmem:[%s8298 + $0xa4] sm:$0x1]
    %v8525 = vld [vmem:[%s8298 + $0xa8] sm:$0xf]
    %v8526 = vld [vmem:[%s8298 + $0xac] sm:$0x1]
    %v8527 = vld [vmem:[%s8298 + $0xb0] sm:$0xf]
    %v8528 = vld [vmem:[%s8298 + $0xb4] sm:$0x1]
    %v8529 = vld [vmem:[%s8298 + $0xb8] sm:$0xf]
    %v8530 = vld [vmem:[%s8298 + $0xbc] sm:$0x1]
    %v8531 = vld [vmem:[%s8298 + $0xc0] sm:$0xf]
    %v8532 = vld [vmem:[%s8298 + $0xc4] sm:$0x1]
    %v8533 = vld [vmem:[%s8298 + $0xc8] sm:$0xf]
    %v8534 = vld [vmem:[%s8298 + $0xcc] sm:$0x1]
    %v8535 = vld [vmem:[%s8298 + $0xd0] sm:$0xf]
    %v8536 = vld [vmem:[%s8298 + $0xd4] sm:$0x1]
    %v8537 = vld [vmem:[%s8298 + $0xd8] sm:$0xf]
    %v8538 = vld [vmem:[%s8298 + $0xdc] sm:$0x1]
    %v8539 = vld [vmem:[%s8298 + $0xf0] sm:$0xf]
    %v8540 = vld [vmem:[%s8298 + $0xf4] sm:$0x1]
    %v8541 = vld [vmem:[%s8298 + $0xf8] sm:$0xf]
    %v8542 = vld [vmem:[%s8298 + $0xfc] sm:$0x1]
    %v8543 = vld [vmem:[%s8298 + $0x100] sm:$0xf]
    %v8544 = vld [vmem:[%s8298 + $0x104] sm:$0x1]
    %v8545 = vld [vmem:[%s8298 + $0x108] sm:$0xf]
    %v8546 = vld [vmem:[%s8298 + $0x10c] sm:$0x1]
    %v8547 = vld [vmem:[%s8298 + $0x110] sm:$0xf]
    %v8548 = vld [vmem:[%s8298 + $0x114] sm:$0x1]
    %v8549 = vld [vmem:[%s8298 + $0x118] sm:$0xf]
    %v8550 = vld [vmem:[%s8298 + $0x11c] sm:$0x1]
    %v8551 = vld [vmem:[%s8298 + $0x120] sm:$0xf]
    %v8552 = vld [vmem:[%s8298 + $0x124] sm:$0x1]
    %v8553 = vld [vmem:[%s8298 + $0x128] sm:$0xf]
    %v8554 = vld [vmem:[%s8298 + $0x12c] sm:$0x1]
    %v8556 = vshrl.u32 %v8491, 16
    %v8558 = vrot.slane %v8556, 4
    %v8559 = vshll.u32 %v8491, 16
    %v8561 = vrot.slane %v8559, 5
    %v8562 = vor.u32 %v8558, %v8561
    %v8563 = vrot.slane %v8562, 4
    %v8565 = vshll.u32 %v8492, 16
    %v8567 = vrot.slane %v8565, 5
    %v8568 = vsel %vm153, %v8563, %v8567
    %v8570 = vshrl.u32 %v8493, 16
    %v8572 = vrot.slane %v8570, 4
    %v8573 = vshll.u32 %v8493, 16
    %v8575 = vrot.slane %v8573, 5
    %v8576 = vor.u32 %v8572, %v8575
    %v8577 = vrot.slane %v8576, 4
    %v8579 = vshll.u32 %v8494, 16
    %v8581 = vrot.slane %v8579, 5
    %v8582 = vsel %vm153, %v8577, %v8581
    %v8584 = vshrl.u32 %v8495, 16
    %v8586 = vrot.slane %v8584, 4
    %v8587 = vshll.u32 %v8495, 16
    %v8589 = vrot.slane %v8587, 5
    %v8590 = vor.u32 %v8586, %v8589
    %v8591 = vrot.slane %v8590, 4
    %v8593 = vshll.u32 %v8496, 16
    %v8595 = vrot.slane %v8593, 5
    %v8596 = vsel %vm153, %v8591, %v8595
    %v8598 = vshrl.u32 %v8497, 16
    %v8600 = vrot.slane %v8598, 4
    %v8601 = vshll.u32 %v8497, 16
    %v8603 = vrot.slane %v8601, 5
    %v8604 = vor.u32 %v8600, %v8603
    %v8605 = vrot.slane %v8604, 4
    %v8607 = vshll.u32 %v8498, 16
    %v8609 = vrot.slane %v8607, 5
    %v8610 = vsel %vm153, %v8605, %v8609
    %v8612 = vshrl.u32 %v8499, 16
    %v8614 = vrot.slane %v8612, 4
    %v8615 = vshll.u32 %v8499, 16
    %v8617 = vrot.slane %v8615, 5
    %v8618 = vor.u32 %v8614, %v8617
    %v8619 = vrot.slane %v8618, 4
    %v8621 = vshll.u32 %v8500, 16
    %v8623 = vrot.slane %v8621, 5
    %v8624 = vsel %vm153, %v8619, %v8623
    %v8626 = vshrl.u32 %v8501, 16
    %v8628 = vrot.slane %v8626, 4
    %v8629 = vshll.u32 %v8501, 16
    %v8631 = vrot.slane %v8629, 5
    %v8632 = vor.u32 %v8628, %v8631
    %v8633 = vrot.slane %v8632, 4
    %v8635 = vshll.u32 %v8502, 16
    %v8637 = vrot.slane %v8635, 5
    %v8638 = vsel %vm153, %v8633, %v8637
    %v8640 = vshrl.u32 %v8503, 16
    %v8642 = vrot.slane %v8640, 4
    %v8643 = vshll.u32 %v8503, 16
    %v8645 = vrot.slane %v8643, 5
    %v8646 = vor.u32 %v8642, %v8645
    %v8647 = vrot.slane %v8646, 4
    %v8649 = vshll.u32 %v8504, 16
    %v8651 = vrot.slane %v8649, 5
    %v8652 = vsel %vm153, %v8647, %v8651
    %v8654 = vshrl.u32 %v8505, 16
    %v8656 = vrot.slane %v8654, 4
    %v8657 = vshll.u32 %v8505, 16
    %v8659 = vrot.slane %v8657, 5
    %v8660 = vor.u32 %v8656, %v8659
    %v8661 = vrot.slane %v8660, 4
    %v8663 = vshll.u32 %v8506, 16
    %v8665 = vrot.slane %v8663, 5
    %v8666 = vsel %vm153, %v8661, %v8665
    %v8668 = vshrl.u32 %v8507, 16
    %v8670 = vrot.slane %v8668, 4
    %v8671 = vshll.u32 %v8507, 16
    %v8673 = vrot.slane %v8671, 5
    %v8674 = vor.u32 %v8670, %v8673
    %v8675 = vrot.slane %v8674, 4
    %v8677 = vshll.u32 %v8508, 16
    %v8679 = vrot.slane %v8677, 5
    %v8680 = vsel %vm153, %v8675, %v8679
    %v8682 = vshrl.u32 %v8509, 16
    %v8684 = vrot.slane %v8682, 4
    %v8685 = vshll.u32 %v8509, 16
    %v8687 = vrot.slane %v8685, 5
    %v8688 = vor.u32 %v8684, %v8687
    %v8689 = vrot.slane %v8688, 4
    %v8691 = vshll.u32 %v8510, 16
    %v8693 = vrot.slane %v8691, 5
    %v8694 = vsel %vm153, %v8689, %v8693
    %v8696 = vshrl.u32 %v8511, 16
    %v8698 = vrot.slane %v8696, 4
    %v8699 = vshll.u32 %v8511, 16
    %v8701 = vrot.slane %v8699, 5
    %v8702 = vor.u32 %v8698, %v8701
    %v8703 = vrot.slane %v8702, 4
    %v8705 = vshll.u32 %v8512, 16
    %v8707 = vrot.slane %v8705, 5
    %v8708 = vsel %vm153, %v8703, %v8707
    %v8710 = vshrl.u32 %v8513, 16
    %v8712 = vrot.slane %v8710, 4
    %v8713 = vshll.u32 %v8513, 16
    %v8715 = vrot.slane %v8713, 5
    %v8716 = vor.u32 %v8712, %v8715
    %v8717 = vrot.slane %v8716, 4
    %v8719 = vshll.u32 %v8514, 16
    %v8721 = vrot.slane %v8719, 5
    %v8722 = vsel %vm153, %v8717, %v8721
    %v8724 = vshrl.u32 %v8515, 16
    %v8726 = vrot.slane %v8724, 4
    %v8727 = vshll.u32 %v8515, 16
    %v8729 = vrot.slane %v8727, 5
    %v8730 = vor.u32 %v8726, %v8729
    %v8731 = vrot.slane %v8730, 4
    %v8733 = vshll.u32 %v8516, 16
    %v8735 = vrot.slane %v8733, 5
    %v8736 = vsel %vm153, %v8731, %v8735
    %v8738 = vshrl.u32 %v8517, 16
    %v8740 = vrot.slane %v8738, 4
    %v8741 = vshll.u32 %v8517, 16
    %v8743 = vrot.slane %v8741, 5
    %v8744 = vor.u32 %v8740, %v8743
    %v8745 = vrot.slane %v8744, 4
    %v8747 = vshll.u32 %v8518, 16
    %v8749 = vrot.slane %v8747, 5
    %v8750 = vsel %vm153, %v8745, %v8749
    %v8752 = vshrl.u32 %v8519, 16
    %v8754 = vrot.slane %v8752, 4
    %v8755 = vshll.u32 %v8519, 16
    %v8757 = vrot.slane %v8755, 5
    %v8758 = vor.u32 %v8754, %v8757
    %v8759 = vrot.slane %v8758, 4
    %v8761 = vshll.u32 %v8520, 16
    %v8763 = vrot.slane %v8761, 5
    %v8764 = vsel %vm153, %v8759, %v8763
    %v8766 = vshrl.u32 %v8521, 16
    %v8768 = vrot.slane %v8766, 4
    %v8769 = vshll.u32 %v8521, 16
    %v8771 = vrot.slane %v8769, 5
    %v8772 = vor.u32 %v8768, %v8771
    %v8773 = vrot.slane %v8772, 4
    %v8775 = vshll.u32 %v8522, 16
    %v8777 = vrot.slane %v8775, 5
    %v8778 = vsel %vm153, %v8773, %v8777
    %v8780 = vshrl.u32 %v8523, 16
    %v8782 = vrot.slane %v8780, 4
    %v8783 = vshll.u32 %v8523, 16
    %v8785 = vrot.slane %v8783, 5
    %v8786 = vor.u32 %v8782, %v8785
    %v8787 = vrot.slane %v8786, 4
    %v8789 = vshll.u32 %v8524, 16
    %v8791 = vrot.slane %v8789, 5
    %v8792 = vsel %vm153, %v8787, %v8791
    %v8794 = vshrl.u32 %v8525, 16
    %v8796 = vrot.slane %v8794, 4
    %v8797 = vshll.u32 %v8525, 16
    %v8799 = vrot.slane %v8797, 5
    %v8800 = vor.u32 %v8796, %v8799
    %v8801 = vrot.slane %v8800, 4
    %v8803 = vshll.u32 %v8526, 16
    %v8805 = vrot.slane %v8803, 5
    %v8806 = vsel %vm153, %v8801, %v8805
    %v8808 = vshrl.u32 %v8527, 16
    %v8810 = vrot.slane %v8808, 4
    %v8811 = vshll.u32 %v8527, 16
    %v8813 = vrot.slane %v8811, 5
    %v8814 = vor.u32 %v8810, %v8813
    %v8815 = vrot.slane %v8814, 4
    %v8817 = vshll.u32 %v8528, 16
    %v8819 = vrot.slane %v8817, 5
    %v8820 = vsel %vm153, %v8815, %v8819
    %v8822 = vshrl.u32 %v8529, 16
    %v8824 = vrot.slane %v8822, 4
    %v8825 = vshll.u32 %v8529, 16
    %v8827 = vrot.slane %v8825, 5
    %v8828 = vor.u32 %v8824, %v8827
    %v8829 = vrot.slane %v8828, 4
    %v8831 = vshll.u32 %v8530, 16
    %v8833 = vrot.slane %v8831, 5
    %v8834 = vsel %vm153, %v8829, %v8833
    %v8836 = vshrl.u32 %v8531, 16
    %v8838 = vrot.slane %v8836, 4
    %v8839 = vshll.u32 %v8531, 16
    %v8841 = vrot.slane %v8839, 5
    %v8842 = vor.u32 %v8838, %v8841
    %v8843 = vrot.slane %v8842, 4
    %v8845 = vshll.u32 %v8532, 16
    %v8847 = vrot.slane %v8845, 5
    %v8848 = vsel %vm153, %v8843, %v8847
    %v8850 = vshrl.u32 %v8533, 16
    %v8852 = vrot.slane %v8850, 4
    %v8853 = vshll.u32 %v8533, 16
    %v8855 = vrot.slane %v8853, 5
    %v8856 = vor.u32 %v8852, %v8855
    %v8857 = vrot.slane %v8856, 4
    %v8859 = vshll.u32 %v8534, 16
    %v8861 = vrot.slane %v8859, 5
    %v8862 = vsel %vm153, %v8857, %v8861
    %v8864 = vshrl.u32 %v8535, 16
    %v8866 = vrot.slane %v8864, 4
    %v8867 = vshll.u32 %v8535, 16
    %v8869 = vrot.slane %v8867, 5
    %v8870 = vor.u32 %v8866, %v8869
    %v8871 = vrot.slane %v8870, 4
    %v8873 = vshll.u32 %v8536, 16
    %v8875 = vrot.slane %v8873, 5
    %v8876 = vsel %vm153, %v8871, %v8875
    %v8878 = vshrl.u32 %v8537, 16
    %v8880 = vrot.slane %v8878, 4
    %v8881 = vshll.u32 %v8537, 16
    %v8883 = vrot.slane %v8881, 5
    %v8884 = vor.u32 %v8880, %v8883
    %v8885 = vrot.slane %v8884, 4
    %v8887 = vshll.u32 %v8538, 16
    %v8889 = vrot.slane %v8887, 5
    %v8890 = vsel %vm153, %v8885, %v8889
    %v8892 = vshrl.u32 %v8539, 16
    %v8894 = vrot.slane %v8892, 4
    %v8895 = vshll.u32 %v8539, 16
    %v8897 = vrot.slane %v8895, 5
    %v8898 = vor.u32 %v8894, %v8897
    %v8899 = vrot.slane %v8898, 4
    %v8901 = vshll.u32 %v8540, 16
    %v8903 = vrot.slane %v8901, 5
    %v8904 = vsel %vm153, %v8899, %v8903
    %v8906 = vshrl.u32 %v8541, 16
    %v8908 = vrot.slane %v8906, 4
    %v8909 = vshll.u32 %v8541, 16
    %v8911 = vrot.slane %v8909, 5
    %v8912 = vor.u32 %v8908, %v8911
    %v8913 = vrot.slane %v8912, 4
    %v8915 = vshll.u32 %v8542, 16
    %v8917 = vrot.slane %v8915, 5
    %v8918 = vsel %vm153, %v8913, %v8917
    %v8920 = vshrl.u32 %v8543, 16
    %v8922 = vrot.slane %v8920, 4
    %v8923 = vshll.u32 %v8543, 16
    %v8925 = vrot.slane %v8923, 5
    %v8926 = vor.u32 %v8922, %v8925
    %v8927 = vrot.slane %v8926, 4
    %v8929 = vshll.u32 %v8544, 16
    %v8931 = vrot.slane %v8929, 5
    %v8932 = vsel %vm153, %v8927, %v8931
    %v8934 = vshrl.u32 %v8545, 16
    %v8936 = vrot.slane %v8934, 4
    %v8937 = vshll.u32 %v8545, 16
    %v8939 = vrot.slane %v8937, 5
    %v8940 = vor.u32 %v8936, %v8939
    %v8941 = vrot.slane %v8940, 4
    %v8943 = vshll.u32 %v8546, 16
    %v8945 = vrot.slane %v8943, 5
    %v8946 = vsel %vm153, %v8941, %v8945
    %v8948 = vshrl.u32 %v8547, 16
    %v8950 = vrot.slane %v8948, 4
    %v8951 = vshll.u32 %v8547, 16
    %v8953 = vrot.slane %v8951, 5
    %v8954 = vor.u32 %v8950, %v8953
    %v8955 = vrot.slane %v8954, 4
    %v8957 = vshll.u32 %v8548, 16
    %v8959 = vrot.slane %v8957, 5
    %v8960 = vsel %vm153, %v8955, %v8959
    %v8962 = vshrl.u32 %v8549, 16
    %v8964 = vrot.slane %v8962, 4
    %v8965 = vshll.u32 %v8549, 16
    %v8967 = vrot.slane %v8965, 5
    %v8968 = vor.u32 %v8964, %v8967
    %v8969 = vrot.slane %v8968, 4
    %v8971 = vshll.u32 %v8550, 16
    %v8973 = vrot.slane %v8971, 5
    %v8974 = vsel %vm153, %v8969, %v8973
    %v8976 = vshrl.u32 %v8551, 16
    %v8978 = vrot.slane %v8976, 4
    %v8979 = vshll.u32 %v8551, 16
    %v8981 = vrot.slane %v8979, 5
    %v8982 = vor.u32 %v8978, %v8981
    %v8983 = vrot.slane %v8982, 4
    %v8985 = vshll.u32 %v8552, 16
    %v8987 = vrot.slane %v8985, 5
    %v8988 = vsel %vm153, %v8983, %v8987
    %v8990 = vshrl.u32 %v8553, 16
    %v8992 = vrot.slane %v8990, 4
    %v8993 = vshll.u32 %v8553, 16
    %v8995 = vrot.slane %v8993, 5
    %v8996 = vor.u32 %v8992, %v8995
    %v8997 = vrot.slane %v8996, 4
    %v8999 = vshll.u32 %v8554, 16
    %v9001 = vrot.slane %v8999, 5
    %v9002 = vsel %vm153, %v8997, %v9001
    %9003 = vrot.lane.b32.xlu0 %v8568, 96
    %v9004 = vpop.permute.xlu0 %9003
    %9005 = vrot.lane.b32.xlu0 %v8582, 96
    %v9006 = vpop.permute.xlu0 %9005
    %9007 = vrot.lane.b32.xlu0 %v8596, 96
    %v9008 = vpop.permute.xlu0 %9007
    %9009 = vrot.lane.b32.xlu0 %v8610, 96
    %v9010 = vpop.permute.xlu0 %9009
    %9011 = vrot.lane.b32.xlu0 %v8624, 96
    %v9012 = vpop.permute.xlu0 %9011
    %9013 = vrot.lane.b32.xlu0 %v8638, 96
    %v9014 = vpop.permute.xlu0 %9013
    %9015 = vrot.lane.b32.xlu0 %v8652, 96
    %v9016 = vpop.permute.xlu0 %9015
    %9017 = vrot.lane.b32.xlu0 %v8666, 96
    %v9018 = vpop.permute.xlu0 %9017
    %9019 = vrot.lane.b32.xlu0 %v8680, 96
    %v9020 = vpop.permute.xlu0 %9019
    %9021 = vrot.lane.b32.xlu0 %v8694, 96
    %v9022 = vpop.permute.xlu0 %9021
    %9023 = vrot.lane.b32.xlu0 %v8708, 96
    %v9024 = vpop.permute.xlu0 %9023
    %9025 = vrot.lane.b32.xlu0 %v8722, 96
    %v9026 = vpop.permute.xlu0 %9025
    %9027 = vrot.lane.b32.xlu0 %v8736, 96
    %v9028 = vpop.permute.xlu0 %9027
    %9029 = vrot.lane.b32.xlu0 %v8750, 96
    %v9030 = vpop.permute.xlu0 %9029
    %9031 = vrot.lane.b32.xlu0 %v8764, 96
    %v9032 = vpop.permute.xlu0 %9031
    %9033 = vrot.lane.b32.xlu0 %v8778, 96
    %v9034 = vpop.permute.xlu0 %9033
    %9035 = vrot.lane.b32.xlu0 %v8792, 96
    %v9036 = vpop.permute.xlu0 %9035
    %9037 = vrot.lane.b32.xlu0 %v8806, 96
    %v9038 = vpop.permute.xlu0 %9037
    %9039 = vrot.lane.b32.xlu0 %v8820, 96
    %v9040 = vpop.permute.xlu0 %9039
    %9041 = vrot.lane.b32.xlu0 %v8834, 96
    %v9042 = vpop.permute.xlu0 %9041
    %9043 = vrot.lane.b32.xlu0 %v8848, 96
    %v9044 = vpop.permute.xlu0 %9043
    %9045 = vrot.lane.b32.xlu0 %v8862, 96
    %v9046 = vpop.permute.xlu0 %9045
    %9047 = vrot.lane.b32.xlu0 %v8876, 96
    %v9048 = vpop.permute.xlu0 %9047
    %9049 = vrot.lane.b32.xlu0 %v8890, 96
    %v9050 = vpop.permute.xlu0 %9049
    %9051 = vrot.lane.b32.xlu0 %v8904, 96
    %v9052 = vpop.permute.xlu0 %9051
    %9053 = vrot.lane.b32.xlu0 %v8918, 96
    %v9054 = vpop.permute.xlu0 %9053
    %9055 = vrot.lane.b32.xlu0 %v8932, 96
    %v9056 = vpop.permute.xlu0 %9055
    %9057 = vrot.lane.b32.xlu0 %v8946, 96
    %v9058 = vpop.permute.xlu0 %9057
    %9059 = vrot.lane.b32.xlu0 %v8960, 96
    %v9060 = vpop.permute.xlu0 %9059
    %9061 = vrot.lane.b32.xlu0 %v8974, 96
    %v9062 = vpop.permute.xlu0 %9061
    %9063 = vrot.lane.b32.xlu0 %v8988, 96
    %v9064 = vpop.permute.xlu0 %9063
    %9065 = vrot.lane.b32.xlu0 %v9002, 96
    %v9066 = vpop.permute.xlu0 %9065
    %9099 = vst.msk [vmem:[#allocation2 + $0x8] sm:$0xf] %vm2500, %v9004
    %9100 = vst.msk [vmem:[#allocation2 + $0x18] sm:$0xf] %vm2500, %v9006
    %9101 = vst.msk [vmem:[#allocation2 + $0x28] sm:$0xf] %vm2500, %v9008
    %9102 = vst.msk [vmem:[#allocation2 + $0x38] sm:$0xf] %vm2500, %v9010
    %9103 = vst.msk [vmem:[#allocation2 + $0x48] sm:$0xf] %vm2500, %v9012
    %9104 = vst.msk [vmem:[#allocation2 + $0x58] sm:$0xf] %vm2500, %v9014
    %9105 = vst.msk [vmem:[#allocation2 + $0x68] sm:$0xf] %vm2500, %v9016
    %9106 = vst.msk [vmem:[#allocation2 + $0x78] sm:$0xf] %vm2500, %v9018
    %9107 = vst.msk [vmem:[#allocation2 + $0x88] sm:$0xf] %vm2500, %v9020
    %9108 = vst.msk [vmem:[#allocation2 + $0x98] sm:$0xf] %vm2500, %v9022
    %9109 = vst.msk [vmem:[#allocation2 + $0xa8] sm:$0xf] %vm2500, %v9024
    %9110 = vst.msk [vmem:[#allocation2 + $0xb8] sm:$0xf] %vm2500, %v9026
    %9111 = vst.msk [vmem:[#allocation2 + $0xc8] sm:$0xf] %vm2500, %v9028
    %9112 = vst.msk [vmem:[#allocation2 + $0xd8] sm:$0xf] %vm2500, %v9030
    %9113 = vst.msk [vmem:[#allocation2 + $0xe8] sm:$0xf] %vm2500, %v9032
    %9114 = vst.msk [vmem:[#allocation2 + $0xf8] sm:$0xf] %vm2500, %v9034
    %9115 = vst.msk [vmem:[#allocation2 + $0x108] sm:$0xf] %vm2500, %v9036
    %9116 = vst.msk [vmem:[#allocation2 + $0x118] sm:$0xf] %vm2500, %v9038
    %9117 = vst.msk [vmem:[#allocation2 + $0x128] sm:$0xf] %vm2500, %v9040
    %9118 = vst.msk [vmem:[#allocation2 + $0x138] sm:$0xf] %vm2500, %v9042
    %9119 = vst.msk [vmem:[#allocation2 + $0x148] sm:$0xf] %vm2500, %v9044
    %9120 = vst.msk [vmem:[#allocation2 + $0x158] sm:$0xf] %vm2500, %v9046
    %9121 = vst.msk [vmem:[#allocation2 + $0x168] sm:$0xf] %vm2500, %v9048
    %9122 = vst.msk [vmem:[#allocation2 + $0x178] sm:$0xf] %vm2500, %v9050
    %9123 = vst.msk [vmem:[#allocation2 + $0x188] sm:$0xf] %vm2500, %v9052
    %9124 = vst.msk [vmem:[#allocation2 + $0x198] sm:$0xf] %vm2500, %v9054
    %9125 = vst.msk [vmem:[#allocation2 + $0x1a8] sm:$0xf] %vm2500, %v9056
    %9126 = vst.msk [vmem:[#allocation2 + $0x1b8] sm:$0xf] %vm2500, %v9058
    %9127 = vst.msk [vmem:[#allocation2 + $0x1c8] sm:$0xf] %vm2500, %v9060
    %9128 = vst.msk [vmem:[#allocation2 + $0x1d8] sm:$0xf] %vm2500, %v9062
    %9129 = vst.msk [vmem:[#allocation2 + $0x1e8] sm:$0xf] %vm2500, %v9064
    %9130 = vst.msk [vmem:[#allocation2 + $0x1f8] sm:$0xf] %vm2500, %v9066
    %v9131 = vld [vmem:[%s8298] sm:$0xe]
    %v9132 = vld [vmem:[%s8298 + $0x4] sm:$0x1]
    %v9133 = vld [vmem:[%s8298 + $0x8] sm:$0xe]
    %v9134 = vld [vmem:[%s8298 + $0xc] sm:$0x1]
    %v9135 = vld [vmem:[%s8298 + $0x10] sm:$0xe]
    %v9136 = vld [vmem:[%s8298 + $0x14] sm:$0x1]
    %v9137 = vld [vmem:[%s8298 + $0x18] sm:$0xe]
    %v9138 = vld [vmem:[%s8298 + $0x1c] sm:$0x1]
    %v9139 = vld [vmem:[%s8298 + $0x20] sm:$0xe]
    %v9140 = vld [vmem:[%s8298 + $0x24] sm:$0x1]
    %v9141 = vld [vmem:[%s8298 + $0x28] sm:$0xe]
    %v9142 = vld [vmem:[%s8298 + $0x2c] sm:$0x1]
    %v9143 = vld [vmem:[%s8298 + $0x30] sm:$0xe]
    %v9144 = vld [vmem:[%s8298 + $0x34] sm:$0x1]
    %v9145 = vld [vmem:[%s8298 + $0x38] sm:$0xe]
    %v9146 = vld [vmem:[%s8298 + $0x3c] sm:$0x1]
    %v9147 = vld [vmem:[%s8298 + $0x50] sm:$0xe]
    %v9148 = vld [vmem:[%s8298 + $0x54] sm:$0x1]
    %v9149 = vld [vmem:[%s8298 + $0x58] sm:$0xe]
    %v9150 = vld [vmem:[%s8298 + $0x5c] sm:$0x1]
    %v9151 = vld [vmem:[%s8298 + $0x60] sm:$0xe]
    %v9152 = vld [vmem:[%s8298 + $0x64] sm:$0x1]
    %v9153 = vld [vmem:[%s8298 + $0x68] sm:$0xe]
    %v9154 = vld [vmem:[%s8298 + $0x6c] sm:$0x1]
    %v9155 = vld [vmem:[%s8298 + $0x70] sm:$0xe]
    %v9156 = vld [vmem:[%s8298 + $0x74] sm:$0x1]
    %v9157 = vld [vmem:[%s8298 + $0x78] sm:$0xe]
    %v9158 = vld [vmem:[%s8298 + $0x7c] sm:$0x1]
    %v9159 = vld [vmem:[%s8298 + $0x80] sm:$0xe]
    %v9160 = vld [vmem:[%s8298 + $0x84] sm:$0x1]
    %v9161 = vld [vmem:[%s8298 + $0x88] sm:$0xe]
    %v9162 = vld [vmem:[%s8298 + $0x8c] sm:$0x1]
    %v9163 = vld [vmem:[%s8298 + $0xa0] sm:$0xe]
    %v9164 = vld [vmem:[%s8298 + $0xa4] sm:$0x1]
    %v9165 = vld [vmem:[%s8298 + $0xa8] sm:$0xe]
    %v9166 = vld [vmem:[%s8298 + $0xac] sm:$0x1]
    %v9167 = vld [vmem:[%s8298 + $0xb0] sm:$0xe]
    %v9168 = vld [vmem:[%s8298 + $0xb4] sm:$0x1]
    %v9169 = vld [vmem:[%s8298 + $0xb8] sm:$0xe]
    %v9170 = vld [vmem:[%s8298 + $0xbc] sm:$0x1]
    %v9171 = vld [vmem:[%s8298 + $0xc0] sm:$0xe]
    %v9172 = vld [vmem:[%s8298 + $0xc4] sm:$0x1]
    %v9173 = vld [vmem:[%s8298 + $0xc8] sm:$0xe]
    %v9174 = vld [vmem:[%s8298 + $0xcc] sm:$0x1]
    %v9175 = vld [vmem:[%s8298 + $0xd0] sm:$0xe]
    %v9176 = vld [vmem:[%s8298 + $0xd4] sm:$0x1]
    %v9177 = vld [vmem:[%s8298 + $0xd8] sm:$0xe]
    %v9178 = vld [vmem:[%s8298 + $0xdc] sm:$0x1]
    %v9179 = vld [vmem:[%s8298 + $0xf0] sm:$0xe]
    %v9180 = vld [vmem:[%s8298 + $0xf4] sm:$0x1]
    %v9181 = vld [vmem:[%s8298 + $0xf8] sm:$0xe]
    %v9182 = vld [vmem:[%s8298 + $0xfc] sm:$0x1]
    %v9183 = vld [vmem:[%s8298 + $0x100] sm:$0xe]
    %v9184 = vld [vmem:[%s8298 + $0x104] sm:$0x1]
    %v9185 = vld [vmem:[%s8298 + $0x108] sm:$0xe]
    %v9186 = vld [vmem:[%s8298 + $0x10c] sm:$0x1]
    %v9187 = vld [vmem:[%s8298 + $0x110] sm:$0xe]
    %v9188 = vld [vmem:[%s8298 + $0x114] sm:$0x1]
    %v9189 = vld [vmem:[%s8298 + $0x118] sm:$0xe]
    %v9190 = vld [vmem:[%s8298 + $0x11c] sm:$0x1]
    %v9191 = vld [vmem:[%s8298 + $0x120] sm:$0xe]
    %v9192 = vld [vmem:[%s8298 + $0x124] sm:$0x1]
    %v9193 = vld [vmem:[%s8298 + $0x128] sm:$0xe]
    %v9194 = vld [vmem:[%s8298 + $0x12c] sm:$0x1]
    %v9259 = vrot.slane %v9131, 5
    %v9260 = vrot.slane %v9259, 4
    %v9261 = vrot.slane %v9132, 5
    %v9262 = vsel %vm861, %v9260, %v9261
    %v9263 = vrot.slane %v9133, 5
    %v9264 = vrot.slane %v9263, 4
    %v9265 = vrot.slane %v9134, 5
    %v9266 = vsel %vm861, %v9264, %v9265
    %v9267 = vrot.slane %v9135, 5
    %v9268 = vrot.slane %v9267, 4
    %v9269 = vrot.slane %v9136, 5
    %v9270 = vsel %vm861, %v9268, %v9269
    %v9271 = vrot.slane %v9137, 5
    %v9272 = vrot.slane %v9271, 4
    %v9273 = vrot.slane %v9138, 5
    %v9274 = vsel %vm861, %v9272, %v9273
    %v9275 = vrot.slane %v9139, 5
    %v9276 = vrot.slane %v9275, 4
    %v9277 = vrot.slane %v9140, 5
    %v9278 = vsel %vm861, %v9276, %v9277
    %v9279 = vrot.slane %v9141, 5
    %v9280 = vrot.slane %v9279, 4
    %v9281 = vrot.slane %v9142, 5
    %v9282 = vsel %vm861, %v9280, %v9281
    %v9283 = vrot.slane %v9143, 5
    %v9284 = vrot.slane %v9283, 4
    %v9285 = vrot.slane %v9144, 5
    %v9286 = vsel %vm861, %v9284, %v9285
    %v9287 = vrot.slane %v9145, 5
    %v9288 = vrot.slane %v9287, 4
    %v9289 = vrot.slane %v9146, 5
    %v9290 = vsel %vm861, %v9288, %v9289
    %v9291 = vrot.slane %v9147, 5
    %v9292 = vrot.slane %v9291, 4
    %v9293 = vrot.slane %v9148, 5
    %v9294 = vsel %vm861, %v9292, %v9293
    %v9295 = vrot.slane %v9149, 5
    %v9296 = vrot.slane %v9295, 4
    %v9297 = vrot.slane %v9150, 5
    %v9298 = vsel %vm861, %v9296, %v9297
    %v9299 = vrot.slane %v9151, 5
    %v9300 = vrot.slane %v9299, 4
    %v9301 = vrot.slane %v9152, 5
    %v9302 = vsel %vm861, %v9300, %v9301
    %v9303 = vrot.slane %v9153, 5
    %v9304 = vrot.slane %v9303, 4
    %v9305 = vrot.slane %v9154, 5
    %v9306 = vsel %vm861, %v9304, %v9305
    %v9307 = vrot.slane %v9155, 5
    %v9308 = vrot.slane %v9307, 4
    %v9309 = vrot.slane %v9156, 5
    %v9310 = vsel %vm861, %v9308, %v9309
    %v9311 = vrot.slane %v9157, 5
    %v9312 = vrot.slane %v9311, 4
    %v9313 = vrot.slane %v9158, 5
    %v9314 = vsel %vm861, %v9312, %v9313
    %v9315 = vrot.slane %v9159, 5
    %v9316 = vrot.slane %v9315, 4
    %v9317 = vrot.slane %v9160, 5
    %v9318 = vsel %vm861, %v9316, %v9317
    %v9319 = vrot.slane %v9161, 5
    %v9320 = vrot.slane %v9319, 4
    %v9321 = vrot.slane %v9162, 5
    %v9322 = vsel %vm861, %v9320, %v9321
    %v9323 = vrot.slane %v9163, 5
    %v9324 = vrot.slane %v9323, 4
    %v9325 = vrot.slane %v9164, 5
    %v9326 = vsel %vm861, %v9324, %v9325
    %v9327 = vrot.slane %v9165, 5
    %v9328 = vrot.slane %v9327, 4
    %v9329 = vrot.slane %v9166, 5
    %v9330 = vsel %vm861, %v9328, %v9329
    %v9331 = vrot.slane %v9167, 5
    %v9332 = vrot.slane %v9331, 4
    %v9333 = vrot.slane %v9168, 5
    %v9334 = vsel %vm861, %v9332, %v9333
    %v9335 = vrot.slane %v9169, 5
    %v9336 = vrot.slane %v9335, 4
    %v9337 = vrot.slane %v9170, 5
    %v9338 = vsel %vm861, %v9336, %v9337
    %v9339 = vrot.slane %v9171, 5
    %v9340 = vrot.slane %v9339, 4
    %v9341 = vrot.slane %v9172, 5
    %v9342 = vsel %vm861, %v9340, %v9341
    %v9343 = vrot.slane %v9173, 5
    %v9344 = vrot.slane %v9343, 4
    %v9345 = vrot.slane %v9174, 5
    %v9346 = vsel %vm861, %v9344, %v9345
    %v9347 = vrot.slane %v9175, 5
    %v9348 = vrot.slane %v9347, 4
    %v9349 = vrot.slane %v9176, 5
    %v9350 = vsel %vm861, %v9348, %v9349
    %v9351 = vrot.slane %v9177, 5
    %v9352 = vrot.slane %v9351, 4
    %v9353 = vrot.slane %v9178, 5
    %v9354 = vsel %vm861, %v9352, %v9353
    %v9355 = vrot.slane %v9179, 5
    %v9356 = vrot.slane %v9355, 4
    %v9357 = vrot.slane %v9180, 5
    %v9358 = vsel %vm861, %v9356, %v9357
    %v9359 = vrot.slane %v9181, 5
    %v9360 = vrot.slane %v9359, 4
    %v9361 = vrot.slane %v9182, 5
    %v9362 = vsel %vm861, %v9360, %v9361
    %v9363 = vrot.slane %v9183, 5
    %v9364 = vrot.slane %v9363, 4
    %v9365 = vrot.slane %v9184, 5
    %v9366 = vsel %vm861, %v9364, %v9365
    %v9367 = vrot.slane %v9185, 5
    %v9368 = vrot.slane %v9367, 4
    %v9369 = vrot.slane %v9186, 5
    %v9370 = vsel %vm861, %v9368, %v9369
    %v9371 = vrot.slane %v9187, 5
    %v9372 = vrot.slane %v9371, 4
    %v9373 = vrot.slane %v9188, 5
    %v9374 = vsel %vm861, %v9372, %v9373
    %v9375 = vrot.slane %v9189, 5
    %v9376 = vrot.slane %v9375, 4
    %v9377 = vrot.slane %v9190, 5
    %v9378 = vsel %vm861, %v9376, %v9377
    %v9379 = vrot.slane %v9191, 5
    %v9380 = vrot.slane %v9379, 4
    %v9381 = vrot.slane %v9192, 5
    %v9382 = vsel %vm861, %v9380, %v9381
    %v9383 = vrot.slane %v9193, 5
    %v9384 = vrot.slane %v9383, 4
    %v9385 = vrot.slane %v9194, 5
    %v9386 = vsel %vm861, %v9384, %v9385
    %9387 = vrot.lane.b32.xlu0 %v9262, 112
    %v9388 = vpop.permute.xlu0 %9387
    %9389 = vrot.lane.b32.xlu0 %v9266, 112
    %v9390 = vpop.permute.xlu0 %9389
    %9391 = vrot.lane.b32.xlu0 %v9270, 112
    %v9392 = vpop.permute.xlu0 %9391
    %9393 = vrot.lane.b32.xlu0 %v9274, 112
    %v9394 = vpop.permute.xlu0 %9393
    %9395 = vrot.lane.b32.xlu0 %v9278, 112
    %v9396 = vpop.permute.xlu0 %9395
    %9397 = vrot.lane.b32.xlu0 %v9282, 112
    %v9398 = vpop.permute.xlu0 %9397
    %9399 = vrot.lane.b32.xlu0 %v9286, 112
    %v9400 = vpop.permute.xlu0 %9399
    %9401 = vrot.lane.b32.xlu0 %v9290, 112
    %v9402 = vpop.permute.xlu0 %9401
    %9403 = vrot.lane.b32.xlu0 %v9294, 112
    %v9404 = vpop.permute.xlu0 %9403
    %9405 = vrot.lane.b32.xlu0 %v9298, 112
    %v9406 = vpop.permute.xlu0 %9405
    %9407 = vrot.lane.b32.xlu0 %v9302, 112
    %v9408 = vpop.permute.xlu0 %9407
    %9409 = vrot.lane.b32.xlu0 %v9306, 112
    %v9410 = vpop.permute.xlu0 %9409
    %9411 = vrot.lane.b32.xlu0 %v9310, 112
    %v9412 = vpop.permute.xlu0 %9411
    %9413 = vrot.lane.b32.xlu0 %v9314, 112
    %v9414 = vpop.permute.xlu0 %9413
    %9415 = vrot.lane.b32.xlu0 %v9318, 112
    %v9416 = vpop.permute.xlu0 %9415
    %9417 = vrot.lane.b32.xlu0 %v9322, 112
    %v9418 = vpop.permute.xlu0 %9417
    %9419 = vrot.lane.b32.xlu0 %v9326, 112
    %v9420 = vpop.permute.xlu0 %9419
    %9421 = vrot.lane.b32.xlu0 %v9330, 112
    %v9422 = vpop.permute.xlu0 %9421
    %9423 = vrot.lane.b32.xlu0 %v9334, 112
    %v9424 = vpop.permute.xlu0 %9423
    %9425 = vrot.lane.b32.xlu0 %v9338, 112
    %v9426 = vpop.permute.xlu0 %9425
    %9427 = vrot.lane.b32.xlu0 %v9342, 112
    %v9428 = vpop.permute.xlu0 %9427
    %9429 = vrot.lane.b32.xlu0 %v9346, 112
    %v9430 = vpop.permute.xlu0 %9429
    %9431 = vrot.lane.b32.xlu0 %v9350, 112
    %v9432 = vpop.permute.xlu0 %9431
    %9433 = vrot.lane.b32.xlu0 %v9354, 112
    %v9434 = vpop.permute.xlu0 %9433
    %9435 = vrot.lane.b32.xlu0 %v9358, 112
    %v9436 = vpop.permute.xlu0 %9435
    %9437 = vrot.lane.b32.xlu0 %v9362, 112
    %v9438 = vpop.permute.xlu0 %9437
    %9439 = vrot.lane.b32.xlu0 %v9366, 112
    %v9440 = vpop.permute.xlu0 %9439
    %9441 = vrot.lane.b32.xlu0 %v9370, 112
    %v9442 = vpop.permute.xlu0 %9441
    %9443 = vrot.lane.b32.xlu0 %v9374, 112
    %v9444 = vpop.permute.xlu0 %9443
    %9445 = vrot.lane.b32.xlu0 %v9378, 112
    %v9446 = vpop.permute.xlu0 %9445
    %9447 = vrot.lane.b32.xlu0 %v9382, 112
    %v9448 = vpop.permute.xlu0 %9447
    %9449 = vrot.lane.b32.xlu0 %v9386, 112
    %v9450 = vpop.permute.xlu0 %9449
    %9483 = vst.msk [vmem:[#allocation2 + $0x8] sm:$0xf] %vm3141, %v9388
    %9484 = vst.msk [vmem:[#allocation2 + $0x18] sm:$0xf] %vm3141, %v9390
    %9485 = vst.msk [vmem:[#allocation2 + $0x28] sm:$0xf] %vm3141, %v9392
    %9486 = vst.msk [vmem:[#allocation2 + $0x38] sm:$0xf] %vm3141, %v9394
    %9487 = vst.msk [vmem:[#allocation2 + $0x48] sm:$0xf] %vm3141, %v9396
    %9488 = vst.msk [vmem:[#allocation2 + $0x58] sm:$0xf] %vm3141, %v9398
    %9489 = vst.msk [vmem:[#allocation2 + $0x68] sm:$0xf] %vm3141, %v9400
    %9490 = vst.msk [vmem:[#allocation2 + $0x78] sm:$0xf] %vm3141, %v9402
    %9491 = vst.msk [vmem:[#allocation2 + $0x88] sm:$0xf] %vm3141, %v9404
    %9492 = vst.msk [vmem:[#allocation2 + $0x98] sm:$0xf] %vm3141, %v9406
    %9493 = vst.msk [vmem:[#allocation2 + $0xa8] sm:$0xf] %vm3141, %v9408
    %9494 = vst.msk [vmem:[#allocation2 + $0xb8] sm:$0xf] %vm3141, %v9410
    %9495 = vst.msk [vmem:[#allocation2 + $0xc8] sm:$0xf] %vm3141, %v9412
    %9496 = vst.msk [vmem:[#allocation2 + $0xd8] sm:$0xf] %vm3141, %v9414
    %9497 = vst.msk [vmem:[#allocation2 + $0xe8] sm:$0xf] %vm3141, %v9416
    %9498 = vst.msk [vmem:[#allocation2 + $0xf8] sm:$0xf] %vm3141, %v9418
    %9499 = vst.msk [vmem:[#allocation2 + $0x108] sm:$0xf] %vm3141, %v9420
    %9500 = vst.msk [vmem:[#allocation2 + $0x118] sm:$0xf] %vm3141, %v9422
    %9501 = vst.msk [vmem:[#allocation2 + $0x128] sm:$0xf] %vm3141, %v9424
    %9502 = vst.msk [vmem:[#allocation2 + $0x138] sm:$0xf] %vm3141, %v9426
    %9503 = vst.msk [vmem:[#allocation2 + $0x148] sm:$0xf] %vm3141, %v9428
    %9504 = vst.msk [vmem:[#allocation2 + $0x158] sm:$0xf] %vm3141, %v9430
    %9505 = vst.msk [vmem:[#allocation2 + $0x168] sm:$0xf] %vm3141, %v9432
    %9506 = vst.msk [vmem:[#allocation2 + $0x178] sm:$0xf] %vm3141, %v9434
    %9507 = vst.msk [vmem:[#allocation2 + $0x188] sm:$0xf] %vm3141, %v9436
    %9508 = vst.msk [vmem:[#allocation2 + $0x198] sm:$0xf] %vm3141, %v9438
    %9509 = vst.msk [vmem:[#allocation2 + $0x1a8] sm:$0xf] %vm3141, %v9440
    %9510 = vst.msk [vmem:[#allocation2 + $0x1b8] sm:$0xf] %vm3141, %v9442
    %9511 = vst.msk [vmem:[#allocation2 + $0x1c8] sm:$0xf] %vm3141, %v9444
    %9512 = vst.msk [vmem:[#allocation2 + $0x1d8] sm:$0xf] %vm3141, %v9446
    %9513 = vst.msk [vmem:[#allocation2 + $0x1e8] sm:$0xf] %vm3141, %v9448
    %9514 = vst.msk [vmem:[#allocation2 + $0x1f8] sm:$0xf] %vm3141, %v9450
    %s9515 = scalar_lea.vmem %s0, 176
    %v9516 = vld [vmem:[%s9515] sm:$0xf]
    %v9517 = vld [vmem:[%s9515 + $0x8] sm:$0xf]
    %v9518 = vld [vmem:[%s9515 + $0x10] sm:$0xf]
    %v9519 = vld [vmem:[%s9515 + $0x18] sm:$0xf]
    %v9520 = vld [vmem:[%s9515 + $0x20] sm:$0xf]
    %v9521 = vld [vmem:[%s9515 + $0x28] sm:$0xf]
    %v9522 = vld [vmem:[%s9515 + $0x30] sm:$0xf]
    %v9523 = vld [vmem:[%s9515 + $0x38] sm:$0xf]
    %v9524 = vld [vmem:[%s9515 + $0x50] sm:$0xf]
    %v9525 = vld [vmem:[%s9515 + $0x58] sm:$0xf]
    %v9526 = vld [vmem:[%s9515 + $0x60] sm:$0xf]
    %v9527 = vld [vmem:[%s9515 + $0x68] sm:$0xf]
    %v9528 = vld [vmem:[%s9515 + $0x70] sm:$0xf]
    %v9529 = vld [vmem:[%s9515 + $0x78] sm:$0xf]
    %v9530 = vld [vmem:[%s9515 + $0x80] sm:$0xf]
    %v9531 = vld [vmem:[%s9515 + $0x88] sm:$0xf]
    %v9532 = vld [vmem:[%s9515 + $0xa0] sm:$0xf]
    %v9533 = vld [vmem:[%s9515 + $0xa8] sm:$0xf]
    %v9534 = vld [vmem:[%s9515 + $0xb0] sm:$0xf]
    %v9535 = vld [vmem:[%s9515 + $0xb8] sm:$0xf]
    %v9536 = vld [vmem:[%s9515 + $0xc0] sm:$0xf]
    %v9537 = vld [vmem:[%s9515 + $0xc8] sm:$0xf]
    %v9538 = vld [vmem:[%s9515 + $0xd0] sm:$0xf]
    %v9539 = vld [vmem:[%s9515 + $0xd8] sm:$0xf]
    %v9540 = vld [vmem:[%s9515 + $0xf0] sm:$0xf]
    %v9541 = vld [vmem:[%s9515 + $0xf8] sm:$0xf]
    %v9542 = vld [vmem:[%s9515 + $0x100] sm:$0xf]
    %v9543 = vld [vmem:[%s9515 + $0x108] sm:$0xf]
    %v9544 = vld [vmem:[%s9515 + $0x110] sm:$0xf]
    %v9545 = vld [vmem:[%s9515 + $0x118] sm:$0xf]
    %v9546 = vld [vmem:[%s9515 + $0x120] sm:$0xf]
    %v9547 = vld [vmem:[%s9515 + $0x128] sm:$0xf]
    %9548 = vst.msk [vmem:[#allocation2 + $0xc] sm:$0xf] %vm54, %v9516
    %9549 = vst.msk [vmem:[#allocation2 + $0x1c] sm:$0xf] %vm54, %v9517
    %9550 = vst.msk [vmem:[#allocation2 + $0x2c] sm:$0xf] %vm54, %v9518
    %9551 = vst.msk [vmem:[#allocation2 + $0x3c] sm:$0xf] %vm54, %v9519
    %9552 = vst.msk [vmem:[#allocation2 + $0x4c] sm:$0xf] %vm54, %v9520
    %9553 = vst.msk [vmem:[#allocation2 + $0x5c] sm:$0xf] %vm54, %v9521
    %9554 = vst.msk [vmem:[#allocation2 + $0x6c] sm:$0xf] %vm54, %v9522
    %9555 = vst.msk [vmem:[#allocation2 + $0x7c] sm:$0xf] %vm54, %v9523
    %9556 = vst.msk [vmem:[#allocation2 + $0x8c] sm:$0xf] %vm54, %v9524
    %9557 = vst.msk [vmem:[#allocation2 + $0x9c] sm:$0xf] %vm54, %v9525
    %9558 = vst.msk [vmem:[#allocation2 + $0xac] sm:$0xf] %vm54, %v9526
    %9559 = vst.msk [vmem:[#allocation2 + $0xbc] sm:$0xf] %vm54, %v9527
    %9560 = vst.msk [vmem:[#allocation2 + $0xcc] sm:$0xf] %vm54, %v9528
    %9561 = vst.msk [vmem:[#allocation2 + $0xdc] sm:$0xf] %vm54, %v9529
    %9562 = vst.msk [vmem:[#allocation2 + $0xec] sm:$0xf] %vm54, %v9530
    %9563 = vst.msk [vmem:[#allocation2 + $0xfc] sm:$0xf] %vm54, %v9531
    %9564 = vst.msk [vmem:[#allocation2 + $0x10c] sm:$0xf] %vm54, %v9532
    %9565 = vst.msk [vmem:[#allocation2 + $0x11c] sm:$0xf] %vm54, %v9533
    %9566 = vst.msk [vmem:[#allocation2 + $0x12c] sm:$0xf] %vm54, %v9534
    %9567 = vst.msk [vmem:[#allocation2 + $0x13c] sm:$0xf] %vm54, %v9535
    %9568 = vst.msk [vmem:[#allocation2 + $0x14c] sm:$0xf] %vm54, %v9536
    %9569 = vst.msk [vmem:[#allocation2 + $0x15c] sm:$0xf] %vm54, %v9537
    %9570 = vst.msk [vmem:[#allocation2 + $0x16c] sm:$0xf] %vm54, %v9538
    %9571 = vst.msk [vmem:[#allocation2 + $0x17c] sm:$0xf] %vm54, %v9539
    %9572 = vst.msk [vmem:[#allocation2 + $0x18c] sm:$0xf] %vm54, %v9540
    %9573 = vst.msk [vmem:[#allocation2 + $0x19c] sm:$0xf] %vm54, %v9541
    %9574 = vst.msk [vmem:[#allocation2 + $0x1ac] sm:$0xf] %vm54, %v9542
    %9575 = vst.msk [vmem:[#allocation2 + $0x1bc] sm:$0xf] %vm54, %v9543
    %9576 = vst.msk [vmem:[#allocation2 + $0x1cc] sm:$0xf] %vm54, %v9544
    %9577 = vst.msk [vmem:[#allocation2 + $0x1dc] sm:$0xf] %vm54, %v9545
    %9578 = vst.msk [vmem:[#allocation2 + $0x1ec] sm:$0xf] %vm54, %v9546
    %9579 = vst.msk [vmem:[#allocation2 + $0x1fc] sm:$0xf] %vm54, %v9547
    %v9580 = vld [vmem:[%s9515] sm:$0xf]
    %v9581 = vld [vmem:[%s9515 + $0x4] sm:$0x1]
    %v9582 = vld [vmem:[%s9515 + $0x8] sm:$0xf]
    %v9583 = vld [vmem:[%s9515 + $0xc] sm:$0x1]
    %v9584 = vld [vmem:[%s9515 + $0x10] sm:$0xf]
    %v9585 = vld [vmem:[%s9515 + $0x14] sm:$0x1]
    %v9586 = vld [vmem:[%s9515 + $0x18] sm:$0xf]
    %v9587 = vld [vmem:[%s9515 + $0x1c] sm:$0x1]
    %v9588 = vld [vmem:[%s9515 + $0x20] sm:$0xf]
    %v9589 = vld [vmem:[%s9515 + $0x24] sm:$0x1]
    %v9590 = vld [vmem:[%s9515 + $0x28] sm:$0xf]
    %v9591 = vld [vmem:[%s9515 + $0x2c] sm:$0x1]
    %v9592 = vld [vmem:[%s9515 + $0x30] sm:$0xf]
    %v9593 = vld [vmem:[%s9515 + $0x34] sm:$0x1]
    %v9594 = vld [vmem:[%s9515 + $0x38] sm:$0xf]
    %v9595 = vld [vmem:[%s9515 + $0x3c] sm:$0x1]
    %v9596 = vld [vmem:[%s9515 + $0x50] sm:$0xf]
    %v9597 = vld [vmem:[%s9515 + $0x54] sm:$0x1]
    %v9598 = vld [vmem:[%s9515 + $0x58] sm:$0xf]
    %v9599 = vld [vmem:[%s9515 + $0x5c] sm:$0x1]
    %v9600 = vld [vmem:[%s9515 + $0x60] sm:$0xf]
    %v9601 = vld [vmem:[%s9515 + $0x64] sm:$0x1]
    %v9602 = vld [vmem:[%s9515 + $0x68] sm:$0xf]
    %v9603 = vld [vmem:[%s9515 + $0x6c] sm:$0x1]
    %v9604 = vld [vmem:[%s9515 + $0x70] sm:$0xf]
    %v9605 = vld [vmem:[%s9515 + $0x74] sm:$0x1]
    %v9606 = vld [vmem:[%s9515 + $0x78] sm:$0xf]
    %v9607 = vld [vmem:[%s9515 + $0x7c] sm:$0x1]
    %v9608 = vld [vmem:[%s9515 + $0x80] sm:$0xf]
    %v9609 = vld [vmem:[%s9515 + $0x84] sm:$0x1]
    %v9610 = vld [vmem:[%s9515 + $0x88] sm:$0xf]
    %v9611 = vld [vmem:[%s9515 + $0x8c] sm:$0x1]
    %v9612 = vld [vmem:[%s9515 + $0xa0] sm:$0xf]
    %v9613 = vld [vmem:[%s9515 + $0xa4] sm:$0x1]
    %v9614 = vld [vmem:[%s9515 + $0xa8] sm:$0xf]
    %v9615 = vld [vmem:[%s9515 + $0xac] sm:$0x1]
    %v9616 = vld [vmem:[%s9515 + $0xb0] sm:$0xf]
    %v9617 = vld [vmem:[%s9515 + $0xb4] sm:$0x1]
    %v9618 = vld [vmem:[%s9515 + $0xb8] sm:$0xf]
    %v9619 = vld [vmem:[%s9515 + $0xbc] sm:$0x1]
    %v9620 = vld [vmem:[%s9515 + $0xc0] sm:$0xf]
    %v9621 = vld [vmem:[%s9515 + $0xc4] sm:$0x1]
    %v9622 = vld [vmem:[%s9515 + $0xc8] sm:$0xf]
    %v9623 = vld [vmem:[%s9515 + $0xcc] sm:$0x1]
    %v9624 = vld [vmem:[%s9515 + $0xd0] sm:$0xf]
    %v9625 = vld [vmem:[%s9515 + $0xd4] sm:$0x1]
    %v9626 = vld [vmem:[%s9515 + $0xd8] sm:$0xf]
    %v9627 = vld [vmem:[%s9515 + $0xdc] sm:$0x1]
    %v9628 = vld [vmem:[%s9515 + $0xf0] sm:$0xf]
    %v9629 = vld [vmem:[%s9515 + $0xf4] sm:$0x1]
    %v9630 = vld [vmem:[%s9515 + $0xf8] sm:$0xf]
    %v9631 = vld [vmem:[%s9515 + $0xfc] sm:$0x1]
    %v9632 = vld [vmem:[%s9515 + $0x100] sm:$0xf]
    %v9633 = vld [vmem:[%s9515 + $0x104] sm:$0x1]
    %v9634 = vld [vmem:[%s9515 + $0x108] sm:$0xf]
    %v9635 = vld [vmem:[%s9515 + $0x10c] sm:$0x1]
    %v9636 = vld [vmem:[%s9515 + $0x110] sm:$0xf]
    %v9637 = vld [vmem:[%s9515 + $0x114] sm:$0x1]
    %v9638 = vld [vmem:[%s9515 + $0x118] sm:$0xf]
    %v9639 = vld [vmem:[%s9515 + $0x11c] sm:$0x1]
    %v9640 = vld [vmem:[%s9515 + $0x120] sm:$0xf]
    %v9641 = vld [vmem:[%s9515 + $0x124] sm:$0x1]
    %v9642 = vld [vmem:[%s9515 + $0x128] sm:$0xf]
    %v9643 = vld [vmem:[%s9515 + $0x12c] sm:$0x1]
    %v9645 = vshrl.u32 %v9580, 16
    %v9647 = vrot.slane %v9645, 4
    %v9648 = vshll.u32 %v9580, 16
    %v9650 = vrot.slane %v9648, 5
    %v9651 = vor.u32 %v9647, %v9650
    %v9652 = vrot.slane %v9651, 4
    %v9654 = vshll.u32 %v9581, 16
    %v9656 = vrot.slane %v9654, 5
    %v9657 = vsel %vm153, %v9652, %v9656
    %v9659 = vshrl.u32 %v9582, 16
    %v9661 = vrot.slane %v9659, 4
    %v9662 = vshll.u32 %v9582, 16
    %v9664 = vrot.slane %v9662, 5
    %v9665 = vor.u32 %v9661, %v9664
    %v9666 = vrot.slane %v9665, 4
    %v9668 = vshll.u32 %v9583, 16
    %v9670 = vrot.slane %v9668, 5
    %v9671 = vsel %vm153, %v9666, %v9670
    %v9673 = vshrl.u32 %v9584, 16
    %v9675 = vrot.slane %v9673, 4
    %v9676 = vshll.u32 %v9584, 16
    %v9678 = vrot.slane %v9676, 5
    %v9679 = vor.u32 %v9675, %v9678
    %v9680 = vrot.slane %v9679, 4
    %v9682 = vshll.u32 %v9585, 16
    %v9684 = vrot.slane %v9682, 5
    %v9685 = vsel %vm153, %v9680, %v9684
    %v9687 = vshrl.u32 %v9586, 16
    %v9689 = vrot.slane %v9687, 4
    %v9690 = vshll.u32 %v9586, 16
    %v9692 = vrot.slane %v9690, 5
    %v9693 = vor.u32 %v9689, %v9692
    %v9694 = vrot.slane %v9693, 4
    %v9696 = vshll.u32 %v9587, 16
    %v9698 = vrot.slane %v9696, 5
    %v9699 = vsel %vm153, %v9694, %v9698
    %v9701 = vshrl.u32 %v9588, 16
    %v9703 = vrot.slane %v9701, 4
    %v9704 = vshll.u32 %v9588, 16
    %v9706 = vrot.slane %v9704, 5
    %v9707 = vor.u32 %v9703, %v9706
    %v9708 = vrot.slane %v9707, 4
    %v9710 = vshll.u32 %v9589, 16
    %v9712 = vrot.slane %v9710, 5
    %v9713 = vsel %vm153, %v9708, %v9712
    %v9715 = vshrl.u32 %v9590, 16
    %v9717 = vrot.slane %v9715, 4
    %v9718 = vshll.u32 %v9590, 16
    %v9720 = vrot.slane %v9718, 5
    %v9721 = vor.u32 %v9717, %v9720
    %v9722 = vrot.slane %v9721, 4
    %v9724 = vshll.u32 %v9591, 16
    %v9726 = vrot.slane %v9724, 5
    %v9727 = vsel %vm153, %v9722, %v9726
    %v9729 = vshrl.u32 %v9592, 16
    %v9731 = vrot.slane %v9729, 4
    %v9732 = vshll.u32 %v9592, 16
    %v9734 = vrot.slane %v9732, 5
    %v9735 = vor.u32 %v9731, %v9734
    %v9736 = vrot.slane %v9735, 4
    %v9738 = vshll.u32 %v9593, 16
    %v9740 = vrot.slane %v9738, 5
    %v9741 = vsel %vm153, %v9736, %v9740
    %v9743 = vshrl.u32 %v9594, 16
    %v9745 = vrot.slane %v9743, 4
    %v9746 = vshll.u32 %v9594, 16
    %v9748 = vrot.slane %v9746, 5
    %v9749 = vor.u32 %v9745, %v9748
    %v9750 = vrot.slane %v9749, 4
    %v9752 = vshll.u32 %v9595, 16
    %v9754 = vrot.slane %v9752, 5
    %v9755 = vsel %vm153, %v9750, %v9754
    %v9757 = vshrl.u32 %v9596, 16
    %v9759 = vrot.slane %v9757, 4
    %v9760 = vshll.u32 %v9596, 16
    %v9762 = vrot.slane %v9760, 5
    %v9763 = vor.u32 %v9759, %v9762
    %v9764 = vrot.slane %v9763, 4
    %v9766 = vshll.u32 %v9597, 16
    %v9768 = vrot.slane %v9766, 5
    %v9769 = vsel %vm153, %v9764, %v9768
    %v9771 = vshrl.u32 %v9598, 16
    %v9773 = vrot.slane %v9771, 4
    %v9774 = vshll.u32 %v9598, 16
    %v9776 = vrot.slane %v9774, 5
    %v9777 = vor.u32 %v9773, %v9776
    %v9778 = vrot.slane %v9777, 4
    %v9780 = vshll.u32 %v9599, 16
    %v9782 = vrot.slane %v9780, 5
    %v9783 = vsel %vm153, %v9778, %v9782
    %v9785 = vshrl.u32 %v9600, 16
    %v9787 = vrot.slane %v9785, 4
    %v9788 = vshll.u32 %v9600, 16
    %v9790 = vrot.slane %v9788, 5
    %v9791 = vor.u32 %v9787, %v9790
    %v9792 = vrot.slane %v9791, 4
    %v9794 = vshll.u32 %v9601, 16
    %v9796 = vrot.slane %v9794, 5
    %v9797 = vsel %vm153, %v9792, %v9796
    %v9799 = vshrl.u32 %v9602, 16
    %v9801 = vrot.slane %v9799, 4
    %v9802 = vshll.u32 %v9602, 16
    %v9804 = vrot.slane %v9802, 5
    %v9805 = vor.u32 %v9801, %v9804
    %v9806 = vrot.slane %v9805, 4
    %v9808 = vshll.u32 %v9603, 16
    %v9810 = vrot.slane %v9808, 5
    %v9811 = vsel %vm153, %v9806, %v9810
    %v9813 = vshrl.u32 %v9604, 16
    %v9815 = vrot.slane %v9813, 4
    %v9816 = vshll.u32 %v9604, 16
    %v9818 = vrot.slane %v9816, 5
    %v9819 = vor.u32 %v9815, %v9818
    %v9820 = vrot.slane %v9819, 4
    %v9822 = vshll.u32 %v9605, 16
    %v9824 = vrot.slane %v9822, 5
    %v9825 = vsel %vm153, %v9820, %v9824
    %v9827 = vshrl.u32 %v9606, 16
    %v9829 = vrot.slane %v9827, 4
    %v9830 = vshll.u32 %v9606, 16
    %v9832 = vrot.slane %v9830, 5
    %v9833 = vor.u32 %v9829, %v9832
    %v9834 = vrot.slane %v9833, 4
    %v9836 = vshll.u32 %v9607, 16
    %v9838 = vrot.slane %v9836, 5
    %v9839 = vsel %vm153, %v9834, %v9838
    %v9841 = vshrl.u32 %v9608, 16
    %v9843 = vrot.slane %v9841, 4
    %v9844 = vshll.u32 %v9608, 16
    %v9846 = vrot.slane %v9844, 5
    %v9847 = vor.u32 %v9843, %v9846
    %v9848 = vrot.slane %v9847, 4
    %v9850 = vshll.u32 %v9609, 16
    %v9852 = vrot.slane %v9850, 5
    %v9853 = vsel %vm153, %v9848, %v9852
    %v9855 = vshrl.u32 %v9610, 16
    %v9857 = vrot.slane %v9855, 4
    %v9858 = vshll.u32 %v9610, 16
    %v9860 = vrot.slane %v9858, 5
    %v9861 = vor.u32 %v9857, %v9860
    %v9862 = vrot.slane %v9861, 4
    %v9864 = vshll.u32 %v9611, 16
    %v9866 = vrot.slane %v9864, 5
    %v9867 = vsel %vm153, %v9862, %v9866
    %v9869 = vshrl.u32 %v9612, 16
    %v9871 = vrot.slane %v9869, 4
    %v9872 = vshll.u32 %v9612, 16
    %v9874 = vrot.slane %v9872, 5
    %v9875 = vor.u32 %v9871, %v9874
    %v9876 = vrot.slane %v9875, 4
    %v9878 = vshll.u32 %v9613, 16
    %v9880 = vrot.slane %v9878, 5
    %v9881 = vsel %vm153, %v9876, %v9880
    %v9883 = vshrl.u32 %v9614, 16
    %v9885 = vrot.slane %v9883, 4
    %v9886 = vshll.u32 %v9614, 16
    %v9888 = vrot.slane %v9886, 5
    %v9889 = vor.u32 %v9885, %v9888
    %v9890 = vrot.slane %v9889, 4
    %v9892 = vshll.u32 %v9615, 16
    %v9894 = vrot.slane %v9892, 5
    %v9895 = vsel %vm153, %v9890, %v9894
    %v9897 = vshrl.u32 %v9616, 16
    %v9899 = vrot.slane %v9897, 4
    %v9900 = vshll.u32 %v9616, 16
    %v9902 = vrot.slane %v9900, 5
    %v9903 = vor.u32 %v9899, %v9902
    %v9904 = vrot.slane %v9903, 4
    %v9906 = vshll.u32 %v9617, 16
    %v9908 = vrot.slane %v9906, 5
    %v9909 = vsel %vm153, %v9904, %v9908
    %v9911 = vshrl.u32 %v9618, 16
    %v9913 = vrot.slane %v9911, 4
    %v9914 = vshll.u32 %v9618, 16
    %v9916 = vrot.slane %v9914, 5
    %v9917 = vor.u32 %v9913, %v9916
    %v9918 = vrot.slane %v9917, 4
    %v9920 = vshll.u32 %v9619, 16
    %v9922 = vrot.slane %v9920, 5
    %v9923 = vsel %vm153, %v9918, %v9922
    %v9925 = vshrl.u32 %v9620, 16
    %v9927 = vrot.slane %v9925, 4
    %v9928 = vshll.u32 %v9620, 16
    %v9930 = vrot.slane %v9928, 5
    %v9931 = vor.u32 %v9927, %v9930
    %v9932 = vrot.slane %v9931, 4
    %v9934 = vshll.u32 %v9621, 16
    %v9936 = vrot.slane %v9934, 5
    %v9937 = vsel %vm153, %v9932, %v9936
    %v9939 = vshrl.u32 %v9622, 16
    %v9941 = vrot.slane %v9939, 4
    %v9942 = vshll.u32 %v9622, 16
    %v9944 = vrot.slane %v9942, 5
    %v9945 = vor.u32 %v9941, %v9944
    %v9946 = vrot.slane %v9945, 4
    %v9948 = vshll.u32 %v9623, 16
    %v9950 = vrot.slane %v9948, 5
    %v9951 = vsel %vm153, %v9946, %v9950
    %v9953 = vshrl.u32 %v9624, 16
    %v9955 = vrot.slane %v9953, 4
    %v9956 = vshll.u32 %v9624, 16
    %v9958 = vrot.slane %v9956, 5
    %v9959 = vor.u32 %v9955, %v9958
    %v9960 = vrot.slane %v9959, 4
    %v9962 = vshll.u32 %v9625, 16
    %v9964 = vrot.slane %v9962, 5
    %v9965 = vsel %vm153, %v9960, %v9964
    %v9967 = vshrl.u32 %v9626, 16
    %v9969 = vrot.slane %v9967, 4
    %v9970 = vshll.u32 %v9626, 16
    %v9972 = vrot.slane %v9970, 5
    %v9973 = vor.u32 %v9969, %v9972
    %v9974 = vrot.slane %v9973, 4
    %v9976 = vshll.u32 %v9627, 16
    %v9978 = vrot.slane %v9976, 5
    %v9979 = vsel %vm153, %v9974, %v9978
    %v9981 = vshrl.u32 %v9628, 16
    %v9983 = vrot.slane %v9981, 4
    %v9984 = vshll.u32 %v9628, 16
    %v9986 = vrot.slane %v9984, 5
    %v9987 = vor.u32 %v9983, %v9986
    %v9988 = vrot.slane %v9987, 4
    %v9990 = vshll.u32 %v9629, 16
    %v9992 = vrot.slane %v9990, 5
    %v9993 = vsel %vm153, %v9988, %v9992
    %v9995 = vshrl.u32 %v9630, 16
    %v9997 = vrot.slane %v9995, 4
    %v9998 = vshll.u32 %v9630, 16
    %v10000 = vrot.slane %v9998, 5
    %v10001 = vor.u32 %v9997, %v10000
    %v10002 = vrot.slane %v10001, 4
    %v10004 = vshll.u32 %v9631, 16
    %v10006 = vrot.slane %v10004, 5
    %v10007 = vsel %vm153, %v10002, %v10006
    %v10009 = vshrl.u32 %v9632, 16
    %v10011 = vrot.slane %v10009, 4
    %v10012 = vshll.u32 %v9632, 16
    %v10014 = vrot.slane %v10012, 5
    %v10015 = vor.u32 %v10011, %v10014
    %v10016 = vrot.slane %v10015, 4
    %v10018 = vshll.u32 %v9633, 16
    %v10020 = vrot.slane %v10018, 5
    %v10021 = vsel %vm153, %v10016, %v10020
    %v10023 = vshrl.u32 %v9634, 16
    %v10025 = vrot.slane %v10023, 4
    %v10026 = vshll.u32 %v9634, 16
    %v10028 = vrot.slane %v10026, 5
    %v10029 = vor.u32 %v10025, %v10028
    %v10030 = vrot.slane %v10029, 4
    %v10032 = vshll.u32 %v9635, 16
    %v10034 = vrot.slane %v10032, 5
    %v10035 = vsel %vm153, %v10030, %v10034
    %v10037 = vshrl.u32 %v9636, 16
    %v10039 = vrot.slane %v10037, 4
    %v10040 = vshll.u32 %v9636, 16
    %v10042 = vrot.slane %v10040, 5
    %v10043 = vor.u32 %v10039, %v10042
    %v10044 = vrot.slane %v10043, 4
    %v10046 = vshll.u32 %v9637, 16
    %v10048 = vrot.slane %v10046, 5
    %v10049 = vsel %vm153, %v10044, %v10048
    %v10051 = vshrl.u32 %v9638, 16
    %v10053 = vrot.slane %v10051, 4
    %v10054 = vshll.u32 %v9638, 16
    %v10056 = vrot.slane %v10054, 5
    %v10057 = vor.u32 %v10053, %v10056
    %v10058 = vrot.slane %v10057, 4
    %v10060 = vshll.u32 %v9639, 16
    %v10062 = vrot.slane %v10060, 5
    %v10063 = vsel %vm153, %v10058, %v10062
    %v10065 = vshrl.u32 %v9640, 16
    %v10067 = vrot.slane %v10065, 4
    %v10068 = vshll.u32 %v9640, 16
    %v10070 = vrot.slane %v10068, 5
    %v10071 = vor.u32 %v10067, %v10070
    %v10072 = vrot.slane %v10071, 4
    %v10074 = vshll.u32 %v9641, 16
    %v10076 = vrot.slane %v10074, 5
    %v10077 = vsel %vm153, %v10072, %v10076
    %v10079 = vshrl.u32 %v9642, 16
    %v10081 = vrot.slane %v10079, 4
    %v10082 = vshll.u32 %v9642, 16
    %v10084 = vrot.slane %v10082, 5
    %v10085 = vor.u32 %v10081, %v10084
    %v10086 = vrot.slane %v10085, 4
    %v10088 = vshll.u32 %v9643, 16
    %v10090 = vrot.slane %v10088, 5
    %v10091 = vsel %vm153, %v10086, %v10090
    %10092 = vrot.lane.b32.xlu0 %v9657, 16
    %v10093 = vpop.permute.xlu0 %10092
    %10094 = vrot.lane.b32.xlu0 %v9671, 16
    %v10095 = vpop.permute.xlu0 %10094
    %10096 = vrot.lane.b32.xlu0 %v9685, 16
    %v10097 = vpop.permute.xlu0 %10096
    %10098 = vrot.lane.b32.xlu0 %v9699, 16
    %v10099 = vpop.permute.xlu0 %10098
    %10100 = vrot.lane.b32.xlu0 %v9713, 16
    %v10101 = vpop.permute.xlu0 %10100
    %10102 = vrot.lane.b32.xlu0 %v9727, 16
    %v10103 = vpop.permute.xlu0 %10102
    %10104 = vrot.lane.b32.xlu0 %v9741, 16
    %v10105 = vpop.permute.xlu0 %10104
    %10106 = vrot.lane.b32.xlu0 %v9755, 16
    %v10107 = vpop.permute.xlu0 %10106
    %10108 = vrot.lane.b32.xlu0 %v9769, 16
    %v10109 = vpop.permute.xlu0 %10108
    %10110 = vrot.lane.b32.xlu0 %v9783, 16
    %v10111 = vpop.permute.xlu0 %10110
    %10112 = vrot.lane.b32.xlu0 %v9797, 16
    %v10113 = vpop.permute.xlu0 %10112
    %10114 = vrot.lane.b32.xlu0 %v9811, 16
    %v10115 = vpop.permute.xlu0 %10114
    %10116 = vrot.lane.b32.xlu0 %v9825, 16
    %v10117 = vpop.permute.xlu0 %10116
    %10118 = vrot.lane.b32.xlu0 %v9839, 16
    %v10119 = vpop.permute.xlu0 %10118
    %10120 = vrot.lane.b32.xlu0 %v9853, 16
    %v10121 = vpop.permute.xlu0 %10120
    %10122 = vrot.lane.b32.xlu0 %v9867, 16
    %v10123 = vpop.permute.xlu0 %10122
    %10124 = vrot.lane.b32.xlu0 %v9881, 16
    %v10125 = vpop.permute.xlu0 %10124
    %10126 = vrot.lane.b32.xlu0 %v9895, 16
    %v10127 = vpop.permute.xlu0 %10126
    %10128 = vrot.lane.b32.xlu0 %v9909, 16
    %v10129 = vpop.permute.xlu0 %10128
    %10130 = vrot.lane.b32.xlu0 %v9923, 16
    %v10131 = vpop.permute.xlu0 %10130
    %10132 = vrot.lane.b32.xlu0 %v9937, 16
    %v10133 = vpop.permute.xlu0 %10132
    %10134 = vrot.lane.b32.xlu0 %v9951, 16
    %v10135 = vpop.permute.xlu0 %10134
    %10136 = vrot.lane.b32.xlu0 %v9965, 16
    %v10137 = vpop.permute.xlu0 %10136
    %10138 = vrot.lane.b32.xlu0 %v9979, 16
    %v10139 = vpop.permute.xlu0 %10138
    %10140 = vrot.lane.b32.xlu0 %v9993, 16
    %v10141 = vpop.permute.xlu0 %10140
    %10142 = vrot.lane.b32.xlu0 %v10007, 16
    %v10143 = vpop.permute.xlu0 %10142
    %10144 = vrot.lane.b32.xlu0 %v10021, 16
    %v10145 = vpop.permute.xlu0 %10144
    %10146 = vrot.lane.b32.xlu0 %v10035, 16
    %v10147 = vpop.permute.xlu0 %10146
    %10148 = vrot.lane.b32.xlu0 %v10049, 16
    %v10149 = vpop.permute.xlu0 %10148
    %10150 = vrot.lane.b32.xlu0 %v10063, 16
    %v10151 = vpop.permute.xlu0 %10150
    %10152 = vrot.lane.b32.xlu0 %v10077, 16
    %v10153 = vpop.permute.xlu0 %10152
    %10154 = vrot.lane.b32.xlu0 %v10091, 16
    %v10155 = vpop.permute.xlu0 %10154
    %10188 = vst.msk [vmem:[#allocation2 + $0xc] sm:$0xf] %vm698, %v10093
    %10189 = vst.msk [vmem:[#allocation2 + $0x1c] sm:$0xf] %vm698, %v10095
    %10190 = vst.msk [vmem:[#allocation2 + $0x2c] sm:$0xf] %vm698, %v10097
    %10191 = vst.msk [vmem:[#allocation2 + $0x3c] sm:$0xf] %vm698, %v10099
    %10192 = vst.msk [vmem:[#allocation2 + $0x4c] sm:$0xf] %vm698, %v10101
    %10193 = vst.msk [vmem:[#allocation2 + $0x5c] sm:$0xf] %vm698, %v10103
    %10194 = vst.msk [vmem:[#allocation2 + $0x6c] sm:$0xf] %vm698, %v10105
    %10195 = vst.msk [vmem:[#allocation2 + $0x7c] sm:$0xf] %vm698, %v10107
    %10196 = vst.msk [vmem:[#allocation2 + $0x8c] sm:$0xf] %vm698, %v10109
    %10197 = vst.msk [vmem:[#allocation2 + $0x9c] sm:$0xf] %vm698, %v10111
    %10198 = vst.msk [vmem:[#allocation2 + $0xac] sm:$0xf] %vm698, %v10113
    %10199 = vst.msk [vmem:[#allocation2 + $0xbc] sm:$0xf] %vm698, %v10115
    %10200 = vst.msk [vmem:[#allocation2 + $0xcc] sm:$0xf] %vm698, %v10117
    %10201 = vst.msk [vmem:[#allocation2 + $0xdc] sm:$0xf] %vm698, %v10119
    %10202 = vst.msk [vmem:[#allocation2 + $0xec] sm:$0xf] %vm698, %v10121
    %10203 = vst.msk [vmem:[#allocation2 + $0xfc] sm:$0xf] %vm698, %v10123
    %10204 = vst.msk [vmem:[#allocation2 + $0x10c] sm:$0xf] %vm698, %v10125
    %10205 = vst.msk [vmem:[#allocation2 + $0x11c] sm:$0xf] %vm698, %v10127
    %10206 = vst.msk [vmem:[#allocation2 + $0x12c] sm:$0xf] %vm698, %v10129
    %10207 = vst.msk [vmem:[#allocation2 + $0x13c] sm:$0xf] %vm698, %v10131
    %10208 = vst.msk [vmem:[#allocation2 + $0x14c] sm:$0xf] %vm698, %v10133
    %10209 = vst.msk [vmem:[#allocation2 + $0x15c] sm:$0xf] %vm698, %v10135
    %10210 = vst.msk [vmem:[#allocation2 + $0x16c] sm:$0xf] %vm698, %v10137
    %10211 = vst.msk [vmem:[#allocation2 + $0x17c] sm:$0xf] %vm698, %v10139
    %10212 = vst.msk [vmem:[#allocation2 + $0x18c] sm:$0xf] %vm698, %v10141
    %10213 = vst.msk [vmem:[#allocation2 + $0x19c] sm:$0xf] %vm698, %v10143
    %10214 = vst.msk [vmem:[#allocation2 + $0x1ac] sm:$0xf] %vm698, %v10145
    %10215 = vst.msk [vmem:[#allocation2 + $0x1bc] sm:$0xf] %vm698, %v10147
    %10216 = vst.msk [vmem:[#allocation2 + $0x1cc] sm:$0xf] %vm698, %v10149
    %10217 = vst.msk [vmem:[#allocation2 + $0x1dc] sm:$0xf] %vm698, %v10151
    %10218 = vst.msk [vmem:[#allocation2 + $0x1ec] sm:$0xf] %vm698, %v10153
    %10219 = vst.msk [vmem:[#allocation2 + $0x1fc] sm:$0xf] %vm698, %v10155
    %v10220 = vld [vmem:[%s9515] sm:$0xe]
    %v10221 = vld [vmem:[%s9515 + $0x4] sm:$0x1]
    %v10222 = vld [vmem:[%s9515 + $0x8] sm:$0xe]
    %v10223 = vld [vmem:[%s9515 + $0xc] sm:$0x1]
    %v10224 = vld [vmem:[%s9515 + $0x10] sm:$0xe]
    %v10225 = vld [vmem:[%s9515 + $0x14] sm:$0x1]
    %v10226 = vld [vmem:[%s9515 + $0x18] sm:$0xe]
    %v10227 = vld [vmem:[%s9515 + $0x1c] sm:$0x1]
    %v10228 = vld [vmem:[%s9515 + $0x20] sm:$0xe]
    %v10229 = vld [vmem:[%s9515 + $0x24] sm:$0x1]
    %v10230 = vld [vmem:[%s9515 + $0x28] sm:$0xe]
    %v10231 = vld [vmem:[%s9515 + $0x2c] sm:$0x1]
    %v10232 = vld [vmem:[%s9515 + $0x30] sm:$0xe]
    %v10233 = vld [vmem:[%s9515 + $0x34] sm:$0x1]
    %v10234 = vld [vmem:[%s9515 + $0x38] sm:$0xe]
    %v10235 = vld [vmem:[%s9515 + $0x3c] sm:$0x1]
    %v10236 = vld [vmem:[%s9515 + $0x50] sm:$0xe]
    %v10237 = vld [vmem:[%s9515 + $0x54] sm:$0x1]
    %v10238 = vld [vmem:[%s9515 + $0x58] sm:$0xe]
    %v10239 = vld [vmem:[%s9515 + $0x5c] sm:$0x1]
    %v10240 = vld [vmem:[%s9515 + $0x60] sm:$0xe]
    %v10241 = vld [vmem:[%s9515 + $0x64] sm:$0x1]
    %v10242 = vld [vmem:[%s9515 + $0x68] sm:$0xe]
    %v10243 = vld [vmem:[%s9515 + $0x6c] sm:$0x1]
    %v10244 = vld [vmem:[%s9515 + $0x70] sm:$0xe]
    %v10245 = vld [vmem:[%s9515 + $0x74] sm:$0x1]
    %v10246 = vld [vmem:[%s9515 + $0x78] sm:$0xe]
    %v10247 = vld [vmem:[%s9515 + $0x7c] sm:$0x1]
    %v10248 = vld [vmem:[%s9515 + $0x80] sm:$0xe]
    %v10249 = vld [vmem:[%s9515 + $0x84] sm:$0x1]
    %v10250 = vld [vmem:[%s9515 + $0x88] sm:$0xe]
    %v10251 = vld [vmem:[%s9515 + $0x8c] sm:$0x1]
    %v10252 = vld [vmem:[%s9515 + $0xa0] sm:$0xe]
    %v10253 = vld [vmem:[%s9515 + $0xa4] sm:$0x1]
    %v10254 = vld [vmem:[%s9515 + $0xa8] sm:$0xe]
    %v10255 = vld [vmem:[%s9515 + $0xac] sm:$0x1]
    %v10256 = vld [vmem:[%s9515 + $0xb0] sm:$0xe]
    %v10257 = vld [vmem:[%s9515 + $0xb4] sm:$0x1]
    %v10258 = vld [vmem:[%s9515 + $0xb8] sm:$0xe]
    %v10259 = vld [vmem:[%s9515 + $0xbc] sm:$0x1]
    %v10260 = vld [vmem:[%s9515 + $0xc0] sm:$0xe]
    %v10261 = vld [vmem:[%s9515 + $0xc4] sm:$0x1]
    %v10262 = vld [vmem:[%s9515 + $0xc8] sm:$0xe]
    %v10263 = vld [vmem:[%s9515 + $0xcc] sm:$0x1]
    %v10264 = vld [vmem:[%s9515 + $0xd0] sm:$0xe]
    %v10265 = vld [vmem:[%s9515 + $0xd4] sm:$0x1]
    %v10266 = vld [vmem:[%s9515 + $0xd8] sm:$0xe]
    %v10267 = vld [vmem:[%s9515 + $0xdc] sm:$0x1]
    %v10268 = vld [vmem:[%s9515 + $0xf0] sm:$0xe]
    %v10269 = vld [vmem:[%s9515 + $0xf4] sm:$0x1]
    %v10270 = vld [vmem:[%s9515 + $0xf8] sm:$0xe]
    %v10271 = vld [vmem:[%s9515 + $0xfc] sm:$0x1]
    %v10272 = vld [vmem:[%s9515 + $0x100] sm:$0xe]
    %v10273 = vld [vmem:[%s9515 + $0x104] sm:$0x1]
    %v10274 = vld [vmem:[%s9515 + $0x108] sm:$0xe]
    %v10275 = vld [vmem:[%s9515 + $0x10c] sm:$0x1]
    %v10276 = vld [vmem:[%s9515 + $0x110] sm:$0xe]
    %v10277 = vld [vmem:[%s9515 + $0x114] sm:$0x1]
    %v10278 = vld [vmem:[%s9515 + $0x118] sm:$0xe]
    %v10279 = vld [vmem:[%s9515 + $0x11c] sm:$0x1]
    %v10280 = vld [vmem:[%s9515 + $0x120] sm:$0xe]
    %v10281 = vld [vmem:[%s9515 + $0x124] sm:$0x1]
    %v10282 = vld [vmem:[%s9515 + $0x128] sm:$0xe]
    %v10283 = vld [vmem:[%s9515 + $0x12c] sm:$0x1]
    %v10348 = vrot.slane %v10220, 5
    %v10349 = vrot.slane %v10348, 4
    %v10350 = vrot.slane %v10221, 5
    %v10351 = vsel %vm861, %v10349, %v10350
    %v10352 = vrot.slane %v10222, 5
    %v10353 = vrot.slane %v10352, 4
    %v10354 = vrot.slane %v10223, 5
    %v10355 = vsel %vm861, %v10353, %v10354
    %v10356 = vrot.slane %v10224, 5
    %v10357 = vrot.slane %v10356, 4
    %v10358 = vrot.slane %v10225, 5
    %v10359 = vsel %vm861, %v10357, %v10358
    %v10360 = vrot.slane %v10226, 5
    %v10361 = vrot.slane %v10360, 4
    %v10362 = vrot.slane %v10227, 5
    %v10363 = vsel %vm861, %v10361, %v10362
    %v10364 = vrot.slane %v10228, 5
    %v10365 = vrot.slane %v10364, 4
    %v10366 = vrot.slane %v10229, 5
    %v10367 = vsel %vm861, %v10365, %v10366
    %v10368 = vrot.slane %v10230, 5
    %v10369 = vrot.slane %v10368, 4
    %v10370 = vrot.slane %v10231, 5
    %v10371 = vsel %vm861, %v10369, %v10370
    %v10372 = vrot.slane %v10232, 5
    %v10373 = vrot.slane %v10372, 4
    %v10374 = vrot.slane %v10233, 5
    %v10375 = vsel %vm861, %v10373, %v10374
    %v10376 = vrot.slane %v10234, 5
    %v10377 = vrot.slane %v10376, 4
    %v10378 = vrot.slane %v10235, 5
    %v10379 = vsel %vm861, %v10377, %v10378
    %v10380 = vrot.slane %v10236, 5
    %v10381 = vrot.slane %v10380, 4
    %v10382 = vrot.slane %v10237, 5
    %v10383 = vsel %vm861, %v10381, %v10382
    %v10384 = vrot.slane %v10238, 5
    %v10385 = vrot.slane %v10384, 4
    %v10386 = vrot.slane %v10239, 5
    %v10387 = vsel %vm861, %v10385, %v10386
    %v10388 = vrot.slane %v10240, 5
    %v10389 = vrot.slane %v10388, 4
    %v10390 = vrot.slane %v10241, 5
    %v10391 = vsel %vm861, %v10389, %v10390
    %v10392 = vrot.slane %v10242, 5
    %v10393 = vrot.slane %v10392, 4
    %v10394 = vrot.slane %v10243, 5
    %v10395 = vsel %vm861, %v10393, %v10394
    %v10396 = vrot.slane %v10244, 5
    %v10397 = vrot.slane %v10396, 4
    %v10398 = vrot.slane %v10245, 5
    %v10399 = vsel %vm861, %v10397, %v10398
    %v10400 = vrot.slane %v10246, 5
    %v10401 = vrot.slane %v10400, 4
    %v10402 = vrot.slane %v10247, 5
    %v10403 = vsel %vm861, %v10401, %v10402
    %v10404 = vrot.slane %v10248, 5
    %v10405 = vrot.slane %v10404, 4
    %v10406 = vrot.slane %v10249, 5
    %v10407 = vsel %vm861, %v10405, %v10406
    %v10408 = vrot.slane %v10250, 5
    %v10409 = vrot.slane %v10408, 4
    %v10410 = vrot.slane %v10251, 5
    %v10411 = vsel %vm861, %v10409, %v10410
    %v10412 = vrot.slane %v10252, 5
    %v10413 = vrot.slane %v10412, 4
    %v10414 = vrot.slane %v10253, 5
    %v10415 = vsel %vm861, %v10413, %v10414
    %v10416 = vrot.slane %v10254, 5
    %v10417 = vrot.slane %v10416, 4
    %v10418 = vrot.slane %v10255, 5
    %v10419 = vsel %vm861, %v10417, %v10418
    %v10420 = vrot.slane %v10256, 5
    %v10421 = vrot.slane %v10420, 4
    %v10422 = vrot.slane %v10257, 5
    %v10423 = vsel %vm861, %v10421, %v10422
    %v10424 = vrot.slane %v10258, 5
    %v10425 = vrot.slane %v10424, 4
    %v10426 = vrot.slane %v10259, 5
    %v10427 = vsel %vm861, %v10425, %v10426
    %v10428 = vrot.slane %v10260, 5
    %v10429 = vrot.slane %v10428, 4
    %v10430 = vrot.slane %v10261, 5
    %v10431 = vsel %vm861, %v10429, %v10430
    %v10432 = vrot.slane %v10262, 5
    %v10433 = vrot.slane %v10432, 4
    %v10434 = vrot.slane %v10263, 5
    %v10435 = vsel %vm861, %v10433, %v10434
    %v10436 = vrot.slane %v10264, 5
    %v10437 = vrot.slane %v10436, 4
    %v10438 = vrot.slane %v10265, 5
    %v10439 = vsel %vm861, %v10437, %v10438
    %v10440 = vrot.slane %v10266, 5
    %v10441 = vrot.slane %v10440, 4
    %v10442 = vrot.slane %v10267, 5
    %v10443 = vsel %vm861, %v10441, %v10442
    %v10444 = vrot.slane %v10268, 5
    %v10445 = vrot.slane %v10444, 4
    %v10446 = vrot.slane %v10269, 5
    %v10447 = vsel %vm861, %v10445, %v10446
    %v10448 = vrot.slane %v10270, 5
    %v10449 = vrot.slane %v10448, 4
    %v10450 = vrot.slane %v10271, 5
    %v10451 = vsel %vm861, %v10449, %v10450
    %v10452 = vrot.slane %v10272, 5
    %v10453 = vrot.slane %v10452, 4
    %v10454 = vrot.slane %v10273, 5
    %v10455 = vsel %vm861, %v10453, %v10454
    %v10456 = vrot.slane %v10274, 5
    %v10457 = vrot.slane %v10456, 4
    %v10458 = vrot.slane %v10275, 5
    %v10459 = vsel %vm861, %v10457, %v10458
    %v10460 = vrot.slane %v10276, 5
    %v10461 = vrot.slane %v10460, 4
    %v10462 = vrot.slane %v10277, 5
    %v10463 = vsel %vm861, %v10461, %v10462
    %v10464 = vrot.slane %v10278, 5
    %v10465 = vrot.slane %v10464, 4
    %v10466 = vrot.slane %v10279, 5
    %v10467 = vsel %vm861, %v10465, %v10466
    %v10468 = vrot.slane %v10280, 5
    %v10469 = vrot.slane %v10468, 4
    %v10470 = vrot.slane %v10281, 5
    %v10471 = vsel %vm861, %v10469, %v10470
    %v10472 = vrot.slane %v10282, 5
    %v10473 = vrot.slane %v10472, 4
    %v10474 = vrot.slane %v10283, 5
    %v10475 = vsel %vm861, %v10473, %v10474
    %10476 = vrot.lane.b32.xlu0 %v10351, 32
    %v10477 = vpop.permute.xlu0 %10476
    %10478 = vrot.lane.b32.xlu0 %v10355, 32
    %v10479 = vpop.permute.xlu0 %10478
    %10480 = vrot.lane.b32.xlu0 %v10359, 32
    %v10481 = vpop.permute.xlu0 %10480
    %10482 = vrot.lane.b32.xlu0 %v10363, 32
    %v10483 = vpop.permute.xlu0 %10482
    %10484 = vrot.lane.b32.xlu0 %v10367, 32
    %v10485 = vpop.permute.xlu0 %10484
    %10486 = vrot.lane.b32.xlu0 %v10371, 32
    %v10487 = vpop.permute.xlu0 %10486
    %10488 = vrot.lane.b32.xlu0 %v10375, 32
    %v10489 = vpop.permute.xlu0 %10488
    %10490 = vrot.lane.b32.xlu0 %v10379, 32
    %v10491 = vpop.permute.xlu0 %10490
    %10492 = vrot.lane.b32.xlu0 %v10383, 32
    %v10493 = vpop.permute.xlu0 %10492
    %10494 = vrot.lane.b32.xlu0 %v10387, 32
    %v10495 = vpop.permute.xlu0 %10494
    %10496 = vrot.lane.b32.xlu0 %v10391, 32
    %v10497 = vpop.permute.xlu0 %10496
    %10498 = vrot.lane.b32.xlu0 %v10395, 32
    %v10499 = vpop.permute.xlu0 %10498
    %10500 = vrot.lane.b32.xlu0 %v10399, 32
    %v10501 = vpop.permute.xlu0 %10500
    %10502 = vrot.lane.b32.xlu0 %v10403, 32
    %v10503 = vpop.permute.xlu0 %10502
    %10504 = vrot.lane.b32.xlu0 %v10407, 32
    %v10505 = vpop.permute.xlu0 %10504
    %10506 = vrot.lane.b32.xlu0 %v10411, 32
    %v10507 = vpop.permute.xlu0 %10506
    %10508 = vrot.lane.b32.xlu0 %v10415, 32
    %v10509 = vpop.permute.xlu0 %10508
    %10510 = vrot.lane.b32.xlu0 %v10419, 32
    %v10511 = vpop.permute.xlu0 %10510
    %10512 = vrot.lane.b32.xlu0 %v10423, 32
    %v10513 = vpop.permute.xlu0 %10512
    %10514 = vrot.lane.b32.xlu0 %v10427, 32
    %v10515 = vpop.permute.xlu0 %10514
    %10516 = vrot.lane.b32.xlu0 %v10431, 32
    %v10517 = vpop.permute.xlu0 %10516
    %10518 = vrot.lane.b32.xlu0 %v10435, 32
    %v10519 = vpop.permute.xlu0 %10518
    %10520 = vrot.lane.b32.xlu0 %v10439, 32
    %v10521 = vpop.permute.xlu0 %10520
    %10522 = vrot.lane.b32.xlu0 %v10443, 32
    %v10523 = vpop.permute.xlu0 %10522
    %10524 = vrot.lane.b32.xlu0 %v10447, 32
    %v10525 = vpop.permute.xlu0 %10524
    %10526 = vrot.lane.b32.xlu0 %v10451, 32
    %v10527 = vpop.permute.xlu0 %10526
    %10528 = vrot.lane.b32.xlu0 %v10455, 32
    %v10529 = vpop.permute.xlu0 %10528
    %10530 = vrot.lane.b32.xlu0 %v10459, 32
    %v10531 = vpop.permute.xlu0 %10530
    %10532 = vrot.lane.b32.xlu0 %v10463, 32
    %v10533 = vpop.permute.xlu0 %10532
    %10534 = vrot.lane.b32.xlu0 %v10467, 32
    %v10535 = vpop.permute.xlu0 %10534
    %10536 = vrot.lane.b32.xlu0 %v10471, 32
    %v10537 = vpop.permute.xlu0 %10536
    %10538 = vrot.lane.b32.xlu0 %v10475, 32
    %v10539 = vpop.permute.xlu0 %10538
    %10572 = vst.msk [vmem:[#allocation2 + $0xc] sm:$0xf] %vm1086, %v10477
    %10573 = vst.msk [vmem:[#allocation2 + $0x1c] sm:$0xf] %vm1086, %v10479
    %10574 = vst.msk [vmem:[#allocation2 + $0x2c] sm:$0xf] %vm1086, %v10481
    %10575 = vst.msk [vmem:[#allocation2 + $0x3c] sm:$0xf] %vm1086, %v10483
    %10576 = vst.msk [vmem:[#allocation2 + $0x4c] sm:$0xf] %vm1086, %v10485
    %10577 = vst.msk [vmem:[#allocation2 + $0x5c] sm:$0xf] %vm1086, %v10487
    %10578 = vst.msk [vmem:[#allocation2 + $0x6c] sm:$0xf] %vm1086, %v10489
    %10579 = vst.msk [vmem:[#allocation2 + $0x7c] sm:$0xf] %vm1086, %v10491
    %10580 = vst.msk [vmem:[#allocation2 + $0x8c] sm:$0xf] %vm1086, %v10493
    %10581 = vst.msk [vmem:[#allocation2 + $0x9c] sm:$0xf] %vm1086, %v10495
    %10582 = vst.msk [vmem:[#allocation2 + $0xac] sm:$0xf] %vm1086, %v10497
    %10583 = vst.msk [vmem:[#allocation2 + $0xbc] sm:$0xf] %vm1086, %v10499
    %10584 = vst.msk [vmem:[#allocation2 + $0xcc] sm:$0xf] %vm1086, %v10501
    %10585 = vst.msk [vmem:[#allocation2 + $0xdc] sm:$0xf] %vm1086, %v10503
    %10586 = vst.msk [vmem:[#allocation2 + $0xec] sm:$0xf] %vm1086, %v10505
    %10587 = vst.msk [vmem:[#allocation2 + $0xfc] sm:$0xf] %vm1086, %v10507
    %10588 = vst.msk [vmem:[#allocation2 + $0x10c] sm:$0xf] %vm1086, %v10509
    %10589 = vst.msk [vmem:[#allocation2 + $0x11c] sm:$0xf] %vm1086, %v10511
    %10590 = vst.msk [vmem:[#allocation2 + $0x12c] sm:$0xf] %vm1086, %v10513
    %10591 = vst.msk [vmem:[#allocation2 + $0x13c] sm:$0xf] %vm1086, %v10515
    %10592 = vst.msk [vmem:[#allocation2 + $0x14c] sm:$0xf] %vm1086, %v10517
    %10593 = vst.msk [vmem:[#allocation2 + $0x15c] sm:$0xf] %vm1086, %v10519
    %10594 = vst.msk [vmem:[#allocation2 + $0x16c] sm:$0xf] %vm1086, %v10521
    %10595 = vst.msk [vmem:[#allocation2 + $0x17c] sm:$0xf] %vm1086, %v10523
    %10596 = vst.msk [vmem:[#allocation2 + $0x18c] sm:$0xf] %vm1086, %v10525
    %10597 = vst.msk [vmem:[#allocation2 + $0x19c] sm:$0xf] %vm1086, %v10527
    %10598 = vst.msk [vmem:[#allocation2 + $0x1ac] sm:$0xf] %vm1086, %v10529
    %10599 = vst.msk [vmem:[#allocation2 + $0x1bc] sm:$0xf] %vm1086, %v10531
    %10600 = vst.msk [vmem:[#allocation2 + $0x1cc] sm:$0xf] %vm1086, %v10533
    %10601 = vst.msk [vmem:[#allocation2 + $0x1dc] sm:$0xf] %vm1086, %v10535
    %10602 = vst.msk [vmem:[#allocation2 + $0x1ec] sm:$0xf] %vm1086, %v10537
    %10603 = vst.msk [vmem:[#allocation2 + $0x1fc] sm:$0xf] %vm1086, %v10539
    %v10604 = vld [vmem:[#allocation2] sm:$0xff]
    %v10605 = vld [vmem:[#allocation2 + $0x8] sm:$0xff]
    %v10606 = vld [vmem:[#allocation2 + $0x10] sm:$0xff]
    %v10607 = vld [vmem:[#allocation2 + $0x18] sm:$0xff]
    %v10608 = vld [vmem:[#allocation2 + $0x20] sm:$0xff]
    %v10609 = vld [vmem:[#allocation2 + $0x28] sm:$0xff]
    %v10610 = vld [vmem:[#allocation2 + $0x30] sm:$0xff]
    %v10611 = vld [vmem:[#allocation2 + $0x38] sm:$0xff]
    %v10612 = vld [vmem:[#allocation2 + $0x40] sm:$0xff]
    %v10613 = vld [vmem:[#allocation2 + $0x48] sm:$0xff]
    %v10614 = vld [vmem:[#allocation2 + $0x50] sm:$0xff]
    %v10615 = vld [vmem:[#allocation2 + $0x58] sm:$0xff]
    %v10616 = vld [vmem:[#allocation2 + $0x60] sm:$0xff]
    %v10617 = vld [vmem:[#allocation2 + $0x68] sm:$0xff]
    %v10618 = vld [vmem:[#allocation2 + $0x70] sm:$0xff]
    %v10619 = vld [vmem:[#allocation2 + $0x78] sm:$0xff]
    %v10620 = vld [vmem:[#allocation2 + $0x80] sm:$0xff]
    %v10621 = vld [vmem:[#allocation2 + $0x88] sm:$0xff]
    %v10622 = vld [vmem:[#allocation2 + $0x90] sm:$0xff]
    %v10623 = vld [vmem:[#allocation2 + $0x98] sm:$0xff]
    %v10624 = vld [vmem:[#allocation2 + $0xa0] sm:$0xff]
    %v10625 = vld [vmem:[#allocation2 + $0xa8] sm:$0xff]
    %v10626 = vld [vmem:[#allocation2 + $0xb0] sm:$0xff]
    %v10627 = vld [vmem:[#allocation2 + $0xb8] sm:$0xff]
    %v10628 = vld [vmem:[#allocation2 + $0xc0] sm:$0xff]
    %v10629 = vld [vmem:[#allocation2 + $0xc8] sm:$0xff]
    %v10630 = vld [vmem:[#allocation2 + $0xd0] sm:$0xff]
    %v10631 = vld [vmem:[#allocation2 + $0xd8] sm:$0xff]
    %v10632 = vld [vmem:[#allocation2 + $0xe0] sm:$0xff]
    %v10633 = vld [vmem:[#allocation2 + $0xe8] sm:$0xff]
    %v10634 = vld [vmem:[#allocation2 + $0xf0] sm:$0xff]
    %v10635 = vld [vmem:[#allocation2 + $0xf8] sm:$0xff]
    %v10636 = vld [vmem:[#allocation2 + $0x100] sm:$0xff]
    %v10637 = vld [vmem:[#allocation2 + $0x108] sm:$0xff]
    %v10638 = vld [vmem:[#allocation2 + $0x110] sm:$0xff]
    %v10639 = vld [vmem:[#allocation2 + $0x118] sm:$0xff]
    %v10640 = vld [vmem:[#allocation2 + $0x120] sm:$0xff]
    %v10641 = vld [vmem:[#allocation2 + $0x128] sm:$0xff]
    %v10642 = vld [vmem:[#allocation2 + $0x130] sm:$0xff]
    %v10643 = vld [vmem:[#allocation2 + $0x138] sm:$0xff]
    %v10644 = vld [vmem:[#allocation2 + $0x140] sm:$0xff]
    %v10645 = vld [vmem:[#allocation2 + $0x148] sm:$0xff]
    %v10646 = vld [vmem:[#allocation2 + $0x150] sm:$0xff]
    %v10647 = vld [vmem:[#allocation2 + $0x158] sm:$0xff]
    %v10648 = vld [vmem:[#allocation2 + $0x160] sm:$0xff]
    %v10649 = vld [vmem:[#allocation2 + $0x168] sm:$0xff]
    %v10650 = vld [vmem:[#allocation2 + $0x170] sm:$0xff]
    %v10651 = vld [vmem:[#allocation2 + $0x178] sm:$0xff]
    %v10652 = vld [vmem:[#allocation2 + $0x180] sm:$0xff]
    %v10653 = vld [vmem:[#allocation2 + $0x188] sm:$0xff]
    %v10654 = vld [vmem:[#allocation2 + $0x190] sm:$0xff]
    %v10655 = vld [vmem:[#allocation2 + $0x198] sm:$0xff]
    %v10656 = vld [vmem:[#allocation2 + $0x1a0] sm:$0xff]
    %v10657 = vld [vmem:[#allocation2 + $0x1a8] sm:$0xff]
    %v10658 = vld [vmem:[#allocation2 + $0x1b0] sm:$0xff]
    %v10659 = vld [vmem:[#allocation2 + $0x1b8] sm:$0xff]
    %v10660 = vld [vmem:[#allocation2 + $0x1c0] sm:$0xff]
    %v10661 = vld [vmem:[#allocation2 + $0x1c8] sm:$0xff]
    %v10662 = vld [vmem:[#allocation2 + $0x1d0] sm:$0xff]
    %v10663 = vld [vmem:[#allocation2 + $0x1d8] sm:$0xff]
    %v10664 = vld [vmem:[#allocation2 + $0x1e0] sm:$0xff]
    %v10665 = vld [vmem:[#allocation2 + $0x1e8] sm:$0xff]
    %v10666 = vld [vmem:[#allocation2 + $0x1f0] sm:$0xff]
    %v10667 = vld [vmem:[#allocation2 + $0x1f8] sm:$0xff]
    %v10668 = vld [vmem:[%s1] sm:$0xf]
    %v10669 = vld [vmem:[%s1 + $0x4] sm:$0xf]
    %v10670 = vld [vmem:[%s1 + $0x8] sm:$0xf]
    %v10671 = vld [vmem:[%s1 + $0xc] sm:$0xf]
    %v10672 = vld [vmem:[%s1 + $0x10] sm:$0xf]
    %v10673 = vld [vmem:[%s1 + $0x14] sm:$0xf]
    %v10674 = vld [vmem:[%s1 + $0x18] sm:$0xf]
    %v10675 = vld [vmem:[%s1 + $0x1c] sm:$0xf]
    %v10676 = vld [vmem:[%s1 + $0x20] sm:$0xf]
    %v10677 = vld [vmem:[%s1 + $0x24] sm:$0xf]
    %v10678 = vld [vmem:[%s1 + $0x28] sm:$0xf]
    %v10679 = vld [vmem:[%s1 + $0x2c] sm:$0xf]
    %v10680 = vld [vmem:[%s1 + $0x30] sm:$0xf]
    %v10681 = vld [vmem:[%s1 + $0x34] sm:$0xf]
    %v10682 = vld [vmem:[%s1 + $0x38] sm:$0xf]
    %v10683 = vld [vmem:[%s1 + $0x3c] sm:$0xf]
    %v10684 = vld [vmem:[%s1 + $0x40] sm:$0xf]
    %v10685 = vld [vmem:[%s1 + $0x44] sm:$0xf]
    %v10686 = vld [vmem:[%s1 + $0x48] sm:$0xf]
    %v10687 = vld [vmem:[%s1 + $0x4c] sm:$0xf]
    %v10688 = vld [vmem:[%s1 + $0x50] sm:$0xf]
    %v10689 = vld [vmem:[%s1 + $0x54] sm:$0xf]
    %v10690 = vld [vmem:[%s1 + $0x58] sm:$0xf]
    %v10691 = vld [vmem:[%s1 + $0x5c] sm:$0xf]
    %v10692 = vld [vmem:[%s1 + $0x60] sm:$0xf]
    %v10693 = vld [vmem:[%s1 + $0x64] sm:$0xf]
    %v10694 = vld [vmem:[%s1 + $0x68] sm:$0xf]
    %v10695 = vld [vmem:[%s1 + $0x6c] sm:$0xf]
    %v10696 = vld [vmem:[%s1 + $0x70] sm:$0xf]
    %v10697 = vld [vmem:[%s1 + $0x74] sm:$0xf]
    %v10698 = vld [vmem:[%s1 + $0x78] sm:$0xf]
    %v10699 = vld [vmem:[%s1 + $0x7c] sm:$0xf]
    %v10700 = vld [vmem:[%s1 + $0x80] sm:$0xf]
    %v10701 = vld [vmem:[%s1 + $0x84] sm:$0xf]
    %v10702 = vld [vmem:[%s1 + $0x88] sm:$0xf]
    %v10703 = vld [vmem:[%s1 + $0x8c] sm:$0xf]
    %v10704 = vld [vmem:[%s1 + $0x90] sm:$0xf]
    %v10705 = vld [vmem:[%s1 + $0x94] sm:$0xf]
    %v10706 = vld [vmem:[%s1 + $0x98] sm:$0xf]
    %v10707 = vld [vmem:[%s1 + $0x9c] sm:$0xf]
    %v10708 = vld [vmem:[%s1 + $0xa0] sm:$0xf]
    %v10709 = vld [vmem:[%s1 + $0xa4] sm:$0xf]
    %v10710 = vld [vmem:[%s1 + $0xa8] sm:$0xf]
    %v10711 = vld [vmem:[%s1 + $0xac] sm:$0xf]
    %v10712 = vld [vmem:[%s1 + $0xb0] sm:$0xf]
    %v10713 = vld [vmem:[%s1 + $0xb4] sm:$0xf]
    %v10714 = vld [vmem:[%s1 + $0xb8] sm:$0xf]
    %v10715 = vld [vmem:[%s1 + $0xbc] sm:$0xf]
    %v10716 = vld [vmem:[%s1 + $0xc0] sm:$0xf]
    %v10717 = vld [vmem:[%s1 + $0xc4] sm:$0xf]
    %v10718 = vld [vmem:[%s1 + $0xc8] sm:$0xf]
    %v10719 = vld [vmem:[%s1 + $0xcc] sm:$0xf]
    %v10720 = vld [vmem:[%s1 + $0xd0] sm:$0xf]
    %v10721 = vld [vmem:[%s1 + $0xd4] sm:$0xf]
    %v10786 = vunpack.c.l.b16 %v10604
    %v10787 = vunpack.c.h.b16 %v10604
    %v10788 = vunpack.c.l.b16 %v10605
    %v10789 = vunpack.c.h.b16 %v10605
    %v10790 = vunpack.c.l.b16 %v10606
    %v10791 = vunpack.c.h.b16 %v10606
    %v10792 = vunpack.c.l.b16 %v10607
    %v10793 = vunpack.c.h.b16 %v10607
    %v10794 = vunpack.c.l.b16 %v10608
    %v10795 = vunpack.c.h.b16 %v10608
    %v10796 = vunpack.c.l.b16 %v10609
    %v10797 = vunpack.c.h.b16 %v10609
    %v10798 = vunpack.c.l.b16 %v10610
    %v10799 = vunpack.c.h.b16 %v10610
    %v10800 = vunpack.c.l.b16 %v10611
    %v10801 = vunpack.c.h.b16 %v10611
    %v10802 = vunpack.c.l.b16 %v10612
    %v10803 = vunpack.c.h.b16 %v10612
    %v10804 = vunpack.c.l.b16 %v10613
    %v10805 = vunpack.c.h.b16 %v10613
    %v10806 = vunpack.c.l.b16 %v10614
    %v10807 = vunpack.c.h.b16 %v10614
    %v10808 = vunpack.c.l.b16 %v10615
    %v10809 = vunpack.c.h.b16 %v10615
    %v10810 = vunpack.c.l.b16 %v10616
    %v10811 = vunpack.c.h.b16 %v10616
    %v10812 = vunpack.c.l.b16 %v10617
    %v10813 = vunpack.c.h.b16 %v10617
    %v10814 = vunpack.c.l.b16 %v10618
    %v10815 = vunpack.c.h.b16 %v10618
    %v10816 = vunpack.c.l.b16 %v10619
    %v10817 = vunpack.c.h.b16 %v10619
    %v10818 = vunpack.c.l.b16 %v10620
    %v10819 = vunpack.c.h.b16 %v10620
    %v10820 = vunpack.c.l.b16 %v10621
    %v10821 = vunpack.c.h.b16 %v10621
    %v10822 = vunpack.c.l.b16 %v10622
    %v10823 = vunpack.c.h.b16 %v10622
    %v10824 = vunpack.c.l.b16 %v10623
    %v10825 = vunpack.c.h.b16 %v10623
    %v10826 = vunpack.c.l.b16 %v10624
    %v10827 = vunpack.c.h.b16 %v10624
    %v10828 = vunpack.c.l.b16 %v10625
    %v10829 = vunpack.c.h.b16 %v10625
    %v10830 = vunpack.c.l.b16 %v10626
    %v10831 = vunpack.c.h.b16 %v10626
    %v10832 = vunpack.c.l.b16 %v10627
    %v10833 = vunpack.c.h.b16 %v10627
    %v10834 = vunpack.c.l.b16 %v10628
    %v10835 = vunpack.c.h.b16 %v10628
    %v10836 = vunpack.c.l.b16 %v10629
    %v10837 = vunpack.c.h.b16 %v10629
    %v10838 = vunpack.c.l.b16 %v10630
    %v10839 = vunpack.c.h.b16 %v10630
    %v10840 = vunpack.c.l.b16 %v10631
    %v10841 = vunpack.c.h.b16 %v10631
    %v10842 = vunpack.c.l.b16 %v10632
    %v10843 = vunpack.c.h.b16 %v10632
    %v10844 = vunpack.c.l.b16 %v10633
    %v10845 = vunpack.c.h.b16 %v10633
    %v10846 = vunpack.c.l.b16 %v10634
    %v10847 = vunpack.c.h.b16 %v10634
    %v10848 = vunpack.c.l.b16 %v10635
    %v10849 = vunpack.c.h.b16 %v10635
    %v10850 = vunpack.c.l.b16 %v10636
    %v10851 = vunpack.c.h.b16 %v10636
    %v10852 = vunpack.c.l.b16 %v10637
    %v10853 = vunpack.c.h.b16 %v10637
    %v10854 = vunpack.c.l.b16 %v10638
    %v10855 = vunpack.c.h.b16 %v10638
    %v10856 = vunpack.c.l.b16 %v10639
    %v10857 = vunpack.c.h.b16 %v10639
    %v10858 = vunpack.c.l.b16 %v10640
    %v10859 = vunpack.c.h.b16 %v10640
    %v10860 = vunpack.c.l.b16 %v10641
    %v10861 = vunpack.c.h.b16 %v10641
    %v10862 = vunpack.c.l.b16 %v10642
    %v10863 = vunpack.c.h.b16 %v10642
    %v10864 = vunpack.c.l.b16 %v10643
    %v10865 = vunpack.c.h.b16 %v10643
    %v10866 = vunpack.c.l.b16 %v10644
    %v10867 = vunpack.c.h.b16 %v10644
    %v10868 = vunpack.c.l.b16 %v10645
    %v10869 = vunpack.c.h.b16 %v10645
    %v10870 = vunpack.c.l.b16 %v10646
    %v10871 = vunpack.c.h.b16 %v10646
    %v10872 = vunpack.c.l.b16 %v10647
    %v10873 = vunpack.c.h.b16 %v10647
    %v10874 = vunpack.c.l.b16 %v10648
    %v10875 = vunpack.c.h.b16 %v10648
    %v10876 = vunpack.c.l.b16 %v10649
    %v10877 = vunpack.c.h.b16 %v10649
    %v10878 = vunpack.c.l.b16 %v10650
    %v10879 = vunpack.c.h.b16 %v10650
    %v10880 = vunpack.c.l.b16 %v10651
    %v10881 = vunpack.c.h.b16 %v10651
    %v10882 = vunpack.c.l.b16 %v10652
    %v10883 = vunpack.c.h.b16 %v10652
    %v10884 = vunpack.c.l.b16 %v10653
    %v10885 = vunpack.c.h.b16 %v10653
    %v10886 = vunpack.c.l.b16 %v10654
    %v10887 = vunpack.c.h.b16 %v10654
    %v10888 = vunpack.c.l.b16 %v10655
    %v10889 = vunpack.c.h.b16 %v10655
    %v10890 = vunpack.c.l.b16 %v10656
    %v10891 = vunpack.c.h.b16 %v10656
    %v10892 = vunpack.c.l.b16 %v10657
    %v10893 = vunpack.c.h.b16 %v10657
    %v10894 = vunpack.c.l.b16 %v10658
    %v10895 = vunpack.c.h.b16 %v10658
    %v10896 = vunpack.c.l.b16 %v10659
    %v10897 = vunpack.c.h.b16 %v10659
    %v10898 = vunpack.c.l.b16 %v10660
    %v10899 = vunpack.c.h.b16 %v10660
    %v10900 = vunpack.c.l.b16 %v10661
    %v10901 = vunpack.c.h.b16 %v10661
    %v10902 = vunpack.c.l.b16 %v10662
    %v10903 = vunpack.c.h.b16 %v10662
    %v10904 = vunpack.c.l.b16 %v10663
    %v10905 = vunpack.c.h.b16 %v10663
    %v10906 = vunpack.c.l.b16 %v10664
    %v10907 = vunpack.c.h.b16 %v10664
    %v10908 = vunpack.c.l.b16 %v10665
    %v10909 = vunpack.c.h.b16 %v10665
    %v10910 = vunpack.c.l.b16 %v10666
    %v10911 = vunpack.c.h.b16 %v10666
    %v10912 = vunpack.c.l.b16 %v10667
    %v10913 = vunpack.c.h.b16 %v10667
    %v10914 = vpack.c.b16 %v10790, %v10786
    %v10915 = vpack.c.b16 %v10791, %v10787
    %v10916 = vpack.c.b16 %v10792, %v10788
    %v10917 = vpack.c.b16 %v10793, %v10789
    %v10918 = vpack.c.b16 %v10798, %v10794
    %v10919 = vpack.c.b16 %v10799, %v10795
    %v10920 = vpack.c.b16 %v10800, %v10796
    %v10921 = vpack.c.b16 %v10801, %v10797
    %v10922 = vpack.c.b16 %v10806, %v10802
    %v10923 = vpack.c.b16 %v10807, %v10803
    %v10924 = vpack.c.b16 %v10808, %v10804
    %v10925 = vpack.c.b16 %v10809, %v10805
    %v10926 = vpack.c.b16 %v10814, %v10810
    %v10927 = vpack.c.b16 %v10815, %v10811
    %v10928 = vpack.c.b16 %v10816, %v10812
    %v10929 = vpack.c.b16 %v10817, %v10813
    %v10930 = vpack.c.b16 %v10822, %v10818
    %v10931 = vpack.c.b16 %v10823, %v10819
    %v10932 = vpack.c.b16 %v10824, %v10820
    %v10933 = vpack.c.b16 %v10825, %v10821
    %v10934 = vpack.c.b16 %v10830, %v10826
    %v10935 = vpack.c.b16 %v10831, %v10827
    %v10936 = vpack.c.b16 %v10832, %v10828
    %v10937 = vpack.c.b16 %v10833, %v10829
    %v10938 = vpack.c.b16 %v10838, %v10834
    %v10939 = vpack.c.b16 %v10839, %v10835
    %v10940 = vpack.c.b16 %v10840, %v10836
    %v10941 = vpack.c.b16 %v10841, %v10837
    %v10942 = vpack.c.b16 %v10846, %v10842
    %v10943 = vpack.c.b16 %v10847, %v10843
    %v10944 = vpack.c.b16 %v10848, %v10844
    %v10945 = vpack.c.b16 %v10849, %v10845
    %v10946 = vpack.c.b16 %v10854, %v10850
    %v10947 = vpack.c.b16 %v10855, %v10851
    %v10948 = vpack.c.b16 %v10856, %v10852
    %v10949 = vpack.c.b16 %v10857, %v10853
    %v10950 = vpack.c.b16 %v10862, %v10858
    %v10951 = vpack.c.b16 %v10863, %v10859
    %v10952 = vpack.c.b16 %v10864, %v10860
    %v10953 = vpack.c.b16 %v10865, %v10861
    %v10954 = vpack.c.b16 %v10870, %v10866
    %v10955 = vpack.c.b16 %v10871, %v10867
    %v10956 = vpack.c.b16 %v10872, %v10868
    %v10957 = vpack.c.b16 %v10873, %v10869
    %v10958 = vpack.c.b16 %v10878, %v10874
    %v10959 = vpack.c.b16 %v10879, %v10875
    %v10960 = vpack.c.b16 %v10880, %v10876
    %v10961 = vpack.c.b16 %v10881, %v10877
    %v10962 = vpack.c.b16 %v10886, %v10882
    %v10963 = vpack.c.b16 %v10887, %v10883
    %v10964 = vpack.c.b16 %v10888, %v10884
    %v10965 = vpack.c.b16 %v10889, %v10885
    %v10966 = vpack.c.b16 %v10894, %v10890
    %v10967 = vpack.c.b16 %v10895, %v10891
    %v10968 = vpack.c.b16 %v10896, %v10892
    %v10969 = vpack.c.b16 %v10897, %v10893
    %v10970 = vpack.c.b16 %v10902, %v10898
    %v10971 = vpack.c.b16 %v10903, %v10899
    %v10972 = vpack.c.b16 %v10904, %v10900
    %v10973 = vpack.c.b16 %v10905, %v10901
    %v10974 = vpack.c.b16 %v10910, %v10906
    %v10975 = vpack.c.b16 %v10911, %v10907
    %v10976 = vpack.c.b16 %v10912, %v10908
    %v10977 = vpack.c.b16 %v10913, %v10909
    %v11080 = vunpack.c.l.b16 %v10668
    %v11081 = vunpack.c.l.b16 %v10669
    %v11082 = vunpack.c.l.b16 %v10670
    %v11083 = vunpack.c.l.b16 %v10671
    %v11084 = vunpack.c.l.b16 %v10672
    %v11085 = vunpack.c.l.b16 %v10673
    %v11086 = vunpack.c.l.b16 %v10674
    %v11087 = vunpack.c.l.b16 %v10675
    %v11088 = vunpack.c.l.b16 %v10676
    %v11089 = vunpack.c.l.b16 %v10677
    %v11090 = vunpack.c.l.b16 %v10678
    %v11091 = vunpack.c.l.b16 %v10679
    %v11092 = vunpack.c.l.b16 %v10680
    %v11093 = vunpack.c.l.b16 %v10681
    %v11094 = vunpack.c.l.b16 %v10682
    %v11095 = vunpack.c.l.b16 %v10683
    %v11096 = vunpack.c.l.b16 %v10684
    %v11097 = vunpack.c.l.b16 %v10685
    %v11098 = vunpack.c.l.b16 %v10686
    %v11099 = vunpack.c.l.b16 %v10687
    %v11100 = vunpack.c.l.b16 %v10688
    %v11101 = vunpack.c.l.b16 %v10689
    %v11102 = vunpack.c.l.b16 %v10690
    %v11103 = vunpack.c.l.b16 %v10691
    %v11104 = vunpack.c.l.b16 %v10692
    %v11105 = vunpack.c.l.b16 %v10693
    %v11106 = vunpack.c.l.b16 %v10694
    %v11107 = vunpack.c.l.b16 %v10695
    %v11108 = vunpack.c.l.b16 %v10696
    %v11109 = vunpack.c.l.b16 %v10697
    %v11110 = vunpack.c.l.b16 %v10698
    %v11111 = vunpack.c.l.b16 %v10699
    %v11112 = vunpack.c.l.b16 %v10700
    %v11113 = vunpack.c.l.b16 %v10701
    %v11114 = vunpack.c.l.b16 %v10702
    %v11115 = vunpack.c.l.b16 %v10703
    %v11116 = vunpack.c.l.b16 %v10704
    %v11117 = vunpack.c.l.b16 %v10705
    %v11118 = vunpack.c.l.b16 %v10706
    %v11119 = vunpack.c.l.b16 %v10707
    %v11120 = vunpack.c.l.b16 %v10708
    %v11121 = vunpack.c.l.b16 %v10709
    %v11122 = vunpack.c.l.b16 %v10710
    %v11123 = vunpack.c.l.b16 %v10711
    %v11124 = vunpack.c.l.b16 %v10712
    %v11125 = vunpack.c.l.b16 %v10713
    %v11126 = vunpack.c.l.b16 %v10714
    %v11127 = vunpack.c.l.b16 %v10715
    %v11128 = vunpack.c.l.b16 %v10716
    %v11129 = vunpack.c.l.b16 %v10717
    %v11130 = vunpack.c.l.b16 %v10718
    %v11131 = vunpack.c.l.b16 %v10719
    %v11132 = vunpack.c.l.b16 %v10720
    %v11133 = vunpack.c.l.b16 %v10721
    %v11134 = vpack.c.b16 %v11081, %v11080
    %v11135 = vpack.c.b16 %v11083, %v11082
    %v11136 = vpack.c.b16 %v11085, %v11084
    %v11137 = vpack.c.b16 %v11087, %v11086
    %v11138 = vpack.c.b16 %v11089, %v11088
    %v11139 = vpack.c.b16 %v11091, %v11090
    %v11140 = vpack.c.b16 %v11093, %v11092
    %v11141 = vpack.c.b16 %v11095, %v11094
    %v11142 = vpack.c.b16 %v11097, %v11096
    %v11143 = vpack.c.b16 %v11099, %v11098
    %v11144 = vpack.c.b16 %v11101, %v11100
    %v11145 = vpack.c.b16 %v11103, %v11102
    %v11146 = vpack.c.b16 %v11105, %v11104
    %v11147 = vpack.c.b16 %v11107, %v11106
    %v11148 = vpack.c.b16 %v11109, %v11108
    %v11149 = vpack.c.b16 %v11111, %v11110
    %v11150 = vpack.c.b16 %v11113, %v11112
    %v11151 = vpack.c.b16 %v11115, %v11114
    %v11152 = vpack.c.b16 %v11117, %v11116
    %v11153 = vpack.c.b16 %v11119, %v11118
    %v11154 = vpack.c.b16 %v11121, %v11120
    %v11155 = vpack.c.b16 %v11123, %v11122
    %v11156 = vpack.c.b16 %v11125, %v11124
    %v11157 = vpack.c.b16 %v11127, %v11126
    %v11158 = vpack.c.b16 %v11129, %v11128
    %v11159 = vpack.c.b16 %v11131, %v11130
    %v11160 = vpack.c.b16 %v11133, %v11132
    %vm11188 = vcmask 392192
    %v11190 = vsel %vm11188, %v10917, 0
    %v11193 = vsel %vm11188, %v10921, 0
    %v11196 = vsel %vm11188, %v10925, 0
    %v11199 = vsel %vm11188, %v10929, 0
    %v11202 = vsel %vm11188, %v10933, 0
    %v11205 = vsel %vm11188, %v10937, 0
    %v11208 = vsel %vm11188, %v10941, 0
    %v11211 = vsel %vm11188, %v10945, 0
    %v11214 = vsel %vm11188, %v10949, 0
    %v11217 = vsel %vm11188, %v10953, 0
    %v11220 = vsel %vm11188, %v10957, 0
    %v11223 = vsel %vm11188, %v10961, 0
    %v11226 = vsel %vm11188, %v10965, 0
    %v11229 = vsel %vm11188, %v10969, 0
    %v11232 = vsel %vm11188, %v10973, 0
    %v11235 = vsel %vm11188, %v10977, 0
    %11237 = vmatprep.subr.bf16.mxu0 0
    %11238 = vmatpush1.bf16.msra.mxu0 %v11141
    %11239 = vmatprep.subr.bf16.mxu0 0
    %11240 = vmatpush1.bf16.msra.mxu0 %v11140
    %11241 = vmatprep.subr.bf16.mxu0 0
    %11242 = vmatpush1.bf16.msra.mxu0 %v11139
    %11243 = vmatprep.subr.bf16.mxu0 0
    %11244 = vmatpush1.bf16.msra.mxu0 %v11138
    %11245 = vmatprep.subr.bf16.mxu0 0
    %11246 = vmatpush1.bf16.msra.mxu0 %v11137
    %11247 = vmatprep.subr.bf16.mxu0 0
    %11248 = vmatpush1.bf16.msra.mxu0 %v11136
    %11249 = vmatprep.subr.bf16.mxu0 0
    %11250 = vmatpush1.bf16.msra.mxu0 %v11135
    %11251 = vmatprep.subr.bf16.mxu0 0
    %11252 = vmatpush1.bf16.msra.mxu0 %v11134
    %11253 = vmatprep.subr.bf16.mxu0 0
    %11254 = vmatpush2.bf16.msra.mxu0 %v11149
    %11255 = vmatprep.subr.bf16.mxu0 0
    %11256 = vmatpush2.bf16.msra.mxu0 %v11148
    %11257 = vmatprep.subr.bf16.mxu0 0
    %11258 = vmatpush2.bf16.msra.mxu0 %v11147
    %11259 = vmatprep.subr.bf16.mxu0 0
    %11260 = vmatpush2.bf16.msra.mxu0 %v11146
    %11261 = vmatprep.subr.bf16.mxu0 0
    %11262 = vmatpush2.bf16.msra.mxu0 %v11145
    %11263 = vmatprep.subr.bf16.mxu0 0
    %11264 = vmatpush2.bf16.msra.mxu0 %v11144
    %11265 = vmatprep.subr.bf16.mxu0 0
    %11266 = vmatpush2.bf16.msra.mxu0 %v11143
    %11267 = vmatprep.subr.bf16.mxu0 0
    %11268 = vmatpush2.bf16.msra.mxu0 %v11142
    %11269 = vmatprep.mubr.bf16.mxu0 %v10915
    %11270 = vmatmul.mubr.bf16.gmra.mxu0 %v10914
    %v11271 = vpop.f32.mrf.mxu0
    %v11272 = vadd.f32 0.0, %v11271
    %v11273 = vpop.f32.mrf.mxu0
    %v11274 = vpop.f32.mrf.mxu0
    %v11275 = vadd.f32 0.0, %v11274
    %v11276 = vpop.f32.mrf.mxu0
    %11277 = vmatprep.mubr.bf16.mxu0 %v10919
    %11278 = vmatmul.mubr.bf16.gmra.mxu0 %v10918
    %v11279 = vpop.f32.mrf.mxu0
    %v11280 = vadd.f32 0.0, %v11279
    %v11281 = vpop.f32.mrf.mxu0
    %v11282 = vpop.f32.mrf.mxu0
    %v11283 = vadd.f32 0.0, %v11282
    %v11284 = vpop.f32.mrf.mxu0
    %11285 = vmatprep.mubr.bf16.mxu0 %v10923
    %11286 = vmatmul.mubr.bf16.gmra.mxu0 %v10922
    %v11287 = vpop.f32.mrf.mxu0
    %v11288 = vadd.f32 0.0, %v11287
    %v11289 = vpop.f32.mrf.mxu0
    %v11290 = vpop.f32.mrf.mxu0
    %v11291 = vadd.f32 0.0, %v11290
    %v11292 = vpop.f32.mrf.mxu0
    %11293 = vmatprep.mubr.bf16.mxu0 %v10927
    %11294 = vmatmul.mubr.bf16.gmra.mxu0 %v10926
    %v11295 = vpop.f32.mrf.mxu0
    %v11296 = vadd.f32 0.0, %v11295
    %v11297 = vpop.f32.mrf.mxu0
    %v11298 = vpop.f32.mrf.mxu0
    %v11299 = vadd.f32 0.0, %v11298
    %v11300 = vpop.f32.mrf.mxu0
    %11301 = vmatprep.mubr.bf16.mxu0 %v10931
    %11302 = vmatmul.mubr.bf16.gmra.mxu0 %v10930
    %v11303 = vpop.f32.mrf.mxu0
    %v11304 = vadd.f32 0.0, %v11303
    %v11305 = vpop.f32.mrf.mxu0
    %v11306 = vpop.f32.mrf.mxu0
    %v11307 = vadd.f32 0.0, %v11306
    %v11308 = vpop.f32.mrf.mxu0
    %11309 = vmatprep.mubr.bf16.mxu0 %v10935
    %11310 = vmatmul.mubr.bf16.gmra.mxu0 %v10934
    %v11311 = vpop.f32.mrf.mxu0
    %v11312 = vadd.f32 0.0, %v11311
    %v11313 = vpop.f32.mrf.mxu0
    %v11314 = vpop.f32.mrf.mxu0
    %v11315 = vadd.f32 0.0, %v11314
    %v11316 = vpop.f32.mrf.mxu0
    %11317 = vmatprep.mubr.bf16.mxu0 %v10939
    %11318 = vmatmul.mubr.bf16.gmra.mxu0 %v10938
    %v11319 = vpop.f32.mrf.mxu0
    %v11320 = vadd.f32 0.0, %v11319
    %v11321 = vpop.f32.mrf.mxu0
    %v11322 = vpop.f32.mrf.mxu0
    %v11323 = vadd.f32 0.0, %v11322
    %v11324 = vpop.f32.mrf.mxu0
    %11325 = vmatprep.mubr.bf16.mxu0 %v10943
    %11326 = vmatmul.mubr.bf16.gmra.mxu0 %v10942
    %v11327 = vpop.f32.mrf.mxu0
    %v11328 = vadd.f32 0.0, %v11327
    %v11329 = vpop.f32.mrf.mxu0
    %v11330 = vpop.f32.mrf.mxu0
    %v11331 = vadd.f32 0.0, %v11330
    %v11332 = vpop.f32.mrf.mxu0
    %11333 = vmatprep.mubr.bf16.mxu0 %v10947
    %11334 = vmatmul.mubr.bf16.gmra.mxu0 %v10946
    %v11335 = vpop.f32.mrf.mxu0
    %v11336 = vadd.f32 0.0, %v11335
    %v11337 = vpop.f32.mrf.mxu0
    %v11338 = vpop.f32.mrf.mxu0
    %v11339 = vadd.f32 0.0, %v11338
    %v11340 = vpop.f32.mrf.mxu0
    %11341 = vmatprep.mubr.bf16.mxu0 %v10951
    %11342 = vmatmul.mubr.bf16.gmra.mxu0 %v10950
    %v11343 = vpop.f32.mrf.mxu0
    %v11344 = vadd.f32 0.0, %v11343
    %v11345 = vpop.f32.mrf.mxu0
    %v11346 = vpop.f32.mrf.mxu0
    %v11347 = vadd.f32 0.0, %v11346
    %v11348 = vpop.f32.mrf.mxu0
    %11349 = vmatprep.mubr.bf16.mxu0 %v10955
    %11350 = vmatmul.mubr.bf16.gmra.mxu0 %v10954
    %v11351 = vpop.f32.mrf.mxu0
    %v11352 = vadd.f32 0.0, %v11351
    %v11353 = vpop.f32.mrf.mxu0
    %v11354 = vpop.f32.mrf.mxu0
    %v11355 = vadd.f32 0.0, %v11354
    %v11356 = vpop.f32.mrf.mxu0
    %11357 = vmatprep.mubr.bf16.mxu0 %v10959
    %11358 = vmatmul.mubr.bf16.gmra.mxu0 %v10958
    %v11359 = vpop.f32.mrf.mxu0
    %v11360 = vadd.f32 0.0, %v11359
    %v11361 = vpop.f32.mrf.mxu0
    %v11362 = vpop.f32.mrf.mxu0
    %v11363 = vadd.f32 0.0, %v11362
    %v11364 = vpop.f32.mrf.mxu0
    %11365 = vmatprep.mubr.bf16.mxu0 %v10963
    %11366 = vmatmul.mubr.bf16.gmra.mxu0 %v10962
    %v11367 = vpop.f32.mrf.mxu0
    %v11368 = vadd.f32 0.0, %v11367
    %v11369 = vpop.f32.mrf.mxu0
    %v11370 = vpop.f32.mrf.mxu0
    %v11371 = vadd.f32 0.0, %v11370
    %v11372 = vpop.f32.mrf.mxu0
    %11373 = vmatprep.mubr.bf16.mxu0 %v10967
    %11374 = vmatmul.mubr.bf16.gmra.mxu0 %v10966
    %v11375 = vpop.f32.mrf.mxu0
    %v11376 = vadd.f32 0.0, %v11375
    %v11377 = vpop.f32.mrf.mxu0
    %v11378 = vpop.f32.mrf.mxu0
    %v11379 = vadd.f32 0.0, %v11378
    %v11380 = vpop.f32.mrf.mxu0
    %11381 = vmatprep.mubr.bf16.mxu0 %v10971
    %11382 = vmatmul.mubr.bf16.gmra.mxu0 %v10970
    %v11383 = vpop.f32.mrf.mxu0
    %v11384 = vadd.f32 0.0, %v11383
    %v11385 = vpop.f32.mrf.mxu0
    %v11386 = vpop.f32.mrf.mxu0
    %v11387 = vadd.f32 0.0, %v11386
    %v11388 = vpop.f32.mrf.mxu0
    %11389 = vmatprep.mubr.bf16.mxu0 %v10975
    %11390 = vmatmul.mubr.bf16.gmra.mxu0 %v10974
    %v11391 = vpop.f32.mrf.mxu0
    %v11392 = vadd.f32 0.0, %v11391
    %v11393 = vpop.f32.mrf.mxu0
    %v11394 = vpop.f32.mrf.mxu0
    %v11395 = vadd.f32 0.0, %v11394
    %v11396 = vpop.f32.mrf.mxu0
    %11397 = vdwg.mxu0
    %11398 = vmatprep.subr.bf16.mxu0 0
    %11399 = vmatpush1.bf16.msra.mxu0 %v11157
    %11400 = vmatprep.subr.bf16.mxu0 0
    %11401 = vmatpush1.bf16.msra.mxu0 %v11156
    %11402 = vmatprep.subr.bf16.mxu0 0
    %11403 = vmatpush1.bf16.msra.mxu0 %v11155
    %11404 = vmatprep.subr.bf16.mxu0 0
    %11405 = vmatpush1.bf16.msra.mxu0 %v11154
    %11406 = vmatprep.subr.bf16.mxu0 0
    %11407 = vmatpush1.bf16.msra.mxu0 %v11153
    %11408 = vmatprep.subr.bf16.mxu0 0
    %11409 = vmatpush1.bf16.msra.mxu0 %v11152
    %11410 = vmatprep.subr.bf16.mxu0 0
    %11411 = vmatpush1.bf16.msra.mxu0 %v11151
    %11412 = vmatprep.subr.bf16.mxu0 0
    %11413 = vmatpush1.bf16.msra.mxu0 %v11150
    %11414 = vmatprep.subr.bf16.mxu0 0
    %11415 = vmatpush2.bf16.msra.mxu0 0
    %11416 = vmatprep.subr.bf16.mxu0 0
    %11417 = vmatpush2.bf16.msra.mxu0 0
    %11418 = vmatprep.subr.bf16.mxu0 0
    %11419 = vmatpush2.bf16.msra.mxu0 0
    %11420 = vmatprep.subr.bf16.mxu0 0
    %11421 = vmatpush2.bf16.msra.mxu0 0
    %11422 = vmatprep.subr.bf16.mxu0 0
    %11423 = vmatpush2.bf16.msra.mxu0 0
    %11424 = vmatprep.subr.bf16.mxu0 0
    %11425 = vmatpush2.bf16.msra.mxu0 %v11160
    %11426 = vmatprep.subr.bf16.mxu0 0
    %11427 = vmatpush2.bf16.msra.mxu0 %v11159
    %11428 = vmatprep.subr.bf16.mxu0 0
    %11429 = vmatpush2.bf16.msra.mxu0 %v11158
    %11430 = vmatprep.mubr.bf16.mxu0 %v11190
    %11431 = vmatmul.mubr.bf16.gmra.mxu0 %v10916
    %v11432 = vpop.f32.mrf.mxu0
    %v11433 = vadd.f32 %v11272, %v11432
    %v11434 = vpop.f32.mrf.mxu0
    %v11435 = vpop.f32.mrf.mxu0
    %v11436 = vadd.f32 %v11275, %v11435
    %v11437 = vpop.f32.mrf.mxu0
    %11438 = vmatprep.mubr.bf16.mxu0 %v11193
    %11439 = vmatmul.mubr.bf16.gmra.mxu0 %v10920
    %v11440 = vpop.f32.mrf.mxu0
    %v11441 = vadd.f32 %v11280, %v11440
    %v11442 = vpop.f32.mrf.mxu0
    %v11443 = vpop.f32.mrf.mxu0
    %v11444 = vadd.f32 %v11283, %v11443
    %v11445 = vpop.f32.mrf.mxu0
    %11446 = vmatprep.mubr.bf16.mxu0 %v11196
    %11447 = vmatmul.mubr.bf16.gmra.mxu0 %v10924
    %v11448 = vpop.f32.mrf.mxu0
    %v11449 = vadd.f32 %v11288, %v11448
    %v11450 = vpop.f32.mrf.mxu0
    %v11451 = vpop.f32.mrf.mxu0
    %v11452 = vadd.f32 %v11291, %v11451
    %v11453 = vpop.f32.mrf.mxu0
    %11454 = vmatprep.mubr.bf16.mxu0 %v11199
    %11455 = vmatmul.mubr.bf16.gmra.mxu0 %v10928
    %v11456 = vpop.f32.mrf.mxu0
    %v11457 = vadd.f32 %v11296, %v11456
    %v11458 = vpop.f32.mrf.mxu0
    %v11459 = vpop.f32.mrf.mxu0
    %v11460 = vadd.f32 %v11299, %v11459
    %v11461 = vpop.f32.mrf.mxu0
    %11462 = vmatprep.mubr.bf16.mxu0 %v11202
    %11463 = vmatmul.mubr.bf16.gmra.mxu0 %v10932
    %v11464 = vpop.f32.mrf.mxu0
    %v11465 = vadd.f32 %v11304, %v11464
    %v11466 = vpop.f32.mrf.mxu0
    %v11467 = vpop.f32.mrf.mxu0
    %v11468 = vadd.f32 %v11307, %v11467
    %v11469 = vpop.f32.mrf.mxu0
    %11470 = vmatprep.mubr.bf16.mxu0 %v11205
    %11471 = vmatmul.mubr.bf16.gmra.mxu0 %v10936
    %v11472 = vpop.f32.mrf.mxu0
    %v11473 = vadd.f32 %v11312, %v11472
    %v11474 = vpop.f32.mrf.mxu0
    %v11475 = vpop.f32.mrf.mxu0
    %v11476 = vadd.f32 %v11315, %v11475
    %v11477 = vpop.f32.mrf.mxu0
    %11478 = vmatprep.mubr.bf16.mxu0 %v11208
    %11479 = vmatmul.mubr.bf16.gmra.mxu0 %v10940
    %v11480 = vpop.f32.mrf.mxu0
    %v11481 = vadd.f32 %v11320, %v11480
    %v11482 = vpop.f32.mrf.mxu0
    %v11483 = vpop.f32.mrf.mxu0
    %v11484 = vadd.f32 %v11323, %v11483
    %v11485 = vpop.f32.mrf.mxu0
    %11486 = vmatprep.mubr.bf16.mxu0 %v11211
    %11487 = vmatmul.mubr.bf16.gmra.mxu0 %v10944
    %v11488 = vpop.f32.mrf.mxu0
    %v11489 = vadd.f32 %v11328, %v11488
    %v11490 = vpop.f32.mrf.mxu0
    %v11491 = vpop.f32.mrf.mxu0
    %v11492 = vadd.f32 %v11331, %v11491
    %v11493 = vpop.f32.mrf.mxu0
    %11494 = vmatprep.mubr.bf16.mxu0 %v11214
    %11495 = vmatmul.mubr.bf16.gmra.mxu0 %v10948
    %v11496 = vpop.f32.mrf.mxu0
    %v11497 = vadd.f32 %v11336, %v11496
    %v11498 = vpop.f32.mrf.mxu0
    %v11499 = vpop.f32.mrf.mxu0
    %v11500 = vadd.f32 %v11339, %v11499
    %v11501 = vpop.f32.mrf.mxu0
    %11502 = vmatprep.mubr.bf16.mxu0 %v11217
    %11503 = vmatmul.mubr.bf16.gmra.mxu0 %v10952
    %v11504 = vpop.f32.mrf.mxu0
    %v11505 = vadd.f32 %v11344, %v11504
    %v11506 = vpop.f32.mrf.mxu0
    %v11507 = vpop.f32.mrf.mxu0
    %v11508 = vadd.f32 %v11347, %v11507
    %v11509 = vpop.f32.mrf.mxu0
    %11510 = vmatprep.mubr.bf16.mxu0 %v11220
    %11511 = vmatmul.mubr.bf16.gmra.mxu0 %v10956
    %v11512 = vpop.f32.mrf.mxu0
    %v11513 = vadd.f32 %v11352, %v11512
    %v11514 = vpop.f32.mrf.mxu0
    %v11515 = vpop.f32.mrf.mxu0
    %v11516 = vadd.f32 %v11355, %v11515
    %v11517 = vpop.f32.mrf.mxu0
    %11518 = vmatprep.mubr.bf16.mxu0 %v11223
    %11519 = vmatmul.mubr.bf16.gmra.mxu0 %v10960
    %v11520 = vpop.f32.mrf.mxu0
    %v11521 = vadd.f32 %v11360, %v11520
    %v11522 = vpop.f32.mrf.mxu0
    %v11523 = vpop.f32.mrf.mxu0
    %v11524 = vadd.f32 %v11363, %v11523
    %v11525 = vpop.f32.mrf.mxu0
    %11526 = vmatprep.mubr.bf16.mxu0 %v11226
    %11527 = vmatmul.mubr.bf16.gmra.mxu0 %v10964
    %v11528 = vpop.f32.mrf.mxu0
    %v11529 = vadd.f32 %v11368, %v11528
    %v11530 = vpop.f32.mrf.mxu0
    %v11531 = vpop.f32.mrf.mxu0
    %v11532 = vadd.f32 %v11371, %v11531
    %v11533 = vpop.f32.mrf.mxu0
    %11534 = vmatprep.mubr.bf16.mxu0 %v11229
    %11535 = vmatmul.mubr.bf16.gmra.mxu0 %v10968
    %v11536 = vpop.f32.mrf.mxu0
    %v11537 = vadd.f32 %v11376, %v11536
    %v11538 = vpop.f32.mrf.mxu0
    %v11539 = vpop.f32.mrf.mxu0
    %v11540 = vadd.f32 %v11379, %v11539
    %v11541 = vpop.f32.mrf.mxu0
    %11542 = vmatprep.mubr.bf16.mxu0 %v11232
    %11543 = vmatmul.mubr.bf16.gmra.mxu0 %v10972
    %v11544 = vpop.f32.mrf.mxu0
    %v11545 = vadd.f32 %v11384, %v11544
    %v11546 = vpop.f32.mrf.mxu0
    %v11547 = vpop.f32.mrf.mxu0
    %v11548 = vadd.f32 %v11387, %v11547
    %v11549 = vpop.f32.mrf.mxu0
    %11550 = vmatprep.mubr.bf16.mxu0 %v11235
    %11551 = vmatmul.mubr.bf16.gmra.mxu0 %v10976
    %v11552 = vpop.f32.mrf.mxu0
    %v11553 = vadd.f32 %v11392, %v11552
    %v11554 = vpop.f32.mrf.mxu0
    %v11555 = vpop.f32.mrf.mxu0
    %v11556 = vadd.f32 %v11395, %v11555
    %v11557 = vpop.f32.mrf.mxu0
    %11558 = vdwg.mxu0
    %v11559 = vld [vmem:[%s2] sm:$0x1]
    %v11561 = vlaneseq
    %v11562 = vshrl.u32 %v11561, 7
    %v11563 = vsub.s32 0, %v11562
    %v11564 = vrot.slane %v11559, %v11563
    %v11566 = vmul.f32 %v11433, %v11564
    %v11567 = vmul.f32 %v11436, %v11564
    %v11568 = vmul.f32 %v11441, %v11564
    %v11569 = vmul.f32 %v11444, %v11564
    %v11570 = vmul.f32 %v11449, %v11564
    %v11571 = vmul.f32 %v11452, %v11564
    %v11572 = vmul.f32 %v11457, %v11564
    %v11573 = vmul.f32 %v11460, %v11564
    %v11574 = vmul.f32 %v11465, %v11564
    %v11575 = vmul.f32 %v11468, %v11564
    %v11576 = vmul.f32 %v11473, %v11564
    %v11577 = vmul.f32 %v11476, %v11564
    %v11578 = vmul.f32 %v11481, %v11564
    %v11579 = vmul.f32 %v11484, %v11564
    %v11580 = vmul.f32 %v11489, %v11564
    %v11581 = vmul.f32 %v11492, %v11564
    %v11582 = vmul.f32 %v11497, %v11564
    %v11583 = vmul.f32 %v11500, %v11564
    %v11584 = vmul.f32 %v11505, %v11564
    %v11585 = vmul.f32 %v11508, %v11564
    %v11586 = vmul.f32 %v11513, %v11564
    %v11587 = vmul.f32 %v11516, %v11564
    %v11588 = vmul.f32 %v11521, %v11564
    %v11589 = vmul.f32 %v11524, %v11564
    %v11590 = vmul.f32 %v11529, %v11564
    %v11591 = vmul.f32 %v11532, %v11564
    %v11592 = vmul.f32 %v11537, %v11564
    %v11593 = vmul.f32 %v11540, %v11564
    %v11594 = vmul.f32 %v11545, %v11564
    %v11595 = vmul.f32 %v11548, %v11564
    %v11596 = vmul.f32 %v11553, %v11564
    %v11597 = vmul.f32 %v11556, %v11564
    %v11598 = vld [vmem:[%s3] sm:$0x1]
    %v11600 = vlaneseq
    %v11601 = vshrl.u32 %v11600, 7
    %v11602 = vsub.s32 0, %v11601
    %v11603 = vrot.slane %v11598, %v11602
    %v11605 = vadd.f32 %v11566, %v11603
    %v11606 = vadd.f32 %v11567, %v11603
    %v11607 = vadd.f32 %v11568, %v11603
    %v11608 = vadd.f32 %v11569, %v11603
    %v11609 = vadd.f32 %v11570, %v11603
    %v11610 = vadd.f32 %v11571, %v11603
    %v11611 = vadd.f32 %v11572, %v11603
    %v11612 = vadd.f32 %v11573, %v11603
    %v11613 = vadd.f32 %v11574, %v11603
    %v11614 = vadd.f32 %v11575, %v11603
    %v11615 = vadd.f32 %v11576, %v11603
    %v11616 = vadd.f32 %v11577, %v11603
    %v11617 = vadd.f32 %v11578, %v11603
    %v11618 = vadd.f32 %v11579, %v11603
    %v11619 = vadd.f32 %v11580, %v11603
    %v11620 = vadd.f32 %v11581, %v11603
    %v11621 = vadd.f32 %v11582, %v11603
    %v11622 = vadd.f32 %v11583, %v11603
    %v11623 = vadd.f32 %v11584, %v11603
    %v11624 = vadd.f32 %v11585, %v11603
    %v11625 = vadd.f32 %v11586, %v11603
    %v11626 = vadd.f32 %v11587, %v11603
    %v11627 = vadd.f32 %v11588, %v11603
    %v11628 = vadd.f32 %v11589, %v11603
    %v11629 = vadd.f32 %v11590, %v11603
    %v11630 = vadd.f32 %v11591, %v11603
    %v11631 = vadd.f32 %v11592, %v11603
    %v11632 = vadd.f32 %v11593, %v11603
    %v11633 = vadd.f32 %v11594, %v11603
    %v11634 = vadd.f32 %v11595, %v11603
    %v11635 = vadd.f32 %v11596, %v11603
    %v11636 = vadd.f32 %v11597, %v11603
    %v11637 = vld [vmem:[%s4] sm:$0xf]
    %v11638 = vld [vmem:[%s4 + $0x4] sm:$0xf]
    %v11639 = vld [vmem:[%s4 + $0x8] sm:$0xf]
    %v11640 = vld [vmem:[%s4 + $0xc] sm:$0xf]
    %v11641 = vld [vmem:[%s4 + $0x10] sm:$0xf]
    %v11642 = vld [vmem:[%s4 + $0x14] sm:$0xf]
    %v11643 = vld [vmem:[%s4 + $0x18] sm:$0xf]
    %v11644 = vld [vmem:[%s4 + $0x1c] sm:$0xf]
    %v11645 = vld [vmem:[%s4 + $0x20] sm:$0xf]
    %v11646 = vld [vmem:[%s4 + $0x24] sm:$0xf]
    %v11647 = vld [vmem:[%s4 + $0x28] sm:$0xf]
    %v11648 = vld [vmem:[%s4 + $0x2c] sm:$0xf]
    %v11649 = vld [vmem:[%s4 + $0x30] sm:$0xf]
    %v11650 = vld [vmem:[%s4 + $0x34] sm:$0xf]
    %v11651 = vld [vmem:[%s4 + $0x38] sm:$0xf]
    %v11652 = vld [vmem:[%s4 + $0x3c] sm:$0xf]
    %v11653 = vld [vmem:[%s4 + $0x40] sm:$0xf]
    %v11654 = vld [vmem:[%s4 + $0x44] sm:$0xf]
    %v11655 = vld [vmem:[%s4 + $0x48] sm:$0xf]
    %v11656 = vld [vmem:[%s4 + $0x4c] sm:$0xf]
    %v11657 = vld [vmem:[%s4 + $0x50] sm:$0xf]
    %v11658 = vld [vmem:[%s4 + $0x54] sm:$0xf]
    %v11659 = vld [vmem:[%s4 + $0x58] sm:$0xf]
    %v11660 = vld [vmem:[%s4 + $0x5c] sm:$0xf]
    %v11661 = vld [vmem:[%s4 + $0x60] sm:$0xf]
    %v11662 = vld [vmem:[%s4 + $0x64] sm:$0xf]
    %v11663 = vld [vmem:[%s4 + $0x68] sm:$0xf]
    %v11664 = vld [vmem:[%s4 + $0x6c] sm:$0xf]
    %v11665 = vld [vmem:[%s4 + $0x70] sm:$0xf]
    %v11666 = vld [vmem:[%s4 + $0x74] sm:$0xf]
    %v11667 = vld [vmem:[%s4 + $0x78] sm:$0xf]
    %v11668 = vld [vmem:[%s4 + $0x7c] sm:$0xf]
    %v11669 = vunpack.c.l.bf16 %v11637
    %v11670 = vunpack.c.l.bf16 %v11638
    %v11671 = vunpack.c.l.bf16 %v11639
    %v11672 = vunpack.c.l.bf16 %v11640
    %v11673 = vunpack.c.l.bf16 %v11641
    %v11674 = vunpack.c.l.bf16 %v11642
    %v11675 = vunpack.c.l.bf16 %v11643
    %v11676 = vunpack.c.l.bf16 %v11644
    %v11677 = vunpack.c.l.bf16 %v11645
    %v11678 = vunpack.c.l.bf16 %v11646
    %v11679 = vunpack.c.l.bf16 %v11647
    %v11680 = vunpack.c.l.bf16 %v11648
    %v11681 = vunpack.c.l.bf16 %v11649
    %v11682 = vunpack.c.l.bf16 %v11650
    %v11683 = vunpack.c.l.bf16 %v11651
    %v11684 = vunpack.c.l.bf16 %v11652
    %v11685 = vunpack.c.l.bf16 %v11653
    %v11686 = vunpack.c.l.bf16 %v11654
    %v11687 = vunpack.c.l.bf16 %v11655
    %v11688 = vunpack.c.l.bf16 %v11656
    %v11689 = vunpack.c.l.bf16 %v11657
    %v11690 = vunpack.c.l.bf16 %v11658
    %v11691 = vunpack.c.l.bf16 %v11659
    %v11692 = vunpack.c.l.bf16 %v11660
    %v11693 = vunpack.c.l.bf16 %v11661
    %v11694 = vunpack.c.l.bf16 %v11662
    %v11695 = vunpack.c.l.bf16 %v11663
    %v11696 = vunpack.c.l.bf16 %v11664
    %v11697 = vunpack.c.l.bf16 %v11665
    %v11698 = vunpack.c.l.bf16 %v11666
    %v11699 = vunpack.c.l.bf16 %v11667
    %v11700 = vunpack.c.l.bf16 %v11668
    %v11701 = vadd.f32 %v11605, %v11669
    %v11702 = vadd.f32 %v11606, %v11670
    %v11703 = vadd.f32 %v11607, %v11671
    %v11704 = vadd.f32 %v11608, %v11672
    %v11705 = vadd.f32 %v11609, %v11673
    %v11706 = vadd.f32 %v11610, %v11674
    %v11707 = vadd.f32 %v11611, %v11675
    %v11708 = vadd.f32 %v11612, %v11676
    %v11709 = vadd.f32 %v11613, %v11677
    %v11710 = vadd.f32 %v11614, %v11678
    %v11711 = vadd.f32 %v11615, %v11679
    %v11712 = vadd.f32 %v11616, %v11680
    %v11713 = vadd.f32 %v11617, %v11681
    %v11714 = vadd.f32 %v11618, %v11682
    %v11715 = vadd.f32 %v11619, %v11683
    %v11716 = vadd.f32 %v11620, %v11684
    %v11717 = vadd.f32 %v11621, %v11685
    %v11718 = vadd.f32 %v11622, %v11686
    %v11719 = vadd.f32 %v11623, %v11687
    %v11720 = vadd.f32 %v11624, %v11688
    %v11721 = vadd.f32 %v11625, %v11689
    %v11722 = vadd.f32 %v11626, %v11690
    %v11723 = vadd.f32 %v11627, %v11691
    %v11724 = vadd.f32 %v11628, %v11692
    %v11725 = vadd.f32 %v11629, %v11693
    %v11726 = vadd.f32 %v11630, %v11694
    %v11727 = vadd.f32 %v11631, %v11695
    %v11728 = vadd.f32 %v11632, %v11696
    %v11729 = vadd.f32 %v11633, %v11697
    %v11730 = vadd.f32 %v11634, %v11698
    %v11731 = vadd.f32 %v11635, %v11699
    %v11732 = vadd.f32 %v11636, %v11700
    %v11733 = vmax.f32 %v11701, 0.0
    %v11734 = vmax.f32 %v11702, 0.0
    %v11735 = vmax.f32 %v11703, 0.0
    %v11736 = vmax.f32 %v11704, 0.0
    %v11737 = vmax.f32 %v11705, 0.0
    %v11738 = vmax.f32 %v11706, 0.0
    %v11739 = vmax.f32 %v11707, 0.0
    %v11740 = vmax.f32 %v11708, 0.0
    %v11741 = vmax.f32 %v11709, 0.0
    %v11742 = vmax.f32 %v11710, 0.0
    %v11743 = vmax.f32 %v11711, 0.0
    %v11744 = vmax.f32 %v11712, 0.0
    %v11745 = vmax.f32 %v11713, 0.0
    %v11746 = vmax.f32 %v11714, 0.0
    %v11747 = vmax.f32 %v11715, 0.0
    %v11748 = vmax.f32 %v11716, 0.0
    %v11749 = vmax.f32 %v11717, 0.0
    %v11750 = vmax.f32 %v11718, 0.0
    %v11751 = vmax.f32 %v11719, 0.0
    %v11752 = vmax.f32 %v11720, 0.0
    %v11753 = vmax.f32 %v11721, 0.0
    %v11754 = vmax.f32 %v11722, 0.0
    %v11755 = vmax.f32 %v11723, 0.0
    %v11756 = vmax.f32 %v11724, 0.0
    %v11757 = vmax.f32 %v11725, 0.0
    %v11758 = vmax.f32 %v11726, 0.0
    %v11759 = vmax.f32 %v11727, 0.0
    %v11760 = vmax.f32 %v11728, 0.0
    %v11761 = vmax.f32 %v11729, 0.0
    %v11762 = vmax.f32 %v11730, 0.0
    %v11763 = vmax.f32 %v11731, 0.0
    %v11764 = vmax.f32 %v11732, 0.0
    %v11765 = vpack.c.bf16 %v11733, %v11733
    %v11766 = vpack.c.bf16 %v11734, %v11734
    %v11767 = vpack.c.bf16 %v11735, %v11735
    %v11768 = vpack.c.bf16 %v11736, %v11736
    %v11769 = vpack.c.bf16 %v11737, %v11737
    %v11770 = vpack.c.bf16 %v11738, %v11738
    %v11771 = vpack.c.bf16 %v11739, %v11739
    %v11772 = vpack.c.bf16 %v11740, %v11740
    %v11773 = vpack.c.bf16 %v11741, %v11741
    %v11774 = vpack.c.bf16 %v11742, %v11742
    %v11775 = vpack.c.bf16 %v11743, %v11743
    %v11776 = vpack.c.bf16 %v11744, %v11744
    %v11777 = vpack.c.bf16 %v11745, %v11745
    %v11778 = vpack.c.bf16 %v11746, %v11746
    %v11779 = vpack.c.bf16 %v11747, %v11747
    %v11780 = vpack.c.bf16 %v11748, %v11748
    %v11781 = vpack.c.bf16 %v11749, %v11749
    %v11782 = vpack.c.bf16 %v11750, %v11750
    %v11783 = vpack.c.bf16 %v11751, %v11751
    %v11784 = vpack.c.bf16 %v11752, %v11752
    %v11785 = vpack.c.bf16 %v11753, %v11753
    %v11786 = vpack.c.bf16 %v11754, %v11754
    %v11787 = vpack.c.bf16 %v11755, %v11755
    %v11788 = vpack.c.bf16 %v11756, %v11756
    %v11789 = vpack.c.bf16 %v11757, %v11757
    %v11790 = vpack.c.bf16 %v11758, %v11758
    %v11791 = vpack.c.bf16 %v11759, %v11759
    %v11792 = vpack.c.bf16 %v11760, %v11760
    %v11793 = vpack.c.bf16 %v11761, %v11761
    %v11794 = vpack.c.bf16 %v11762, %v11762
    %v11795 = vpack.c.bf16 %v11763, %v11763
    %v11796 = vpack.c.bf16 %v11764, %v11764
    %vm11797 = vcmask 257024
    %11798 = vst.msk [vmem:[#allocation3] sm:$0xf] %vm11797, %v11765
    %11799 = vst.msk [vmem:[#allocation3 + $0x4] sm:$0xf] %vm11797, %v11766
    %11800 = vst.msk [vmem:[#allocation3 + $0x8] sm:$0xf] %vm11797, %v11767
    %11801 = vst.msk [vmem:[#allocation3 + $0xc] sm:$0xf] %vm11797, %v11768
    %11802 = vst.msk [vmem:[#allocation3 + $0x10] sm:$0xf] %vm11797, %v11769
    %11803 = vst.msk [vmem:[#allocation3 + $0x14] sm:$0xf] %vm11797, %v11770
    %11804 = vst.msk [vmem:[#allocation3 + $0x18] sm:$0xf] %vm11797, %v11771
    %11805 = vst.msk [vmem:[#allocation3 + $0x1c] sm:$0xf] %vm11797, %v11772
    %11806 = vst.msk [vmem:[#allocation3 + $0x20] sm:$0xf] %vm11797, %v11773
    %11807 = vst.msk [vmem:[#allocation3 + $0x24] sm:$0xf] %vm11797, %v11774
    %11808 = vst.msk [vmem:[#allocation3 + $0x28] sm:$0xf] %vm11797, %v11775
    %11809 = vst.msk [vmem:[#allocation3 + $0x2c] sm:$0xf] %vm11797, %v11776
    %11810 = vst.msk [vmem:[#allocation3 + $0x30] sm:$0xf] %vm11797, %v11777
    %11811 = vst.msk [vmem:[#allocation3 + $0x34] sm:$0xf] %vm11797, %v11778
    %11812 = vst.msk [vmem:[#allocation3 + $0x38] sm:$0xf] %vm11797, %v11779
    %11813 = vst.msk [vmem:[#allocation3 + $0x3c] sm:$0xf] %vm11797, %v11780
    %11814 = vst.msk [vmem:[#allocation3 + $0x40] sm:$0xf] %vm11797, %v11781
    %11815 = vst.msk [vmem:[#allocation3 + $0x44] sm:$0xf] %vm11797, %v11782
    %11816 = vst.msk [vmem:[#allocation3 + $0x48] sm:$0xf] %vm11797, %v11783
    %11817 = vst.msk [vmem:[#allocation3 + $0x4c] sm:$0xf] %vm11797, %v11784
    %11818 = vst.msk [vmem:[#allocation3 + $0x50] sm:$0xf] %vm11797, %v11785
    %11819 = vst.msk [vmem:[#allocation3 + $0x54] sm:$0xf] %vm11797, %v11786
    %11820 = vst.msk [vmem:[#allocation3 + $0x58] sm:$0xf] %vm11797, %v11787
    %11821 = vst.msk [vmem:[#allocation3 + $0x5c] sm:$0xf] %vm11797, %v11788
    %11822 = vst.msk [vmem:[#allocation3 + $0x60] sm:$0xf] %vm11797, %v11789
    %11823 = vst.msk [vmem:[#allocation3 + $0x64] sm:$0xf] %vm11797, %v11790
    %11824 = vst.msk [vmem:[#allocation3 + $0x68] sm:$0xf] %vm11797, %v11791
    %11825 = vst.msk [vmem:[#allocation3 + $0x6c] sm:$0xf] %vm11797, %v11792
    %11826 = vst.msk [vmem:[#allocation3 + $0x70] sm:$0xf] %vm11797, %v11793
    %11827 = vst.msk [vmem:[#allocation3 + $0x74] sm:$0xf] %vm11797, %v11794
    %11828 = vst.msk [vmem:[#allocation3 + $0x78] sm:$0xf] %vm11797, %v11795
    %11829 = vst.msk [vmem:[#allocation3 + $0x7c] sm:$0xf] %vm11797, %v11796
    // Predicated region
    $region22: #{tpu_custom_call.1} parent=1 // pred_check
      _
    $region23: #{tpu_custom_call.1} parent=1 // pred_check_branch
      %11831 = sbr.rel (0) target = $region25
    $region24: #{tpu_custom_call.1} parent=1 // pred_region
      %s11833 = ssub.s32 2048, 2048
      %11834 = vsyncadd [#allocation4], %s11833
      %s11835 = sshll.u32 [#allocation3], 4
      %s11836 = int_to_ptr.vmem [resolvable:$true] %s11835
      %11841 = dma.vmem_to_hbm [thread:$0]  %s11836, 2048, %s5, [#allocation4], 64, 64, 4
    $region25: #{tpu_custom_call.1} parent=1 // pred_fallthru
      _
    // Predicated region
    $region26: #{tpu_custom_call.1} parent=1 // pred_check
      _
    $region27: #{tpu_custom_call.1} parent=1 // pred_check_branch
      %11843 = sbr.rel (0) target = $region29
    $region28: #{tpu_custom_call.1} parent=1 // pred_region
      %11844 = dma.done [#allocation4], 2048
    $region29: #{tpu_custom_call.1} parent=1 // pred_fallthru
      _
    %11845 = vsyncpa [#allocation4], 1

</llo_original>
